<compile_context>
chip_gen: v7x
topology: tpu7x:2x2x1
jax: 0.10.0
libtpu: 0.0.40
codegen_flags: <defaults>
</compile_context>

<pallas_src>
import functools

import jax
import jax.numpy as jnp
from jax.experimental import pallas as pl
from jax.experimental.pallas import tpu as pltpu


def _round_up(x, m):
    return ((x + m - 1) // m) * m


# ----------------------------------------------------------------------
# Kernel 1: fused [deferred-BN affine + ReLU] prologue -> bf16 MXU matmul
#   cols_tile = act(x_tile * scale + shift) @ W_mat   (f32 accumulation)
# ----------------------------------------------------------------------
def _prologue_matmul_kernel(*refs, apply_affine, act):
    if apply_affine:
        x_ref, scale_ref, shift_ref, w_ref, o_ref = refs
    else:
        x_ref, w_ref, o_ref = refs
    x = x_ref[...]                                      # (tm, Kp) f32
    if apply_affine:
        x = x * scale_ref[...] + shift_ref[...]         # deferred BN of prev layer
    if act == "relu":
        x = jnp.maximum(x, 0.0)
    o_ref[...] = jnp.dot(x.astype(jnp.bfloat16), w_ref[...],
                         preferred_element_type=jnp.float32)


def prologue_matmul(x, w_bf16, scale=None, shift=None, *, act="none", tm=256):
    """x: (M, Kp) f32, w_bf16: (Kp, Ncols) bf16 -> cols (M, Ncols) f32."""
    M, Kp = x.shape
    Ncols = w_bf16.shape[1]
    apply_affine = scale is not None

    tm_eff = min(tm, _round_up(M, 8))
    Mp = _round_up(M, tm_eff)
    if Mp != M:
        x = jnp.pad(x, ((0, Mp - M), (0, 0)))

    args = [x]
    in_specs = [pl.BlockSpec((tm_eff, Kp), lambda i: (i, 0))]
    if apply_affine:
        args += [scale.reshape(1, Kp).astype(jnp.float32),
                 shift.reshape(1, Kp).astype(jnp.float32)]
        in_specs += [pl.BlockSpec((1, Kp), lambda i: (0, 0)),
                     pl.BlockSpec((1, Kp), lambda i: (0, 0))]
    args.append(w_bf16)
    in_specs.append(pl.BlockSpec((Kp, Ncols), lambda i: (0, 0)))  # resident weights

    kernel = functools.partial(_prologue_matmul_kernel,
                               apply_affine=apply_affine, act=act)
    out = pl.pallas_call(
        kernel,
        out_shape=jax.ShapeDtypeStruct((Mp, Ncols), jnp.float32),
        grid=(Mp // tm_eff,),
        in_specs=in_specs,
        out_specs=pl.BlockSpec((tm_eff, Ncols), lambda i: (i, 0)),
        compiler_params=pltpu.CompilerParams(
            dimension_semantics=("parallel",),
            vmem_limit_bytes=48 << 20,
        ),
    )(*args)
    return out[:M] if Mp != M else out


# ----------------------------------------------------------------------
# Kernel 2: per-channel BatchNorm statistics (sum, sum of squares)
#   Tiled over M with an "arbitrary" axis; (2, C) accumulator stays resident.
# ----------------------------------------------------------------------
def _stats_kernel(y_ref, s_ref):
    @pl.when(pl.program_id(0) == 0)
    def _init():
        s_ref[...] = jnp.zeros_like(s_ref)

    y = y_ref[...]
    ssum = jnp.sum(y, axis=0, keepdims=True)
    ssq = jnp.sum(y * y, axis=0, keepdims=True)
    s_ref[...] = s_ref[...] + jnp.concatenate([ssum, ssq], axis=0)


def channel_stats(y2d, *, tm=512):
    """y2d: (M, C) f32 -> (2, C): row 0 = sum, row 1 = sum of squares."""
    M, C = y2d.shape
    tm_eff = min(tm, _round_up(M, 8))
    Mp = _round_up(M, tm_eff)
    if Mp != M:
        y2d = jnp.pad(y2d, ((0, Mp - M), (0, 0)))   # zero rows: no effect on sums
    return pl.pallas_call(
        _stats_kernel,
        out_shape=jax.ShapeDtypeStruct((2, C), jnp.float32),
        grid=(Mp // tm_eff,),
        in_specs=[pl.BlockSpec((tm_eff, C), lambda i: (i, 0))],
        out_specs=pl.BlockSpec((2, C), lambda i: (0, 0)),
        compiler_params=pltpu.CompilerParams(
            dimension_semantics=("arbitrary",)),
    )(y2d)


# ----------------------------------------------------------------------
# Kernel 3: final layer conv-bias + tanh on a lane-dense (rows, OW*Cp) slab
# ----------------------------------------------------------------------
def _bias_tanh_kernel(y_ref, b_ref, o_ref):
    o_ref[...] = jnp.tanh(y_ref[...] + b_ref[...])


def bias_tanh(y2d, bias_row, *, tm=512):
    M, L = y2d.shape
    tm_eff = min(tm, _round_up(M, 8))
    Mp = _round_up(M, tm_eff)
    if Mp != M:
        y2d = jnp.pad(y2d, ((0, Mp - M), (0, 0)))
    out = pl.pallas_call(
        _bias_tanh_kernel,
        out_shape=jax.ShapeDtypeStruct((Mp, L), jnp.float32),
        grid=(Mp // tm_eff,),
        in_specs=[pl.BlockSpec((tm_eff, L), lambda i: (i, 0)),
                  pl.BlockSpec((1, L), lambda i: (0, 0))],
        out_specs=pl.BlockSpec((tm_eff, L), lambda i: (i, 0)),
        compiler_params=pltpu.CompilerParams(
            dimension_semantics=("parallel",)),
    )(y2d, bias_row.reshape(1, L).astype(jnp.float32))
    return out[:M] if Mp != M else out


# ----------------------------------------------------------------------
# Host-side glue: col2im overlap-add (transposed-conv scatter of the cols)
# ----------------------------------------------------------------------
def col2im(cols, N, H, W, Cp, k, stride, padding):
    """cols: (N*H*W, Cp*k*k) f32 -> NHWC raw conv-transpose output (N,OH,OW,Cp)."""
    cols = cols.reshape(N, H, W, Cp, k, k)
    Hf = (H - 1) * stride + k
    Wf = (W - 1) * stride + k
    out = jnp.zeros((N, Hf, Wf, Cp), jnp.float32)
    for kh in range(k):
        for kw in range(k):
            out = out.at[:, kh:kh + (H - 1) * stride + 1:stride,
                         kw:kw + (W - 1) * stride + 1:stride, :].add(
                cols[:, :, :, :, kh, kw])
    return out[:, padding:Hf - padding, padding:Wf - padding, :]


# ----------------------------------------------------------------------
# Layer configuration (dim = 64, latent = 100)
# ----------------------------------------------------------------------
_LAYER_CFG = (
    dict(k=4, s=1, p=0, bn=True),    # 100 -> 256,   1x1 ->  4x4
    dict(k=4, s=2, p=1, bn=True),    # 256 -> 128,   4x4 ->  8x8
    dict(k=4, s=2, p=1, bn=True),    # 128 ->  64,   8x8 -> 16x16
    dict(k=4, s=2, p=1, bn=False),   #  64 ->   C, 16x16 -> 32x32  (+ tanh)
)


def prepare_params(params):
    """Precompute padded bf16 weight matrices once (outside the hot path)."""
    prep = []
    for li, (cfg, (w, b, g, beta)) in enumerate(zip(_LAYER_CFG, params)):
        cin, cout, k, _ = w.shape
        kp = _round_up(cin, 128) if li == 0 else cin    # only latent K needs pad
        cp = _round_up(cout, 8)                         # so Cp*k*k % 128 == 0
        wmat = w.reshape(cin, cout, k * k)
        wmat = jnp.pad(wmat, ((0, kp - cin), (0, cp - cout), (0, 0)))
        wmat = wmat.reshape(kp, cp * k * k).astype(jnp.bfloat16)
        entry = dict(w=wmat)
        if cfg["bn"]:
            assert cp == cout, "BN layer channels must be a multiple of 8"
            # Conv bias cancels exactly under training-mode BN mean subtraction.
            entry["gamma"] = g.astype(jnp.float32)
            entry["beta"] = beta.astype(jnp.float32)
        else:
            entry["bias"] = jnp.pad(b.astype(jnp.float32), (0, cp - cout))
        prep.append(entry)
    return prep


def generator_forward(z, prep, *, channels):
    """z: (N, 100, 1, 1) NCHW f32 -> (N, channels, 32, 32) NCHW f32."""
    N = z.shape[0]
    kp0 = prep[0]["w"].shape[0]
    # Latent: H=W=1 so NCHW flatten == NHWC flatten; pad K 100 -> 128.
    x2d = jnp.pad(z.reshape(N, z.shape[1]), ((0, 0), (0, kp0 - z.shape[1])))

    H = W = 1
    scale = shift = None          # deferred BN scale/shift of the previous layer
    act_prev = "none"
    y = None
    for cfg, p in zip(_LAYER_CFG, prep):
        k, s, pd = cfg["k"], cfg["s"], cfg["p"]
        cp = p["w"].shape[1] // (k * k)

        cols = prologue_matmul(x2d, p["w"], scale, shift, act=act_prev, tm=256)
        OH = (H - 1) * s + k - 2 * pd
        OW = (W - 1) * s + k - 2 * pd
        y = col2im(cols, N, H, W, cp, k, s, pd)          # raw conv output, NHWC

        if cfg["bn"]:
            m = N * OH * OW
            y2d = y.reshape(m, cp)
            stats = channel_stats(y2d)
            mean = stats[0] / m
            var = jnp.maximum(stats[1] / m - mean * mean, 0.0)   # biased variance
            inv = jax.lax.rsqrt(var + 1e-5)
            scale = p["gamma"] * inv                              # fold gamma
            shift = p["beta"] - mean * scale
            act_prev = "relu"
            x2d = y2d                  # BN+ReLU deferred into next layer's matmul
        else:
            # Final layer: conv bias + tanh on a lane-dense (N*OH, OW*Cp) slab.
            L = OW * cp
            bias_row = jnp.tile(p["bias"], OW)
            out2d = bias_tanh(y.reshape(N * OH, L), bias_row)
            y = out2d.reshape(N, OH, OW, cp)
        H, W = OH, OW

    # Drop channel padding, convert to NCHW once at the very end.
    return y[:, :, :, :channels].transpose(0, 3, 1, 2)


def init_params(key, channels, dim=64):
    """Deterministic synthetic parameters (shapes match the PyTorch module)."""
    chans = [(100, dim * 4), (dim * 4, dim * 2), (dim * 2, dim), (dim, channels)]
    params = []
    for li, (cin, cout) in enumerate(chans):
        key, kw, kb, kg, kbt = jax.random.split(key, 5)
        w = 0.05 * jax.random.normal(kw, (cin, cout, 4, 4), jnp.float32)
        b = 0.05 * jax.random.normal(kb, (cout,), jnp.float32)
        if li < 3:  # BN layers
            g = 1.0 + 0.1 * jax.random.normal(kg, (cout,), jnp.float32)
            beta = 0.1 * jax.random.normal(kbt, (cout,), jnp.float32)
        else:       # last layer has no BN; identity affine (unused)
            g = jnp.ones((cout,), jnp.float32)
            beta = jnp.zeros((cout,), jnp.float32)
        params.append((w, b, g, beta))
    return params


if __name__ == "__main__":
    key = jax.random.PRNGKey(0)
    k_x, k_p = jax.random.split(key)

    batch, channels = 2, 3
    z = jax.random.normal(k_x, (batch, 100, 1, 1), jnp.float32)   # latent
    params = init_params(k_p, channels)
    prep = prepare_params(params)       # padded bf16 weight matrices, once

    fwd = jax.jit(functools.partial(generator_forward, channels=channels))
    out = jax.block_until_ready(fwd(z, prep))

    assert out.shape == (batch, channels, 32, 32), out.shape
    assert out.dtype == jnp.float32
    assert bool(jnp.all(jnp.isfinite(out)))
    assert bool(jnp.all(jnp.abs(out) <= 1.0 + 1e-6))   # tanh output range
    print("KERNEL_OK")
</pallas_src>

<mosaic_0001>
module attributes {stable_mosaic.version = 11 : i64} {
  func.func @_prologue_matmul_kernel(%arg0: i32, %arg1: memref<8x128xf32, #tpu.memory_space<vmem>>, %arg2: memref<128x4096xbf16, #tpu.memory_space<vmem>>, %arg3: memref<8x4096xf32, #tpu.memory_space<vmem>>) attributes {dimension_semantics = [#tpu.dimension_semantics<parallel>], iteration_bounds = array<i64: 1>, scalar_prefetch = 0 : i64, scratch_operands = 0 : i64, tpu.core_type = #tpu.core_type<tc>, window_params = [{transform_indices = @transform_0, window_bounds = array<i64: 8, 128>}, {pipeline_mode = #tpu.pipeline_mode<synchronous>, transform_indices = @transform_1, window_bounds = array<i64: 128, 4096>}, {transform_indices = @transform_2, window_bounds = array<i64: 8, 4096>}]} {
    %c0 = arith.constant 0 : index
    %c0_0 = arith.constant 0 : index
    %0 = vector.load %arg1[%c0, %c0_0] : memref<8x128xf32, #tpu.memory_space<vmem>>, vector<8x128xf32>
    %1 = arith.truncf %0 : vector<8x128xf32> to vector<8x128xbf16>
    %c0_1 = arith.constant 0 : index
    %c0_2 = arith.constant 0 : index
    %2 = vector.load %arg2[%c0_1, %c0_2] : memref<128x4096xbf16, #tpu.memory_space<vmem>>, vector<128x4096xbf16>
    %cst = arith.constant dense<0.000000e+00> : vector<8x4096xf32>
    %3 = tpu.matmul %1, %2, %cst {dimension_numbers = #tpu.dot_dimension_numbers<[1], [0], [0], [1], [0, 0, 1, 1], [], []>} : vector<8x128xbf16>, vector<128x4096xbf16>, vector<8x4096xf32> -> vector<8x4096xf32>
    %c0_3 = arith.constant 0 : index
    %c0_4 = arith.constant 0 : index
    %4 = vector.load %arg3[%c0_3, %c0_4] : memref<8x4096xf32, #tpu.memory_space<vmem>>, vector<8x4096xf32>
    tpu.vector_store %arg3[%c0_3, %c0_4], %3 {strides = array<i32>} : memref<8x4096xf32, #tpu.memory_space<vmem>>, vector<8x4096xf32>,
    return
  }
  func.func @transform_0(%arg0: i32) -> (i32, i32) {
    %c0_i32 = arith.constant 0 : i32
    %c0_i32_0 = arith.constant 0 : i32
    return %arg0, %c0_i32 : i32, i32
  }
  func.func @transform_1(%arg0: i32) -> (i32, i32) {
    %c0_i32 = arith.constant 0 : i32
    %c0_i32_0 = arith.constant 0 : i32
    %c0_i32_1 = arith.constant 0 : i32
    return %c0_i32, %c0_i32_0 : i32, i32
  }
  func.func @transform_2(%arg0: i32) -> (i32, i32) {
    %c0_i32 = arith.constant 0 : i32
    %c0_i32_0 = arith.constant 0 : i32
    return %arg0, %c0_i32 : i32, i32
  }
}

module attributes {stable_mosaic.version = 11 : i64} {
  func.func @_stats_kernel(%arg0: i32, %arg1: memref<32x256xf32, #tpu.memory_space<vmem>>, %arg2: memref<2x256xf32, #tpu.memory_space<vmem>>) attributes {dimension_semantics = [#tpu.dimension_semantics<arbitrary>], iteration_bounds = array<i64: 1>, scalar_prefetch = 0 : i64, scratch_operands = 0 : i64, tpu.core_type = #tpu.core_type<tc>, window_params = [{transform_indices = @transform_0, window_bounds = array<i64: 32, 256>}, {pipeline_mode = #tpu.pipeline_mode<synchronous>, transform_indices = @transform_1, window_bounds = array<i64: 2, 256>}]} {
    %c0_i32 = arith.constant 0 : i32
    %0 = arith.cmpi eq, %arg0, %c0_i32 : i32
    %1 = arith.extui %0 : i1 to i32
    %c0_i32_0 = arith.constant 0 : i32
    %2 = arith.cmpi ne, %1, %c0_i32_0 : i32
    scf.if %2 {
      %cst_7 = arith.constant 0.000000e+00 : f32
      %13 = vector.broadcast %cst_7 : f32 to vector<2x256xf32>
      %c0_8 = arith.constant 0 : index
      %c0_9 = arith.constant 0 : index
      %14 = vector.load %arg2[%c0_8, %c0_9] : memref<2x256xf32, #tpu.memory_space<vmem>>, vector<2x256xf32>
      tpu.vector_store %arg2[%c0_8, %c0_9], %13 {strides = array<i32>} : memref<2x256xf32, #tpu.memory_space<vmem>>, vector<2x256xf32>,
    } else {
    }
    %c0 = arith.constant 0 : index
    %c0_1 = arith.constant 0 : index
    %3 = vector.load %arg1[%c0, %c0_1] : memref<32x256xf32, #tpu.memory_space<vmem>>, vector<32x256xf32>
    %cst = arith.constant dense<0.000000e+00> : vector<256xf32>
    %4 = vector.multi_reduction <add>, %3, %cst [0] : vector<32x256xf32> to vector<256xf32>
    %5 = vector.shape_cast %4 : vector<256xf32> to vector<1x256xf32>
    %6 = arith.mulf %3, %3 : vector<32x256xf32>
    %cst_2 = arith.constant dense<0.000000e+00> : vector<256xf32>
    %7 = vector.multi_reduction <add>, %6, %cst_2 [0] : vector<32x256xf32> to vector<256xf32>
    %8 = vector.shape_cast %7 : vector<256xf32> to vector<1x256xf32>
    %c0_3 = arith.constant 0 : index
    %c0_4 = arith.constant 0 : index
    %9 = vector.load %arg2[%c0_3, %c0_4] : memref<2x256xf32, #tpu.memory_space<vmem>>, vector<2x256xf32>
    %10 = tpu.concatenate %5, %8 in 0 : vector<1x256xf32>, vector<1x256xf32> -> vector<2x256xf32>
    %11 = arith.addf %9, %10 : vector<2x256xf32>
    %c0_5 = arith.constant 0 : index
    %c0_6 = arith.constant 0 : index
    %12 = vector.load %arg2[%c0_5, %c0_6] : memref<2x256xf32, #tpu.memory_space<vmem>>, vector<2x256xf32>
    tpu.vector_store %arg2[%c0_5, %c0_6], %11 {strides = array<i32>} : memref<2x256xf32, #tpu.memory_space<vmem>>, vector<2x256xf32>,
    return
  }
  func.func @transform_0(%arg0: i32) -> (i32, i32) {
    %c0_i32 = arith.constant 0 : i32
    %c0_i32_0 = arith.constant 0 : i32
    return %arg0, %c0_i32 : i32, i32
  }
  func.func @transform_1(%arg0: i32) -> (i32, i32) {
    %c0_i32 = arith.constant 0 : i32
    %c0_i32_0 = arith.constant 0 : i32
    %c0_i32_1 = arith.constant 0 : i32
    return %c0_i32, %c0_i32_0 : i32, i32
  }
}

module attributes {stable_mosaic.version = 11 : i64} {
  func.func @_prologue_matmul_kernel(%arg0: i32, %arg1: memref<32x256xf32, #tpu.memory_space<vmem>>, %arg2: memref<1x256xf32, #tpu.memory_space<vmem>>, %arg3: memref<1x256xf32, #tpu.memory_space<vmem>>, %arg4: memref<256x2048xbf16, #tpu.memory_space<vmem>>, %arg5: memref<32x2048xf32, #tpu.memory_space<vmem>>) attributes {dimension_semantics = [#tpu.dimension_semantics<parallel>], iteration_bounds = array<i64: 1>, scalar_prefetch = 0 : i64, scratch_operands = 0 : i64, tpu.core_type = #tpu.core_type<tc>, window_params = [{transform_indices = @transform_0, window_bounds = array<i64: 32, 256>}, {pipeline_mode = #tpu.pipeline_mode<synchronous>, transform_indices = @transform_1, window_bounds = array<i64: 1, 256>}, {pipeline_mode = #tpu.pipeline_mode<synchronous>, transform_indices = @transform_2, window_bounds = array<i64: 1, 256>}, {pipeline_mode = #tpu.pipeline_mode<synchronous>, transform_indices = @transform_3, window_bounds = array<i64: 256, 2048>}, {transform_indices = @transform_4, window_bounds = array<i64: 32, 2048>}]} {
    %c0 = arith.constant 0 : index
    %c0_0 = arith.constant 0 : index
    %0 = vector.load %arg1[%c0, %c0_0] : memref<32x256xf32, #tpu.memory_space<vmem>>, vector<32x256xf32>
    %c0_1 = arith.constant 0 : index
    %c0_2 = arith.constant 0 : index
    %1 = vector.load %arg2[%c0_1, %c0_2] : memref<1x256xf32, #tpu.memory_space<vmem>>, vector<1x256xf32>
    %2 = vector.broadcast %1 : vector<1x256xf32> to vector<32x256xf32>
    %3 = arith.mulf %0, %2 : vector<32x256xf32>
    %c0_3 = arith.constant 0 : index
    %c0_4 = arith.constant 0 : index
    %4 = vector.load %arg3[%c0_3, %c0_4] : memref<1x256xf32, #tpu.memory_space<vmem>>, vector<1x256xf32>
    %5 = vector.broadcast %4 : vector<1x256xf32> to vector<32x256xf32>
    %6 = arith.addf %3, %5 : vector<32x256xf32>
    %cst = arith.constant 0.000000e+00 : f32
    %7 = vector.broadcast %cst : f32 to vector<32x256xf32>
    %8 = arith.maximumf %6, %7 : vector<32x256xf32>
    %9 = arith.truncf %8 : vector<32x256xf32> to vector<32x256xbf16>
    %c0_5 = arith.constant 0 : index
    %c0_6 = arith.constant 0 : index
    %10 = vector.load %arg4[%c0_5, %c0_6] : memref<256x2048xbf16, #tpu.memory_space<vmem>>, vector<256x2048xbf16>
    %cst_7 = arith.constant dense<0.000000e+00> : vector<32x2048xf32>
    %11 = tpu.matmul %9, %10, %cst_7 {dimension_numbers = #tpu.dot_dimension_numbers<[1], [0], [0], [1], [0, 0, 1, 1], [], []>} : vector<32x256xbf16>, vector<256x2048xbf16>, vector<32x2048xf32> -> vector<32x2048xf32>
    %c0_8 = arith.constant 0 : index
    %c0_9 = arith.constant 0 : index
    %12 = vector.load %arg5[%c0_8, %c0_9] : memref<32x2048xf32, #tpu.memory_space<vmem>>, vector<32x2048xf32>
    tpu.vector_store %arg5[%c0_8, %c0_9], %11 {strides = array<i32>} : memref<32x2048xf32, #tpu.memory_space<vmem>>, vector<32x2048xf32>,
    return
  }
  func.func @transform_0(%arg0: i32) -> (i32, i32) {
    %c0_i32 = arith.constant 0 : i32
    %c0_i32_0 = arith.constant 0 : i32
    return %arg0, %c0_i32 : i32, i32
  }
  func.func @transform_1(%arg0: i32) -> (i32, i32) {
    %c0_i32 = arith.constant 0 : i32
    %c0_i32_0 = arith.constant 0 : i32
    %c0_i32_1 = arith.constant 0 : i32
    return %c0_i32, %c0_i32_0 : i32, i32
  }
  func.func @transform_2(%arg0: i32) -> (i32, i32) {
    %c0_i32 = arith.constant 0 : i32
    %c0_i32_0 = arith.constant 0 : i32
    %c0_i32_1 = arith.constant 0 : i32
    return %c0_i32, %c0_i32_0 : i32, i32
  }
  func.func @transform_3(%arg0: i32) -> (i32, i32) {
    %c0_i32 = arith.constant 0 : i32
    %c0_i32_0 = arith.constant 0 : i32
    %c0_i32_1 = arith.constant 0 : i32
    return %c0_i32, %c0_i32_0 : i32, i32
  }
  func.func @transform_4(%arg0: i32) -> (i32, i32) {
    %c0_i32 = arith.constant 0 : i32
    %c0_i32_0 = arith.constant 0 : i32
    return %arg0, %c0_i32 : i32, i32
  }
}

module attributes {stable_mosaic.version = 11 : i64} {
  func.func @_stats_kernel(%arg0: i32, %arg1: memref<128x128xf32, #tpu.memory_space<vmem>>, %arg2: memref<2x128xf32, #tpu.memory_space<vmem>>) attributes {dimension_semantics = [#tpu.dimension_semantics<arbitrary>], iteration_bounds = array<i64: 1>, scalar_prefetch = 0 : i64, scratch_operands = 0 : i64, tpu.core_type = #tpu.core_type<tc>, window_params = [{transform_indices = @transform_0, window_bounds = array<i64: 128, 128>}, {pipeline_mode = #tpu.pipeline_mode<synchronous>, transform_indices = @transform_1, window_bounds = array<i64: 2, 128>}]} {
    %c0_i32 = arith.constant 0 : i32
    %0 = arith.cmpi eq, %arg0, %c0_i32 : i32
    %1 = arith.extui %0 : i1 to i32
    %c0_i32_0 = arith.constant 0 : i32
    %2 = arith.cmpi ne, %1, %c0_i32_0 : i32
    scf.if %2 {
      %cst_7 = arith.constant 0.000000e+00 : f32
      %13 = vector.broadcast %cst_7 : f32 to vector<2x128xf32>
      %c0_8 = arith.constant 0 : index
      %c0_9 = arith.constant 0 : index
      %14 = vector.load %arg2[%c0_8, %c0_9] : memref<2x128xf32, #tpu.memory_space<vmem>>, vector<2x128xf32>
      tpu.vector_store %arg2[%c0_8, %c0_9], %13 {strides = array<i32>} : memref<2x128xf32, #tpu.memory_space<vmem>>, vector<2x128xf32>,
    } else {
    }
    %c0 = arith.constant 0 : index
    %c0_1 = arith.constant 0 : index
    %3 = vector.load %arg1[%c0, %c0_1] : memref<128x128xf32, #tpu.memory_space<vmem>>, vector<128x128xf32>
    %cst = arith.constant dense<0.000000e+00> : vector<128xf32>
    %4 = vector.multi_reduction <add>, %3, %cst [0] : vector<128x128xf32> to vector<128xf32>
    %5 = vector.shape_cast %4 : vector<128xf32> to vector<1x128xf32>
    %6 = arith.mulf %3, %3 : vector<128x128xf32>
    %cst_2 = arith.constant dense<0.000000e+00> : vector<128xf32>
    %7 = vector.multi_reduction <add>, %6, %cst_2 [0] : vector<128x128xf32> to vector<128xf32>
    %8 = vector.shape_cast %7 : vector<128xf32> to vector<1x128xf32>
    %c0_3 = arith.constant 0 : index
    %c0_4 = arith.constant 0 : index
    %9 = vector.load %arg2[%c0_3, %c0_4] : memref<2x128xf32, #tpu.memory_space<vmem>>, vector<2x128xf32>
    %10 = tpu.concatenate %5, %8 in 0 : vector<1x128xf32>, vector<1x128xf32> -> vector<2x128xf32>
    %11 = arith.addf %9, %10 : vector<2x128xf32>
    %c0_5 = arith.constant 0 : index
    %c0_6 = arith.constant 0 : index
    %12 = vector.load %arg2[%c0_5, %c0_6] : memref<2x128xf32, #tpu.memory_space<vmem>>, vector<2x128xf32>
    tpu.vector_store %arg2[%c0_5, %c0_6], %11 {strides = array<i32>} : memref<2x128xf32, #tpu.memory_space<vmem>>, vector<2x128xf32>,
    return
  }
  func.func @transform_0(%arg0: i32) -> (i32, i32) {
    %c0_i32 = arith.constant 0 : i32
    %c0_i32_0 = arith.constant 0 : i32
    return %arg0, %c0_i32 : i32, i32
  }
  func.func @transform_1(%arg0: i32) -> (i32, i32) {
    %c0_i32 = arith.constant 0 : i32
    %c0_i32_0 = arith.constant 0 : i32
    %c0_i32_1 = arith.constant 0 : i32
    return %c0_i32, %c0_i32_0 : i32, i32
  }
}

module attributes {stable_mosaic.version = 11 : i64} {
  func.func @_prologue_matmul_kernel(%arg0: i32, %arg1: memref<128x128xf32, #tpu.memory_space<vmem>>, %arg2: memref<1x128xf32, #tpu.memory_space<vmem>>, %arg3: memref<1x128xf32, #tpu.memory_space<vmem>>, %arg4: memref<128x1024xbf16, #tpu.memory_space<vmem>>, %arg5: memref<128x1024xf32, #tpu.memory_space<vmem>>) attributes {dimension_semantics = [#tpu.dimension_semantics<parallel>], iteration_bounds = array<i64: 1>, scalar_prefetch = 0 : i64, scratch_operands = 0 : i64, tpu.core_type = #tpu.core_type<tc>, window_params = [{transform_indices = @transform_0, window_bounds = array<i64: 128, 128>}, {pipeline_mode = #tpu.pipeline_mode<synchronous>, transform_indices = @transform_1, window_bounds = array<i64: 1, 128>}, {pipeline_mode = #tpu.pipeline_mode<synchronous>, transform_indices = @transform_2, window_bounds = array<i64: 1, 128>}, {pipeline_mode = #tpu.pipeline_mode<synchronous>, transform_indices = @transform_3, window_bounds = array<i64: 128, 1024>}, {transform_indices = @transform_4, window_bounds = array<i64: 128, 1024>}]} {
    %c0 = arith.constant 0 : index
    %c0_0 = arith.constant 0 : index
    %0 = vector.load %arg1[%c0, %c0_0] : memref<128x128xf32, #tpu.memory_space<vmem>>, vector<128x128xf32>
    %c0_1 = arith.constant 0 : index
    %c0_2 = arith.constant 0 : index
    %1 = vector.load %arg2[%c0_1, %c0_2] : memref<1x128xf32, #tpu.memory_space<vmem>>, vector<1x128xf32>
    %2 = vector.broadcast %1 : vector<1x128xf32> to vector<128x128xf32>
    %3 = arith.mulf %0, %2 : vector<128x128xf32>
    %c0_3 = arith.constant 0 : index
    %c0_4 = arith.constant 0 : index
    %4 = vector.load %arg3[%c0_3, %c0_4] : memref<1x128xf32, #tpu.memory_space<vmem>>, vector<1x128xf32>
    %5 = vector.broadcast %4 : vector<1x128xf32> to vector<128x128xf32>
    %6 = arith.addf %3, %5 : vector<128x128xf32>
    %cst = arith.constant 0.000000e+00 : f32
    %7 = vector.broadcast %cst : f32 to vector<128x128xf32>
    %8 = arith.maximumf %6, %7 : vector<128x128xf32>
    %9 = arith.truncf %8 : vector<128x128xf32> to vector<128x128xbf16>
    %c0_5 = arith.constant 0 : index
    %c0_6 = arith.constant 0 : index
    %10 = vector.load %arg4[%c0_5, %c0_6] : memref<128x1024xbf16, #tpu.memory_space<vmem>>, vector<128x1024xbf16>
    %cst_7 = arith.constant dense<0.000000e+00> : vector<128x1024xf32>
    %11 = tpu.matmul %9, %10, %cst_7 {dimension_numbers = #tpu.dot_dimension_numbers<[1], [0], [0], [1], [0, 0, 1, 1], [], []>} : vector<128x128xbf16>, vector<128x1024xbf16>, vector<128x1024xf32> -> vector<128x1024xf32>
    %c0_8 = arith.constant 0 : index
    %c0_9 = arith.constant 0 : index
    %12 = vector.load %arg5[%c0_8, %c0_9] : memref<128x1024xf32, #tpu.memory_space<vmem>>, vector<128x1024xf32>
    tpu.vector_store %arg5[%c0_8, %c0_9], %11 {strides = array<i32>} : memref<128x1024xf32, #tpu.memory_space<vmem>>, vector<128x1024xf32>,
    return
  }
  func.func @transform_0(%arg0: i32) -> (i32, i32) {
    %c0_i32 = arith.constant 0 : i32
    %c0_i32_0 = arith.constant 0 : i32
    return %arg0, %c0_i32 : i32, i32
  }
  func.func @transform_1(%arg0: i32) -> (i32, i32) {
    %c0_i32 = arith.constant 0 : i32
    %c0_i32_0 = arith.constant 0 : i32
    %c0_i32_1 = arith.constant 0 : i32
    return %c0_i32, %c0_i32_0 : i32, i32
  }
  func.func @transform_2(%arg0: i32) -> (i32, i32) {
    %c0_i32 = arith.constant 0 : i32
    %c0_i32_0 = arith.constant 0 : i32
    %c0_i32_1 = arith.constant 0 : i32
    return %c0_i32, %c0_i32_0 : i32, i32
  }
  func.func @transform_3(%arg0: i32) -> (i32, i32) {
    %c0_i32 = arith.constant 0 : i32
    %c0_i32_0 = arith.constant 0 : i32
    %c0_i32_1 = arith.constant 0 : i32
    return %c0_i32, %c0_i32_0 : i32, i32
  }
  func.func @transform_4(%arg0: i32) -> (i32, i32) {
    %c0_i32 = arith.constant 0 : i32
    %c0_i32_0 = arith.constant 0 : i32
    return %arg0, %c0_i32 : i32, i32
  }
}

module attributes {stable_mosaic.version = 11 : i64} {
  func.func @_stats_kernel(%arg0: i32, %arg1: memref<512x64xf32, #tpu.memory_space<vmem>>, %arg2: memref<2x64xf32, #tpu.memory_space<vmem>>) attributes {dimension_semantics = [#tpu.dimension_semantics<arbitrary>], iteration_bounds = array<i64: 1>, scalar_prefetch = 0 : i64, scratch_operands = 0 : i64, tpu.core_type = #tpu.core_type<tc>, window_params = [{transform_indices = @transform_0, window_bounds = array<i64: 512, 64>}, {pipeline_mode = #tpu.pipeline_mode<synchronous>, transform_indices = @transform_1, window_bounds = array<i64: 2, 64>}]} {
    %c0_i32 = arith.constant 0 : i32
    %0 = arith.cmpi eq, %arg0, %c0_i32 : i32
    %1 = arith.extui %0 : i1 to i32
    %c0_i32_0 = arith.constant 0 : i32
    %2 = arith.cmpi ne, %1, %c0_i32_0 : i32
    scf.if %2 {
      %cst_7 = arith.constant 0.000000e+00 : f32
      %13 = vector.broadcast %cst_7 : f32 to vector<2x64xf32>
      %c0_8 = arith.constant 0 : index
      %c0_9 = arith.constant 0 : index
      %14 = vector.load %arg2[%c0_8, %c0_9] : memref<2x64xf32, #tpu.memory_space<vmem>>, vector<2x64xf32>
      tpu.vector_store %arg2[%c0_8, %c0_9], %13 {strides = array<i32>} : memref<2x64xf32, #tpu.memory_space<vmem>>, vector<2x64xf32>,
    } else {
    }
    %c0 = arith.constant 0 : index
    %c0_1 = arith.constant 0 : index
    %3 = vector.load %arg1[%c0, %c0_1] : memref<512x64xf32, #tpu.memory_space<vmem>>, vector<512x64xf32>
    %cst = arith.constant dense<0.000000e+00> : vector<64xf32>
    %4 = vector.multi_reduction <add>, %3, %cst [0] : vector<512x64xf32> to vector<64xf32>
    %5 = vector.shape_cast %4 : vector<64xf32> to vector<1x64xf32>
    %6 = arith.mulf %3, %3 : vector<512x64xf32>
    %cst_2 = arith.constant dense<0.000000e+00> : vector<64xf32>
    %7 = vector.multi_reduction <add>, %6, %cst_2 [0] : vector<512x64xf32> to vector<64xf32>
    %8 = vector.shape_cast %7 : vector<64xf32> to vector<1x64xf32>
    %c0_3 = arith.constant 0 : index
    %c0_4 = arith.constant 0 : index
    %9 = vector.load %arg2[%c0_3, %c0_4] : memref<2x64xf32, #tpu.memory_space<vmem>>, vector<2x64xf32>
    %10 = tpu.concatenate %5, %8 in 0 : vector<1x64xf32>, vector<1x64xf32> -> vector<2x64xf32>
    %11 = arith.addf %9, %10 : vector<2x64xf32>
    %c0_5 = arith.constant 0 : index
    %c0_6 = arith.constant 0 : index
    %12 = vector.load %arg2[%c0_5, %c0_6] : memref<2x64xf32, #tpu.memory_space<vmem>>, vector<2x64xf32>
    tpu.vector_store %arg2[%c0_5, %c0_6], %11 {strides = array<i32>} : memref<2x64xf32, #tpu.memory_space<vmem>>, vector<2x64xf32>,
    return
  }
  func.func @transform_0(%arg0: i32) -> (i32, i32) {
    %c0_i32 = arith.constant 0 : i32
    %c0_i32_0 = arith.constant 0 : i32
    return %arg0, %c0_i32 : i32, i32
  }
  func.func @transform_1(%arg0: i32) -> (i32, i32) {
    %c0_i32 = arith.constant 0 : i32
    %c0_i32_0 = arith.constant 0 : i32
    %c0_i32_1 = arith.constant 0 : i32
    return %c0_i32, %c0_i32_0 : i32, i32
  }
}

module attributes {stable_mosaic.version = 11 : i64} {
  func.func @_prologue_matmul_kernel(%arg0: i32, %arg1: memref<256x64xf32, #tpu.memory_space<vmem>>, %arg2: memref<1x64xf32, #tpu.memory_space<vmem>>, %arg3: memref<1x64xf32, #tpu.memory_space<vmem>>, %arg4: memref<64x128xbf16, #tpu.memory_space<vmem>>, %arg5: memref<256x128xf32, #tpu.memory_space<vmem>>) attributes {dimension_semantics = [#tpu.dimension_semantics<parallel>], iteration_bounds = array<i64: 2>, scalar_prefetch = 0 : i64, scratch_operands = 0 : i64, tpu.core_type = #tpu.core_type<tc>, window_params = [{transform_indices = @transform_0, window_bounds = array<i64: 256, 64>}, {pipeline_mode = #tpu.pipeline_mode<synchronous>, transform_indices = @transform_1, window_bounds = array<i64: 1, 64>}, {pipeline_mode = #tpu.pipeline_mode<synchronous>, transform_indices = @transform_2, window_bounds = array<i64: 1, 64>}, {pipeline_mode = #tpu.pipeline_mode<synchronous>, transform_indices = @transform_3, window_bounds = array<i64: 64, 128>}, {transform_indices = @transform_4, window_bounds = array<i64: 256, 128>}]} {
    %c0 = arith.constant 0 : index
    %c0_0 = arith.constant 0 : index
    %0 = vector.load %arg1[%c0, %c0_0] : memref<256x64xf32, #tpu.memory_space<vmem>>, vector<256x64xf32>
    %c0_1 = arith.constant 0 : index
    %c0_2 = arith.constant 0 : index
    %1 = vector.load %arg2[%c0_1, %c0_2] : memref<1x64xf32, #tpu.memory_space<vmem>>, vector<1x64xf32>
    %2 = vector.broadcast %1 : vector<1x64xf32> to vector<256x64xf32>
    %3 = arith.mulf %0, %2 : vector<256x64xf32>
    %c0_3 = arith.constant 0 : index
    %c0_4 = arith.constant 0 : index
    %4 = vector.load %arg3[%c0_3, %c0_4] : memref<1x64xf32, #tpu.memory_space<vmem>>, vector<1x64xf32>
    %5 = vector.broadcast %4 : vector<1x64xf32> to vector<256x64xf32>
    %6 = arith.addf %3, %5 : vector<256x64xf32>
    %cst = arith.constant 0.000000e+00 : f32
    %7 = vector.broadcast %cst : f32 to vector<256x64xf32>
    %8 = arith.maximumf %6, %7 : vector<256x64xf32>
    %9 = arith.truncf %8 : vector<256x64xf32> to vector<256x64xbf16>
    %c0_5 = arith.constant 0 : index
    %c0_6 = arith.constant 0 : index
    %10 = vector.load %arg4[%c0_5, %c0_6] : memref<64x128xbf16, #tpu.memory_space<vmem>>, vector<64x128xbf16>
    %cst_7 = arith.constant dense<0.000000e+00> : vector<256x128xf32>
    %11 = tpu.matmul %9, %10, %cst_7 {dimension_numbers = #tpu.dot_dimension_numbers<[1], [0], [0], [1], [0, 0, 1, 1], [], []>} : vector<256x64xbf16>, vector<64x128xbf16>, vector<256x128xf32> -> vector<256x128xf32>
    %c0_8 = arith.constant 0 : index
    %c0_9 = arith.constant 0 : index
    %12 = vector.load %arg5[%c0_8, %c0_9] : memref<256x128xf32, #tpu.memory_space<vmem>>, vector<256x128xf32>
    tpu.vector_store %arg5[%c0_8, %c0_9], %11 {strides = array<i32>} : memref<256x128xf32, #tpu.memory_space<vmem>>, vector<256x128xf32>,
    return
  }
  func.func @transform_0(%arg0: i32) -> (i32, i32) {
    %c0_i32 = arith.constant 0 : i32
    %c0_i32_0 = arith.constant 0 : i32
    return %arg0, %c0_i32 : i32, i32
  }
  func.func @transform_1(%arg0: i32) -> (i32, i32) {
    %c0_i32 = arith.constant 0 : i32
    %c0_i32_0 = arith.constant 0 : i32
    %c0_i32_1 = arith.constant 0 : i32
    return %c0_i32, %c0_i32_0 : i32, i32
  }
  func.func @transform_2(%arg0: i32) -> (i32, i32) {
    %c0_i32 = arith.constant 0 : i32
    %c0_i32_0 = arith.constant 0 : i32
    %c0_i32_1 = arith.constant 0 : i32
    return %c0_i32, %c0_i32_0 : i32, i32
  }
  func.func @transform_3(%arg0: i32) -> (i32, i32) {
    %c0_i32 = arith.constant 0 : i32
    %c0_i32_0 = arith.constant 0 : i32
    %c0_i32_1 = arith.constant 0 : i32
    return %c0_i32, %c0_i32_0 : i32, i32
  }
  func.func @transform_4(%arg0: i32) -> (i32, i32) {
    %c0_i32 = arith.constant 0 : i32
    %c0_i32_0 = arith.constant 0 : i32
    return %arg0, %c0_i32 : i32, i32
  }
}

module attributes {stable_mosaic.version = 11 : i64} {
  func.func @_bias_tanh_kernel(%arg0: i32, %arg1: memref<64x256xf32, #tpu.memory_space<vmem>>, %arg2: memref<1x256xf32, #tpu.memory_space<vmem>>, %arg3: memref<64x256xf32, #tpu.memory_space<vmem>>) attributes {dimension_semantics = [#tpu.dimension_semantics<parallel>], iteration_bounds = array<i64: 1>, scalar_prefetch = 0 : i64, scratch_operands = 0 : i64, tpu.core_type = #tpu.core_type<tc>, window_params = [{transform_indices = @transform_0, window_bounds = array<i64: 64, 256>}, {pipeline_mode = #tpu.pipeline_mode<synchronous>, transform_indices = @transform_1, window_bounds = array<i64: 1, 256>}, {transform_indices = @transform_2, window_bounds = array<i64: 64, 256>}]} {
    %c0 = arith.constant 0 : index
    %c0_0 = arith.constant 0 : index
    %0 = vector.load %arg1[%c0, %c0_0] : memref<64x256xf32, #tpu.memory_space<vmem>>, vector<64x256xf32>
    %c0_1 = arith.constant 0 : index
    %c0_2 = arith.constant 0 : index
    %1 = vector.load %arg2[%c0_1, %c0_2] : memref<1x256xf32, #tpu.memory_space<vmem>>, vector<1x256xf32>
    %2 = vector.broadcast %1 : vector<1x256xf32> to vector<64x256xf32>
    %3 = arith.addf %0, %2 : vector<64x256xf32>
    %4 = math.tanh %3 : vector<64x256xf32>
    %c0_3 = arith.constant 0 : index
    %c0_4 = arith.constant 0 : index
    %5 = vector.load %arg3[%c0_3, %c0_4] : memref<64x256xf32, #tpu.memory_space<vmem>>, vector<64x256xf32>
    tpu.vector_store %arg3[%c0_3, %c0_4], %4 {strides = array<i32>} : memref<64x256xf32, #tpu.memory_space<vmem>>, vector<64x256xf32>,
    return
  }
  func.func @transform_0(%arg0: i32) -> (i32, i32) {
    %c0_i32 = arith.constant 0 : i32
    %c0_i32_0 = arith.constant 0 : i32
    return %arg0, %c0_i32 : i32, i32
  }
  func.func @transform_1(%arg0: i32) -> (i32, i32) {
    %c0_i32 = arith.constant 0 : i32
    %c0_i32_0 = arith.constant 0 : i32
    %c0_i32_1 = arith.constant 0 : i32
    return %c0_i32, %c0_i32_0 : i32, i32
  }
  func.func @transform_2(%arg0: i32) -> (i32, i32) {
    %c0_i32 = arith.constant 0 : i32
    %c0_i32_0 = arith.constant 0 : i32
    return %arg0, %c0_i32 : i32, i32
  }
}

</mosaic_0001>

<llo_original>
// kernel: generator_forward.8
$region0: #{generator_forward.8}
  #allocation0 [shape = 'u32[]', space=smem, size = 0x4, offset = 0x4, fixed_abs, tag = 'smem constant byte address 0x4 - core index']
  #allocation1 [shape = 'u32[144,128]{1,0:T(1,128)}', space=vmem, size = 0x12000, scoped, tag = 'internal scratch']
  %s0 = inlined_call_operand.vmem [shape: f32[8,128], index: 0, kind: input, shape index: {}]
  %s1 = inlined_call_operand.hbm [shape: bf16[128,4096], index: 1, kind: input, shape index: {}]
  %s2 = inlined_call_operand.vmem [shape: f32[8,4096], index: 2, kind: output, shape index: {}]
  %s3 = sld [smem:[#allocation0]]
  $region22: #{generator_forward.8} parent=0
    _
  %s5 = ssub.s32 1, %s3
  %s6 = scalar_select 0, %s5, %s3
  $region1: #{generator_forward.8} parent=0
    #allocation2 [shape = 'u8[1048576]{0}', space=vmem, size = 0x100000, scoped, tag = 'input window, operand 1, single buffered']
    #allocation3 [shape = 's32[1]{0}', space=sflag, size = 0x4, scoped, tag = 'scoped memory for generator_forward.8']
    %7 = vsyncpa [#allocation3], 0
    // Predicated region
    $region2: #{generator_forward.8} parent=1 // pred_check
      _
    $region3: #{generator_forward.8} parent=1 // pred_check_branch
      %9 = sbr.rel (0) target = $region5
    $region4: #{generator_forward.8} parent=1 // pred_region
      _
    $region5: #{generator_forward.8} parent=1 // pred_fallthru
      _
    // Predicated region
    $region6: #{generator_forward.8} parent=1 // pred_check
      _
    $region7: #{generator_forward.8} parent=1 // pred_check_branch
      %11 = sbr.rel (0) target = $region9
    $region8: #{generator_forward.8} parent=1 // pred_region
      %s13 = ssub.s32 32768, 32768
      %14 = vsyncadd [#allocation3], %s13
      %s15 = sshll.u32 [#allocation2], 4
      %s16 = int_to_ptr.vmem [resolvable:$true] %s15
      %21 = dma.hbm_to_vmem [thread:$0]  %s1, 32768, %s16, [#allocation3], 2048, 2048, 128
    $region9: #{generator_forward.8} parent=1 // pred_fallthru
      _
    // Predicated region
    $region10: #{generator_forward.8} parent=1 // pred_check
      _
    $region11: #{generator_forward.8} parent=1 // pred_check_branch
      %23 = sbr.rel (0) target = $region13
    $region12: #{generator_forward.8} parent=1 // pred_region
      %24 = dma.done [#allocation3], 32768
    $region13: #{generator_forward.8} parent=1 // pred_fallthru
      _
    %v26 = vld [vmem:[%s0] sm:$0xff]
    %v27 = vpack.c.bf16 %v26, %v26
    %v28 = vld [vmem:[#allocation2] sm:$0xff]
    %v29 = vld [vmem:[#allocation2 + $0x8] sm:$0xff]
    %v30 = vld [vmem:[#allocation2 + $0x10] sm:$0xff]
    %v31 = vld [vmem:[#allocation2 + $0x18] sm:$0xff]
    %v32 = vld [vmem:[#allocation2 + $0x20] sm:$0xff]
    %v33 = vld [vmem:[#allocation2 + $0x28] sm:$0xff]
    %v34 = vld [vmem:[#allocation2 + $0x30] sm:$0xff]
    %v35 = vld [vmem:[#allocation2 + $0x38] sm:$0xff]
    %v36 = vld [vmem:[#allocation2 + $0x40] sm:$0xff]
    %v37 = vld [vmem:[#allocation2 + $0x48] sm:$0xff]
    %v38 = vld [vmem:[#allocation2 + $0x50] sm:$0xff]
    %v39 = vld [vmem:[#allocation2 + $0x58] sm:$0xff]
    %v40 = vld [vmem:[#allocation2 + $0x60] sm:$0xff]
    %v41 = vld [vmem:[#allocation2 + $0x68] sm:$0xff]
    %v42 = vld [vmem:[#allocation2 + $0x70] sm:$0xff]
    %v43 = vld [vmem:[#allocation2 + $0x78] sm:$0xff]
    %v44 = vld [vmem:[#allocation2 + $0x80] sm:$0xff]
    %v45 = vld [vmem:[#allocation2 + $0x88] sm:$0xff]
    %v46 = vld [vmem:[#allocation2 + $0x90] sm:$0xff]
    %v47 = vld [vmem:[#allocation2 + $0x98] sm:$0xff]
    %v48 = vld [vmem:[#allocation2 + $0xa0] sm:$0xff]
    %v49 = vld [vmem:[#allocation2 + $0xa8] sm:$0xff]
    %v50 = vld [vmem:[#allocation2 + $0xb0] sm:$0xff]
    %v51 = vld [vmem:[#allocation2 + $0xb8] sm:$0xff]
    %v52 = vld [vmem:[#allocation2 + $0xc0] sm:$0xff]
    %v53 = vld [vmem:[#allocation2 + $0xc8] sm:$0xff]
    %v54 = vld [vmem:[#allocation2 + $0xd0] sm:$0xff]
    %v55 = vld [vmem:[#allocation2 + $0xd8] sm:$0xff]
    %v56 = vld [vmem:[#allocation2 + $0xe0] sm:$0xff]
    %v57 = vld [vmem:[#allocation2 + $0xe8] sm:$0xff]
    %v58 = vld [vmem:[#allocation2 + $0xf0] sm:$0xff]
    %v59 = vld [vmem:[#allocation2 + $0xf8] sm:$0xff]
    %v60 = vld [vmem:[#allocation2 + $0x100] sm:$0xff]
    %v61 = vld [vmem:[#allocation2 + $0x108] sm:$0xff]
    %v62 = vld [vmem:[#allocation2 + $0x110] sm:$0xff]
    %v63 = vld [vmem:[#allocation2 + $0x118] sm:$0xff]
    %v64 = vld [vmem:[#allocation2 + $0x120] sm:$0xff]
    %v65 = vld [vmem:[#allocation2 + $0x128] sm:$0xff]
    %v66 = vld [vmem:[#allocation2 + $0x130] sm:$0xff]
    %v67 = vld [vmem:[#allocation2 + $0x138] sm:$0xff]
    %v68 = vld [vmem:[#allocation2 + $0x140] sm:$0xff]
    %v69 = vld [vmem:[#allocation2 + $0x148] sm:$0xff]
    %v70 = vld [vmem:[#allocation2 + $0x150] sm:$0xff]
    %v71 = vld [vmem:[#allocation2 + $0x158] sm:$0xff]
    %v72 = vld [vmem:[#allocation2 + $0x160] sm:$0xff]
    %v73 = vld [vmem:[#allocation2 + $0x168] sm:$0xff]
    %v74 = vld [vmem:[#allocation2 + $0x170] sm:$0xff]
    %v75 = vld [vmem:[#allocation2 + $0x178] sm:$0xff]
    %v76 = vld [vmem:[#allocation2 + $0x180] sm:$0xff]
    %v77 = vld [vmem:[#allocation2 + $0x188] sm:$0xff]
    %v78 = vld [vmem:[#allocation2 + $0x190] sm:$0xff]
    %v79 = vld [vmem:[#allocation2 + $0x198] sm:$0xff]
    %v80 = vld [vmem:[#allocation2 + $0x1a0] sm:$0xff]
    %v81 = vld [vmem:[#allocation2 + $0x1a8] sm:$0xff]
    %v82 = vld [vmem:[#allocation2 + $0x1b0] sm:$0xff]
    %v83 = vld [vmem:[#allocation2 + $0x1b8] sm:$0xff]
    %v84 = vld [vmem:[#allocation2 + $0x1c0] sm:$0xff]
    %v85 = vld [vmem:[#allocation2 + $0x1c8] sm:$0xff]
    %v86 = vld [vmem:[#allocation2 + $0x1d0] sm:$0xff]
    %v87 = vld [vmem:[#allocation2 + $0x1d8] sm:$0xff]
    %v88 = vld [vmem:[#allocation2 + $0x1e0] sm:$0xff]
    %v89 = vld [vmem:[#allocation2 + $0x1e8] sm:$0xff]
    %v90 = vld [vmem:[#allocation2 + $0x1f0] sm:$0xff]
    %v91 = vld [vmem:[#allocation2 + $0x1f8] sm:$0xff]
    %v92 = vld [vmem:[#allocation2 + $0x200] sm:$0xff]
    %v93 = vld [vmem:[#allocation2 + $0x208] sm:$0xff]
    %v94 = vld [vmem:[#allocation2 + $0x210] sm:$0xff]
    %v95 = vld [vmem:[#allocation2 + $0x218] sm:$0xff]
    %v96 = vld [vmem:[#allocation2 + $0x220] sm:$0xff]
    %v97 = vld [vmem:[#allocation2 + $0x228] sm:$0xff]
    %v98 = vld [vmem:[#allocation2 + $0x230] sm:$0xff]
    %v99 = vld [vmem:[#allocation2 + $0x238] sm:$0xff]
    %v100 = vld [vmem:[#allocation2 + $0x240] sm:$0xff]
    %v101 = vld [vmem:[#allocation2 + $0x248] sm:$0xff]
    %v102 = vld [vmem:[#allocation2 + $0x250] sm:$0xff]
    %v103 = vld [vmem:[#allocation2 + $0x258] sm:$0xff]
    %v104 = vld [vmem:[#allocation2 + $0x260] sm:$0xff]
    %v105 = vld [vmem:[#allocation2 + $0x268] sm:$0xff]
    %v106 = vld [vmem:[#allocation2 + $0x270] sm:$0xff]
    %v107 = vld [vmem:[#allocation2 + $0x278] sm:$0xff]
    %v108 = vld [vmem:[#allocation2 + $0x280] sm:$0xff]
    %v109 = vld [vmem:[#allocation2 + $0x288] sm:$0xff]
    %v110 = vld [vmem:[#allocation2 + $0x290] sm:$0xff]
    %v111 = vld [vmem:[#allocation2 + $0x298] sm:$0xff]
    %v112 = vld [vmem:[#allocation2 + $0x2a0] sm:$0xff]
    %v113 = vld [vmem:[#allocation2 + $0x2a8] sm:$0xff]
    %v114 = vld [vmem:[#allocation2 + $0x2b0] sm:$0xff]
    %v115 = vld [vmem:[#allocation2 + $0x2b8] sm:$0xff]
    %v116 = vld [vmem:[#allocation2 + $0x2c0] sm:$0xff]
    %v117 = vld [vmem:[#allocation2 + $0x2c8] sm:$0xff]
    %v118 = vld [vmem:[#allocation2 + $0x2d0] sm:$0xff]
    %v119 = vld [vmem:[#allocation2 + $0x2d8] sm:$0xff]
    %v120 = vld [vmem:[#allocation2 + $0x2e0] sm:$0xff]
    %v121 = vld [vmem:[#allocation2 + $0x2e8] sm:$0xff]
    %v122 = vld [vmem:[#allocation2 + $0x2f0] sm:$0xff]
    %v123 = vld [vmem:[#allocation2 + $0x2f8] sm:$0xff]
    %v124 = vld [vmem:[#allocation2 + $0x300] sm:$0xff]
    %v125 = vld [vmem:[#allocation2 + $0x308] sm:$0xff]
    %v126 = vld [vmem:[#allocation2 + $0x310] sm:$0xff]
    %v127 = vld [vmem:[#allocation2 + $0x318] sm:$0xff]
    %v128 = vld [vmem:[#allocation2 + $0x320] sm:$0xff]
    %v129 = vld [vmem:[#allocation2 + $0x328] sm:$0xff]
    %v130 = vld [vmem:[#allocation2 + $0x330] sm:$0xff]
    %v131 = vld [vmem:[#allocation2 + $0x338] sm:$0xff]
    %v132 = vld [vmem:[#allocation2 + $0x340] sm:$0xff]
    %v133 = vld [vmem:[#allocation2 + $0x348] sm:$0xff]
    %v134 = vld [vmem:[#allocation2 + $0x350] sm:$0xff]
    %v135 = vld [vmem:[#allocation2 + $0x358] sm:$0xff]
    %v136 = vld [vmem:[#allocation2 + $0x360] sm:$0xff]
    %v137 = vld [vmem:[#allocation2 + $0x368] sm:$0xff]
    %v138 = vld [vmem:[#allocation2 + $0x370] sm:$0xff]
    %v139 = vld [vmem:[#allocation2 + $0x378] sm:$0xff]
    %v140 = vld [vmem:[#allocation2 + $0x380] sm:$0xff]
    %v141 = vld [vmem:[#allocation2 + $0x388] sm:$0xff]
    %v142 = vld [vmem:[#allocation2 + $0x390] sm:$0xff]
    %v143 = vld [vmem:[#allocation2 + $0x398] sm:$0xff]
    %v144 = vld [vmem:[#allocation2 + $0x3a0] sm:$0xff]
    %v145 = vld [vmem:[#allocation2 + $0x3a8] sm:$0xff]
    %v146 = vld [vmem:[#allocation2 + $0x3b0] sm:$0xff]
    %v147 = vld [vmem:[#allocation2 + $0x3b8] sm:$0xff]
    %v148 = vld [vmem:[#allocation2 + $0x3c0] sm:$0xff]
    %v149 = vld [vmem:[#allocation2 + $0x3c8] sm:$0xff]
    %v150 = vld [vmem:[#allocation2 + $0x3d0] sm:$0xff]
    %v151 = vld [vmem:[#allocation2 + $0x3d8] sm:$0xff]
    %v152 = vld [vmem:[#allocation2 + $0x3e0] sm:$0xff]
    %v153 = vld [vmem:[#allocation2 + $0x3e8] sm:$0xff]
    %v154 = vld [vmem:[#allocation2 + $0x3f0] sm:$0xff]
    %v155 = vld [vmem:[#allocation2 + $0x3f8] sm:$0xff]
    %v156 = vld [vmem:[#allocation2 + $0x400] sm:$0xff]
    %v157 = vld [vmem:[#allocation2 + $0x408] sm:$0xff]
    %v158 = vld [vmem:[#allocation2 + $0x410] sm:$0xff]
    %v159 = vld [vmem:[#allocation2 + $0x418] sm:$0xff]
    %v160 = vld [vmem:[#allocation2 + $0x420] sm:$0xff]
    %v161 = vld [vmem:[#allocation2 + $0x428] sm:$0xff]
    %v162 = vld [vmem:[#allocation2 + $0x430] sm:$0xff]
    %v163 = vld [vmem:[#allocation2 + $0x438] sm:$0xff]
    %v164 = vld [vmem:[#allocation2 + $0x440] sm:$0xff]
    %v165 = vld [vmem:[#allocation2 + $0x448] sm:$0xff]
    %v166 = vld [vmem:[#allocation2 + $0x450] sm:$0xff]
    %v167 = vld [vmem:[#allocation2 + $0x458] sm:$0xff]
    %v168 = vld [vmem:[#allocation2 + $0x460] sm:$0xff]
    %v169 = vld [vmem:[#allocation2 + $0x468] sm:$0xff]
    %v170 = vld [vmem:[#allocation2 + $0x470] sm:$0xff]
    %v171 = vld [vmem:[#allocation2 + $0x478] sm:$0xff]
    %v172 = vld [vmem:[#allocation2 + $0x480] sm:$0xff]
    %v173 = vld [vmem:[#allocation2 + $0x488] sm:$0xff]
    %v174 = vld [vmem:[#allocation2 + $0x490] sm:$0xff]
    %v175 = vld [vmem:[#allocation2 + $0x498] sm:$0xff]
    %v176 = vld [vmem:[#allocation2 + $0x4a0] sm:$0xff]
    %v177 = vld [vmem:[#allocation2 + $0x4a8] sm:$0xff]
    %v178 = vld [vmem:[#allocation2 + $0x4b0] sm:$0xff]
    %v179 = vld [vmem:[#allocation2 + $0x4b8] sm:$0xff]
    %v180 = vld [vmem:[#allocation2 + $0x4c0] sm:$0xff]
    %v181 = vld [vmem:[#allocation2 + $0x4c8] sm:$0xff]
    %v182 = vld [vmem:[#allocation2 + $0x4d0] sm:$0xff]
    %v183 = vld [vmem:[#allocation2 + $0x4d8] sm:$0xff]
    %v184 = vld [vmem:[#allocation2 + $0x4e0] sm:$0xff]
    %v185 = vld [vmem:[#allocation2 + $0x4e8] sm:$0xff]
    %v186 = vld [vmem:[#allocation2 + $0x4f0] sm:$0xff]
    %v187 = vld [vmem:[#allocation2 + $0x4f8] sm:$0xff]
    %v188 = vld [vmem:[#allocation2 + $0x500] sm:$0xff]
    %v189 = vld [vmem:[#allocation2 + $0x508] sm:$0xff]
    %v190 = vld [vmem:[#allocation2 + $0x510] sm:$0xff]
    %v191 = vld [vmem:[#allocation2 + $0x518] sm:$0xff]
    %v192 = vld [vmem:[#allocation2 + $0x520] sm:$0xff]
    %v193 = vld [vmem:[#allocation2 + $0x528] sm:$0xff]
    %v194 = vld [vmem:[#allocation2 + $0x530] sm:$0xff]
    %v195 = vld [vmem:[#allocation2 + $0x538] sm:$0xff]
    %v196 = vld [vmem:[#allocation2 + $0x540] sm:$0xff]
    %v197 = vld [vmem:[#allocation2 + $0x548] sm:$0xff]
    %v198 = vld [vmem:[#allocation2 + $0x550] sm:$0xff]
    %v199 = vld [vmem:[#allocation2 + $0x558] sm:$0xff]
    %v200 = vld [vmem:[#allocation2 + $0x560] sm:$0xff]
    %v201 = vld [vmem:[#allocation2 + $0x568] sm:$0xff]
    %v202 = vld [vmem:[#allocation2 + $0x570] sm:$0xff]
    %v203 = vld [vmem:[#allocation2 + $0x578] sm:$0xff]
    %v204 = vld [vmem:[#allocation2 + $0x580] sm:$0xff]
    %v205 = vld [vmem:[#allocation2 + $0x588] sm:$0xff]
    %v206 = vld [vmem:[#allocation2 + $0x590] sm:$0xff]
    %v207 = vld [vmem:[#allocation2 + $0x598] sm:$0xff]
    %v208 = vld [vmem:[#allocation2 + $0x5a0] sm:$0xff]
    %v209 = vld [vmem:[#allocation2 + $0x5a8] sm:$0xff]
    %v210 = vld [vmem:[#allocation2 + $0x5b0] sm:$0xff]
    %v211 = vld [vmem:[#allocation2 + $0x5b8] sm:$0xff]
    %v212 = vld [vmem:[#allocation2 + $0x5c0] sm:$0xff]
    %v213 = vld [vmem:[#allocation2 + $0x5c8] sm:$0xff]
    %v214 = vld [vmem:[#allocation2 + $0x5d0] sm:$0xff]
    %v215 = vld [vmem:[#allocation2 + $0x5d8] sm:$0xff]
    %v216 = vld [vmem:[#allocation2 + $0x5e0] sm:$0xff]
    %v217 = vld [vmem:[#allocation2 + $0x5e8] sm:$0xff]
    %v218 = vld [vmem:[#allocation2 + $0x5f0] sm:$0xff]
    %v219 = vld [vmem:[#allocation2 + $0x5f8] sm:$0xff]
    %v220 = vld [vmem:[#allocation2 + $0x600] sm:$0xff]
    %v221 = vld [vmem:[#allocation2 + $0x608] sm:$0xff]
    %v222 = vld [vmem:[#allocation2 + $0x610] sm:$0xff]
    %v223 = vld [vmem:[#allocation2 + $0x618] sm:$0xff]
    %v224 = vld [vmem:[#allocation2 + $0x620] sm:$0xff]
    %v225 = vld [vmem:[#allocation2 + $0x628] sm:$0xff]
    %v226 = vld [vmem:[#allocation2 + $0x630] sm:$0xff]
    %v227 = vld [vmem:[#allocation2 + $0x638] sm:$0xff]
    %v228 = vld [vmem:[#allocation2 + $0x640] sm:$0xff]
    %v229 = vld [vmem:[#allocation2 + $0x648] sm:$0xff]
    %v230 = vld [vmem:[#allocation2 + $0x650] sm:$0xff]
    %v231 = vld [vmem:[#allocation2 + $0x658] sm:$0xff]
    %v232 = vld [vmem:[#allocation2 + $0x660] sm:$0xff]
    %v233 = vld [vmem:[#allocation2 + $0x668] sm:$0xff]
    %v234 = vld [vmem:[#allocation2 + $0x670] sm:$0xff]
    %v235 = vld [vmem:[#allocation2 + $0x678] sm:$0xff]
    %v236 = vld [vmem:[#allocation2 + $0x680] sm:$0xff]
    %v237 = vld [vmem:[#allocation2 + $0x688] sm:$0xff]
    %v238 = vld [vmem:[#allocation2 + $0x690] sm:$0xff]
    %v239 = vld [vmem:[#allocation2 + $0x698] sm:$0xff]
    %v240 = vld [vmem:[#allocation2 + $0x6a0] sm:$0xff]
    %v241 = vld [vmem:[#allocation2 + $0x6a8] sm:$0xff]
    %v242 = vld [vmem:[#allocation2 + $0x6b0] sm:$0xff]
    %v243 = vld [vmem:[#allocation2 + $0x6b8] sm:$0xff]
    %v244 = vld [vmem:[#allocation2 + $0x6c0] sm:$0xff]
    %v245 = vld [vmem:[#allocation2 + $0x6c8] sm:$0xff]
    %v246 = vld [vmem:[#allocation2 + $0x6d0] sm:$0xff]
    %v247 = vld [vmem:[#allocation2 + $0x6d8] sm:$0xff]
    %v248 = vld [vmem:[#allocation2 + $0x6e0] sm:$0xff]
    %v249 = vld [vmem:[#allocation2 + $0x6e8] sm:$0xff]
    %v250 = vld [vmem:[#allocation2 + $0x6f0] sm:$0xff]
    %v251 = vld [vmem:[#allocation2 + $0x6f8] sm:$0xff]
    %v252 = vld [vmem:[#allocation2 + $0x700] sm:$0xff]
    %v253 = vld [vmem:[#allocation2 + $0x708] sm:$0xff]
    %v254 = vld [vmem:[#allocation2 + $0x710] sm:$0xff]
    %v255 = vld [vmem:[#allocation2 + $0x718] sm:$0xff]
    %v256 = vld [vmem:[#allocation2 + $0x720] sm:$0xff]
    %v257 = vld [vmem:[#allocation2 + $0x728] sm:$0xff]
    %v258 = vld [vmem:[#allocation2 + $0x730] sm:$0xff]
    %v259 = vld [vmem:[#allocation2 + $0x738] sm:$0xff]
    %v260 = vld [vmem:[#allocation2 + $0x740] sm:$0xff]
    %v261 = vld [vmem:[#allocation2 + $0x748] sm:$0xff]
    %v262 = vld [vmem:[#allocation2 + $0x750] sm:$0xff]
    %v263 = vld [vmem:[#allocation2 + $0x758] sm:$0xff]
    %v264 = vld [vmem:[#allocation2 + $0x760] sm:$0xff]
    %v265 = vld [vmem:[#allocation2 + $0x768] sm:$0xff]
    %v266 = vld [vmem:[#allocation2 + $0x770] sm:$0xff]
    %v267 = vld [vmem:[#allocation2 + $0x778] sm:$0xff]
    %v268 = vld [vmem:[#allocation2 + $0x780] sm:$0xff]
    %v269 = vld [vmem:[#allocation2 + $0x788] sm:$0xff]
    %v270 = vld [vmem:[#allocation2 + $0x790] sm:$0xff]
    %v271 = vld [vmem:[#allocation2 + $0x798] sm:$0xff]
    %v272 = vld [vmem:[#allocation2 + $0x7a0] sm:$0xff]
    %v273 = vld [vmem:[#allocation2 + $0x7a8] sm:$0xff]
    %v274 = vld [vmem:[#allocation2 + $0x7b0] sm:$0xff]
    %v275 = vld [vmem:[#allocation2 + $0x7b8] sm:$0xff]
    %v276 = vld [vmem:[#allocation2 + $0x7c0] sm:$0xff]
    %v277 = vld [vmem:[#allocation2 + $0x7c8] sm:$0xff]
    %v278 = vld [vmem:[#allocation2 + $0x7d0] sm:$0xff]
    %v279 = vld [vmem:[#allocation2 + $0x7d8] sm:$0xff]
    %v280 = vld [vmem:[#allocation2 + $0x7e0] sm:$0xff]
    %v281 = vld [vmem:[#allocation2 + $0x7e8] sm:$0xff]
    %v282 = vld [vmem:[#allocation2 + $0x7f0] sm:$0xff]
    %v283 = vld [vmem:[#allocation2 + $0x7f8] sm:$0xff]
    %v540 = vunpack.c.l.b16 %v28
    %v541 = vunpack.c.h.b16 %v28
    %v542 = vunpack.c.l.b16 %v29
    %v543 = vunpack.c.h.b16 %v29
    %v544 = vunpack.c.l.b16 %v30
    %v545 = vunpack.c.h.b16 %v30
    %v546 = vunpack.c.l.b16 %v31
    %v547 = vunpack.c.h.b16 %v31
    %v548 = vunpack.c.l.b16 %v32
    %v549 = vunpack.c.h.b16 %v32
    %v550 = vunpack.c.l.b16 %v33
    %v551 = vunpack.c.h.b16 %v33
    %v552 = vunpack.c.l.b16 %v34
    %v553 = vunpack.c.h.b16 %v34
    %v554 = vunpack.c.l.b16 %v35
    %v555 = vunpack.c.h.b16 %v35
    %v556 = vunpack.c.l.b16 %v36
    %v557 = vunpack.c.h.b16 %v36
    %v558 = vunpack.c.l.b16 %v37
    %v559 = vunpack.c.h.b16 %v37
    %v560 = vunpack.c.l.b16 %v38
    %v561 = vunpack.c.h.b16 %v38
    %v562 = vunpack.c.l.b16 %v39
    %v563 = vunpack.c.h.b16 %v39
    %v564 = vunpack.c.l.b16 %v40
    %v565 = vunpack.c.h.b16 %v40
    %v566 = vunpack.c.l.b16 %v41
    %v567 = vunpack.c.h.b16 %v41
    %v568 = vunpack.c.l.b16 %v42
    %v569 = vunpack.c.h.b16 %v42
    %v570 = vunpack.c.l.b16 %v43
    %v571 = vunpack.c.h.b16 %v43
    %v572 = vunpack.c.l.b16 %v44
    %v573 = vunpack.c.h.b16 %v44
    %v574 = vunpack.c.l.b16 %v45
    %v575 = vunpack.c.h.b16 %v45
    %v576 = vunpack.c.l.b16 %v46
    %v577 = vunpack.c.h.b16 %v46
    %v578 = vunpack.c.l.b16 %v47
    %v579 = vunpack.c.h.b16 %v47
    %v580 = vunpack.c.l.b16 %v48
    %v581 = vunpack.c.h.b16 %v48
    %v582 = vunpack.c.l.b16 %v49
    %v583 = vunpack.c.h.b16 %v49
    %v584 = vunpack.c.l.b16 %v50
    %v585 = vunpack.c.h.b16 %v50
    %v586 = vunpack.c.l.b16 %v51
    %v587 = vunpack.c.h.b16 %v51
    %v588 = vunpack.c.l.b16 %v52
    %v589 = vunpack.c.h.b16 %v52
    %v590 = vunpack.c.l.b16 %v53
    %v591 = vunpack.c.h.b16 %v53
    %v592 = vunpack.c.l.b16 %v54
    %v593 = vunpack.c.h.b16 %v54
    %v594 = vunpack.c.l.b16 %v55
    %v595 = vunpack.c.h.b16 %v55
    %v596 = vunpack.c.l.b16 %v56
    %v597 = vunpack.c.h.b16 %v56
    %v598 = vunpack.c.l.b16 %v57
    %v599 = vunpack.c.h.b16 %v57
    %v600 = vunpack.c.l.b16 %v58
    %v601 = vunpack.c.h.b16 %v58
    %v602 = vunpack.c.l.b16 %v59
    %v603 = vunpack.c.h.b16 %v59
    %v604 = vunpack.c.l.b16 %v60
    %v605 = vunpack.c.h.b16 %v60
    %v606 = vunpack.c.l.b16 %v61
    %v607 = vunpack.c.h.b16 %v61
    %v608 = vunpack.c.l.b16 %v62
    %v609 = vunpack.c.h.b16 %v62
    %v610 = vunpack.c.l.b16 %v63
    %v611 = vunpack.c.h.b16 %v63
    %v612 = vunpack.c.l.b16 %v64
    %v613 = vunpack.c.h.b16 %v64
    %v614 = vunpack.c.l.b16 %v65
    %v615 = vunpack.c.h.b16 %v65
    %v616 = vunpack.c.l.b16 %v66
    %v617 = vunpack.c.h.b16 %v66
    %v618 = vunpack.c.l.b16 %v67
    %v619 = vunpack.c.h.b16 %v67
    %v620 = vunpack.c.l.b16 %v68
    %v621 = vunpack.c.h.b16 %v68
    %v622 = vunpack.c.l.b16 %v69
    %v623 = vunpack.c.h.b16 %v69
    %v624 = vunpack.c.l.b16 %v70
    %v625 = vunpack.c.h.b16 %v70
    %v626 = vunpack.c.l.b16 %v71
    %v627 = vunpack.c.h.b16 %v71
    %v628 = vunpack.c.l.b16 %v72
    %v629 = vunpack.c.h.b16 %v72
    %v630 = vunpack.c.l.b16 %v73
    %v631 = vunpack.c.h.b16 %v73
    %v632 = vunpack.c.l.b16 %v74
    %v633 = vunpack.c.h.b16 %v74
    %v634 = vunpack.c.l.b16 %v75
    %v635 = vunpack.c.h.b16 %v75
    %v636 = vunpack.c.l.b16 %v76
    %v637 = vunpack.c.h.b16 %v76
    %v638 = vunpack.c.l.b16 %v77
    %v639 = vunpack.c.h.b16 %v77
    %v640 = vunpack.c.l.b16 %v78
    %v641 = vunpack.c.h.b16 %v78
    %v642 = vunpack.c.l.b16 %v79
    %v643 = vunpack.c.h.b16 %v79
    %v644 = vunpack.c.l.b16 %v80
    %v645 = vunpack.c.h.b16 %v80
    %v646 = vunpack.c.l.b16 %v81
    %v647 = vunpack.c.h.b16 %v81
    %v648 = vunpack.c.l.b16 %v82
    %v649 = vunpack.c.h.b16 %v82
    %v650 = vunpack.c.l.b16 %v83
    %v651 = vunpack.c.h.b16 %v83
    %v652 = vunpack.c.l.b16 %v84
    %v653 = vunpack.c.h.b16 %v84
    %v654 = vunpack.c.l.b16 %v85
    %v655 = vunpack.c.h.b16 %v85
    %v656 = vunpack.c.l.b16 %v86
    %v657 = vunpack.c.h.b16 %v86
    %v658 = vunpack.c.l.b16 %v87
    %v659 = vunpack.c.h.b16 %v87
    %v660 = vunpack.c.l.b16 %v88
    %v661 = vunpack.c.h.b16 %v88
    %v662 = vunpack.c.l.b16 %v89
    %v663 = vunpack.c.h.b16 %v89
    %v664 = vunpack.c.l.b16 %v90
    %v665 = vunpack.c.h.b16 %v90
    %v666 = vunpack.c.l.b16 %v91
    %v667 = vunpack.c.h.b16 %v91
    %v668 = vunpack.c.l.b16 %v92
    %v669 = vunpack.c.h.b16 %v92
    %v670 = vunpack.c.l.b16 %v93
    %v671 = vunpack.c.h.b16 %v93
    %v672 = vunpack.c.l.b16 %v94
    %v673 = vunpack.c.h.b16 %v94
    %v674 = vunpack.c.l.b16 %v95
    %v675 = vunpack.c.h.b16 %v95
    %v676 = vunpack.c.l.b16 %v96
    %v677 = vunpack.c.h.b16 %v96
    %v678 = vunpack.c.l.b16 %v97
    %v679 = vunpack.c.h.b16 %v97
    %v680 = vunpack.c.l.b16 %v98
    %v681 = vunpack.c.h.b16 %v98
    %v682 = vunpack.c.l.b16 %v99
    %v683 = vunpack.c.h.b16 %v99
    %v684 = vunpack.c.l.b16 %v100
    %v685 = vunpack.c.h.b16 %v100
    %v686 = vunpack.c.l.b16 %v101
    %v687 = vunpack.c.h.b16 %v101
    %v688 = vunpack.c.l.b16 %v102
    %v689 = vunpack.c.h.b16 %v102
    %v690 = vunpack.c.l.b16 %v103
    %v691 = vunpack.c.h.b16 %v103
    %v692 = vunpack.c.l.b16 %v104
    %v693 = vunpack.c.h.b16 %v104
    %v694 = vunpack.c.l.b16 %v105
    %v695 = vunpack.c.h.b16 %v105
    %v696 = vunpack.c.l.b16 %v106
    %v697 = vunpack.c.h.b16 %v106
    %v698 = vunpack.c.l.b16 %v107
    %v699 = vunpack.c.h.b16 %v107
    %v700 = vunpack.c.l.b16 %v108
    %v701 = vunpack.c.h.b16 %v108
    %v702 = vunpack.c.l.b16 %v109
    %v703 = vunpack.c.h.b16 %v109
    %v704 = vunpack.c.l.b16 %v110
    %v705 = vunpack.c.h.b16 %v110
    %v706 = vunpack.c.l.b16 %v111
    %v707 = vunpack.c.h.b16 %v111
    %v708 = vunpack.c.l.b16 %v112
    %v709 = vunpack.c.h.b16 %v112
    %v710 = vunpack.c.l.b16 %v113
    %v711 = vunpack.c.h.b16 %v113
    %v712 = vunpack.c.l.b16 %v114
    %v713 = vunpack.c.h.b16 %v114
    %v714 = vunpack.c.l.b16 %v115
    %v715 = vunpack.c.h.b16 %v115
    %v716 = vunpack.c.l.b16 %v116
    %v717 = vunpack.c.h.b16 %v116
    %v718 = vunpack.c.l.b16 %v117
    %v719 = vunpack.c.h.b16 %v117
    %v720 = vunpack.c.l.b16 %v118
    %v721 = vunpack.c.h.b16 %v118
    %v722 = vunpack.c.l.b16 %v119
    %v723 = vunpack.c.h.b16 %v119
    %v724 = vunpack.c.l.b16 %v120
    %v725 = vunpack.c.h.b16 %v120
    %v726 = vunpack.c.l.b16 %v121
    %v727 = vunpack.c.h.b16 %v121
    %v728 = vunpack.c.l.b16 %v122
    %v729 = vunpack.c.h.b16 %v122
    %v730 = vunpack.c.l.b16 %v123
    %v731 = vunpack.c.h.b16 %v123
    %v732 = vunpack.c.l.b16 %v124
    %v733 = vunpack.c.h.b16 %v124
    %v734 = vunpack.c.l.b16 %v125
    %v735 = vunpack.c.h.b16 %v125
    %v736 = vunpack.c.l.b16 %v126
    %v737 = vunpack.c.h.b16 %v126
    %v738 = vunpack.c.l.b16 %v127
    %v739 = vunpack.c.h.b16 %v127
    %v740 = vunpack.c.l.b16 %v128
    %v741 = vunpack.c.h.b16 %v128
    %v742 = vunpack.c.l.b16 %v129
    %v743 = vunpack.c.h.b16 %v129
    %v744 = vunpack.c.l.b16 %v130
    %v745 = vunpack.c.h.b16 %v130
    %v746 = vunpack.c.l.b16 %v131
    %v747 = vunpack.c.h.b16 %v131
    %v748 = vunpack.c.l.b16 %v132
    %v749 = vunpack.c.h.b16 %v132
    %v750 = vunpack.c.l.b16 %v133
    %v751 = vunpack.c.h.b16 %v133
    %v752 = vunpack.c.l.b16 %v134
    %v753 = vunpack.c.h.b16 %v134
    %v754 = vunpack.c.l.b16 %v135
    %v755 = vunpack.c.h.b16 %v135
    %v756 = vunpack.c.l.b16 %v136
    %v757 = vunpack.c.h.b16 %v136
    %v758 = vunpack.c.l.b16 %v137
    %v759 = vunpack.c.h.b16 %v137
    %v760 = vunpack.c.l.b16 %v138
    %v761 = vunpack.c.h.b16 %v138
    %v762 = vunpack.c.l.b16 %v139
    %v763 = vunpack.c.h.b16 %v139
    %v764 = vunpack.c.l.b16 %v140
    %v765 = vunpack.c.h.b16 %v140
    %v766 = vunpack.c.l.b16 %v141
    %v767 = vunpack.c.h.b16 %v141
    %v768 = vunpack.c.l.b16 %v142
    %v769 = vunpack.c.h.b16 %v142
    %v770 = vunpack.c.l.b16 %v143
    %v771 = vunpack.c.h.b16 %v143
    %v772 = vunpack.c.l.b16 %v144
    %v773 = vunpack.c.h.b16 %v144
    %v774 = vunpack.c.l.b16 %v145
    %v775 = vunpack.c.h.b16 %v145
    %v776 = vunpack.c.l.b16 %v146
    %v777 = vunpack.c.h.b16 %v146
    %v778 = vunpack.c.l.b16 %v147
    %v779 = vunpack.c.h.b16 %v147
    %v780 = vunpack.c.l.b16 %v148
    %v781 = vunpack.c.h.b16 %v148
    %v782 = vunpack.c.l.b16 %v149
    %v783 = vunpack.c.h.b16 %v149
    %v784 = vunpack.c.l.b16 %v150
    %v785 = vunpack.c.h.b16 %v150
    %v786 = vunpack.c.l.b16 %v151
    %v787 = vunpack.c.h.b16 %v151
    %v788 = vunpack.c.l.b16 %v152
    %v789 = vunpack.c.h.b16 %v152
    %v790 = vunpack.c.l.b16 %v153
    %v791 = vunpack.c.h.b16 %v153
    %v792 = vunpack.c.l.b16 %v154
    %v793 = vunpack.c.h.b16 %v154
    %v794 = vunpack.c.l.b16 %v155
    %v795 = vunpack.c.h.b16 %v155
    %v796 = vunpack.c.l.b16 %v156
    %v797 = vunpack.c.h.b16 %v156
    %v798 = vunpack.c.l.b16 %v157
    %v799 = vunpack.c.h.b16 %v157
    %v800 = vunpack.c.l.b16 %v158
    %v801 = vunpack.c.h.b16 %v158
    %v802 = vunpack.c.l.b16 %v159
    %v803 = vunpack.c.h.b16 %v159
    %v804 = vunpack.c.l.b16 %v160
    %v805 = vunpack.c.h.b16 %v160
    %v806 = vunpack.c.l.b16 %v161
    %v807 = vunpack.c.h.b16 %v161
    %v808 = vunpack.c.l.b16 %v162
    %v809 = vunpack.c.h.b16 %v162
    %v810 = vunpack.c.l.b16 %v163
    %v811 = vunpack.c.h.b16 %v163
    %v812 = vunpack.c.l.b16 %v164
    %v813 = vunpack.c.h.b16 %v164
    %v814 = vunpack.c.l.b16 %v165
    %v815 = vunpack.c.h.b16 %v165
    %v816 = vunpack.c.l.b16 %v166
    %v817 = vunpack.c.h.b16 %v166
    %v818 = vunpack.c.l.b16 %v167
    %v819 = vunpack.c.h.b16 %v167
    %v820 = vunpack.c.l.b16 %v168
    %v821 = vunpack.c.h.b16 %v168
    %v822 = vunpack.c.l.b16 %v169
    %v823 = vunpack.c.h.b16 %v169
    %v824 = vunpack.c.l.b16 %v170
    %v825 = vunpack.c.h.b16 %v170
    %v826 = vunpack.c.l.b16 %v171
    %v827 = vunpack.c.h.b16 %v171
    %v828 = vunpack.c.l.b16 %v172
    %v829 = vunpack.c.h.b16 %v172
    %v830 = vunpack.c.l.b16 %v173
    %v831 = vunpack.c.h.b16 %v173
    %v832 = vunpack.c.l.b16 %v174
    %v833 = vunpack.c.h.b16 %v174
    %v834 = vunpack.c.l.b16 %v175
    %v835 = vunpack.c.h.b16 %v175
    %v836 = vunpack.c.l.b16 %v176
    %v837 = vunpack.c.h.b16 %v176
    %v838 = vunpack.c.l.b16 %v177
    %v839 = vunpack.c.h.b16 %v177
    %v840 = vunpack.c.l.b16 %v178
    %v841 = vunpack.c.h.b16 %v178
    %v842 = vunpack.c.l.b16 %v179
    %v843 = vunpack.c.h.b16 %v179
    %v844 = vunpack.c.l.b16 %v180
    %v845 = vunpack.c.h.b16 %v180
    %v846 = vunpack.c.l.b16 %v181
    %v847 = vunpack.c.h.b16 %v181
    %v848 = vunpack.c.l.b16 %v182
    %v849 = vunpack.c.h.b16 %v182
    %v850 = vunpack.c.l.b16 %v183
    %v851 = vunpack.c.h.b16 %v183
    %v852 = vunpack.c.l.b16 %v184
    %v853 = vunpack.c.h.b16 %v184
    %v854 = vunpack.c.l.b16 %v185
    %v855 = vunpack.c.h.b16 %v185
    %v856 = vunpack.c.l.b16 %v186
    %v857 = vunpack.c.h.b16 %v186
    %v858 = vunpack.c.l.b16 %v187
    %v859 = vunpack.c.h.b16 %v187
    %v860 = vunpack.c.l.b16 %v188
    %v861 = vunpack.c.h.b16 %v188
    %v862 = vunpack.c.l.b16 %v189
    %v863 = vunpack.c.h.b16 %v189
    %v864 = vunpack.c.l.b16 %v190
    %v865 = vunpack.c.h.b16 %v190
    %v866 = vunpack.c.l.b16 %v191
    %v867 = vunpack.c.h.b16 %v191
    %v868 = vunpack.c.l.b16 %v192
    %v869 = vunpack.c.h.b16 %v192
    %v870 = vunpack.c.l.b16 %v193
    %v871 = vunpack.c.h.b16 %v193
    %v872 = vunpack.c.l.b16 %v194
    %v873 = vunpack.c.h.b16 %v194
    %v874 = vunpack.c.l.b16 %v195
    %v875 = vunpack.c.h.b16 %v195
    %v876 = vunpack.c.l.b16 %v196
    %v877 = vunpack.c.h.b16 %v196
    %v878 = vunpack.c.l.b16 %v197
    %v879 = vunpack.c.h.b16 %v197
    %v880 = vunpack.c.l.b16 %v198
    %v881 = vunpack.c.h.b16 %v198
    %v882 = vunpack.c.l.b16 %v199
    %v883 = vunpack.c.h.b16 %v199
    %v884 = vunpack.c.l.b16 %v200
    %v885 = vunpack.c.h.b16 %v200
    %v886 = vunpack.c.l.b16 %v201
    %v887 = vunpack.c.h.b16 %v201
    %v888 = vunpack.c.l.b16 %v202
    %v889 = vunpack.c.h.b16 %v202
    %v890 = vunpack.c.l.b16 %v203
    %v891 = vunpack.c.h.b16 %v203
    %v892 = vunpack.c.l.b16 %v204
    %v893 = vunpack.c.h.b16 %v204
    %v894 = vunpack.c.l.b16 %v205
    %v895 = vunpack.c.h.b16 %v205
    %v896 = vunpack.c.l.b16 %v206
    %v897 = vunpack.c.h.b16 %v206
    %v898 = vunpack.c.l.b16 %v207
    %v899 = vunpack.c.h.b16 %v207
    %v900 = vunpack.c.l.b16 %v208
    %v901 = vunpack.c.h.b16 %v208
    %v902 = vunpack.c.l.b16 %v209
    %v903 = vunpack.c.h.b16 %v209
    %v904 = vunpack.c.l.b16 %v210
    %v905 = vunpack.c.h.b16 %v210
    %v906 = vunpack.c.l.b16 %v211
    %v907 = vunpack.c.h.b16 %v211
    %v908 = vunpack.c.l.b16 %v212
    %v909 = vunpack.c.h.b16 %v212
    %v910 = vunpack.c.l.b16 %v213
    %v911 = vunpack.c.h.b16 %v213
    %v912 = vunpack.c.l.b16 %v214
    %v913 = vunpack.c.h.b16 %v214
    %v914 = vunpack.c.l.b16 %v215
    %v915 = vunpack.c.h.b16 %v215
    %v916 = vunpack.c.l.b16 %v216
    %v917 = vunpack.c.h.b16 %v216
    %v918 = vunpack.c.l.b16 %v217
    %v919 = vunpack.c.h.b16 %v217
    %v920 = vunpack.c.l.b16 %v218
    %v921 = vunpack.c.h.b16 %v218
    %v922 = vunpack.c.l.b16 %v219
    %v923 = vunpack.c.h.b16 %v219
    %v924 = vunpack.c.l.b16 %v220
    %v925 = vunpack.c.h.b16 %v220
    %v926 = vunpack.c.l.b16 %v221
    %v927 = vunpack.c.h.b16 %v221
    %v928 = vunpack.c.l.b16 %v222
    %v929 = vunpack.c.h.b16 %v222
    %v930 = vunpack.c.l.b16 %v223
    %v931 = vunpack.c.h.b16 %v223
    %v932 = vunpack.c.l.b16 %v224
    %v933 = vunpack.c.h.b16 %v224
    %v934 = vunpack.c.l.b16 %v225
    %v935 = vunpack.c.h.b16 %v225
    %v936 = vunpack.c.l.b16 %v226
    %v937 = vunpack.c.h.b16 %v226
    %v938 = vunpack.c.l.b16 %v227
    %v939 = vunpack.c.h.b16 %v227
    %v940 = vunpack.c.l.b16 %v228
    %v941 = vunpack.c.h.b16 %v228
    %v942 = vunpack.c.l.b16 %v229
    %v943 = vunpack.c.h.b16 %v229
    %v944 = vunpack.c.l.b16 %v230
    %v945 = vunpack.c.h.b16 %v230
    %v946 = vunpack.c.l.b16 %v231
    %v947 = vunpack.c.h.b16 %v231
    %v948 = vunpack.c.l.b16 %v232
    %v949 = vunpack.c.h.b16 %v232
    %v950 = vunpack.c.l.b16 %v233
    %v951 = vunpack.c.h.b16 %v233
    %v952 = vunpack.c.l.b16 %v234
    %v953 = vunpack.c.h.b16 %v234
    %v954 = vunpack.c.l.b16 %v235
    %v955 = vunpack.c.h.b16 %v235
    %v956 = vunpack.c.l.b16 %v236
    %v957 = vunpack.c.h.b16 %v236
    %v958 = vunpack.c.l.b16 %v237
    %v959 = vunpack.c.h.b16 %v237
    %v960 = vunpack.c.l.b16 %v238
    %v961 = vunpack.c.h.b16 %v238
    %v962 = vunpack.c.l.b16 %v239
    %v963 = vunpack.c.h.b16 %v239
    %v964 = vunpack.c.l.b16 %v240
    %v965 = vunpack.c.h.b16 %v240
    %v966 = vunpack.c.l.b16 %v241
    %v967 = vunpack.c.h.b16 %v241
    %v968 = vunpack.c.l.b16 %v242
    %v969 = vunpack.c.h.b16 %v242
    %v970 = vunpack.c.l.b16 %v243
    %v971 = vunpack.c.h.b16 %v243
    %v972 = vunpack.c.l.b16 %v244
    %v973 = vunpack.c.h.b16 %v244
    %v974 = vunpack.c.l.b16 %v245
    %v975 = vunpack.c.h.b16 %v245
    %v976 = vunpack.c.l.b16 %v246
    %v977 = vunpack.c.h.b16 %v246
    %v978 = vunpack.c.l.b16 %v247
    %v979 = vunpack.c.h.b16 %v247
    %v980 = vunpack.c.l.b16 %v248
    %v981 = vunpack.c.h.b16 %v248
    %v982 = vunpack.c.l.b16 %v249
    %v983 = vunpack.c.h.b16 %v249
    %v984 = vunpack.c.l.b16 %v250
    %v985 = vunpack.c.h.b16 %v250
    %v986 = vunpack.c.l.b16 %v251
    %v987 = vunpack.c.h.b16 %v251
    %v988 = vunpack.c.l.b16 %v252
    %v989 = vunpack.c.h.b16 %v252
    %v990 = vunpack.c.l.b16 %v253
    %v991 = vunpack.c.h.b16 %v253
    %v992 = vunpack.c.l.b16 %v254
    %v993 = vunpack.c.h.b16 %v254
    %v994 = vunpack.c.l.b16 %v255
    %v995 = vunpack.c.h.b16 %v255
    %v996 = vunpack.c.l.b16 %v256
    %v997 = vunpack.c.h.b16 %v256
    %v998 = vunpack.c.l.b16 %v257
    %v999 = vunpack.c.h.b16 %v257
    %v1000 = vunpack.c.l.b16 %v258
    %v1001 = vunpack.c.h.b16 %v258
    %v1002 = vunpack.c.l.b16 %v259
    %v1003 = vunpack.c.h.b16 %v259
    %v1004 = vunpack.c.l.b16 %v260
    %v1005 = vunpack.c.h.b16 %v260
    %v1006 = vunpack.c.l.b16 %v261
    %v1007 = vunpack.c.h.b16 %v261
    %v1008 = vunpack.c.l.b16 %v262
    %v1009 = vunpack.c.h.b16 %v262
    %v1010 = vunpack.c.l.b16 %v263
    %v1011 = vunpack.c.h.b16 %v263
    %v1012 = vunpack.c.l.b16 %v264
    %v1013 = vunpack.c.h.b16 %v264
    %v1014 = vunpack.c.l.b16 %v265
    %v1015 = vunpack.c.h.b16 %v265
    %v1016 = vunpack.c.l.b16 %v266
    %v1017 = vunpack.c.h.b16 %v266
    %v1018 = vunpack.c.l.b16 %v267
    %v1019 = vunpack.c.h.b16 %v267
    %v1020 = vunpack.c.l.b16 %v268
    %v1021 = vunpack.c.h.b16 %v268
    %v1022 = vunpack.c.l.b16 %v269
    %v1023 = vunpack.c.h.b16 %v269
    %v1024 = vunpack.c.l.b16 %v270
    %v1025 = vunpack.c.h.b16 %v270
    %v1026 = vunpack.c.l.b16 %v271
    %v1027 = vunpack.c.h.b16 %v271
    %v1028 = vunpack.c.l.b16 %v272
    %v1029 = vunpack.c.h.b16 %v272
    %v1030 = vunpack.c.l.b16 %v273
    %v1031 = vunpack.c.h.b16 %v273
    %v1032 = vunpack.c.l.b16 %v274
    %v1033 = vunpack.c.h.b16 %v274
    %v1034 = vunpack.c.l.b16 %v275
    %v1035 = vunpack.c.h.b16 %v275
    %v1036 = vunpack.c.l.b16 %v276
    %v1037 = vunpack.c.h.b16 %v276
    %v1038 = vunpack.c.l.b16 %v277
    %v1039 = vunpack.c.h.b16 %v277
    %v1040 = vunpack.c.l.b16 %v278
    %v1041 = vunpack.c.h.b16 %v278
    %v1042 = vunpack.c.l.b16 %v279
    %v1043 = vunpack.c.h.b16 %v279
    %v1044 = vunpack.c.l.b16 %v280
    %v1045 = vunpack.c.h.b16 %v280
    %v1046 = vunpack.c.l.b16 %v281
    %v1047 = vunpack.c.h.b16 %v281
    %v1048 = vunpack.c.l.b16 %v282
    %v1049 = vunpack.c.h.b16 %v282
    %v1050 = vunpack.c.l.b16 %v283
    %v1051 = vunpack.c.h.b16 %v283
    %v1052 = vpack.c.b16 %v572, %v540
    %v1053 = vpack.c.b16 %v573, %v541
    %v1054 = vpack.c.b16 %v574, %v542
    %v1055 = vpack.c.b16 %v575, %v543
    %v1056 = vpack.c.b16 %v576, %v544
    %v1057 = vpack.c.b16 %v577, %v545
    %v1058 = vpack.c.b16 %v578, %v546
    %v1059 = vpack.c.b16 %v579, %v547
    %v1060 = vpack.c.b16 %v580, %v548
    %v1061 = vpack.c.b16 %v581, %v549
    %v1062 = vpack.c.b16 %v582, %v550
    %v1063 = vpack.c.b16 %v583, %v551
    %v1064 = vpack.c.b16 %v584, %v552
    %v1065 = vpack.c.b16 %v585, %v553
    %v1066 = vpack.c.b16 %v586, %v554
    %v1067 = vpack.c.b16 %v587, %v555
    %v1068 = vpack.c.b16 %v588, %v556
    %v1069 = vpack.c.b16 %v589, %v557
    %v1070 = vpack.c.b16 %v590, %v558
    %v1071 = vpack.c.b16 %v591, %v559
    %v1072 = vpack.c.b16 %v592, %v560
    %v1073 = vpack.c.b16 %v593, %v561
    %v1074 = vpack.c.b16 %v594, %v562
    %v1075 = vpack.c.b16 %v595, %v563
    %v1076 = vpack.c.b16 %v596, %v564
    %v1077 = vpack.c.b16 %v597, %v565
    %v1078 = vpack.c.b16 %v598, %v566
    %v1079 = vpack.c.b16 %v599, %v567
    %v1080 = vpack.c.b16 %v600, %v568
    %v1081 = vpack.c.b16 %v601, %v569
    %v1082 = vpack.c.b16 %v602, %v570
    %v1083 = vpack.c.b16 %v603, %v571
    %v1084 = vpack.c.b16 %v636, %v604
    %v1085 = vpack.c.b16 %v637, %v605
    %v1086 = vpack.c.b16 %v638, %v606
    %v1087 = vpack.c.b16 %v639, %v607
    %v1088 = vpack.c.b16 %v640, %v608
    %v1089 = vpack.c.b16 %v641, %v609
    %v1090 = vpack.c.b16 %v642, %v610
    %v1091 = vpack.c.b16 %v643, %v611
    %v1092 = vpack.c.b16 %v644, %v612
    %v1093 = vpack.c.b16 %v645, %v613
    %v1094 = vpack.c.b16 %v646, %v614
    %v1095 = vpack.c.b16 %v647, %v615
    %v1096 = vpack.c.b16 %v648, %v616
    %v1097 = vpack.c.b16 %v649, %v617
    %v1098 = vpack.c.b16 %v650, %v618
    %v1099 = vpack.c.b16 %v651, %v619
    %v1100 = vpack.c.b16 %v652, %v620
    %v1101 = vpack.c.b16 %v653, %v621
    %v1102 = vpack.c.b16 %v654, %v622
    %v1103 = vpack.c.b16 %v655, %v623
    %v1104 = vpack.c.b16 %v656, %v624
    %v1105 = vpack.c.b16 %v657, %v625
    %v1106 = vpack.c.b16 %v658, %v626
    %v1107 = vpack.c.b16 %v659, %v627
    %v1108 = vpack.c.b16 %v660, %v628
    %v1109 = vpack.c.b16 %v661, %v629
    %v1110 = vpack.c.b16 %v662, %v630
    %v1111 = vpack.c.b16 %v663, %v631
    %v1112 = vpack.c.b16 %v664, %v632
    %v1113 = vpack.c.b16 %v665, %v633
    %v1114 = vpack.c.b16 %v666, %v634
    %v1115 = vpack.c.b16 %v667, %v635
    %v1116 = vpack.c.b16 %v700, %v668
    %v1117 = vpack.c.b16 %v701, %v669
    %v1118 = vpack.c.b16 %v702, %v670
    %v1119 = vpack.c.b16 %v703, %v671
    %v1120 = vpack.c.b16 %v704, %v672
    %v1121 = vpack.c.b16 %v705, %v673
    %v1122 = vpack.c.b16 %v706, %v674
    %v1123 = vpack.c.b16 %v707, %v675
    %v1124 = vpack.c.b16 %v708, %v676
    %v1125 = vpack.c.b16 %v709, %v677
    %v1126 = vpack.c.b16 %v710, %v678
    %v1127 = vpack.c.b16 %v711, %v679
    %v1128 = vpack.c.b16 %v712, %v680
    %v1129 = vpack.c.b16 %v713, %v681
    %v1130 = vpack.c.b16 %v714, %v682
    %v1131 = vpack.c.b16 %v715, %v683
    %v1132 = vpack.c.b16 %v716, %v684
    %v1133 = vpack.c.b16 %v717, %v685
    %v1134 = vpack.c.b16 %v718, %v686
    %v1135 = vpack.c.b16 %v719, %v687
    %v1136 = vpack.c.b16 %v720, %v688
    %v1137 = vpack.c.b16 %v721, %v689
    %v1138 = vpack.c.b16 %v722, %v690
    %v1139 = vpack.c.b16 %v723, %v691
    %v1140 = vpack.c.b16 %v724, %v692
    %v1141 = vpack.c.b16 %v725, %v693
    %v1142 = vpack.c.b16 %v726, %v694
    %v1143 = vpack.c.b16 %v727, %v695
    %v1144 = vpack.c.b16 %v728, %v696
    %v1145 = vpack.c.b16 %v729, %v697
    %v1146 = vpack.c.b16 %v730, %v698
    %v1147 = vpack.c.b16 %v731, %v699
    %v1148 = vpack.c.b16 %v764, %v732
    %v1149 = vpack.c.b16 %v765, %v733
    %v1150 = vpack.c.b16 %v766, %v734
    %v1151 = vpack.c.b16 %v767, %v735
    %v1152 = vpack.c.b16 %v768, %v736
    %v1153 = vpack.c.b16 %v769, %v737
    %v1154 = vpack.c.b16 %v770, %v738
    %v1155 = vpack.c.b16 %v771, %v739
    %v1156 = vpack.c.b16 %v772, %v740
    %v1157 = vpack.c.b16 %v773, %v741
    %v1158 = vpack.c.b16 %v774, %v742
    %v1159 = vpack.c.b16 %v775, %v743
    %v1160 = vpack.c.b16 %v776, %v744
    %v1161 = vpack.c.b16 %v777, %v745
    %v1162 = vpack.c.b16 %v778, %v746
    %v1163 = vpack.c.b16 %v779, %v747
    %v1164 = vpack.c.b16 %v780, %v748
    %v1165 = vpack.c.b16 %v781, %v749
    %v1166 = vpack.c.b16 %v782, %v750
    %v1167 = vpack.c.b16 %v783, %v751
    %v1168 = vpack.c.b16 %v784, %v752
    %v1169 = vpack.c.b16 %v785, %v753
    %v1170 = vpack.c.b16 %v786, %v754
    %v1171 = vpack.c.b16 %v787, %v755
    %v1172 = vpack.c.b16 %v788, %v756
    %v1173 = vpack.c.b16 %v789, %v757
    %v1174 = vpack.c.b16 %v790, %v758
    %v1175 = vpack.c.b16 %v791, %v759
    %v1176 = vpack.c.b16 %v792, %v760
    %v1177 = vpack.c.b16 %v793, %v761
    %v1178 = vpack.c.b16 %v794, %v762
    %v1179 = vpack.c.b16 %v795, %v763
    %v1180 = vpack.c.b16 %v828, %v796
    %v1181 = vpack.c.b16 %v829, %v797
    %v1182 = vpack.c.b16 %v830, %v798
    %v1183 = vpack.c.b16 %v831, %v799
    %v1184 = vpack.c.b16 %v832, %v800
    %v1185 = vpack.c.b16 %v833, %v801
    %v1186 = vpack.c.b16 %v834, %v802
    %v1187 = vpack.c.b16 %v835, %v803
    %v1188 = vpack.c.b16 %v836, %v804
    %v1189 = vpack.c.b16 %v837, %v805
    %v1190 = vpack.c.b16 %v838, %v806
    %v1191 = vpack.c.b16 %v839, %v807
    %v1192 = vpack.c.b16 %v840, %v808
    %v1193 = vpack.c.b16 %v841, %v809
    %v1194 = vpack.c.b16 %v842, %v810
    %v1195 = vpack.c.b16 %v843, %v811
    %v1196 = vpack.c.b16 %v844, %v812
    %v1197 = vpack.c.b16 %v845, %v813
    %v1198 = vpack.c.b16 %v846, %v814
    %v1199 = vpack.c.b16 %v847, %v815
    %v1200 = vpack.c.b16 %v848, %v816
    %v1201 = vpack.c.b16 %v849, %v817
    %v1202 = vpack.c.b16 %v850, %v818
    %v1203 = vpack.c.b16 %v851, %v819
    %v1204 = vpack.c.b16 %v852, %v820
    %v1205 = vpack.c.b16 %v853, %v821
    %v1206 = vpack.c.b16 %v854, %v822
    %v1207 = vpack.c.b16 %v855, %v823
    %v1208 = vpack.c.b16 %v856, %v824
    %v1209 = vpack.c.b16 %v857, %v825
    %v1210 = vpack.c.b16 %v858, %v826
    %v1211 = vpack.c.b16 %v859, %v827
    %v1212 = vpack.c.b16 %v892, %v860
    %v1213 = vpack.c.b16 %v893, %v861
    %v1214 = vpack.c.b16 %v894, %v862
    %v1215 = vpack.c.b16 %v895, %v863
    %v1216 = vpack.c.b16 %v896, %v864
    %v1217 = vpack.c.b16 %v897, %v865
    %v1218 = vpack.c.b16 %v898, %v866
    %v1219 = vpack.c.b16 %v899, %v867
    %v1220 = vpack.c.b16 %v900, %v868
    %v1221 = vpack.c.b16 %v901, %v869
    %v1222 = vpack.c.b16 %v902, %v870
    %v1223 = vpack.c.b16 %v903, %v871
    %v1224 = vpack.c.b16 %v904, %v872
    %v1225 = vpack.c.b16 %v905, %v873
    %v1226 = vpack.c.b16 %v906, %v874
    %v1227 = vpack.c.b16 %v907, %v875
    %v1228 = vpack.c.b16 %v908, %v876
    %v1229 = vpack.c.b16 %v909, %v877
    %v1230 = vpack.c.b16 %v910, %v878
    %v1231 = vpack.c.b16 %v911, %v879
    %v1232 = vpack.c.b16 %v912, %v880
    %v1233 = vpack.c.b16 %v913, %v881
    %v1234 = vpack.c.b16 %v914, %v882
    %v1235 = vpack.c.b16 %v915, %v883
    %v1236 = vpack.c.b16 %v916, %v884
    %v1237 = vpack.c.b16 %v917, %v885
    %v1238 = vpack.c.b16 %v918, %v886
    %v1239 = vpack.c.b16 %v919, %v887
    %v1240 = vpack.c.b16 %v920, %v888
    %v1241 = vpack.c.b16 %v921, %v889
    %v1242 = vpack.c.b16 %v922, %v890
    %v1243 = vpack.c.b16 %v923, %v891
    %v1244 = vpack.c.b16 %v956, %v924
    %v1245 = vpack.c.b16 %v957, %v925
    %v1246 = vpack.c.b16 %v958, %v926
    %v1247 = vpack.c.b16 %v959, %v927
    %v1248 = vpack.c.b16 %v960, %v928
    %v1249 = vpack.c.b16 %v961, %v929
    %v1250 = vpack.c.b16 %v962, %v930
    %v1251 = vpack.c.b16 %v963, %v931
    %v1252 = vpack.c.b16 %v964, %v932
    %v1253 = vpack.c.b16 %v965, %v933
    %v1254 = vpack.c.b16 %v966, %v934
    %v1255 = vpack.c.b16 %v967, %v935
    %v1256 = vpack.c.b16 %v968, %v936
    %v1257 = vpack.c.b16 %v969, %v937
    %v1258 = vpack.c.b16 %v970, %v938
    %v1259 = vpack.c.b16 %v971, %v939
    %v1260 = vpack.c.b16 %v972, %v940
    %v1261 = vpack.c.b16 %v973, %v941
    %v1262 = vpack.c.b16 %v974, %v942
    %v1263 = vpack.c.b16 %v975, %v943
    %v1264 = vpack.c.b16 %v976, %v944
    %v1265 = vpack.c.b16 %v977, %v945
    %v1266 = vpack.c.b16 %v978, %v946
    %v1267 = vpack.c.b16 %v979, %v947
    %v1268 = vpack.c.b16 %v980, %v948
    %v1269 = vpack.c.b16 %v981, %v949
    %v1270 = vpack.c.b16 %v982, %v950
    %v1271 = vpack.c.b16 %v983, %v951
    %v1272 = vpack.c.b16 %v984, %v952
    %v1273 = vpack.c.b16 %v985, %v953
    %v1274 = vpack.c.b16 %v986, %v954
    %v1275 = vpack.c.b16 %v987, %v955
    %v1276 = vpack.c.b16 %v1020, %v988
    %v1277 = vpack.c.b16 %v1021, %v989
    %v1278 = vpack.c.b16 %v1022, %v990
    %v1279 = vpack.c.b16 %v1023, %v991
    %v1280 = vpack.c.b16 %v1024, %v992
    %v1281 = vpack.c.b16 %v1025, %v993
    %v1282 = vpack.c.b16 %v1026, %v994
    %v1283 = vpack.c.b16 %v1027, %v995
    %v1284 = vpack.c.b16 %v1028, %v996
    %v1285 = vpack.c.b16 %v1029, %v997
    %v1286 = vpack.c.b16 %v1030, %v998
    %v1287 = vpack.c.b16 %v1031, %v999
    %v1288 = vpack.c.b16 %v1032, %v1000
    %v1289 = vpack.c.b16 %v1033, %v1001
    %v1290 = vpack.c.b16 %v1034, %v1002
    %v1291 = vpack.c.b16 %v1035, %v1003
    %v1292 = vpack.c.b16 %v1036, %v1004
    %v1293 = vpack.c.b16 %v1037, %v1005
    %v1294 = vpack.c.b16 %v1038, %v1006
    %v1295 = vpack.c.b16 %v1039, %v1007
    %v1296 = vpack.c.b16 %v1040, %v1008
    %v1297 = vpack.c.b16 %v1041, %v1009
    %v1298 = vpack.c.b16 %v1042, %v1010
    %v1299 = vpack.c.b16 %v1043, %v1011
    %v1300 = vpack.c.b16 %v1044, %v1012
    %v1301 = vpack.c.b16 %v1045, %v1013
    %v1302 = vpack.c.b16 %v1046, %v1014
    %v1303 = vpack.c.b16 %v1047, %v1015
    %v1304 = vpack.c.b16 %v1048, %v1016
    %v1305 = vpack.c.b16 %v1049, %v1017
    %v1306 = vpack.c.b16 %v1050, %v1018
    %v1307 = vpack.c.b16 %v1051, %v1019
    %1564 = vmatprep.subr.bf16.mxu0 %v1053
    %1565 = vmatpush1.bf16.msra.mxu0 %v1052
    %1566 = vmatprep.subr.bf16.mxu0 %v1085
    %1567 = vmatpush1.bf16.msra.mxu0 %v1084
    %1568 = vmatprep.subr.bf16.mxu0 %v1117
    %1569 = vmatpush1.bf16.msra.mxu0 %v1116
    %1570 = vmatprep.subr.bf16.mxu0 %v1149
    %1571 = vmatpush1.bf16.msra.mxu0 %v1148
    %1572 = vmatprep.subr.bf16.mxu0 %v1181
    %1573 = vmatpush1.bf16.msra.mxu0 %v1180
    %1574 = vmatprep.subr.bf16.mxu0 %v1213
    %1575 = vmatpush1.bf16.msra.mxu0 %v1212
    %1576 = vmatprep.subr.bf16.mxu0 %v1245
    %1577 = vmatpush1.bf16.msra.mxu0 %v1244
    %1578 = vmatprep.subr.bf16.mxu0 %v1277
    %1579 = vmatpush1.bf16.msra.mxu0 %v1276
    %1580 = vmatprep.subr.bf16.mxu0 0
    %1581 = vmatpush1.bf16.msra.mxu0 0
    %1582 = vmatprep.subr.bf16.mxu0 0
    %1583 = vmatpush1.bf16.msra.mxu0 0
    %1584 = vmatprep.subr.bf16.mxu0 0
    %1585 = vmatpush1.bf16.msra.mxu0 0
    %1586 = vmatprep.subr.bf16.mxu0 0
    %1587 = vmatpush1.bf16.msra.mxu0 0
    %1588 = vmatprep.subr.bf16.mxu0 0
    %1589 = vmatpush1.bf16.msra.mxu0 0
    %1590 = vmatprep.subr.bf16.mxu0 0
    %1591 = vmatpush1.bf16.msra.mxu0 0
    %1592 = vmatprep.subr.bf16.mxu0 0
    %1593 = vmatpush1.bf16.msra.mxu0 0
    %1594 = vmatprep.subr.bf16.mxu0 0
    %1595 = vmatpush1.bf16.msra.mxu0 0
    %1596 = vmatprep.mubr.bf16.mxu0 0
    %1597 = vmatmul.mubr.bf16.gmra.mrb[0].mxu0 %v27
    %v1598 = vpop.f32.mrb[0].mxu0
    %v1599 = vadd.f32 0.0, %v1598
    %v1600 = vpop.f32.mrb[0].mxu0
    %v1601 = vadd.f32 0.0, %v1600
    %v1602 = vpop.f32.mrb[0].mxu0
    %v1603 = vpop.f32.mrb[0].mxu0
    %1604 = vdwg.mxu0
    %1605 = vmatprep.subr.bf16.mxu0 %v1055
    %1606 = vmatpush1.bf16.msra.mxu0 %v1054
    %1607 = vmatprep.subr.bf16.mxu0 %v1087
    %1608 = vmatpush1.bf16.msra.mxu0 %v1086
    %1609 = vmatprep.subr.bf16.mxu0 %v1119
    %1610 = vmatpush1.bf16.msra.mxu0 %v1118
    %1611 = vmatprep.subr.bf16.mxu0 %v1151
    %1612 = vmatpush1.bf16.msra.mxu0 %v1150
    %1613 = vmatprep.subr.bf16.mxu0 %v1183
    %1614 = vmatpush1.bf16.msra.mxu0 %v1182
    %1615 = vmatprep.subr.bf16.mxu0 %v1215
    %1616 = vmatpush1.bf16.msra.mxu0 %v1214
    %1617 = vmatprep.subr.bf16.mxu0 %v1247
    %1618 = vmatpush1.bf16.msra.mxu0 %v1246
    %1619 = vmatprep.subr.bf16.mxu0 %v1279
    %1620 = vmatpush1.bf16.msra.mxu0 %v1278
    %1621 = vmatprep.subr.bf16.mxu0 0
    %1622 = vmatpush1.bf16.msra.mxu0 0
    %1623 = vmatprep.subr.bf16.mxu0 0
    %1624 = vmatpush1.bf16.msra.mxu0 0
    %1625 = vmatprep.subr.bf16.mxu0 0
    %1626 = vmatpush1.bf16.msra.mxu0 0
    %1627 = vmatprep.subr.bf16.mxu0 0
    %1628 = vmatpush1.bf16.msra.mxu0 0
    %1629 = vmatprep.subr.bf16.mxu0 0
    %1630 = vmatpush1.bf16.msra.mxu0 0
    %1631 = vmatprep.subr.bf16.mxu0 0
    %1632 = vmatpush1.bf16.msra.mxu0 0
    %1633 = vmatprep.subr.bf16.mxu0 0
    %1634 = vmatpush1.bf16.msra.mxu0 0
    %1635 = vmatprep.subr.bf16.mxu0 0
    %1636 = vmatpush1.bf16.msra.mxu0 0
    %1637 = vmatprep.mubr.bf16.mxu0 0
    %1638 = vmatmul.mubr.bf16.gmra.mrb[0].mxu0 %v27
    %v1639 = vpop.f32.mrb[0].mxu0
    %v1640 = vadd.f32 0.0, %v1639
    %v1641 = vpop.f32.mrb[0].mxu0
    %v1642 = vadd.f32 0.0, %v1641
    %v1643 = vpop.f32.mrb[0].mxu0
    %v1644 = vpop.f32.mrb[0].mxu0
    %1645 = vdwg.mxu0
    %1646 = vmatprep.subr.bf16.mxu0 %v1057
    %1647 = vmatpush1.bf16.msra.mxu0 %v1056
    %1648 = vmatprep.subr.bf16.mxu0 %v1089
    %1649 = vmatpush1.bf16.msra.mxu0 %v1088
    %1650 = vmatprep.subr.bf16.mxu0 %v1121
    %1651 = vmatpush1.bf16.msra.mxu0 %v1120
    %1652 = vmatprep.subr.bf16.mxu0 %v1153
    %1653 = vmatpush1.bf16.msra.mxu0 %v1152
    %1654 = vmatprep.subr.bf16.mxu0 %v1185
    %1655 = vmatpush1.bf16.msra.mxu0 %v1184
    %1656 = vmatprep.subr.bf16.mxu0 %v1217
    %1657 = vmatpush1.bf16.msra.mxu0 %v1216
    %1658 = vmatprep.subr.bf16.mxu0 %v1249
    %1659 = vmatpush1.bf16.msra.mxu0 %v1248
    %1660 = vmatprep.subr.bf16.mxu0 %v1281
    %1661 = vmatpush1.bf16.msra.mxu0 %v1280
    %1662 = vmatprep.subr.bf16.mxu0 0
    %1663 = vmatpush1.bf16.msra.mxu0 0
    %1664 = vmatprep.subr.bf16.mxu0 0
    %1665 = vmatpush1.bf16.msra.mxu0 0
    %1666 = vmatprep.subr.bf16.mxu0 0
    %1667 = vmatpush1.bf16.msra.mxu0 0
    %1668 = vmatprep.subr.bf16.mxu0 0
    %1669 = vmatpush1.bf16.msra.mxu0 0
    %1670 = vmatprep.subr.bf16.mxu0 0
    %1671 = vmatpush1.bf16.msra.mxu0 0
    %1672 = vmatprep.subr.bf16.mxu0 0
    %1673 = vmatpush1.bf16.msra.mxu0 0
    %1674 = vmatprep.subr.bf16.mxu0 0
    %1675 = vmatpush1.bf16.msra.mxu0 0
    %1676 = vmatprep.subr.bf16.mxu0 0
    %1677 = vmatpush1.bf16.msra.mxu0 0
    %1678 = vmatprep.mubr.bf16.mxu0 0
    %1679 = vmatmul.mubr.bf16.gmra.mrb[0].mxu0 %v27
    %v1680 = vpop.f32.mrb[0].mxu0
    %v1681 = vadd.f32 0.0, %v1680
    %v1682 = vpop.f32.mrb[0].mxu0
    %v1683 = vadd.f32 0.0, %v1682
    %v1684 = vpop.f32.mrb[0].mxu0
    %v1685 = vpop.f32.mrb[0].mxu0
    %1686 = vdwg.mxu0
    %1687 = vmatprep.subr.bf16.mxu0 %v1059
    %1688 = vmatpush1.bf16.msra.mxu0 %v1058
    %1689 = vmatprep.subr.bf16.mxu0 %v1091
    %1690 = vmatpush1.bf16.msra.mxu0 %v1090
    %1691 = vmatprep.subr.bf16.mxu0 %v1123
    %1692 = vmatpush1.bf16.msra.mxu0 %v1122
    %1693 = vmatprep.subr.bf16.mxu0 %v1155
    %1694 = vmatpush1.bf16.msra.mxu0 %v1154
    %1695 = vmatprep.subr.bf16.mxu0 %v1187
    %1696 = vmatpush1.bf16.msra.mxu0 %v1186
    %1697 = vmatprep.subr.bf16.mxu0 %v1219
    %1698 = vmatpush1.bf16.msra.mxu0 %v1218
    %1699 = vmatprep.subr.bf16.mxu0 %v1251
    %1700 = vmatpush1.bf16.msra.mxu0 %v1250
    %1701 = vmatprep.subr.bf16.mxu0 %v1283
    %1702 = vmatpush1.bf16.msra.mxu0 %v1282
    %1703 = vmatprep.subr.bf16.mxu0 0
    %1704 = vmatpush1.bf16.msra.mxu0 0
    %1705 = vmatprep.subr.bf16.mxu0 0
    %1706 = vmatpush1.bf16.msra.mxu0 0
    %1707 = vmatprep.subr.bf16.mxu0 0
    %1708 = vmatpush1.bf16.msra.mxu0 0
    %1709 = vmatprep.subr.bf16.mxu0 0
    %1710 = vmatpush1.bf16.msra.mxu0 0
    %1711 = vmatprep.subr.bf16.mxu0 0
    %1712 = vmatpush1.bf16.msra.mxu0 0
    %1713 = vmatprep.subr.bf16.mxu0 0
    %1714 = vmatpush1.bf16.msra.mxu0 0
    %1715 = vmatprep.subr.bf16.mxu0 0
    %1716 = vmatpush1.bf16.msra.mxu0 0
    %1717 = vmatprep.subr.bf16.mxu0 0
    %1718 = vmatpush1.bf16.msra.mxu0 0
    %1719 = vmatprep.mubr.bf16.mxu0 0
    %1720 = vmatmul.mubr.bf16.gmra.mrb[0].mxu0 %v27
    %v1721 = vpop.f32.mrb[0].mxu0
    %v1722 = vadd.f32 0.0, %v1721
    %v1723 = vpop.f32.mrb[0].mxu0
    %v1724 = vadd.f32 0.0, %v1723
    %v1725 = vpop.f32.mrb[0].mxu0
    %v1726 = vpop.f32.mrb[0].mxu0
    %1727 = vdwg.mxu0
    %1728 = vmatprep.subr.bf16.mxu0 %v1061
    %1729 = vmatpush1.bf16.msra.mxu0 %v1060
    %1730 = vmatprep.subr.bf16.mxu0 %v1093
    %1731 = vmatpush1.bf16.msra.mxu0 %v1092
    %1732 = vmatprep.subr.bf16.mxu0 %v1125
    %1733 = vmatpush1.bf16.msra.mxu0 %v1124
    %1734 = vmatprep.subr.bf16.mxu0 %v1157
    %1735 = vmatpush1.bf16.msra.mxu0 %v1156
    %1736 = vmatprep.subr.bf16.mxu0 %v1189
    %1737 = vmatpush1.bf16.msra.mxu0 %v1188
    %1738 = vmatprep.subr.bf16.mxu0 %v1221
    %1739 = vmatpush1.bf16.msra.mxu0 %v1220
    %1740 = vmatprep.subr.bf16.mxu0 %v1253
    %1741 = vmatpush1.bf16.msra.mxu0 %v1252
    %1742 = vmatprep.subr.bf16.mxu0 %v1285
    %1743 = vmatpush1.bf16.msra.mxu0 %v1284
    %1744 = vmatprep.subr.bf16.mxu0 0
    %1745 = vmatpush1.bf16.msra.mxu0 0
    %1746 = vmatprep.subr.bf16.mxu0 0
    %1747 = vmatpush1.bf16.msra.mxu0 0
    %1748 = vmatprep.subr.bf16.mxu0 0
    %1749 = vmatpush1.bf16.msra.mxu0 0
    %1750 = vmatprep.subr.bf16.mxu0 0
    %1751 = vmatpush1.bf16.msra.mxu0 0
    %1752 = vmatprep.subr.bf16.mxu0 0
    %1753 = vmatpush1.bf16.msra.mxu0 0
    %1754 = vmatprep.subr.bf16.mxu0 0
    %1755 = vmatpush1.bf16.msra.mxu0 0
    %1756 = vmatprep.subr.bf16.mxu0 0
    %1757 = vmatpush1.bf16.msra.mxu0 0
    %1758 = vmatprep.subr.bf16.mxu0 0
    %1759 = vmatpush1.bf16.msra.mxu0 0
    %1760 = vmatprep.mubr.bf16.mxu0 0
    %1761 = vmatmul.mubr.bf16.gmra.mrb[0].mxu0 %v27
    %v1762 = vpop.f32.mrb[0].mxu0
    %v1763 = vadd.f32 0.0, %v1762
    %v1764 = vpop.f32.mrb[0].mxu0
    %v1765 = vadd.f32 0.0, %v1764
    %v1766 = vpop.f32.mrb[0].mxu0
    %v1767 = vpop.f32.mrb[0].mxu0
    %1768 = vdwg.mxu0
    %1769 = vmatprep.subr.bf16.mxu0 %v1063
    %1770 = vmatpush1.bf16.msra.mxu0 %v1062
    %1771 = vmatprep.subr.bf16.mxu0 %v1095
    %1772 = vmatpush1.bf16.msra.mxu0 %v1094
    %1773 = vmatprep.subr.bf16.mxu0 %v1127
    %1774 = vmatpush1.bf16.msra.mxu0 %v1126
    %1775 = vmatprep.subr.bf16.mxu0 %v1159
    %1776 = vmatpush1.bf16.msra.mxu0 %v1158
    %1777 = vmatprep.subr.bf16.mxu0 %v1191
    %1778 = vmatpush1.bf16.msra.mxu0 %v1190
    %1779 = vmatprep.subr.bf16.mxu0 %v1223
    %1780 = vmatpush1.bf16.msra.mxu0 %v1222
    %1781 = vmatprep.subr.bf16.mxu0 %v1255
    %1782 = vmatpush1.bf16.msra.mxu0 %v1254
    %1783 = vmatprep.subr.bf16.mxu0 %v1287
    %1784 = vmatpush1.bf16.msra.mxu0 %v1286
    %1785 = vmatprep.subr.bf16.mxu0 0
    %1786 = vmatpush1.bf16.msra.mxu0 0
    %1787 = vmatprep.subr.bf16.mxu0 0
    %1788 = vmatpush1.bf16.msra.mxu0 0
    %1789 = vmatprep.subr.bf16.mxu0 0
    %1790 = vmatpush1.bf16.msra.mxu0 0
    %1791 = vmatprep.subr.bf16.mxu0 0
    %1792 = vmatpush1.bf16.msra.mxu0 0
    %1793 = vmatprep.subr.bf16.mxu0 0
    %1794 = vmatpush1.bf16.msra.mxu0 0
    %1795 = vmatprep.subr.bf16.mxu0 0
    %1796 = vmatpush1.bf16.msra.mxu0 0
    %1797 = vmatprep.subr.bf16.mxu0 0
    %1798 = vmatpush1.bf16.msra.mxu0 0
    %1799 = vmatprep.subr.bf16.mxu0 0
    %1800 = vmatpush1.bf16.msra.mxu0 0
    %1801 = vmatprep.mubr.bf16.mxu0 0
    %1802 = vmatmul.mubr.bf16.gmra.mrb[0].mxu0 %v27
    %v1803 = vpop.f32.mrb[0].mxu0
    %v1804 = vadd.f32 0.0, %v1803
    %v1805 = vpop.f32.mrb[0].mxu0
    %v1806 = vadd.f32 0.0, %v1805
    %v1807 = vpop.f32.mrb[0].mxu0
    %v1808 = vpop.f32.mrb[0].mxu0
    %1809 = vdwg.mxu0
    %1810 = vmatprep.subr.bf16.mxu0 %v1065
    %1811 = vmatpush1.bf16.msra.mxu0 %v1064
    %1812 = vmatprep.subr.bf16.mxu0 %v1097
    %1813 = vmatpush1.bf16.msra.mxu0 %v1096
    %1814 = vmatprep.subr.bf16.mxu0 %v1129
    %1815 = vmatpush1.bf16.msra.mxu0 %v1128
    %1816 = vmatprep.subr.bf16.mxu0 %v1161
    %1817 = vmatpush1.bf16.msra.mxu0 %v1160
    %1818 = vmatprep.subr.bf16.mxu0 %v1193
    %1819 = vmatpush1.bf16.msra.mxu0 %v1192
    %1820 = vmatprep.subr.bf16.mxu0 %v1225
    %1821 = vmatpush1.bf16.msra.mxu0 %v1224
    %1822 = vmatprep.subr.bf16.mxu0 %v1257
    %1823 = vmatpush1.bf16.msra.mxu0 %v1256
    %1824 = vmatprep.subr.bf16.mxu0 %v1289
    %1825 = vmatpush1.bf16.msra.mxu0 %v1288
    %1826 = vmatprep.subr.bf16.mxu0 0
    %1827 = vmatpush1.bf16.msra.mxu0 0
    %1828 = vmatprep.subr.bf16.mxu0 0
    %1829 = vmatpush1.bf16.msra.mxu0 0
    %1830 = vmatprep.subr.bf16.mxu0 0
    %1831 = vmatpush1.bf16.msra.mxu0 0
    %1832 = vmatprep.subr.bf16.mxu0 0
    %1833 = vmatpush1.bf16.msra.mxu0 0
    %1834 = vmatprep.subr.bf16.mxu0 0
    %1835 = vmatpush1.bf16.msra.mxu0 0
    %1836 = vmatprep.subr.bf16.mxu0 0
    %1837 = vmatpush1.bf16.msra.mxu0 0
    %1838 = vmatprep.subr.bf16.mxu0 0
    %1839 = vmatpush1.bf16.msra.mxu0 0
    %1840 = vmatprep.subr.bf16.mxu0 0
    %1841 = vmatpush1.bf16.msra.mxu0 0
    %1842 = vmatprep.mubr.bf16.mxu0 0
    %1843 = vmatmul.mubr.bf16.gmra.mrb[0].mxu0 %v27
    %v1844 = vpop.f32.mrb[0].mxu0
    %v1845 = vadd.f32 0.0, %v1844
    %v1846 = vpop.f32.mrb[0].mxu0
    %v1847 = vadd.f32 0.0, %v1846
    %v1848 = vpop.f32.mrb[0].mxu0
    %v1849 = vpop.f32.mrb[0].mxu0
    %1850 = vdwg.mxu0
    %1851 = vmatprep.subr.bf16.mxu0 %v1067
    %1852 = vmatpush1.bf16.msra.mxu0 %v1066
    %1853 = vmatprep.subr.bf16.mxu0 %v1099
    %1854 = vmatpush1.bf16.msra.mxu0 %v1098
    %1855 = vmatprep.subr.bf16.mxu0 %v1131
    %1856 = vmatpush1.bf16.msra.mxu0 %v1130
    %1857 = vmatprep.subr.bf16.mxu0 %v1163
    %1858 = vmatpush1.bf16.msra.mxu0 %v1162
    %1859 = vmatprep.subr.bf16.mxu0 %v1195
    %1860 = vmatpush1.bf16.msra.mxu0 %v1194
    %1861 = vmatprep.subr.bf16.mxu0 %v1227
    %1862 = vmatpush1.bf16.msra.mxu0 %v1226
    %1863 = vmatprep.subr.bf16.mxu0 %v1259
    %1864 = vmatpush1.bf16.msra.mxu0 %v1258
    %1865 = vmatprep.subr.bf16.mxu0 %v1291
    %1866 = vmatpush1.bf16.msra.mxu0 %v1290
    %1867 = vmatprep.subr.bf16.mxu0 0
    %1868 = vmatpush1.bf16.msra.mxu0 0
    %1869 = vmatprep.subr.bf16.mxu0 0
    %1870 = vmatpush1.bf16.msra.mxu0 0
    %1871 = vmatprep.subr.bf16.mxu0 0
    %1872 = vmatpush1.bf16.msra.mxu0 0
    %1873 = vmatprep.subr.bf16.mxu0 0
    %1874 = vmatpush1.bf16.msra.mxu0 0
    %1875 = vmatprep.subr.bf16.mxu0 0
    %1876 = vmatpush1.bf16.msra.mxu0 0
    %1877 = vmatprep.subr.bf16.mxu0 0
    %1878 = vmatpush1.bf16.msra.mxu0 0
    %1879 = vmatprep.subr.bf16.mxu0 0
    %1880 = vmatpush1.bf16.msra.mxu0 0
    %1881 = vmatprep.subr.bf16.mxu0 0
    %1882 = vmatpush1.bf16.msra.mxu0 0
    %1883 = vmatprep.mubr.bf16.mxu0 0
    %1884 = vmatmul.mubr.bf16.gmra.mrb[0].mxu0 %v27
    %v1885 = vpop.f32.mrb[0].mxu0
    %v1886 = vadd.f32 0.0, %v1885
    %v1887 = vpop.f32.mrb[0].mxu0
    %v1888 = vadd.f32 0.0, %v1887
    %v1889 = vpop.f32.mrb[0].mxu0
    %v1890 = vpop.f32.mrb[0].mxu0
    %1891 = vdwg.mxu0
    %1892 = vmatprep.subr.bf16.mxu0 %v1069
    %1893 = vmatpush1.bf16.msra.mxu0 %v1068
    %1894 = vmatprep.subr.bf16.mxu0 %v1101
    %1895 = vmatpush1.bf16.msra.mxu0 %v1100
    %1896 = vmatprep.subr.bf16.mxu0 %v1133
    %1897 = vmatpush1.bf16.msra.mxu0 %v1132
    %1898 = vmatprep.subr.bf16.mxu0 %v1165
    %1899 = vmatpush1.bf16.msra.mxu0 %v1164
    %1900 = vmatprep.subr.bf16.mxu0 %v1197
    %1901 = vmatpush1.bf16.msra.mxu0 %v1196
    %1902 = vmatprep.subr.bf16.mxu0 %v1229
    %1903 = vmatpush1.bf16.msra.mxu0 %v1228
    %1904 = vmatprep.subr.bf16.mxu0 %v1261
    %1905 = vmatpush1.bf16.msra.mxu0 %v1260
    %1906 = vmatprep.subr.bf16.mxu0 %v1293
    %1907 = vmatpush1.bf16.msra.mxu0 %v1292
    %1908 = vmatprep.subr.bf16.mxu0 0
    %1909 = vmatpush1.bf16.msra.mxu0 0
    %1910 = vmatprep.subr.bf16.mxu0 0
    %1911 = vmatpush1.bf16.msra.mxu0 0
    %1912 = vmatprep.subr.bf16.mxu0 0
    %1913 = vmatpush1.bf16.msra.mxu0 0
    %1914 = vmatprep.subr.bf16.mxu0 0
    %1915 = vmatpush1.bf16.msra.mxu0 0
    %1916 = vmatprep.subr.bf16.mxu0 0
    %1917 = vmatpush1.bf16.msra.mxu0 0
    %1918 = vmatprep.subr.bf16.mxu0 0
    %1919 = vmatpush1.bf16.msra.mxu0 0
    %1920 = vmatprep.subr.bf16.mxu0 0
    %1921 = vmatpush1.bf16.msra.mxu0 0
    %1922 = vmatprep.subr.bf16.mxu0 0
    %1923 = vmatpush1.bf16.msra.mxu0 0
    %1924 = vmatprep.mubr.bf16.mxu0 0
    %1925 = vmatmul.mubr.bf16.gmra.mrb[0].mxu0 %v27
    %v1926 = vpop.f32.mrb[0].mxu0
    %v1927 = vadd.f32 0.0, %v1926
    %v1928 = vpop.f32.mrb[0].mxu0
    %v1929 = vadd.f32 0.0, %v1928
    %v1930 = vpop.f32.mrb[0].mxu0
    %v1931 = vpop.f32.mrb[0].mxu0
    %1932 = vdwg.mxu0
    %1933 = vmatprep.subr.bf16.mxu0 %v1071
    %1934 = vmatpush1.bf16.msra.mxu0 %v1070
    %1935 = vmatprep.subr.bf16.mxu0 %v1103
    %1936 = vmatpush1.bf16.msra.mxu0 %v1102
    %1937 = vmatprep.subr.bf16.mxu0 %v1135
    %1938 = vmatpush1.bf16.msra.mxu0 %v1134
    %1939 = vmatprep.subr.bf16.mxu0 %v1167
    %1940 = vmatpush1.bf16.msra.mxu0 %v1166
    %1941 = vmatprep.subr.bf16.mxu0 %v1199
    %1942 = vmatpush1.bf16.msra.mxu0 %v1198
    %1943 = vmatprep.subr.bf16.mxu0 %v1231
    %1944 = vmatpush1.bf16.msra.mxu0 %v1230
    %1945 = vmatprep.subr.bf16.mxu0 %v1263
    %1946 = vmatpush1.bf16.msra.mxu0 %v1262
    %1947 = vmatprep.subr.bf16.mxu0 %v1295
    %1948 = vmatpush1.bf16.msra.mxu0 %v1294
    %1949 = vmatprep.subr.bf16.mxu0 0
    %1950 = vmatpush1.bf16.msra.mxu0 0
    %1951 = vmatprep.subr.bf16.mxu0 0
    %1952 = vmatpush1.bf16.msra.mxu0 0
    %1953 = vmatprep.subr.bf16.mxu0 0
    %1954 = vmatpush1.bf16.msra.mxu0 0
    %1955 = vmatprep.subr.bf16.mxu0 0
    %1956 = vmatpush1.bf16.msra.mxu0 0
    %1957 = vmatprep.subr.bf16.mxu0 0
    %1958 = vmatpush1.bf16.msra.mxu0 0
    %1959 = vmatprep.subr.bf16.mxu0 0
    %1960 = vmatpush1.bf16.msra.mxu0 0
    %1961 = vmatprep.subr.bf16.mxu0 0
    %1962 = vmatpush1.bf16.msra.mxu0 0
    %1963 = vmatprep.subr.bf16.mxu0 0
    %1964 = vmatpush1.bf16.msra.mxu0 0
    %1965 = vmatprep.mubr.bf16.mxu0 0
    %1966 = vmatmul.mubr.bf16.gmra.mrb[0].mxu0 %v27
    %v1967 = vpop.f32.mrb[0].mxu0
    %v1968 = vadd.f32 0.0, %v1967
    %v1969 = vpop.f32.mrb[0].mxu0
    %v1970 = vadd.f32 0.0, %v1969
    %v1971 = vpop.f32.mrb[0].mxu0
    %v1972 = vpop.f32.mrb[0].mxu0
    %1973 = vdwg.mxu0
    %1974 = vmatprep.subr.bf16.mxu0 %v1073
    %1975 = vmatpush1.bf16.msra.mxu0 %v1072
    %1976 = vmatprep.subr.bf16.mxu0 %v1105
    %1977 = vmatpush1.bf16.msra.mxu0 %v1104
    %1978 = vmatprep.subr.bf16.mxu0 %v1137
    %1979 = vmatpush1.bf16.msra.mxu0 %v1136
    %1980 = vmatprep.subr.bf16.mxu0 %v1169
    %1981 = vmatpush1.bf16.msra.mxu0 %v1168
    %1982 = vmatprep.subr.bf16.mxu0 %v1201
    %1983 = vmatpush1.bf16.msra.mxu0 %v1200
    %1984 = vmatprep.subr.bf16.mxu0 %v1233
    %1985 = vmatpush1.bf16.msra.mxu0 %v1232
    %1986 = vmatprep.subr.bf16.mxu0 %v1265
    %1987 = vmatpush1.bf16.msra.mxu0 %v1264
    %1988 = vmatprep.subr.bf16.mxu0 %v1297
    %1989 = vmatpush1.bf16.msra.mxu0 %v1296
    %1990 = vmatprep.subr.bf16.mxu0 0
    %1991 = vmatpush1.bf16.msra.mxu0 0
    %1992 = vmatprep.subr.bf16.mxu0 0
    %1993 = vmatpush1.bf16.msra.mxu0 0
    %1994 = vmatprep.subr.bf16.mxu0 0
    %1995 = vmatpush1.bf16.msra.mxu0 0
    %1996 = vmatprep.subr.bf16.mxu0 0
    %1997 = vmatpush1.bf16.msra.mxu0 0
    %1998 = vmatprep.subr.bf16.mxu0 0
    %1999 = vmatpush1.bf16.msra.mxu0 0
    %2000 = vmatprep.subr.bf16.mxu0 0
    %2001 = vmatpush1.bf16.msra.mxu0 0
    %2002 = vmatprep.subr.bf16.mxu0 0
    %2003 = vmatpush1.bf16.msra.mxu0 0
    %2004 = vmatprep.subr.bf16.mxu0 0
    %2005 = vmatpush1.bf16.msra.mxu0 0
    %2006 = vmatprep.mubr.bf16.mxu0 0
    %2007 = vmatmul.mubr.bf16.gmra.mrb[0].mxu0 %v27
    %v2008 = vpop.f32.mrb[0].mxu0
    %v2009 = vadd.f32 0.0, %v2008
    %v2010 = vpop.f32.mrb[0].mxu0
    %v2011 = vadd.f32 0.0, %v2010
    %v2012 = vpop.f32.mrb[0].mxu0
    %v2013 = vpop.f32.mrb[0].mxu0
    %2014 = vdwg.mxu0
    %2015 = vmatprep.subr.bf16.mxu0 %v1075
    %2016 = vmatpush1.bf16.msra.mxu0 %v1074
    %2017 = vmatprep.subr.bf16.mxu0 %v1107
    %2018 = vmatpush1.bf16.msra.mxu0 %v1106
    %2019 = vmatprep.subr.bf16.mxu0 %v1139
    %2020 = vmatpush1.bf16.msra.mxu0 %v1138
    %2021 = vmatprep.subr.bf16.mxu0 %v1171
    %2022 = vmatpush1.bf16.msra.mxu0 %v1170
    %2023 = vmatprep.subr.bf16.mxu0 %v1203
    %2024 = vmatpush1.bf16.msra.mxu0 %v1202
    %2025 = vmatprep.subr.bf16.mxu0 %v1235
    %2026 = vmatpush1.bf16.msra.mxu0 %v1234
    %2027 = vmatprep.subr.bf16.mxu0 %v1267
    %2028 = vmatpush1.bf16.msra.mxu0 %v1266
    %2029 = vmatprep.subr.bf16.mxu0 %v1299
    %2030 = vmatpush1.bf16.msra.mxu0 %v1298
    %2031 = vmatprep.subr.bf16.mxu0 0
    %2032 = vmatpush1.bf16.msra.mxu0 0
    %2033 = vmatprep.subr.bf16.mxu0 0
    %2034 = vmatpush1.bf16.msra.mxu0 0
    %2035 = vmatprep.subr.bf16.mxu0 0
    %2036 = vmatpush1.bf16.msra.mxu0 0
    %2037 = vmatprep.subr.bf16.mxu0 0
    %2038 = vmatpush1.bf16.msra.mxu0 0
    %2039 = vmatprep.subr.bf16.mxu0 0
    %2040 = vmatpush1.bf16.msra.mxu0 0
    %2041 = vmatprep.subr.bf16.mxu0 0
    %2042 = vmatpush1.bf16.msra.mxu0 0
    %2043 = vmatprep.subr.bf16.mxu0 0
    %2044 = vmatpush1.bf16.msra.mxu0 0
    %2045 = vmatprep.subr.bf16.mxu0 0
    %2046 = vmatpush1.bf16.msra.mxu0 0
    %2047 = vmatprep.mubr.bf16.mxu0 0
    %2048 = vmatmul.mubr.bf16.gmra.mrb[0].mxu0 %v27
    %v2049 = vpop.f32.mrb[0].mxu0
    %v2050 = vadd.f32 0.0, %v2049
    %v2051 = vpop.f32.mrb[0].mxu0
    %v2052 = vadd.f32 0.0, %v2051
    %v2053 = vpop.f32.mrb[0].mxu0
    %v2054 = vpop.f32.mrb[0].mxu0
    %2055 = vdwg.mxu0
    %2056 = vmatprep.subr.bf16.mxu0 %v1077
    %2057 = vmatpush1.bf16.msra.mxu0 %v1076
    %2058 = vmatprep.subr.bf16.mxu0 %v1109
    %2059 = vmatpush1.bf16.msra.mxu0 %v1108
    %2060 = vmatprep.subr.bf16.mxu0 %v1141
    %2061 = vmatpush1.bf16.msra.mxu0 %v1140
    %2062 = vmatprep.subr.bf16.mxu0 %v1173
    %2063 = vmatpush1.bf16.msra.mxu0 %v1172
    %2064 = vmatprep.subr.bf16.mxu0 %v1205
    %2065 = vmatpush1.bf16.msra.mxu0 %v1204
    %2066 = vmatprep.subr.bf16.mxu0 %v1237
    %2067 = vmatpush1.bf16.msra.mxu0 %v1236
    %2068 = vmatprep.subr.bf16.mxu0 %v1269
    %2069 = vmatpush1.bf16.msra.mxu0 %v1268
    %2070 = vmatprep.subr.bf16.mxu0 %v1301
    %2071 = vmatpush1.bf16.msra.mxu0 %v1300
    %2072 = vmatprep.subr.bf16.mxu0 0
    %2073 = vmatpush1.bf16.msra.mxu0 0
    %2074 = vmatprep.subr.bf16.mxu0 0
    %2075 = vmatpush1.bf16.msra.mxu0 0
    %2076 = vmatprep.subr.bf16.mxu0 0
    %2077 = vmatpush1.bf16.msra.mxu0 0
    %2078 = vmatprep.subr.bf16.mxu0 0
    %2079 = vmatpush1.bf16.msra.mxu0 0
    %2080 = vmatprep.subr.bf16.mxu0 0
    %2081 = vmatpush1.bf16.msra.mxu0 0
    %2082 = vmatprep.subr.bf16.mxu0 0
    %2083 = vmatpush1.bf16.msra.mxu0 0
    %2084 = vmatprep.subr.bf16.mxu0 0
    %2085 = vmatpush1.bf16.msra.mxu0 0
    %2086 = vmatprep.subr.bf16.mxu0 0
    %2087 = vmatpush1.bf16.msra.mxu0 0
    %2088 = vmatprep.mubr.bf16.mxu0 0
    %2089 = vmatmul.mubr.bf16.gmra.mrb[0].mxu0 %v27
    %v2090 = vpop.f32.mrb[0].mxu0
    %v2091 = vadd.f32 0.0, %v2090
    %v2092 = vpop.f32.mrb[0].mxu0
    %v2093 = vadd.f32 0.0, %v2092
    %v2094 = vpop.f32.mrb[0].mxu0
    %v2095 = vpop.f32.mrb[0].mxu0
    %2096 = vdwg.mxu0
    %2097 = vmatprep.subr.bf16.mxu0 %v1079
    %2098 = vmatpush1.bf16.msra.mxu0 %v1078
    %2099 = vmatprep.subr.bf16.mxu0 %v1111
    %2100 = vmatpush1.bf16.msra.mxu0 %v1110
    %2101 = vmatprep.subr.bf16.mxu0 %v1143
    %2102 = vmatpush1.bf16.msra.mxu0 %v1142
    %2103 = vmatprep.subr.bf16.mxu0 %v1175
    %2104 = vmatpush1.bf16.msra.mxu0 %v1174
    %2105 = vmatprep.subr.bf16.mxu0 %v1207
    %2106 = vmatpush1.bf16.msra.mxu0 %v1206
    %2107 = vmatprep.subr.bf16.mxu0 %v1239
    %2108 = vmatpush1.bf16.msra.mxu0 %v1238
    %2109 = vmatprep.subr.bf16.mxu0 %v1271
    %2110 = vmatpush1.bf16.msra.mxu0 %v1270
    %2111 = vmatprep.subr.bf16.mxu0 %v1303
    %2112 = vmatpush1.bf16.msra.mxu0 %v1302
    %2113 = vmatprep.subr.bf16.mxu0 0
    %2114 = vmatpush1.bf16.msra.mxu0 0
    %2115 = vmatprep.subr.bf16.mxu0 0
    %2116 = vmatpush1.bf16.msra.mxu0 0
    %2117 = vmatprep.subr.bf16.mxu0 0
    %2118 = vmatpush1.bf16.msra.mxu0 0
    %2119 = vmatprep.subr.bf16.mxu0 0
    %2120 = vmatpush1.bf16.msra.mxu0 0
    %2121 = vmatprep.subr.bf16.mxu0 0
    %2122 = vmatpush1.bf16.msra.mxu0 0
    %2123 = vmatprep.subr.bf16.mxu0 0
    %2124 = vmatpush1.bf16.msra.mxu0 0
    %2125 = vmatprep.subr.bf16.mxu0 0
    %2126 = vmatpush1.bf16.msra.mxu0 0
    %2127 = vmatprep.subr.bf16.mxu0 0
    %2128 = vmatpush1.bf16.msra.mxu0 0
    %2129 = vmatprep.mubr.bf16.mxu0 0
    %2130 = vmatmul.mubr.bf16.gmra.mrb[0].mxu0 %v27
    %v2131 = vpop.f32.mrb[0].mxu0
    %v2132 = vadd.f32 0.0, %v2131
    %v2133 = vpop.f32.mrb[0].mxu0
    %v2134 = vadd.f32 0.0, %v2133
    %v2135 = vpop.f32.mrb[0].mxu0
    %v2136 = vpop.f32.mrb[0].mxu0
    %2137 = vdwg.mxu0
    %2138 = vmatprep.subr.bf16.mxu0 %v1081
    %2139 = vmatpush1.bf16.msra.mxu0 %v1080
    %2140 = vmatprep.subr.bf16.mxu0 %v1113
    %2141 = vmatpush1.bf16.msra.mxu0 %v1112
    %2142 = vmatprep.subr.bf16.mxu0 %v1145
    %2143 = vmatpush1.bf16.msra.mxu0 %v1144
    %2144 = vmatprep.subr.bf16.mxu0 %v1177
    %2145 = vmatpush1.bf16.msra.mxu0 %v1176
    %2146 = vmatprep.subr.bf16.mxu0 %v1209
    %2147 = vmatpush1.bf16.msra.mxu0 %v1208
    %2148 = vmatprep.subr.bf16.mxu0 %v1241
    %2149 = vmatpush1.bf16.msra.mxu0 %v1240
    %2150 = vmatprep.subr.bf16.mxu0 %v1273
    %2151 = vmatpush1.bf16.msra.mxu0 %v1272
    %2152 = vmatprep.subr.bf16.mxu0 %v1305
    %2153 = vmatpush1.bf16.msra.mxu0 %v1304
    %2154 = vmatprep.subr.bf16.mxu0 0
    %2155 = vmatpush1.bf16.msra.mxu0 0
    %2156 = vmatprep.subr.bf16.mxu0 0
    %2157 = vmatpush1.bf16.msra.mxu0 0
    %2158 = vmatprep.subr.bf16.mxu0 0
    %2159 = vmatpush1.bf16.msra.mxu0 0
    %2160 = vmatprep.subr.bf16.mxu0 0
    %2161 = vmatpush1.bf16.msra.mxu0 0
    %2162 = vmatprep.subr.bf16.mxu0 0
    %2163 = vmatpush1.bf16.msra.mxu0 0
    %2164 = vmatprep.subr.bf16.mxu0 0
    %2165 = vmatpush1.bf16.msra.mxu0 0
    %2166 = vmatprep.subr.bf16.mxu0 0
    %2167 = vmatpush1.bf16.msra.mxu0 0
    %2168 = vmatprep.subr.bf16.mxu0 0
    %2169 = vmatpush1.bf16.msra.mxu0 0
    %2170 = vmatprep.mubr.bf16.mxu0 0
    %2171 = vmatmul.mubr.bf16.gmra.mrb[0].mxu0 %v27
    %v2172 = vpop.f32.mrb[0].mxu0
    %v2173 = vadd.f32 0.0, %v2172
    %v2174 = vpop.f32.mrb[0].mxu0
    %v2175 = vadd.f32 0.0, %v2174
    %v2176 = vpop.f32.mrb[0].mxu0
    %v2177 = vpop.f32.mrb[0].mxu0
    %2178 = vdwg.mxu0
    %2179 = vmatprep.subr.bf16.mxu0 %v1083
    %2180 = vmatpush1.bf16.msra.mxu0 %v1082
    %2181 = vmatprep.subr.bf16.mxu0 %v1115
    %2182 = vmatpush1.bf16.msra.mxu0 %v1114
    %2183 = vmatprep.subr.bf16.mxu0 %v1147
    %2184 = vmatpush1.bf16.msra.mxu0 %v1146
    %2185 = vmatprep.subr.bf16.mxu0 %v1179
    %2186 = vmatpush1.bf16.msra.mxu0 %v1178
    %2187 = vmatprep.subr.bf16.mxu0 %v1211
    %2188 = vmatpush1.bf16.msra.mxu0 %v1210
    %2189 = vmatprep.subr.bf16.mxu0 %v1243
    %2190 = vmatpush1.bf16.msra.mxu0 %v1242
    %2191 = vmatprep.subr.bf16.mxu0 %v1275
    %2192 = vmatpush1.bf16.msra.mxu0 %v1274
    %2193 = vmatprep.subr.bf16.mxu0 %v1307
    %2194 = vmatpush1.bf16.msra.mxu0 %v1306
    %2195 = vmatprep.subr.bf16.mxu0 0
    %2196 = vmatpush1.bf16.msra.mxu0 0
    %2197 = vmatprep.subr.bf16.mxu0 0
    %2198 = vmatpush1.bf16.msra.mxu0 0
    %2199 = vmatprep.subr.bf16.mxu0 0
    %2200 = vmatpush1.bf16.msra.mxu0 0
    %2201 = vmatprep.subr.bf16.mxu0 0
    %2202 = vmatpush1.bf16.msra.mxu0 0
    %2203 = vmatprep.subr.bf16.mxu0 0
    %2204 = vmatpush1.bf16.msra.mxu0 0
    %2205 = vmatprep.subr.bf16.mxu0 0
    %2206 = vmatpush1.bf16.msra.mxu0 0
    %2207 = vmatprep.subr.bf16.mxu0 0
    %2208 = vmatpush1.bf16.msra.mxu0 0
    %2209 = vmatprep.subr.bf16.mxu0 0
    %2210 = vmatpush1.bf16.msra.mxu0 0
    %2211 = vmatprep.mubr.bf16.mxu0 0
    %2212 = vmatmul.mubr.bf16.gmra.mrb[0].mxu0 %v27
    %v2213 = vpop.f32.mrb[0].mxu0
    %v2214 = vadd.f32 0.0, %v2213
    %v2215 = vpop.f32.mrb[0].mxu0
    %v2216 = vadd.f32 0.0, %v2215
    %v2217 = vpop.f32.mrb[0].mxu0
    %v2218 = vpop.f32.mrb[0].mxu0
    %2219 = vdwg.mxu0
    %2220 = vst [vmem:[%s2] sm:$0xff] %v1599
    %2221 = vst [vmem:[%s2 + $0x8] sm:$0xff] %v1601
    %2222 = vst [vmem:[%s2 + $0x10] sm:$0xff] %v1640
    %2223 = vst [vmem:[%s2 + $0x18] sm:$0xff] %v1642
    %2224 = vst [vmem:[%s2 + $0x20] sm:$0xff] %v1681
    %2225 = vst [vmem:[%s2 + $0x28] sm:$0xff] %v1683
    %2226 = vst [vmem:[%s2 + $0x30] sm:$0xff] %v1722
    %2227 = vst [vmem:[%s2 + $0x38] sm:$0xff] %v1724
    %2228 = vst [vmem:[%s2 + $0x40] sm:$0xff] %v1763
    %2229 = vst [vmem:[%s2 + $0x48] sm:$0xff] %v1765
    %2230 = vst [vmem:[%s2 + $0x50] sm:$0xff] %v1804
    %2231 = vst [vmem:[%s2 + $0x58] sm:$0xff] %v1806
    %2232 = vst [vmem:[%s2 + $0x60] sm:$0xff] %v1845
    %2233 = vst [vmem:[%s2 + $0x68] sm:$0xff] %v1847
    %2234 = vst [vmem:[%s2 + $0x70] sm:$0xff] %v1886
    %2235 = vst [vmem:[%s2 + $0x78] sm:$0xff] %v1888
    %2236 = vst [vmem:[%s2 + $0x80] sm:$0xff] %v1927
    %2237 = vst [vmem:[%s2 + $0x88] sm:$0xff] %v1929
    %2238 = vst [vmem:[%s2 + $0x90] sm:$0xff] %v1968
    %2239 = vst [vmem:[%s2 + $0x98] sm:$0xff] %v1970
    %2240 = vst [vmem:[%s2 + $0xa0] sm:$0xff] %v2009
    %2241 = vst [vmem:[%s2 + $0xa8] sm:$0xff] %v2011
    %2242 = vst [vmem:[%s2 + $0xb0] sm:$0xff] %v2050
    %2243 = vst [vmem:[%s2 + $0xb8] sm:$0xff] %v2052
    %2244 = vst [vmem:[%s2 + $0xc0] sm:$0xff] %v2091
    %2245 = vst [vmem:[%s2 + $0xc8] sm:$0xff] %v2093
    %2246 = vst [vmem:[%s2 + $0xd0] sm:$0xff] %v2132
    %2247 = vst [vmem:[%s2 + $0xd8] sm:$0xff] %v2134
    %2248 = vst [vmem:[%s2 + $0xe0] sm:$0xff] %v2173
    %2249 = vst [vmem:[%s2 + $0xe8] sm:$0xff] %v2175
    %2250 = vst [vmem:[%s2 + $0xf0] sm:$0xff] %v2214
    %2251 = vst [vmem:[%s2 + $0xf8] sm:$0xff] %v2216
    // Predicated region
    $region14: #{generator_forward.8} parent=1 // pred_check
      _
    $region15: #{generator_forward.8} parent=1 // pred_check_branch
      %2253 = sbr.rel (0) target = $region17
    $region16: #{generator_forward.8} parent=1 // pred_region
      _
    $region17: #{generator_forward.8} parent=1 // pred_fallthru
      _
    // Predicated region
    $region18: #{generator_forward.8} parent=1 // pred_check
      _
    $region19: #{generator_forward.8} parent=1 // pred_check_branch
      %2255 = sbr.rel (0) target = $region21
    $region20: #{generator_forward.8} parent=1 // pred_region
      _
    $region21: #{generator_forward.8} parent=1 // pred_fallthru
      _
    %2256 = vsyncpa [#allocation3], 1

// kernel: generator_forward.9
$region0: #{generator_forward.9}
  #allocation0 [shape = 'u32[]', space=smem, size = 0x4, offset = 0x4, fixed_abs, tag = 'smem constant byte address 0x4 - core index']
  #allocation1 [shape = 'u32[144,128]{1,0:T(1,128)}', space=vmem, size = 0x12000, scoped, tag = 'internal scratch']
  %s0 = inlined_call_operand.vmem [shape: f32[32,256], index: 0, kind: input, shape index: {}]
  %s1 = inlined_call_operand.vmem [shape: f32[2,256], index: 1, kind: output, shape index: {}]
  %s2 = sld [smem:[#allocation0]]
  $region18: #{generator_forward.9} parent=0
    _
  %s4 = ssub.s32 1, %s2
  %s5 = scalar_select 0, %s4, %s2
  // Predicated region
  $region2: #{generator_forward.9} parent=0 // pred_check
    _
  $region3: #{generator_forward.9} parent=0 // pred_check_branch
    %7 = sbr.rel (0) target = $region5
  $region4: #{generator_forward.9} parent=0 // pred_region
    _
  $region5: #{generator_forward.9} parent=0 // pred_fallthru
    _
  %p8 = scmp.eq.s32.totalorder 0, 0
  // Predicated region
  $region6: #{generator_forward.9} parent=0 // pred_check
    %p9 = pneg %p8
  $region7: #{generator_forward.9} parent=0 // pred_check_branch
    %11 = sbr.rel (%p9) target = $region9
  $region8: #{generator_forward.9} parent=0 // pred_region
    %12 = vst [vmem:[%s1] sm:$0xf] 0.0
  $region9: #{generator_forward.9} parent=0 // pred_fallthru
    _
  %v13 = vld [vmem:[%s0] sm:$0xff]
  %v14 = vld [vmem:[%s0 + $0x8] sm:$0xff]
  %v15 = vld [vmem:[%s0 + $0x10] sm:$0xff]
  %v16 = vld [vmem:[%s0 + $0x18] sm:$0xff]
  %v17 = vld [vmem:[%s0 + $0x20] sm:$0xff]
  %v18 = vld [vmem:[%s0 + $0x28] sm:$0xff]
  %v19 = vld [vmem:[%s0 + $0x30] sm:$0xff]
  %v20 = vld [vmem:[%s0 + $0x38] sm:$0xff]
  %v21 = vadd.f32 %v13, %v15
  %v22 = vadd.f32 %v21, %v17
  %v23 = vadd.f32 %v22, %v19
  %v24 = vrot.slane %v23, 4
  %v25 = vadd.f32 %v23, %v24
  %v26 = vrot.slane %v25, 2
  %v27 = vadd.f32 %v25, %v26
  %v28 = vrot.slane %v27, 1
  %v29 = vadd.f32 %v27, %v28
  %v30 = vadd.f32 %v14, %v16
  %v31 = vadd.f32 %v30, %v18
  %v32 = vadd.f32 %v31, %v20
  %v33 = vrot.slane %v32, 4
  %v34 = vadd.f32 %v32, %v33
  %v35 = vrot.slane %v34, 2
  %v36 = vadd.f32 %v34, %v35
  %v37 = vrot.slane %v36, 1
  %v38 = vadd.f32 %v36, %v37
  %v39 = vmul.f32 %v13, %v13
  %v40 = vmul.f32 %v14, %v14
  %v41 = vmul.f32 %v15, %v15
  %v42 = vmul.f32 %v16, %v16
  %v43 = vmul.f32 %v17, %v17
  %v44 = vmul.f32 %v18, %v18
  %v45 = vmul.f32 %v19, %v19
  %v46 = vmul.f32 %v20, %v20
  %v47 = vadd.f32 %v39, %v41
  %v48 = vadd.f32 %v47, %v43
  %v49 = vadd.f32 %v48, %v45
  %v50 = vrot.slane %v49, 4
  %v51 = vadd.f32 %v49, %v50
  %v52 = vrot.slane %v51, 2
  %v53 = vadd.f32 %v51, %v52
  %v54 = vrot.slane %v53, 1
  %v55 = vadd.f32 %v53, %v54
  %v56 = vadd.f32 %v40, %v42
  %v57 = vadd.f32 %v56, %v44
  %v58 = vadd.f32 %v57, %v46
  %v59 = vrot.slane %v58, 4
  %v60 = vadd.f32 %v58, %v59
  %v61 = vrot.slane %v60, 2
  %v62 = vadd.f32 %v60, %v61
  %v63 = vrot.slane %v62, 1
  %v64 = vadd.f32 %v62, %v63
  %v65 = vld [vmem:[%s1] sm:$0xf]
  %vm66 = vcmask 1040384
  %v67 = vsel %vm66, %v29, %v55
  %v68 = vsel %vm66, %v38, %v64
  %v71 = vcombine.low %v67, %v68
  %v73 = vunpack.c.l.s4 1983009808
  %v74 = vunpack.c.0.s8 %v73
  %v75 = vlaneseq
  %v76 = vshrl.u32 %v75, 7
  %v77 = vsub.s32 %v74, %v76
  %v78 = vrot.slane %v71, %v77
  %v80 = vadd.f32 %v65, %v78
  %81 = vst [vmem:[%s1] sm:$0xf] %v80
  // Predicated region
  $region10: #{generator_forward.9} parent=0 // pred_check
    _
  $region11: #{generator_forward.9} parent=0 // pred_check_branch
    %83 = sbr.rel (0) target = $region13
  $region12: #{generator_forward.9} parent=0 // pred_region
    _
  $region13: #{generator_forward.9} parent=0 // pred_fallthru
    _
  // Predicated region
  $region14: #{generator_forward.9} parent=0 // pred_check
    _
  $region15: #{generator_forward.9} parent=0 // pred_check_branch
    %85 = sbr.rel (0) target = $region17
  $region16: #{generator_forward.9} parent=0 // pred_region
    _
  $region17: #{generator_forward.9} parent=0 // pred_fallthru
    _

// kernel: generator_forward.10
$region0: #{generator_forward.10}
  #allocation0 [shape = 'u32[]', space=smem, size = 0x4, offset = 0x4, fixed_abs, tag = 'smem constant byte address 0x4 - core index']
  #allocation1 [shape = 'u32[144,128]{1,0:T(1,128)}', space=vmem, size = 0x12000, scoped, tag = 'internal scratch']
  %s0 = inlined_call_operand.vmem [shape: f32[32,256], index: 0, kind: input, shape index: {}]
  %s1 = inlined_call_operand.vmem [shape: f32[1,256], index: 1, kind: input, shape index: {}]
  %s2 = inlined_call_operand.vmem [shape: f32[1,256], index: 2, kind: input, shape index: {}]
  %s3 = inlined_call_operand.vmem [shape: bf16[256,2048], index: 3, kind: input, shape index: {}]
  %s4 = inlined_call_operand.vmem [shape: f32[32,2048], index: 4, kind: output, shape index: {}]
  %s5 = sld [smem:[#allocation0]]
  $region26: #{generator_forward.10} parent=0
    _
  %s7 = ssub.s32 1, %s5
  %s8 = scalar_select 0, %s7, %s5
  // Predicated region
  $region2: #{generator_forward.10} parent=0 // pred_check
    _
  $region3: #{generator_forward.10} parent=0 // pred_check_branch
    %10 = sbr.rel (0) target = $region5
  $region4: #{generator_forward.10} parent=0 // pred_region
    _
  $region5: #{generator_forward.10} parent=0 // pred_fallthru
    _
  // Predicated region
  $region6: #{generator_forward.10} parent=0 // pred_check
    _
  $region7: #{generator_forward.10} parent=0 // pred_check_branch
    %12 = sbr.rel (0) target = $region9
  $region8: #{generator_forward.10} parent=0 // pred_region
    _
  $region9: #{generator_forward.10} parent=0 // pred_fallthru
    _
  // Predicated region
  $region10: #{generator_forward.10} parent=0 // pred_check
    _
  $region11: #{generator_forward.10} parent=0 // pred_check_branch
    %14 = sbr.rel (0) target = $region13
  $region12: #{generator_forward.10} parent=0 // pred_region
    _
  $region13: #{generator_forward.10} parent=0 // pred_fallthru
    _
  // Predicated region
  $region14: #{generator_forward.10} parent=0 // pred_check
    _
  $region15: #{generator_forward.10} parent=0 // pred_check_branch
    %16 = sbr.rel (0) target = $region17
  $region16: #{generator_forward.10} parent=0 // pred_region
    _
  $region17: #{generator_forward.10} parent=0 // pred_fallthru
    _
  %v17 = vld [vmem:[%s0] sm:$0xff]
  %v18 = vld [vmem:[%s0 + $0x8] sm:$0xff]
  %v19 = vld [vmem:[%s0 + $0x10] sm:$0xff]
  %v20 = vld [vmem:[%s0 + $0x18] sm:$0xff]
  %v21 = vld [vmem:[%s0 + $0x20] sm:$0xff]
  %v22 = vld [vmem:[%s0 + $0x28] sm:$0xff]
  %v23 = vld [vmem:[%s0 + $0x30] sm:$0xff]
  %v24 = vld [vmem:[%s0 + $0x38] sm:$0xff]
  %v25 = vld [vmem:[%s1] sm:$0x3]
  %v27 = vlaneseq
  %v28 = vshrl.u32 %v27, 7
  %v29 = vsub.s32 0, %v28
  %v30 = vrot.slane %v25, %v29
  %v31 = vlaneseq
  %v32 = vshrl.u32 %v31, 7
  %v33 = vsub.s32 1, %v32
  %v34 = vrot.slane %v25, %v33
  %v37 = vmul.f32 %v17, %v30
  %v38 = vmul.f32 %v18, %v34
  %v39 = vmul.f32 %v19, %v30
  %v40 = vmul.f32 %v20, %v34
  %v41 = vmul.f32 %v21, %v30
  %v42 = vmul.f32 %v22, %v34
  %v43 = vmul.f32 %v23, %v30
  %v44 = vmul.f32 %v24, %v34
  %v45 = vld [vmem:[%s2] sm:$0x3]
  %v47 = vlaneseq
  %v48 = vshrl.u32 %v47, 7
  %v49 = vsub.s32 0, %v48
  %v50 = vrot.slane %v45, %v49
  %v51 = vlaneseq
  %v52 = vshrl.u32 %v51, 7
  %v53 = vsub.s32 1, %v52
  %v54 = vrot.slane %v45, %v53
  %v57 = vadd.f32 %v37, %v50
  %v58 = vadd.f32 %v38, %v54
  %v59 = vadd.f32 %v39, %v50
  %v60 = vadd.f32 %v40, %v54
  %v61 = vadd.f32 %v41, %v50
  %v62 = vadd.f32 %v42, %v54
  %v63 = vadd.f32 %v43, %v50
  %v64 = vadd.f32 %v44, %v54
  %v65 = vmax.f32 %v57, 0.0
  %v66 = vmax.f32 %v58, 0.0
  %v67 = vmax.f32 %v59, 0.0
  %v68 = vmax.f32 %v60, 0.0
  %v69 = vmax.f32 %v61, 0.0
  %v70 = vmax.f32 %v62, 0.0
  %v71 = vmax.f32 %v63, 0.0
  %v72 = vmax.f32 %v64, 0.0
  %v73 = vpack.c.bf16 %v67, %v65
  %v74 = vpack.c.bf16 %v68, %v66
  %v75 = vpack.c.bf16 %v71, %v69
  %v76 = vpack.c.bf16 %v72, %v70
  %v77 = vld [vmem:[%s3] sm:$0xff]
  %v78 = vld [vmem:[%s3 + $0x8] sm:$0xff]
  %v79 = vld [vmem:[%s3 + $0x10] sm:$0xff]
  %v80 = vld [vmem:[%s3 + $0x18] sm:$0xff]
  %v81 = vld [vmem:[%s3 + $0x20] sm:$0xff]
  %v82 = vld [vmem:[%s3 + $0x28] sm:$0xff]
  %v83 = vld [vmem:[%s3 + $0x30] sm:$0xff]
  %v84 = vld [vmem:[%s3 + $0x38] sm:$0xff]
  %v85 = vld [vmem:[%s3 + $0x40] sm:$0xff]
  %v86 = vld [vmem:[%s3 + $0x48] sm:$0xff]
  %v87 = vld [vmem:[%s3 + $0x50] sm:$0xff]
  %v88 = vld [vmem:[%s3 + $0x58] sm:$0xff]
  %v89 = vld [vmem:[%s3 + $0x60] sm:$0xff]
  %v90 = vld [vmem:[%s3 + $0x68] sm:$0xff]
  %v91 = vld [vmem:[%s3 + $0x70] sm:$0xff]
  %v92 = vld [vmem:[%s3 + $0x78] sm:$0xff]
  %v93 = vld [vmem:[%s3 + $0x80] sm:$0xff]
  %v94 = vld [vmem:[%s3 + $0x88] sm:$0xff]
  %v95 = vld [vmem:[%s3 + $0x90] sm:$0xff]
  %v96 = vld [vmem:[%s3 + $0x98] sm:$0xff]
  %v97 = vld [vmem:[%s3 + $0xa0] sm:$0xff]
  %v98 = vld [vmem:[%s3 + $0xa8] sm:$0xff]
  %v99 = vld [vmem:[%s3 + $0xb0] sm:$0xff]
  %v100 = vld [vmem:[%s3 + $0xb8] sm:$0xff]
  %v101 = vld [vmem:[%s3 + $0xc0] sm:$0xff]
  %v102 = vld [vmem:[%s3 + $0xc8] sm:$0xff]
  %v103 = vld [vmem:[%s3 + $0xd0] sm:$0xff]
  %v104 = vld [vmem:[%s3 + $0xd8] sm:$0xff]
  %v105 = vld [vmem:[%s3 + $0xe0] sm:$0xff]
  %v106 = vld [vmem:[%s3 + $0xe8] sm:$0xff]
  %v107 = vld [vmem:[%s3 + $0xf0] sm:$0xff]
  %v108 = vld [vmem:[%s3 + $0xf8] sm:$0xff]
  %v109 = vld [vmem:[%s3 + $0x100] sm:$0xff]
  %v110 = vld [vmem:[%s3 + $0x108] sm:$0xff]
  %v111 = vld [vmem:[%s3 + $0x110] sm:$0xff]
  %v112 = vld [vmem:[%s3 + $0x118] sm:$0xff]
  %v113 = vld [vmem:[%s3 + $0x120] sm:$0xff]
  %v114 = vld [vmem:[%s3 + $0x128] sm:$0xff]
  %v115 = vld [vmem:[%s3 + $0x130] sm:$0xff]
  %v116 = vld [vmem:[%s3 + $0x138] sm:$0xff]
  %v117 = vld [vmem:[%s3 + $0x140] sm:$0xff]
  %v118 = vld [vmem:[%s3 + $0x148] sm:$0xff]
  %v119 = vld [vmem:[%s3 + $0x150] sm:$0xff]
  %v120 = vld [vmem:[%s3 + $0x158] sm:$0xff]
  %v121 = vld [vmem:[%s3 + $0x160] sm:$0xff]
  %v122 = vld [vmem:[%s3 + $0x168] sm:$0xff]
  %v123 = vld [vmem:[%s3 + $0x170] sm:$0xff]
  %v124 = vld [vmem:[%s3 + $0x178] sm:$0xff]
  %v125 = vld [vmem:[%s3 + $0x180] sm:$0xff]
  %v126 = vld [vmem:[%s3 + $0x188] sm:$0xff]
  %v127 = vld [vmem:[%s3 + $0x190] sm:$0xff]
  %v128 = vld [vmem:[%s3 + $0x198] sm:$0xff]
  %v129 = vld [vmem:[%s3 + $0x1a0] sm:$0xff]
  %v130 = vld [vmem:[%s3 + $0x1a8] sm:$0xff]
  %v131 = vld [vmem:[%s3 + $0x1b0] sm:$0xff]
  %v132 = vld [vmem:[%s3 + $0x1b8] sm:$0xff]
  %v133 = vld [vmem:[%s3 + $0x1c0] sm:$0xff]
  %v134 = vld [vmem:[%s3 + $0x1c8] sm:$0xff]
  %v135 = vld [vmem:[%s3 + $0x1d0] sm:$0xff]
  %v136 = vld [vmem:[%s3 + $0x1d8] sm:$0xff]
  %v137 = vld [vmem:[%s3 + $0x1e0] sm:$0xff]
  %v138 = vld [vmem:[%s3 + $0x1e8] sm:$0xff]
  %v139 = vld [vmem:[%s3 + $0x1f0] sm:$0xff]
  %v140 = vld [vmem:[%s3 + $0x1f8] sm:$0xff]
  %v141 = vld [vmem:[%s3 + $0x200] sm:$0xff]
  %v142 = vld [vmem:[%s3 + $0x208] sm:$0xff]
  %v143 = vld [vmem:[%s3 + $0x210] sm:$0xff]
  %v144 = vld [vmem:[%s3 + $0x218] sm:$0xff]
  %v145 = vld [vmem:[%s3 + $0x220] sm:$0xff]
  %v146 = vld [vmem:[%s3 + $0x228] sm:$0xff]
  %v147 = vld [vmem:[%s3 + $0x230] sm:$0xff]
  %v148 = vld [vmem:[%s3 + $0x238] sm:$0xff]
  %v149 = vld [vmem:[%s3 + $0x240] sm:$0xff]
  %v150 = vld [vmem:[%s3 + $0x248] sm:$0xff]
  %v151 = vld [vmem:[%s3 + $0x250] sm:$0xff]
  %v152 = vld [vmem:[%s3 + $0x258] sm:$0xff]
  %v153 = vld [vmem:[%s3 + $0x260] sm:$0xff]
  %v154 = vld [vmem:[%s3 + $0x268] sm:$0xff]
  %v155 = vld [vmem:[%s3 + $0x270] sm:$0xff]
  %v156 = vld [vmem:[%s3 + $0x278] sm:$0xff]
  %v157 = vld [vmem:[%s3 + $0x280] sm:$0xff]
  %v158 = vld [vmem:[%s3 + $0x288] sm:$0xff]
  %v159 = vld [vmem:[%s3 + $0x290] sm:$0xff]
  %v160 = vld [vmem:[%s3 + $0x298] sm:$0xff]
  %v161 = vld [vmem:[%s3 + $0x2a0] sm:$0xff]
  %v162 = vld [vmem:[%s3 + $0x2a8] sm:$0xff]
  %v163 = vld [vmem:[%s3 + $0x2b0] sm:$0xff]
  %v164 = vld [vmem:[%s3 + $0x2b8] sm:$0xff]
  %v165 = vld [vmem:[%s3 + $0x2c0] sm:$0xff]
  %v166 = vld [vmem:[%s3 + $0x2c8] sm:$0xff]
  %v167 = vld [vmem:[%s3 + $0x2d0] sm:$0xff]
  %v168 = vld [vmem:[%s3 + $0x2d8] sm:$0xff]
  %v169 = vld [vmem:[%s3 + $0x2e0] sm:$0xff]
  %v170 = vld [vmem:[%s3 + $0x2e8] sm:$0xff]
  %v171 = vld [vmem:[%s3 + $0x2f0] sm:$0xff]
  %v172 = vld [vmem:[%s3 + $0x2f8] sm:$0xff]
  %v173 = vld [vmem:[%s3 + $0x300] sm:$0xff]
  %v174 = vld [vmem:[%s3 + $0x308] sm:$0xff]
  %v175 = vld [vmem:[%s3 + $0x310] sm:$0xff]
  %v176 = vld [vmem:[%s3 + $0x318] sm:$0xff]
  %v177 = vld [vmem:[%s3 + $0x320] sm:$0xff]
  %v178 = vld [vmem:[%s3 + $0x328] sm:$0xff]
  %v179 = vld [vmem:[%s3 + $0x330] sm:$0xff]
  %v180 = vld [vmem:[%s3 + $0x338] sm:$0xff]
  %v181 = vld [vmem:[%s3 + $0x340] sm:$0xff]
  %v182 = vld [vmem:[%s3 + $0x348] sm:$0xff]
  %v183 = vld [vmem:[%s3 + $0x350] sm:$0xff]
  %v184 = vld [vmem:[%s3 + $0x358] sm:$0xff]
  %v185 = vld [vmem:[%s3 + $0x360] sm:$0xff]
  %v186 = vld [vmem:[%s3 + $0x368] sm:$0xff]
  %v187 = vld [vmem:[%s3 + $0x370] sm:$0xff]
  %v188 = vld [vmem:[%s3 + $0x378] sm:$0xff]
  %v189 = vld [vmem:[%s3 + $0x380] sm:$0xff]
  %v190 = vld [vmem:[%s3 + $0x388] sm:$0xff]
  %v191 = vld [vmem:[%s3 + $0x390] sm:$0xff]
  %v192 = vld [vmem:[%s3 + $0x398] sm:$0xff]
  %v193 = vld [vmem:[%s3 + $0x3a0] sm:$0xff]
  %v194 = vld [vmem:[%s3 + $0x3a8] sm:$0xff]
  %v195 = vld [vmem:[%s3 + $0x3b0] sm:$0xff]
  %v196 = vld [vmem:[%s3 + $0x3b8] sm:$0xff]
  %v197 = vld [vmem:[%s3 + $0x3c0] sm:$0xff]
  %v198 = vld [vmem:[%s3 + $0x3c8] sm:$0xff]
  %v199 = vld [vmem:[%s3 + $0x3d0] sm:$0xff]
  %v200 = vld [vmem:[%s3 + $0x3d8] sm:$0xff]
  %v201 = vld [vmem:[%s3 + $0x3e0] sm:$0xff]
  %v202 = vld [vmem:[%s3 + $0x3e8] sm:$0xff]
  %v203 = vld [vmem:[%s3 + $0x3f0] sm:$0xff]
  %v204 = vld [vmem:[%s3 + $0x3f8] sm:$0xff]
  %v205 = vld [vmem:[%s3 + $0x400] sm:$0xff]
  %v206 = vld [vmem:[%s3 + $0x408] sm:$0xff]
  %v207 = vld [vmem:[%s3 + $0x410] sm:$0xff]
  %v208 = vld [vmem:[%s3 + $0x418] sm:$0xff]
  %v209 = vld [vmem:[%s3 + $0x420] sm:$0xff]
  %v210 = vld [vmem:[%s3 + $0x428] sm:$0xff]
  %v211 = vld [vmem:[%s3 + $0x430] sm:$0xff]
  %v212 = vld [vmem:[%s3 + $0x438] sm:$0xff]
  %v213 = vld [vmem:[%s3 + $0x440] sm:$0xff]
  %v214 = vld [vmem:[%s3 + $0x448] sm:$0xff]
  %v215 = vld [vmem:[%s3 + $0x450] sm:$0xff]
  %v216 = vld [vmem:[%s3 + $0x458] sm:$0xff]
  %v217 = vld [vmem:[%s3 + $0x460] sm:$0xff]
  %v218 = vld [vmem:[%s3 + $0x468] sm:$0xff]
  %v219 = vld [vmem:[%s3 + $0x470] sm:$0xff]
  %v220 = vld [vmem:[%s3 + $0x478] sm:$0xff]
  %v221 = vld [vmem:[%s3 + $0x480] sm:$0xff]
  %v222 = vld [vmem:[%s3 + $0x488] sm:$0xff]
  %v223 = vld [vmem:[%s3 + $0x490] sm:$0xff]
  %v224 = vld [vmem:[%s3 + $0x498] sm:$0xff]
  %v225 = vld [vmem:[%s3 + $0x4a0] sm:$0xff]
  %v226 = vld [vmem:[%s3 + $0x4a8] sm:$0xff]
  %v227 = vld [vmem:[%s3 + $0x4b0] sm:$0xff]
  %v228 = vld [vmem:[%s3 + $0x4b8] sm:$0xff]
  %v229 = vld [vmem:[%s3 + $0x4c0] sm:$0xff]
  %v230 = vld [vmem:[%s3 + $0x4c8] sm:$0xff]
  %v231 = vld [vmem:[%s3 + $0x4d0] sm:$0xff]
  %v232 = vld [vmem:[%s3 + $0x4d8] sm:$0xff]
  %v233 = vld [vmem:[%s3 + $0x4e0] sm:$0xff]
  %v234 = vld [vmem:[%s3 + $0x4e8] sm:$0xff]
  %v235 = vld [vmem:[%s3 + $0x4f0] sm:$0xff]
  %v236 = vld [vmem:[%s3 + $0x4f8] sm:$0xff]
  %v237 = vld [vmem:[%s3 + $0x500] sm:$0xff]
  %v238 = vld [vmem:[%s3 + $0x508] sm:$0xff]
  %v239 = vld [vmem:[%s3 + $0x510] sm:$0xff]
  %v240 = vld [vmem:[%s3 + $0x518] sm:$0xff]
  %v241 = vld [vmem:[%s3 + $0x520] sm:$0xff]
  %v242 = vld [vmem:[%s3 + $0x528] sm:$0xff]
  %v243 = vld [vmem:[%s3 + $0x530] sm:$0xff]
  %v244 = vld [vmem:[%s3 + $0x538] sm:$0xff]
  %v245 = vld [vmem:[%s3 + $0x540] sm:$0xff]
  %v246 = vld [vmem:[%s3 + $0x548] sm:$0xff]
  %v247 = vld [vmem:[%s3 + $0x550] sm:$0xff]
  %v248 = vld [vmem:[%s3 + $0x558] sm:$0xff]
  %v249 = vld [vmem:[%s3 + $0x560] sm:$0xff]
  %v250 = vld [vmem:[%s3 + $0x568] sm:$0xff]
  %v251 = vld [vmem:[%s3 + $0x570] sm:$0xff]
  %v252 = vld [vmem:[%s3 + $0x578] sm:$0xff]
  %v253 = vld [vmem:[%s3 + $0x580] sm:$0xff]
  %v254 = vld [vmem:[%s3 + $0x588] sm:$0xff]
  %v255 = vld [vmem:[%s3 + $0x590] sm:$0xff]
  %v256 = vld [vmem:[%s3 + $0x598] sm:$0xff]
  %v257 = vld [vmem:[%s3 + $0x5a0] sm:$0xff]
  %v258 = vld [vmem:[%s3 + $0x5a8] sm:$0xff]
  %v259 = vld [vmem:[%s3 + $0x5b0] sm:$0xff]
  %v260 = vld [vmem:[%s3 + $0x5b8] sm:$0xff]
  %v261 = vld [vmem:[%s3 + $0x5c0] sm:$0xff]
  %v262 = vld [vmem:[%s3 + $0x5c8] sm:$0xff]
  %v263 = vld [vmem:[%s3 + $0x5d0] sm:$0xff]
  %v264 = vld [vmem:[%s3 + $0x5d8] sm:$0xff]
  %v265 = vld [vmem:[%s3 + $0x5e0] sm:$0xff]
  %v266 = vld [vmem:[%s3 + $0x5e8] sm:$0xff]
  %v267 = vld [vmem:[%s3 + $0x5f0] sm:$0xff]
  %v268 = vld [vmem:[%s3 + $0x5f8] sm:$0xff]
  %v269 = vld [vmem:[%s3 + $0x600] sm:$0xff]
  %v270 = vld [vmem:[%s3 + $0x608] sm:$0xff]
  %v271 = vld [vmem:[%s3 + $0x610] sm:$0xff]
  %v272 = vld [vmem:[%s3 + $0x618] sm:$0xff]
  %v273 = vld [vmem:[%s3 + $0x620] sm:$0xff]
  %v274 = vld [vmem:[%s3 + $0x628] sm:$0xff]
  %v275 = vld [vmem:[%s3 + $0x630] sm:$0xff]
  %v276 = vld [vmem:[%s3 + $0x638] sm:$0xff]
  %v277 = vld [vmem:[%s3 + $0x640] sm:$0xff]
  %v278 = vld [vmem:[%s3 + $0x648] sm:$0xff]
  %v279 = vld [vmem:[%s3 + $0x650] sm:$0xff]
  %v280 = vld [vmem:[%s3 + $0x658] sm:$0xff]
  %v281 = vld [vmem:[%s3 + $0x660] sm:$0xff]
  %v282 = vld [vmem:[%s3 + $0x668] sm:$0xff]
  %v283 = vld [vmem:[%s3 + $0x670] sm:$0xff]
  %v284 = vld [vmem:[%s3 + $0x678] sm:$0xff]
  %v285 = vld [vmem:[%s3 + $0x680] sm:$0xff]
  %v286 = vld [vmem:[%s3 + $0x688] sm:$0xff]
  %v287 = vld [vmem:[%s3 + $0x690] sm:$0xff]
  %v288 = vld [vmem:[%s3 + $0x698] sm:$0xff]
  %v289 = vld [vmem:[%s3 + $0x6a0] sm:$0xff]
  %v290 = vld [vmem:[%s3 + $0x6a8] sm:$0xff]
  %v291 = vld [vmem:[%s3 + $0x6b0] sm:$0xff]
  %v292 = vld [vmem:[%s3 + $0x6b8] sm:$0xff]
  %v293 = vld [vmem:[%s3 + $0x6c0] sm:$0xff]
  %v294 = vld [vmem:[%s3 + $0x6c8] sm:$0xff]
  %v295 = vld [vmem:[%s3 + $0x6d0] sm:$0xff]
  %v296 = vld [vmem:[%s3 + $0x6d8] sm:$0xff]
  %v297 = vld [vmem:[%s3 + $0x6e0] sm:$0xff]
  %v298 = vld [vmem:[%s3 + $0x6e8] sm:$0xff]
  %v299 = vld [vmem:[%s3 + $0x6f0] sm:$0xff]
  %v300 = vld [vmem:[%s3 + $0x6f8] sm:$0xff]
  %v301 = vld [vmem:[%s3 + $0x700] sm:$0xff]
  %v302 = vld [vmem:[%s3 + $0x708] sm:$0xff]
  %v303 = vld [vmem:[%s3 + $0x710] sm:$0xff]
  %v304 = vld [vmem:[%s3 + $0x718] sm:$0xff]
  %v305 = vld [vmem:[%s3 + $0x720] sm:$0xff]
  %v306 = vld [vmem:[%s3 + $0x728] sm:$0xff]
  %v307 = vld [vmem:[%s3 + $0x730] sm:$0xff]
  %v308 = vld [vmem:[%s3 + $0x738] sm:$0xff]
  %v309 = vld [vmem:[%s3 + $0x740] sm:$0xff]
  %v310 = vld [vmem:[%s3 + $0x748] sm:$0xff]
  %v311 = vld [vmem:[%s3 + $0x750] sm:$0xff]
  %v312 = vld [vmem:[%s3 + $0x758] sm:$0xff]
  %v313 = vld [vmem:[%s3 + $0x760] sm:$0xff]
  %v314 = vld [vmem:[%s3 + $0x768] sm:$0xff]
  %v315 = vld [vmem:[%s3 + $0x770] sm:$0xff]
  %v316 = vld [vmem:[%s3 + $0x778] sm:$0xff]
  %v317 = vld [vmem:[%s3 + $0x780] sm:$0xff]
  %v318 = vld [vmem:[%s3 + $0x788] sm:$0xff]
  %v319 = vld [vmem:[%s3 + $0x790] sm:$0xff]
  %v320 = vld [vmem:[%s3 + $0x798] sm:$0xff]
  %v321 = vld [vmem:[%s3 + $0x7a0] sm:$0xff]
  %v322 = vld [vmem:[%s3 + $0x7a8] sm:$0xff]
  %v323 = vld [vmem:[%s3 + $0x7b0] sm:$0xff]
  %v324 = vld [vmem:[%s3 + $0x7b8] sm:$0xff]
  %v325 = vld [vmem:[%s3 + $0x7c0] sm:$0xff]
  %v326 = vld [vmem:[%s3 + $0x7c8] sm:$0xff]
  %v327 = vld [vmem:[%s3 + $0x7d0] sm:$0xff]
  %v328 = vld [vmem:[%s3 + $0x7d8] sm:$0xff]
  %v329 = vld [vmem:[%s3 + $0x7e0] sm:$0xff]
  %v330 = vld [vmem:[%s3 + $0x7e8] sm:$0xff]
  %v331 = vld [vmem:[%s3 + $0x7f0] sm:$0xff]
  %v332 = vld [vmem:[%s3 + $0x7f8] sm:$0xff]
  %v589 = vunpack.c.l.b16 %v77
  %v590 = vunpack.c.h.b16 %v77
  %v591 = vunpack.c.l.b16 %v78
  %v592 = vunpack.c.h.b16 %v78
  %v593 = vunpack.c.l.b16 %v79
  %v594 = vunpack.c.h.b16 %v79
  %v595 = vunpack.c.l.b16 %v80
  %v596 = vunpack.c.h.b16 %v80
  %v597 = vunpack.c.l.b16 %v81
  %v598 = vunpack.c.h.b16 %v81
  %v599 = vunpack.c.l.b16 %v82
  %v600 = vunpack.c.h.b16 %v82
  %v601 = vunpack.c.l.b16 %v83
  %v602 = vunpack.c.h.b16 %v83
  %v603 = vunpack.c.l.b16 %v84
  %v604 = vunpack.c.h.b16 %v84
  %v605 = vunpack.c.l.b16 %v85
  %v606 = vunpack.c.h.b16 %v85
  %v607 = vunpack.c.l.b16 %v86
  %v608 = vunpack.c.h.b16 %v86
  %v609 = vunpack.c.l.b16 %v87
  %v610 = vunpack.c.h.b16 %v87
  %v611 = vunpack.c.l.b16 %v88
  %v612 = vunpack.c.h.b16 %v88
  %v613 = vunpack.c.l.b16 %v89
  %v614 = vunpack.c.h.b16 %v89
  %v615 = vunpack.c.l.b16 %v90
  %v616 = vunpack.c.h.b16 %v90
  %v617 = vunpack.c.l.b16 %v91
  %v618 = vunpack.c.h.b16 %v91
  %v619 = vunpack.c.l.b16 %v92
  %v620 = vunpack.c.h.b16 %v92
  %v621 = vunpack.c.l.b16 %v93
  %v622 = vunpack.c.h.b16 %v93
  %v623 = vunpack.c.l.b16 %v94
  %v624 = vunpack.c.h.b16 %v94
  %v625 = vunpack.c.l.b16 %v95
  %v626 = vunpack.c.h.b16 %v95
  %v627 = vunpack.c.l.b16 %v96
  %v628 = vunpack.c.h.b16 %v96
  %v629 = vunpack.c.l.b16 %v97
  %v630 = vunpack.c.h.b16 %v97
  %v631 = vunpack.c.l.b16 %v98
  %v632 = vunpack.c.h.b16 %v98
  %v633 = vunpack.c.l.b16 %v99
  %v634 = vunpack.c.h.b16 %v99
  %v635 = vunpack.c.l.b16 %v100
  %v636 = vunpack.c.h.b16 %v100
  %v637 = vunpack.c.l.b16 %v101
  %v638 = vunpack.c.h.b16 %v101
  %v639 = vunpack.c.l.b16 %v102
  %v640 = vunpack.c.h.b16 %v102
  %v641 = vunpack.c.l.b16 %v103
  %v642 = vunpack.c.h.b16 %v103
  %v643 = vunpack.c.l.b16 %v104
  %v644 = vunpack.c.h.b16 %v104
  %v645 = vunpack.c.l.b16 %v105
  %v646 = vunpack.c.h.b16 %v105
  %v647 = vunpack.c.l.b16 %v106
  %v648 = vunpack.c.h.b16 %v106
  %v649 = vunpack.c.l.b16 %v107
  %v650 = vunpack.c.h.b16 %v107
  %v651 = vunpack.c.l.b16 %v108
  %v652 = vunpack.c.h.b16 %v108
  %v653 = vunpack.c.l.b16 %v109
  %v654 = vunpack.c.h.b16 %v109
  %v655 = vunpack.c.l.b16 %v110
  %v656 = vunpack.c.h.b16 %v110
  %v657 = vunpack.c.l.b16 %v111
  %v658 = vunpack.c.h.b16 %v111
  %v659 = vunpack.c.l.b16 %v112
  %v660 = vunpack.c.h.b16 %v112
  %v661 = vunpack.c.l.b16 %v113
  %v662 = vunpack.c.h.b16 %v113
  %v663 = vunpack.c.l.b16 %v114
  %v664 = vunpack.c.h.b16 %v114
  %v665 = vunpack.c.l.b16 %v115
  %v666 = vunpack.c.h.b16 %v115
  %v667 = vunpack.c.l.b16 %v116
  %v668 = vunpack.c.h.b16 %v116
  %v669 = vunpack.c.l.b16 %v117
  %v670 = vunpack.c.h.b16 %v117
  %v671 = vunpack.c.l.b16 %v118
  %v672 = vunpack.c.h.b16 %v118
  %v673 = vunpack.c.l.b16 %v119
  %v674 = vunpack.c.h.b16 %v119
  %v675 = vunpack.c.l.b16 %v120
  %v676 = vunpack.c.h.b16 %v120
  %v677 = vunpack.c.l.b16 %v121
  %v678 = vunpack.c.h.b16 %v121
  %v679 = vunpack.c.l.b16 %v122
  %v680 = vunpack.c.h.b16 %v122
  %v681 = vunpack.c.l.b16 %v123
  %v682 = vunpack.c.h.b16 %v123
  %v683 = vunpack.c.l.b16 %v124
  %v684 = vunpack.c.h.b16 %v124
  %v685 = vunpack.c.l.b16 %v125
  %v686 = vunpack.c.h.b16 %v125
  %v687 = vunpack.c.l.b16 %v126
  %v688 = vunpack.c.h.b16 %v126
  %v689 = vunpack.c.l.b16 %v127
  %v690 = vunpack.c.h.b16 %v127
  %v691 = vunpack.c.l.b16 %v128
  %v692 = vunpack.c.h.b16 %v128
  %v693 = vunpack.c.l.b16 %v129
  %v694 = vunpack.c.h.b16 %v129
  %v695 = vunpack.c.l.b16 %v130
  %v696 = vunpack.c.h.b16 %v130
  %v697 = vunpack.c.l.b16 %v131
  %v698 = vunpack.c.h.b16 %v131
  %v699 = vunpack.c.l.b16 %v132
  %v700 = vunpack.c.h.b16 %v132
  %v701 = vunpack.c.l.b16 %v133
  %v702 = vunpack.c.h.b16 %v133
  %v703 = vunpack.c.l.b16 %v134
  %v704 = vunpack.c.h.b16 %v134
  %v705 = vunpack.c.l.b16 %v135
  %v706 = vunpack.c.h.b16 %v135
  %v707 = vunpack.c.l.b16 %v136
  %v708 = vunpack.c.h.b16 %v136
  %v709 = vunpack.c.l.b16 %v137
  %v710 = vunpack.c.h.b16 %v137
  %v711 = vunpack.c.l.b16 %v138
  %v712 = vunpack.c.h.b16 %v138
  %v713 = vunpack.c.l.b16 %v139
  %v714 = vunpack.c.h.b16 %v139
  %v715 = vunpack.c.l.b16 %v140
  %v716 = vunpack.c.h.b16 %v140
  %v717 = vunpack.c.l.b16 %v141
  %v718 = vunpack.c.h.b16 %v141
  %v719 = vunpack.c.l.b16 %v142
  %v720 = vunpack.c.h.b16 %v142
  %v721 = vunpack.c.l.b16 %v143
  %v722 = vunpack.c.h.b16 %v143
  %v723 = vunpack.c.l.b16 %v144
  %v724 = vunpack.c.h.b16 %v144
  %v725 = vunpack.c.l.b16 %v145
  %v726 = vunpack.c.h.b16 %v145
  %v727 = vunpack.c.l.b16 %v146
  %v728 = vunpack.c.h.b16 %v146
  %v729 = vunpack.c.l.b16 %v147
  %v730 = vunpack.c.h.b16 %v147
  %v731 = vunpack.c.l.b16 %v148
  %v732 = vunpack.c.h.b16 %v148
  %v733 = vunpack.c.l.b16 %v149
  %v734 = vunpack.c.h.b16 %v149
  %v735 = vunpack.c.l.b16 %v150
  %v736 = vunpack.c.h.b16 %v150
  %v737 = vunpack.c.l.b16 %v151
  %v738 = vunpack.c.h.b16 %v151
  %v739 = vunpack.c.l.b16 %v152
  %v740 = vunpack.c.h.b16 %v152
  %v741 = vunpack.c.l.b16 %v153
  %v742 = vunpack.c.h.b16 %v153
  %v743 = vunpack.c.l.b16 %v154
  %v744 = vunpack.c.h.b16 %v154
  %v745 = vunpack.c.l.b16 %v155
  %v746 = vunpack.c.h.b16 %v155
  %v747 = vunpack.c.l.b16 %v156
  %v748 = vunpack.c.h.b16 %v156
  %v749 = vunpack.c.l.b16 %v157
  %v750 = vunpack.c.h.b16 %v157
  %v751 = vunpack.c.l.b16 %v158
  %v752 = vunpack.c.h.b16 %v158
  %v753 = vunpack.c.l.b16 %v159
  %v754 = vunpack.c.h.b16 %v159
  %v755 = vunpack.c.l.b16 %v160
  %v756 = vunpack.c.h.b16 %v160
  %v757 = vunpack.c.l.b16 %v161
  %v758 = vunpack.c.h.b16 %v161
  %v759 = vunpack.c.l.b16 %v162
  %v760 = vunpack.c.h.b16 %v162
  %v761 = vunpack.c.l.b16 %v163
  %v762 = vunpack.c.h.b16 %v163
  %v763 = vunpack.c.l.b16 %v164
  %v764 = vunpack.c.h.b16 %v164
  %v765 = vunpack.c.l.b16 %v165
  %v766 = vunpack.c.h.b16 %v165
  %v767 = vunpack.c.l.b16 %v166
  %v768 = vunpack.c.h.b16 %v166
  %v769 = vunpack.c.l.b16 %v167
  %v770 = vunpack.c.h.b16 %v167
  %v771 = vunpack.c.l.b16 %v168
  %v772 = vunpack.c.h.b16 %v168
  %v773 = vunpack.c.l.b16 %v169
  %v774 = vunpack.c.h.b16 %v169
  %v775 = vunpack.c.l.b16 %v170
  %v776 = vunpack.c.h.b16 %v170
  %v777 = vunpack.c.l.b16 %v171
  %v778 = vunpack.c.h.b16 %v171
  %v779 = vunpack.c.l.b16 %v172
  %v780 = vunpack.c.h.b16 %v172
  %v781 = vunpack.c.l.b16 %v173
  %v782 = vunpack.c.h.b16 %v173
  %v783 = vunpack.c.l.b16 %v174
  %v784 = vunpack.c.h.b16 %v174
  %v785 = vunpack.c.l.b16 %v175
  %v786 = vunpack.c.h.b16 %v175
  %v787 = vunpack.c.l.b16 %v176
  %v788 = vunpack.c.h.b16 %v176
  %v789 = vunpack.c.l.b16 %v177
  %v790 = vunpack.c.h.b16 %v177
  %v791 = vunpack.c.l.b16 %v178
  %v792 = vunpack.c.h.b16 %v178
  %v793 = vunpack.c.l.b16 %v179
  %v794 = vunpack.c.h.b16 %v179
  %v795 = vunpack.c.l.b16 %v180
  %v796 = vunpack.c.h.b16 %v180
  %v797 = vunpack.c.l.b16 %v181
  %v798 = vunpack.c.h.b16 %v181
  %v799 = vunpack.c.l.b16 %v182
  %v800 = vunpack.c.h.b16 %v182
  %v801 = vunpack.c.l.b16 %v183
  %v802 = vunpack.c.h.b16 %v183
  %v803 = vunpack.c.l.b16 %v184
  %v804 = vunpack.c.h.b16 %v184
  %v805 = vunpack.c.l.b16 %v185
  %v806 = vunpack.c.h.b16 %v185
  %v807 = vunpack.c.l.b16 %v186
  %v808 = vunpack.c.h.b16 %v186
  %v809 = vunpack.c.l.b16 %v187
  %v810 = vunpack.c.h.b16 %v187
  %v811 = vunpack.c.l.b16 %v188
  %v812 = vunpack.c.h.b16 %v188
  %v813 = vunpack.c.l.b16 %v189
  %v814 = vunpack.c.h.b16 %v189
  %v815 = vunpack.c.l.b16 %v190
  %v816 = vunpack.c.h.b16 %v190
  %v817 = vunpack.c.l.b16 %v191
  %v818 = vunpack.c.h.b16 %v191
  %v819 = vunpack.c.l.b16 %v192
  %v820 = vunpack.c.h.b16 %v192
  %v821 = vunpack.c.l.b16 %v193
  %v822 = vunpack.c.h.b16 %v193
  %v823 = vunpack.c.l.b16 %v194
  %v824 = vunpack.c.h.b16 %v194
  %v825 = vunpack.c.l.b16 %v195
  %v826 = vunpack.c.h.b16 %v195
  %v827 = vunpack.c.l.b16 %v196
  %v828 = vunpack.c.h.b16 %v196
  %v829 = vunpack.c.l.b16 %v197
  %v830 = vunpack.c.h.b16 %v197
  %v831 = vunpack.c.l.b16 %v198
  %v832 = vunpack.c.h.b16 %v198
  %v833 = vunpack.c.l.b16 %v199
  %v834 = vunpack.c.h.b16 %v199
  %v835 = vunpack.c.l.b16 %v200
  %v836 = vunpack.c.h.b16 %v200
  %v837 = vunpack.c.l.b16 %v201
  %v838 = vunpack.c.h.b16 %v201
  %v839 = vunpack.c.l.b16 %v202
  %v840 = vunpack.c.h.b16 %v202
  %v841 = vunpack.c.l.b16 %v203
  %v842 = vunpack.c.h.b16 %v203
  %v843 = vunpack.c.l.b16 %v204
  %v844 = vunpack.c.h.b16 %v204
  %v845 = vunpack.c.l.b16 %v205
  %v846 = vunpack.c.h.b16 %v205
  %v847 = vunpack.c.l.b16 %v206
  %v848 = vunpack.c.h.b16 %v206
  %v849 = vunpack.c.l.b16 %v207
  %v850 = vunpack.c.h.b16 %v207
  %v851 = vunpack.c.l.b16 %v208
  %v852 = vunpack.c.h.b16 %v208
  %v853 = vunpack.c.l.b16 %v209
  %v854 = vunpack.c.h.b16 %v209
  %v855 = vunpack.c.l.b16 %v210
  %v856 = vunpack.c.h.b16 %v210
  %v857 = vunpack.c.l.b16 %v211
  %v858 = vunpack.c.h.b16 %v211
  %v859 = vunpack.c.l.b16 %v212
  %v860 = vunpack.c.h.b16 %v212
  %v861 = vunpack.c.l.b16 %v213
  %v862 = vunpack.c.h.b16 %v213
  %v863 = vunpack.c.l.b16 %v214
  %v864 = vunpack.c.h.b16 %v214
  %v865 = vunpack.c.l.b16 %v215
  %v866 = vunpack.c.h.b16 %v215
  %v867 = vunpack.c.l.b16 %v216
  %v868 = vunpack.c.h.b16 %v216
  %v869 = vunpack.c.l.b16 %v217
  %v870 = vunpack.c.h.b16 %v217
  %v871 = vunpack.c.l.b16 %v218
  %v872 = vunpack.c.h.b16 %v218
  %v873 = vunpack.c.l.b16 %v219
  %v874 = vunpack.c.h.b16 %v219
  %v875 = vunpack.c.l.b16 %v220
  %v876 = vunpack.c.h.b16 %v220
  %v877 = vunpack.c.l.b16 %v221
  %v878 = vunpack.c.h.b16 %v221
  %v879 = vunpack.c.l.b16 %v222
  %v880 = vunpack.c.h.b16 %v222
  %v881 = vunpack.c.l.b16 %v223
  %v882 = vunpack.c.h.b16 %v223
  %v883 = vunpack.c.l.b16 %v224
  %v884 = vunpack.c.h.b16 %v224
  %v885 = vunpack.c.l.b16 %v225
  %v886 = vunpack.c.h.b16 %v225
  %v887 = vunpack.c.l.b16 %v226
  %v888 = vunpack.c.h.b16 %v226
  %v889 = vunpack.c.l.b16 %v227
  %v890 = vunpack.c.h.b16 %v227
  %v891 = vunpack.c.l.b16 %v228
  %v892 = vunpack.c.h.b16 %v228
  %v893 = vunpack.c.l.b16 %v229
  %v894 = vunpack.c.h.b16 %v229
  %v895 = vunpack.c.l.b16 %v230
  %v896 = vunpack.c.h.b16 %v230
  %v897 = vunpack.c.l.b16 %v231
  %v898 = vunpack.c.h.b16 %v231
  %v899 = vunpack.c.l.b16 %v232
  %v900 = vunpack.c.h.b16 %v232
  %v901 = vunpack.c.l.b16 %v233
  %v902 = vunpack.c.h.b16 %v233
  %v903 = vunpack.c.l.b16 %v234
  %v904 = vunpack.c.h.b16 %v234
  %v905 = vunpack.c.l.b16 %v235
  %v906 = vunpack.c.h.b16 %v235
  %v907 = vunpack.c.l.b16 %v236
  %v908 = vunpack.c.h.b16 %v236
  %v909 = vunpack.c.l.b16 %v237
  %v910 = vunpack.c.h.b16 %v237
  %v911 = vunpack.c.l.b16 %v238
  %v912 = vunpack.c.h.b16 %v238
  %v913 = vunpack.c.l.b16 %v239
  %v914 = vunpack.c.h.b16 %v239
  %v915 = vunpack.c.l.b16 %v240
  %v916 = vunpack.c.h.b16 %v240
  %v917 = vunpack.c.l.b16 %v241
  %v918 = vunpack.c.h.b16 %v241
  %v919 = vunpack.c.l.b16 %v242
  %v920 = vunpack.c.h.b16 %v242
  %v921 = vunpack.c.l.b16 %v243
  %v922 = vunpack.c.h.b16 %v243
  %v923 = vunpack.c.l.b16 %v244
  %v924 = vunpack.c.h.b16 %v244
  %v925 = vunpack.c.l.b16 %v245
  %v926 = vunpack.c.h.b16 %v245
  %v927 = vunpack.c.l.b16 %v246
  %v928 = vunpack.c.h.b16 %v246
  %v929 = vunpack.c.l.b16 %v247
  %v930 = vunpack.c.h.b16 %v247
  %v931 = vunpack.c.l.b16 %v248
  %v932 = vunpack.c.h.b16 %v248
  %v933 = vunpack.c.l.b16 %v249
  %v934 = vunpack.c.h.b16 %v249
  %v935 = vunpack.c.l.b16 %v250
  %v936 = vunpack.c.h.b16 %v250
  %v937 = vunpack.c.l.b16 %v251
  %v938 = vunpack.c.h.b16 %v251
  %v939 = vunpack.c.l.b16 %v252
  %v940 = vunpack.c.h.b16 %v252
  %v941 = vunpack.c.l.b16 %v253
  %v942 = vunpack.c.h.b16 %v253
  %v943 = vunpack.c.l.b16 %v254
  %v944 = vunpack.c.h.b16 %v254
  %v945 = vunpack.c.l.b16 %v255
  %v946 = vunpack.c.h.b16 %v255
  %v947 = vunpack.c.l.b16 %v256
  %v948 = vunpack.c.h.b16 %v256
  %v949 = vunpack.c.l.b16 %v257
  %v950 = vunpack.c.h.b16 %v257
  %v951 = vunpack.c.l.b16 %v258
  %v952 = vunpack.c.h.b16 %v258
  %v953 = vunpack.c.l.b16 %v259
  %v954 = vunpack.c.h.b16 %v259
  %v955 = vunpack.c.l.b16 %v260
  %v956 = vunpack.c.h.b16 %v260
  %v957 = vunpack.c.l.b16 %v261
  %v958 = vunpack.c.h.b16 %v261
  %v959 = vunpack.c.l.b16 %v262
  %v960 = vunpack.c.h.b16 %v262
  %v961 = vunpack.c.l.b16 %v263
  %v962 = vunpack.c.h.b16 %v263
  %v963 = vunpack.c.l.b16 %v264
  %v964 = vunpack.c.h.b16 %v264
  %v965 = vunpack.c.l.b16 %v265
  %v966 = vunpack.c.h.b16 %v265
  %v967 = vunpack.c.l.b16 %v266
  %v968 = vunpack.c.h.b16 %v266
  %v969 = vunpack.c.l.b16 %v267
  %v970 = vunpack.c.h.b16 %v267
  %v971 = vunpack.c.l.b16 %v268
  %v972 = vunpack.c.h.b16 %v268
  %v973 = vunpack.c.l.b16 %v269
  %v974 = vunpack.c.h.b16 %v269
  %v975 = vunpack.c.l.b16 %v270
  %v976 = vunpack.c.h.b16 %v270
  %v977 = vunpack.c.l.b16 %v271
  %v978 = vunpack.c.h.b16 %v271
  %v979 = vunpack.c.l.b16 %v272
  %v980 = vunpack.c.h.b16 %v272
  %v981 = vunpack.c.l.b16 %v273
  %v982 = vunpack.c.h.b16 %v273
  %v983 = vunpack.c.l.b16 %v274
  %v984 = vunpack.c.h.b16 %v274
  %v985 = vunpack.c.l.b16 %v275
  %v986 = vunpack.c.h.b16 %v275
  %v987 = vunpack.c.l.b16 %v276
  %v988 = vunpack.c.h.b16 %v276
  %v989 = vunpack.c.l.b16 %v277
  %v990 = vunpack.c.h.b16 %v277
  %v991 = vunpack.c.l.b16 %v278
  %v992 = vunpack.c.h.b16 %v278
  %v993 = vunpack.c.l.b16 %v279
  %v994 = vunpack.c.h.b16 %v279
  %v995 = vunpack.c.l.b16 %v280
  %v996 = vunpack.c.h.b16 %v280
  %v997 = vunpack.c.l.b16 %v281
  %v998 = vunpack.c.h.b16 %v281
  %v999 = vunpack.c.l.b16 %v282
  %v1000 = vunpack.c.h.b16 %v282
  %v1001 = vunpack.c.l.b16 %v283
  %v1002 = vunpack.c.h.b16 %v283
  %v1003 = vunpack.c.l.b16 %v284
  %v1004 = vunpack.c.h.b16 %v284
  %v1005 = vunpack.c.l.b16 %v285
  %v1006 = vunpack.c.h.b16 %v285
  %v1007 = vunpack.c.l.b16 %v286
  %v1008 = vunpack.c.h.b16 %v286
  %v1009 = vunpack.c.l.b16 %v287
  %v1010 = vunpack.c.h.b16 %v287
  %v1011 = vunpack.c.l.b16 %v288
  %v1012 = vunpack.c.h.b16 %v288
  %v1013 = vunpack.c.l.b16 %v289
  %v1014 = vunpack.c.h.b16 %v289
  %v1015 = vunpack.c.l.b16 %v290
  %v1016 = vunpack.c.h.b16 %v290
  %v1017 = vunpack.c.l.b16 %v291
  %v1018 = vunpack.c.h.b16 %v291
  %v1019 = vunpack.c.l.b16 %v292
  %v1020 = vunpack.c.h.b16 %v292
  %v1021 = vunpack.c.l.b16 %v293
  %v1022 = vunpack.c.h.b16 %v293
  %v1023 = vunpack.c.l.b16 %v294
  %v1024 = vunpack.c.h.b16 %v294
  %v1025 = vunpack.c.l.b16 %v295
  %v1026 = vunpack.c.h.b16 %v295
  %v1027 = vunpack.c.l.b16 %v296
  %v1028 = vunpack.c.h.b16 %v296
  %v1029 = vunpack.c.l.b16 %v297
  %v1030 = vunpack.c.h.b16 %v297
  %v1031 = vunpack.c.l.b16 %v298
  %v1032 = vunpack.c.h.b16 %v298
  %v1033 = vunpack.c.l.b16 %v299
  %v1034 = vunpack.c.h.b16 %v299
  %v1035 = vunpack.c.l.b16 %v300
  %v1036 = vunpack.c.h.b16 %v300
  %v1037 = vunpack.c.l.b16 %v301
  %v1038 = vunpack.c.h.b16 %v301
  %v1039 = vunpack.c.l.b16 %v302
  %v1040 = vunpack.c.h.b16 %v302
  %v1041 = vunpack.c.l.b16 %v303
  %v1042 = vunpack.c.h.b16 %v303
  %v1043 = vunpack.c.l.b16 %v304
  %v1044 = vunpack.c.h.b16 %v304
  %v1045 = vunpack.c.l.b16 %v305
  %v1046 = vunpack.c.h.b16 %v305
  %v1047 = vunpack.c.l.b16 %v306
  %v1048 = vunpack.c.h.b16 %v306
  %v1049 = vunpack.c.l.b16 %v307
  %v1050 = vunpack.c.h.b16 %v307
  %v1051 = vunpack.c.l.b16 %v308
  %v1052 = vunpack.c.h.b16 %v308
  %v1053 = vunpack.c.l.b16 %v309
  %v1054 = vunpack.c.h.b16 %v309
  %v1055 = vunpack.c.l.b16 %v310
  %v1056 = vunpack.c.h.b16 %v310
  %v1057 = vunpack.c.l.b16 %v311
  %v1058 = vunpack.c.h.b16 %v311
  %v1059 = vunpack.c.l.b16 %v312
  %v1060 = vunpack.c.h.b16 %v312
  %v1061 = vunpack.c.l.b16 %v313
  %v1062 = vunpack.c.h.b16 %v313
  %v1063 = vunpack.c.l.b16 %v314
  %v1064 = vunpack.c.h.b16 %v314
  %v1065 = vunpack.c.l.b16 %v315
  %v1066 = vunpack.c.h.b16 %v315
  %v1067 = vunpack.c.l.b16 %v316
  %v1068 = vunpack.c.h.b16 %v316
  %v1069 = vunpack.c.l.b16 %v317
  %v1070 = vunpack.c.h.b16 %v317
  %v1071 = vunpack.c.l.b16 %v318
  %v1072 = vunpack.c.h.b16 %v318
  %v1073 = vunpack.c.l.b16 %v319
  %v1074 = vunpack.c.h.b16 %v319
  %v1075 = vunpack.c.l.b16 %v320
  %v1076 = vunpack.c.h.b16 %v320
  %v1077 = vunpack.c.l.b16 %v321
  %v1078 = vunpack.c.h.b16 %v321
  %v1079 = vunpack.c.l.b16 %v322
  %v1080 = vunpack.c.h.b16 %v322
  %v1081 = vunpack.c.l.b16 %v323
  %v1082 = vunpack.c.h.b16 %v323
  %v1083 = vunpack.c.l.b16 %v324
  %v1084 = vunpack.c.h.b16 %v324
  %v1085 = vunpack.c.l.b16 %v325
  %v1086 = vunpack.c.h.b16 %v325
  %v1087 = vunpack.c.l.b16 %v326
  %v1088 = vunpack.c.h.b16 %v326
  %v1089 = vunpack.c.l.b16 %v327
  %v1090 = vunpack.c.h.b16 %v327
  %v1091 = vunpack.c.l.b16 %v328
  %v1092 = vunpack.c.h.b16 %v328
  %v1093 = vunpack.c.l.b16 %v329
  %v1094 = vunpack.c.h.b16 %v329
  %v1095 = vunpack.c.l.b16 %v330
  %v1096 = vunpack.c.h.b16 %v330
  %v1097 = vunpack.c.l.b16 %v331
  %v1098 = vunpack.c.h.b16 %v331
  %v1099 = vunpack.c.l.b16 %v332
  %v1100 = vunpack.c.h.b16 %v332
  %v1101 = vpack.c.b16 %v605, %v589
  %v1102 = vpack.c.b16 %v606, %v590
  %v1103 = vpack.c.b16 %v607, %v591
  %v1104 = vpack.c.b16 %v608, %v592
  %v1105 = vpack.c.b16 %v609, %v593
  %v1106 = vpack.c.b16 %v610, %v594
  %v1107 = vpack.c.b16 %v611, %v595
  %v1108 = vpack.c.b16 %v612, %v596
  %v1109 = vpack.c.b16 %v613, %v597
  %v1110 = vpack.c.b16 %v614, %v598
  %v1111 = vpack.c.b16 %v615, %v599
  %v1112 = vpack.c.b16 %v616, %v600
  %v1113 = vpack.c.b16 %v617, %v601
  %v1114 = vpack.c.b16 %v618, %v602
  %v1115 = vpack.c.b16 %v619, %v603
  %v1116 = vpack.c.b16 %v620, %v604
  %v1117 = vpack.c.b16 %v637, %v621
  %v1118 = vpack.c.b16 %v638, %v622
  %v1119 = vpack.c.b16 %v639, %v623
  %v1120 = vpack.c.b16 %v640, %v624
  %v1121 = vpack.c.b16 %v641, %v625
  %v1122 = vpack.c.b16 %v642, %v626
  %v1123 = vpack.c.b16 %v643, %v627
  %v1124 = vpack.c.b16 %v644, %v628
  %v1125 = vpack.c.b16 %v645, %v629
  %v1126 = vpack.c.b16 %v646, %v630
  %v1127 = vpack.c.b16 %v647, %v631
  %v1128 = vpack.c.b16 %v648, %v632
  %v1129 = vpack.c.b16 %v649, %v633
  %v1130 = vpack.c.b16 %v650, %v634
  %v1131 = vpack.c.b16 %v651, %v635
  %v1132 = vpack.c.b16 %v652, %v636
  %v1133 = vpack.c.b16 %v669, %v653
  %v1134 = vpack.c.b16 %v670, %v654
  %v1135 = vpack.c.b16 %v671, %v655
  %v1136 = vpack.c.b16 %v672, %v656
  %v1137 = vpack.c.b16 %v673, %v657
  %v1138 = vpack.c.b16 %v674, %v658
  %v1139 = vpack.c.b16 %v675, %v659
  %v1140 = vpack.c.b16 %v676, %v660
  %v1141 = vpack.c.b16 %v677, %v661
  %v1142 = vpack.c.b16 %v678, %v662
  %v1143 = vpack.c.b16 %v679, %v663
  %v1144 = vpack.c.b16 %v680, %v664
  %v1145 = vpack.c.b16 %v681, %v665
  %v1146 = vpack.c.b16 %v682, %v666
  %v1147 = vpack.c.b16 %v683, %v667
  %v1148 = vpack.c.b16 %v684, %v668
  %v1149 = vpack.c.b16 %v701, %v685
  %v1150 = vpack.c.b16 %v702, %v686
  %v1151 = vpack.c.b16 %v703, %v687
  %v1152 = vpack.c.b16 %v704, %v688
  %v1153 = vpack.c.b16 %v705, %v689
  %v1154 = vpack.c.b16 %v706, %v690
  %v1155 = vpack.c.b16 %v707, %v691
  %v1156 = vpack.c.b16 %v708, %v692
  %v1157 = vpack.c.b16 %v709, %v693
  %v1158 = vpack.c.b16 %v710, %v694
  %v1159 = vpack.c.b16 %v711, %v695
  %v1160 = vpack.c.b16 %v712, %v696
  %v1161 = vpack.c.b16 %v713, %v697
  %v1162 = vpack.c.b16 %v714, %v698
  %v1163 = vpack.c.b16 %v715, %v699
  %v1164 = vpack.c.b16 %v716, %v700
  %v1165 = vpack.c.b16 %v733, %v717
  %v1166 = vpack.c.b16 %v734, %v718
  %v1167 = vpack.c.b16 %v735, %v719
  %v1168 = vpack.c.b16 %v736, %v720
  %v1169 = vpack.c.b16 %v737, %v721
  %v1170 = vpack.c.b16 %v738, %v722
  %v1171 = vpack.c.b16 %v739, %v723
  %v1172 = vpack.c.b16 %v740, %v724
  %v1173 = vpack.c.b16 %v741, %v725
  %v1174 = vpack.c.b16 %v742, %v726
  %v1175 = vpack.c.b16 %v743, %v727
  %v1176 = vpack.c.b16 %v744, %v728
  %v1177 = vpack.c.b16 %v745, %v729
  %v1178 = vpack.c.b16 %v746, %v730
  %v1179 = vpack.c.b16 %v747, %v731
  %v1180 = vpack.c.b16 %v748, %v732
  %v1181 = vpack.c.b16 %v765, %v749
  %v1182 = vpack.c.b16 %v766, %v750
  %v1183 = vpack.c.b16 %v767, %v751
  %v1184 = vpack.c.b16 %v768, %v752
  %v1185 = vpack.c.b16 %v769, %v753
  %v1186 = vpack.c.b16 %v770, %v754
  %v1187 = vpack.c.b16 %v771, %v755
  %v1188 = vpack.c.b16 %v772, %v756
  %v1189 = vpack.c.b16 %v773, %v757
  %v1190 = vpack.c.b16 %v774, %v758
  %v1191 = vpack.c.b16 %v775, %v759
  %v1192 = vpack.c.b16 %v776, %v760
  %v1193 = vpack.c.b16 %v777, %v761
  %v1194 = vpack.c.b16 %v778, %v762
  %v1195 = vpack.c.b16 %v779, %v763
  %v1196 = vpack.c.b16 %v780, %v764
  %v1197 = vpack.c.b16 %v797, %v781
  %v1198 = vpack.c.b16 %v798, %v782
  %v1199 = vpack.c.b16 %v799, %v783
  %v1200 = vpack.c.b16 %v800, %v784
  %v1201 = vpack.c.b16 %v801, %v785
  %v1202 = vpack.c.b16 %v802, %v786
  %v1203 = vpack.c.b16 %v803, %v787
  %v1204 = vpack.c.b16 %v804, %v788
  %v1205 = vpack.c.b16 %v805, %v789
  %v1206 = vpack.c.b16 %v806, %v790
  %v1207 = vpack.c.b16 %v807, %v791
  %v1208 = vpack.c.b16 %v808, %v792
  %v1209 = vpack.c.b16 %v809, %v793
  %v1210 = vpack.c.b16 %v810, %v794
  %v1211 = vpack.c.b16 %v811, %v795
  %v1212 = vpack.c.b16 %v812, %v796
  %v1213 = vpack.c.b16 %v829, %v813
  %v1214 = vpack.c.b16 %v830, %v814
  %v1215 = vpack.c.b16 %v831, %v815
  %v1216 = vpack.c.b16 %v832, %v816
  %v1217 = vpack.c.b16 %v833, %v817
  %v1218 = vpack.c.b16 %v834, %v818
  %v1219 = vpack.c.b16 %v835, %v819
  %v1220 = vpack.c.b16 %v836, %v820
  %v1221 = vpack.c.b16 %v837, %v821
  %v1222 = vpack.c.b16 %v838, %v822
  %v1223 = vpack.c.b16 %v839, %v823
  %v1224 = vpack.c.b16 %v840, %v824
  %v1225 = vpack.c.b16 %v841, %v825
  %v1226 = vpack.c.b16 %v842, %v826
  %v1227 = vpack.c.b16 %v843, %v827
  %v1228 = vpack.c.b16 %v844, %v828
  %v1229 = vpack.c.b16 %v861, %v845
  %v1230 = vpack.c.b16 %v862, %v846
  %v1231 = vpack.c.b16 %v863, %v847
  %v1232 = vpack.c.b16 %v864, %v848
  %v1233 = vpack.c.b16 %v865, %v849
  %v1234 = vpack.c.b16 %v866, %v850
  %v1235 = vpack.c.b16 %v867, %v851
  %v1236 = vpack.c.b16 %v868, %v852
  %v1237 = vpack.c.b16 %v869, %v853
  %v1238 = vpack.c.b16 %v870, %v854
  %v1239 = vpack.c.b16 %v871, %v855
  %v1240 = vpack.c.b16 %v872, %v856
  %v1241 = vpack.c.b16 %v873, %v857
  %v1242 = vpack.c.b16 %v874, %v858
  %v1243 = vpack.c.b16 %v875, %v859
  %v1244 = vpack.c.b16 %v876, %v860
  %v1245 = vpack.c.b16 %v893, %v877
  %v1246 = vpack.c.b16 %v894, %v878
  %v1247 = vpack.c.b16 %v895, %v879
  %v1248 = vpack.c.b16 %v896, %v880
  %v1249 = vpack.c.b16 %v897, %v881
  %v1250 = vpack.c.b16 %v898, %v882
  %v1251 = vpack.c.b16 %v899, %v883
  %v1252 = vpack.c.b16 %v900, %v884
  %v1253 = vpack.c.b16 %v901, %v885
  %v1254 = vpack.c.b16 %v902, %v886
  %v1255 = vpack.c.b16 %v903, %v887
  %v1256 = vpack.c.b16 %v904, %v888
  %v1257 = vpack.c.b16 %v905, %v889
  %v1258 = vpack.c.b16 %v906, %v890
  %v1259 = vpack.c.b16 %v907, %v891
  %v1260 = vpack.c.b16 %v908, %v892
  %v1261 = vpack.c.b16 %v925, %v909
  %v1262 = vpack.c.b16 %v926, %v910
  %v1263 = vpack.c.b16 %v927, %v911
  %v1264 = vpack.c.b16 %v928, %v912
  %v1265 = vpack.c.b16 %v929, %v913
  %v1266 = vpack.c.b16 %v930, %v914
  %v1267 = vpack.c.b16 %v931, %v915
  %v1268 = vpack.c.b16 %v932, %v916
  %v1269 = vpack.c.b16 %v933, %v917
  %v1270 = vpack.c.b16 %v934, %v918
  %v1271 = vpack.c.b16 %v935, %v919
  %v1272 = vpack.c.b16 %v936, %v920
  %v1273 = vpack.c.b16 %v937, %v921
  %v1274 = vpack.c.b16 %v938, %v922
  %v1275 = vpack.c.b16 %v939, %v923
  %v1276 = vpack.c.b16 %v940, %v924
  %v1277 = vpack.c.b16 %v957, %v941
  %v1278 = vpack.c.b16 %v958, %v942
  %v1279 = vpack.c.b16 %v959, %v943
  %v1280 = vpack.c.b16 %v960, %v944
  %v1281 = vpack.c.b16 %v961, %v945
  %v1282 = vpack.c.b16 %v962, %v946
  %v1283 = vpack.c.b16 %v963, %v947
  %v1284 = vpack.c.b16 %v964, %v948
  %v1285 = vpack.c.b16 %v965, %v949
  %v1286 = vpack.c.b16 %v966, %v950
  %v1287 = vpack.c.b16 %v967, %v951
  %v1288 = vpack.c.b16 %v968, %v952
  %v1289 = vpack.c.b16 %v969, %v953
  %v1290 = vpack.c.b16 %v970, %v954
  %v1291 = vpack.c.b16 %v971, %v955
  %v1292 = vpack.c.b16 %v972, %v956
  %v1293 = vpack.c.b16 %v989, %v973
  %v1294 = vpack.c.b16 %v990, %v974
  %v1295 = vpack.c.b16 %v991, %v975
  %v1296 = vpack.c.b16 %v992, %v976
  %v1297 = vpack.c.b16 %v993, %v977
  %v1298 = vpack.c.b16 %v994, %v978
  %v1299 = vpack.c.b16 %v995, %v979
  %v1300 = vpack.c.b16 %v996, %v980
  %v1301 = vpack.c.b16 %v997, %v981
  %v1302 = vpack.c.b16 %v998, %v982
  %v1303 = vpack.c.b16 %v999, %v983
  %v1304 = vpack.c.b16 %v1000, %v984
  %v1305 = vpack.c.b16 %v1001, %v985
  %v1306 = vpack.c.b16 %v1002, %v986
  %v1307 = vpack.c.b16 %v1003, %v987
  %v1308 = vpack.c.b16 %v1004, %v988
  %v1309 = vpack.c.b16 %v1021, %v1005
  %v1310 = vpack.c.b16 %v1022, %v1006
  %v1311 = vpack.c.b16 %v1023, %v1007
  %v1312 = vpack.c.b16 %v1024, %v1008
  %v1313 = vpack.c.b16 %v1025, %v1009
  %v1314 = vpack.c.b16 %v1026, %v1010
  %v1315 = vpack.c.b16 %v1027, %v1011
  %v1316 = vpack.c.b16 %v1028, %v1012
  %v1317 = vpack.c.b16 %v1029, %v1013
  %v1318 = vpack.c.b16 %v1030, %v1014
  %v1319 = vpack.c.b16 %v1031, %v1015
  %v1320 = vpack.c.b16 %v1032, %v1016
  %v1321 = vpack.c.b16 %v1033, %v1017
  %v1322 = vpack.c.b16 %v1034, %v1018
  %v1323 = vpack.c.b16 %v1035, %v1019
  %v1324 = vpack.c.b16 %v1036, %v1020
  %v1325 = vpack.c.b16 %v1053, %v1037
  %v1326 = vpack.c.b16 %v1054, %v1038
  %v1327 = vpack.c.b16 %v1055, %v1039
  %v1328 = vpack.c.b16 %v1056, %v1040
  %v1329 = vpack.c.b16 %v1057, %v1041
  %v1330 = vpack.c.b16 %v1058, %v1042
  %v1331 = vpack.c.b16 %v1059, %v1043
  %v1332 = vpack.c.b16 %v1060, %v1044
  %v1333 = vpack.c.b16 %v1061, %v1045
  %v1334 = vpack.c.b16 %v1062, %v1046
  %v1335 = vpack.c.b16 %v1063, %v1047
  %v1336 = vpack.c.b16 %v1064, %v1048
  %v1337 = vpack.c.b16 %v1065, %v1049
  %v1338 = vpack.c.b16 %v1066, %v1050
  %v1339 = vpack.c.b16 %v1067, %v1051
  %v1340 = vpack.c.b16 %v1068, %v1052
  %v1341 = vpack.c.b16 %v1085, %v1069
  %v1342 = vpack.c.b16 %v1086, %v1070
  %v1343 = vpack.c.b16 %v1087, %v1071
  %v1344 = vpack.c.b16 %v1088, %v1072
  %v1345 = vpack.c.b16 %v1089, %v1073
  %v1346 = vpack.c.b16 %v1090, %v1074
  %v1347 = vpack.c.b16 %v1091, %v1075
  %v1348 = vpack.c.b16 %v1092, %v1076
  %v1349 = vpack.c.b16 %v1093, %v1077
  %v1350 = vpack.c.b16 %v1094, %v1078
  %v1351 = vpack.c.b16 %v1095, %v1079
  %v1352 = vpack.c.b16 %v1096, %v1080
  %v1353 = vpack.c.b16 %v1097, %v1081
  %v1354 = vpack.c.b16 %v1098, %v1082
  %v1355 = vpack.c.b16 %v1099, %v1083
  %v1356 = vpack.c.b16 %v1100, %v1084
  %1613 = vmatprep.subr.bf16.mxu0 %v1102
  %1614 = vmatpush1.bf16.msra.mxu0 %v1101
  %1615 = vmatprep.subr.bf16.mxu0 %v1118
  %1616 = vmatpush1.bf16.msra.mxu0 %v1117
  %1617 = vmatprep.subr.bf16.mxu0 %v1134
  %1618 = vmatpush1.bf16.msra.mxu0 %v1133
  %1619 = vmatprep.subr.bf16.mxu0 %v1150
  %1620 = vmatpush1.bf16.msra.mxu0 %v1149
  %1621 = vmatprep.subr.bf16.mxu0 %v1166
  %1622 = vmatpush1.bf16.msra.mxu0 %v1165
  %1623 = vmatprep.subr.bf16.mxu0 %v1182
  %1624 = vmatpush1.bf16.msra.mxu0 %v1181
  %1625 = vmatprep.subr.bf16.mxu0 %v1198
  %1626 = vmatpush1.bf16.msra.mxu0 %v1197
  %1627 = vmatprep.subr.bf16.mxu0 %v1214
  %1628 = vmatpush1.bf16.msra.mxu0 %v1213
  %1629 = vmatprep.subr.bf16.mxu0 %v1230
  %1630 = vmatpush1.bf16.msra.mxu0 %v1229
  %1631 = vmatprep.subr.bf16.mxu0 %v1246
  %1632 = vmatpush1.bf16.msra.mxu0 %v1245
  %1633 = vmatprep.subr.bf16.mxu0 %v1262
  %1634 = vmatpush1.bf16.msra.mxu0 %v1261
  %1635 = vmatprep.subr.bf16.mxu0 %v1278
  %1636 = vmatpush1.bf16.msra.mxu0 %v1277
  %1637 = vmatprep.subr.bf16.mxu0 %v1294
  %1638 = vmatpush1.bf16.msra.mxu0 %v1293
  %1639 = vmatprep.subr.bf16.mxu0 %v1310
  %1640 = vmatpush1.bf16.msra.mxu0 %v1309
  %1641 = vmatprep.subr.bf16.mxu0 %v1326
  %1642 = vmatpush1.bf16.msra.mxu0 %v1325
  %1643 = vmatprep.subr.bf16.mxu0 %v1342
  %1644 = vmatpush1.bf16.msra.mxu0 %v1341
  %1645 = vmatprep.mubr.bf16.mxu0 %v74
  %1646 = vmatmul.mubr.bf16.gmra.mrb[0].mxu0 %v73
  %v1647 = vpop.f32.mrb[0].mxu0
  %v1648 = vadd.f32 0.0, %v1647
  %v1649 = vpop.f32.mrb[0].mxu0
  %v1650 = vadd.f32 0.0, %v1649
  %v1651 = vpop.f32.mrb[0].mxu0
  %v1652 = vadd.f32 0.0, %v1651
  %v1653 = vpop.f32.mrb[0].mxu0
  %v1654 = vadd.f32 0.0, %v1653
  %1655 = vmatprep.mubr.bf16.mxu0 %v76
  %1656 = vmatmul.mubr.bf16.gmra.mrb[0].mxu0 %v75
  %v1657 = vpop.f32.mrb[0].mxu0
  %v1658 = vadd.f32 0.0, %v1657
  %v1659 = vpop.f32.mrb[0].mxu0
  %v1660 = vadd.f32 0.0, %v1659
  %v1661 = vpop.f32.mrb[0].mxu0
  %v1662 = vadd.f32 0.0, %v1661
  %v1663 = vpop.f32.mrb[0].mxu0
  %v1664 = vadd.f32 0.0, %v1663
  %1665 = vdwg.mxu0
  %1666 = vmatprep.subr.bf16.mxu0 %v1104
  %1667 = vmatpush1.bf16.msra.mxu0 %v1103
  %1668 = vmatprep.subr.bf16.mxu0 %v1120
  %1669 = vmatpush1.bf16.msra.mxu0 %v1119
  %1670 = vmatprep.subr.bf16.mxu0 %v1136
  %1671 = vmatpush1.bf16.msra.mxu0 %v1135
  %1672 = vmatprep.subr.bf16.mxu0 %v1152
  %1673 = vmatpush1.bf16.msra.mxu0 %v1151
  %1674 = vmatprep.subr.bf16.mxu0 %v1168
  %1675 = vmatpush1.bf16.msra.mxu0 %v1167
  %1676 = vmatprep.subr.bf16.mxu0 %v1184
  %1677 = vmatpush1.bf16.msra.mxu0 %v1183
  %1678 = vmatprep.subr.bf16.mxu0 %v1200
  %1679 = vmatpush1.bf16.msra.mxu0 %v1199
  %1680 = vmatprep.subr.bf16.mxu0 %v1216
  %1681 = vmatpush1.bf16.msra.mxu0 %v1215
  %1682 = vmatprep.subr.bf16.mxu0 %v1232
  %1683 = vmatpush1.bf16.msra.mxu0 %v1231
  %1684 = vmatprep.subr.bf16.mxu0 %v1248
  %1685 = vmatpush1.bf16.msra.mxu0 %v1247
  %1686 = vmatprep.subr.bf16.mxu0 %v1264
  %1687 = vmatpush1.bf16.msra.mxu0 %v1263
  %1688 = vmatprep.subr.bf16.mxu0 %v1280
  %1689 = vmatpush1.bf16.msra.mxu0 %v1279
  %1690 = vmatprep.subr.bf16.mxu0 %v1296
  %1691 = vmatpush1.bf16.msra.mxu0 %v1295
  %1692 = vmatprep.subr.bf16.mxu0 %v1312
  %1693 = vmatpush1.bf16.msra.mxu0 %v1311
  %1694 = vmatprep.subr.bf16.mxu0 %v1328
  %1695 = vmatpush1.bf16.msra.mxu0 %v1327
  %1696 = vmatprep.subr.bf16.mxu0 %v1344
  %1697 = vmatpush1.bf16.msra.mxu0 %v1343
  %1698 = vmatprep.mubr.bf16.mxu0 %v74
  %1699 = vmatmul.mubr.bf16.gmra.mrb[0].mxu0 %v73
  %v1700 = vpop.f32.mrb[0].mxu0
  %v1701 = vadd.f32 0.0, %v1700
  %v1702 = vpop.f32.mrb[0].mxu0
  %v1703 = vadd.f32 0.0, %v1702
  %v1704 = vpop.f32.mrb[0].mxu0
  %v1705 = vadd.f32 0.0, %v1704
  %v1706 = vpop.f32.mrb[0].mxu0
  %v1707 = vadd.f32 0.0, %v1706
  %1708 = vmatprep.mubr.bf16.mxu0 %v76
  %1709 = vmatmul.mubr.bf16.gmra.mrb[0].mxu0 %v75
  %v1710 = vpop.f32.mrb[0].mxu0
  %v1711 = vadd.f32 0.0, %v1710
  %v1712 = vpop.f32.mrb[0].mxu0
  %v1713 = vadd.f32 0.0, %v1712
  %v1714 = vpop.f32.mrb[0].mxu0
  %v1715 = vadd.f32 0.0, %v1714
  %v1716 = vpop.f32.mrb[0].mxu0
  %v1717 = vadd.f32 0.0, %v1716
  %1718 = vdwg.mxu0
  %1719 = vmatprep.subr.bf16.mxu0 %v1106
  %1720 = vmatpush1.bf16.msra.mxu0 %v1105
  %1721 = vmatprep.subr.bf16.mxu0 %v1122
  %1722 = vmatpush1.bf16.msra.mxu0 %v1121
  %1723 = vmatprep.subr.bf16.mxu0 %v1138
  %1724 = vmatpush1.bf16.msra.mxu0 %v1137
  %1725 = vmatprep.subr.bf16.mxu0 %v1154
  %1726 = vmatpush1.bf16.msra.mxu0 %v1153
  %1727 = vmatprep.subr.bf16.mxu0 %v1170
  %1728 = vmatpush1.bf16.msra.mxu0 %v1169
  %1729 = vmatprep.subr.bf16.mxu0 %v1186
  %1730 = vmatpush1.bf16.msra.mxu0 %v1185
  %1731 = vmatprep.subr.bf16.mxu0 %v1202
  %1732 = vmatpush1.bf16.msra.mxu0 %v1201
  %1733 = vmatprep.subr.bf16.mxu0 %v1218
  %1734 = vmatpush1.bf16.msra.mxu0 %v1217
  %1735 = vmatprep.subr.bf16.mxu0 %v1234
  %1736 = vmatpush1.bf16.msra.mxu0 %v1233
  %1737 = vmatprep.subr.bf16.mxu0 %v1250
  %1738 = vmatpush1.bf16.msra.mxu0 %v1249
  %1739 = vmatprep.subr.bf16.mxu0 %v1266
  %1740 = vmatpush1.bf16.msra.mxu0 %v1265
  %1741 = vmatprep.subr.bf16.mxu0 %v1282
  %1742 = vmatpush1.bf16.msra.mxu0 %v1281
  %1743 = vmatprep.subr.bf16.mxu0 %v1298
  %1744 = vmatpush1.bf16.msra.mxu0 %v1297
  %1745 = vmatprep.subr.bf16.mxu0 %v1314
  %1746 = vmatpush1.bf16.msra.mxu0 %v1313
  %1747 = vmatprep.subr.bf16.mxu0 %v1330
  %1748 = vmatpush1.bf16.msra.mxu0 %v1329
  %1749 = vmatprep.subr.bf16.mxu0 %v1346
  %1750 = vmatpush1.bf16.msra.mxu0 %v1345
  %1751 = vmatprep.mubr.bf16.mxu0 %v74
  %1752 = vmatmul.mubr.bf16.gmra.mrb[0].mxu0 %v73
  %v1753 = vpop.f32.mrb[0].mxu0
  %v1754 = vadd.f32 0.0, %v1753
  %v1755 = vpop.f32.mrb[0].mxu0
  %v1756 = vadd.f32 0.0, %v1755
  %v1757 = vpop.f32.mrb[0].mxu0
  %v1758 = vadd.f32 0.0, %v1757
  %v1759 = vpop.f32.mrb[0].mxu0
  %v1760 = vadd.f32 0.0, %v1759
  %1761 = vmatprep.mubr.bf16.mxu0 %v76
  %1762 = vmatmul.mubr.bf16.gmra.mrb[0].mxu0 %v75
  %v1763 = vpop.f32.mrb[0].mxu0
  %v1764 = vadd.f32 0.0, %v1763
  %v1765 = vpop.f32.mrb[0].mxu0
  %v1766 = vadd.f32 0.0, %v1765
  %v1767 = vpop.f32.mrb[0].mxu0
  %v1768 = vadd.f32 0.0, %v1767
  %v1769 = vpop.f32.mrb[0].mxu0
  %v1770 = vadd.f32 0.0, %v1769
  %1771 = vdwg.mxu0
  %1772 = vmatprep.subr.bf16.mxu0 %v1108
  %1773 = vmatpush1.bf16.msra.mxu0 %v1107
  %1774 = vmatprep.subr.bf16.mxu0 %v1124
  %1775 = vmatpush1.bf16.msra.mxu0 %v1123
  %1776 = vmatprep.subr.bf16.mxu0 %v1140
  %1777 = vmatpush1.bf16.msra.mxu0 %v1139
  %1778 = vmatprep.subr.bf16.mxu0 %v1156
  %1779 = vmatpush1.bf16.msra.mxu0 %v1155
  %1780 = vmatprep.subr.bf16.mxu0 %v1172
  %1781 = vmatpush1.bf16.msra.mxu0 %v1171
  %1782 = vmatprep.subr.bf16.mxu0 %v1188
  %1783 = vmatpush1.bf16.msra.mxu0 %v1187
  %1784 = vmatprep.subr.bf16.mxu0 %v1204
  %1785 = vmatpush1.bf16.msra.mxu0 %v1203
  %1786 = vmatprep.subr.bf16.mxu0 %v1220
  %1787 = vmatpush1.bf16.msra.mxu0 %v1219
  %1788 = vmatprep.subr.bf16.mxu0 %v1236
  %1789 = vmatpush1.bf16.msra.mxu0 %v1235
  %1790 = vmatprep.subr.bf16.mxu0 %v1252
  %1791 = vmatpush1.bf16.msra.mxu0 %v1251
  %1792 = vmatprep.subr.bf16.mxu0 %v1268
  %1793 = vmatpush1.bf16.msra.mxu0 %v1267
  %1794 = vmatprep.subr.bf16.mxu0 %v1284
  %1795 = vmatpush1.bf16.msra.mxu0 %v1283
  %1796 = vmatprep.subr.bf16.mxu0 %v1300
  %1797 = vmatpush1.bf16.msra.mxu0 %v1299
  %1798 = vmatprep.subr.bf16.mxu0 %v1316
  %1799 = vmatpush1.bf16.msra.mxu0 %v1315
  %1800 = vmatprep.subr.bf16.mxu0 %v1332
  %1801 = vmatpush1.bf16.msra.mxu0 %v1331
  %1802 = vmatprep.subr.bf16.mxu0 %v1348
  %1803 = vmatpush1.bf16.msra.mxu0 %v1347
  %1804 = vmatprep.mubr.bf16.mxu0 %v74
  %1805 = vmatmul.mubr.bf16.gmra.mrb[0].mxu0 %v73
  %v1806 = vpop.f32.mrb[0].mxu0
  %v1807 = vadd.f32 0.0, %v1806
  %v1808 = vpop.f32.mrb[0].mxu0
  %v1809 = vadd.f32 0.0, %v1808
  %v1810 = vpop.f32.mrb[0].mxu0
  %v1811 = vadd.f32 0.0, %v1810
  %v1812 = vpop.f32.mrb[0].mxu0
  %v1813 = vadd.f32 0.0, %v1812
  %1814 = vmatprep.mubr.bf16.mxu0 %v76
  %1815 = vmatmul.mubr.bf16.gmra.mrb[0].mxu0 %v75
  %v1816 = vpop.f32.mrb[0].mxu0
  %v1817 = vadd.f32 0.0, %v1816
  %v1818 = vpop.f32.mrb[0].mxu0
  %v1819 = vadd.f32 0.0, %v1818
  %v1820 = vpop.f32.mrb[0].mxu0
  %v1821 = vadd.f32 0.0, %v1820
  %v1822 = vpop.f32.mrb[0].mxu0
  %v1823 = vadd.f32 0.0, %v1822
  %1824 = vdwg.mxu0
  %1825 = vmatprep.subr.bf16.mxu0 %v1110
  %1826 = vmatpush1.bf16.msra.mxu0 %v1109
  %1827 = vmatprep.subr.bf16.mxu0 %v1126
  %1828 = vmatpush1.bf16.msra.mxu0 %v1125
  %1829 = vmatprep.subr.bf16.mxu0 %v1142
  %1830 = vmatpush1.bf16.msra.mxu0 %v1141
  %1831 = vmatprep.subr.bf16.mxu0 %v1158
  %1832 = vmatpush1.bf16.msra.mxu0 %v1157
  %1833 = vmatprep.subr.bf16.mxu0 %v1174
  %1834 = vmatpush1.bf16.msra.mxu0 %v1173
  %1835 = vmatprep.subr.bf16.mxu0 %v1190
  %1836 = vmatpush1.bf16.msra.mxu0 %v1189
  %1837 = vmatprep.subr.bf16.mxu0 %v1206
  %1838 = vmatpush1.bf16.msra.mxu0 %v1205
  %1839 = vmatprep.subr.bf16.mxu0 %v1222
  %1840 = vmatpush1.bf16.msra.mxu0 %v1221
  %1841 = vmatprep.subr.bf16.mxu0 %v1238
  %1842 = vmatpush1.bf16.msra.mxu0 %v1237
  %1843 = vmatprep.subr.bf16.mxu0 %v1254
  %1844 = vmatpush1.bf16.msra.mxu0 %v1253
  %1845 = vmatprep.subr.bf16.mxu0 %v1270
  %1846 = vmatpush1.bf16.msra.mxu0 %v1269
  %1847 = vmatprep.subr.bf16.mxu0 %v1286
  %1848 = vmatpush1.bf16.msra.mxu0 %v1285
  %1849 = vmatprep.subr.bf16.mxu0 %v1302
  %1850 = vmatpush1.bf16.msra.mxu0 %v1301
  %1851 = vmatprep.subr.bf16.mxu0 %v1318
  %1852 = vmatpush1.bf16.msra.mxu0 %v1317
  %1853 = vmatprep.subr.bf16.mxu0 %v1334
  %1854 = vmatpush1.bf16.msra.mxu0 %v1333
  %1855 = vmatprep.subr.bf16.mxu0 %v1350
  %1856 = vmatpush1.bf16.msra.mxu0 %v1349
  %1857 = vmatprep.mubr.bf16.mxu0 %v74
  %1858 = vmatmul.mubr.bf16.gmra.mrb[0].mxu0 %v73
  %v1859 = vpop.f32.mrb[0].mxu0
  %v1860 = vadd.f32 0.0, %v1859
  %v1861 = vpop.f32.mrb[0].mxu0
  %v1862 = vadd.f32 0.0, %v1861
  %v1863 = vpop.f32.mrb[0].mxu0
  %v1864 = vadd.f32 0.0, %v1863
  %v1865 = vpop.f32.mrb[0].mxu0
  %v1866 = vadd.f32 0.0, %v1865
  %1867 = vmatprep.mubr.bf16.mxu0 %v76
  %1868 = vmatmul.mubr.bf16.gmra.mrb[0].mxu0 %v75
  %v1869 = vpop.f32.mrb[0].mxu0
  %v1870 = vadd.f32 0.0, %v1869
  %v1871 = vpop.f32.mrb[0].mxu0
  %v1872 = vadd.f32 0.0, %v1871
  %v1873 = vpop.f32.mrb[0].mxu0
  %v1874 = vadd.f32 0.0, %v1873
  %v1875 = vpop.f32.mrb[0].mxu0
  %v1876 = vadd.f32 0.0, %v1875
  %1877 = vdwg.mxu0
  %1878 = vmatprep.subr.bf16.mxu0 %v1112
  %1879 = vmatpush1.bf16.msra.mxu0 %v1111
  %1880 = vmatprep.subr.bf16.mxu0 %v1128
  %1881 = vmatpush1.bf16.msra.mxu0 %v1127
  %1882 = vmatprep.subr.bf16.mxu0 %v1144
  %1883 = vmatpush1.bf16.msra.mxu0 %v1143
  %1884 = vmatprep.subr.bf16.mxu0 %v1160
  %1885 = vmatpush1.bf16.msra.mxu0 %v1159
  %1886 = vmatprep.subr.bf16.mxu0 %v1176
  %1887 = vmatpush1.bf16.msra.mxu0 %v1175
  %1888 = vmatprep.subr.bf16.mxu0 %v1192
  %1889 = vmatpush1.bf16.msra.mxu0 %v1191
  %1890 = vmatprep.subr.bf16.mxu0 %v1208
  %1891 = vmatpush1.bf16.msra.mxu0 %v1207
  %1892 = vmatprep.subr.bf16.mxu0 %v1224
  %1893 = vmatpush1.bf16.msra.mxu0 %v1223
  %1894 = vmatprep.subr.bf16.mxu0 %v1240
  %1895 = vmatpush1.bf16.msra.mxu0 %v1239
  %1896 = vmatprep.subr.bf16.mxu0 %v1256
  %1897 = vmatpush1.bf16.msra.mxu0 %v1255
  %1898 = vmatprep.subr.bf16.mxu0 %v1272
  %1899 = vmatpush1.bf16.msra.mxu0 %v1271
  %1900 = vmatprep.subr.bf16.mxu0 %v1288
  %1901 = vmatpush1.bf16.msra.mxu0 %v1287
  %1902 = vmatprep.subr.bf16.mxu0 %v1304
  %1903 = vmatpush1.bf16.msra.mxu0 %v1303
  %1904 = vmatprep.subr.bf16.mxu0 %v1320
  %1905 = vmatpush1.bf16.msra.mxu0 %v1319
  %1906 = vmatprep.subr.bf16.mxu0 %v1336
  %1907 = vmatpush1.bf16.msra.mxu0 %v1335
  %1908 = vmatprep.subr.bf16.mxu0 %v1352
  %1909 = vmatpush1.bf16.msra.mxu0 %v1351
  %1910 = vmatprep.mubr.bf16.mxu0 %v74
  %1911 = vmatmul.mubr.bf16.gmra.mrb[0].mxu0 %v73
  %v1912 = vpop.f32.mrb[0].mxu0
  %v1913 = vadd.f32 0.0, %v1912
  %v1914 = vpop.f32.mrb[0].mxu0
  %v1915 = vadd.f32 0.0, %v1914
  %v1916 = vpop.f32.mrb[0].mxu0
  %v1917 = vadd.f32 0.0, %v1916
  %v1918 = vpop.f32.mrb[0].mxu0
  %v1919 = vadd.f32 0.0, %v1918
  %1920 = vmatprep.mubr.bf16.mxu0 %v76
  %1921 = vmatmul.mubr.bf16.gmra.mrb[0].mxu0 %v75
  %v1922 = vpop.f32.mrb[0].mxu0
  %v1923 = vadd.f32 0.0, %v1922
  %v1924 = vpop.f32.mrb[0].mxu0
  %v1925 = vadd.f32 0.0, %v1924
  %v1926 = vpop.f32.mrb[0].mxu0
  %v1927 = vadd.f32 0.0, %v1926
  %v1928 = vpop.f32.mrb[0].mxu0
  %v1929 = vadd.f32 0.0, %v1928
  %1930 = vdwg.mxu0
  %1931 = vmatprep.subr.bf16.mxu0 %v1114
  %1932 = vmatpush1.bf16.msra.mxu0 %v1113
  %1933 = vmatprep.subr.bf16.mxu0 %v1130
  %1934 = vmatpush1.bf16.msra.mxu0 %v1129
  %1935 = vmatprep.subr.bf16.mxu0 %v1146
  %1936 = vmatpush1.bf16.msra.mxu0 %v1145
  %1937 = vmatprep.subr.bf16.mxu0 %v1162
  %1938 = vmatpush1.bf16.msra.mxu0 %v1161
  %1939 = vmatprep.subr.bf16.mxu0 %v1178
  %1940 = vmatpush1.bf16.msra.mxu0 %v1177
  %1941 = vmatprep.subr.bf16.mxu0 %v1194
  %1942 = vmatpush1.bf16.msra.mxu0 %v1193
  %1943 = vmatprep.subr.bf16.mxu0 %v1210
  %1944 = vmatpush1.bf16.msra.mxu0 %v1209
  %1945 = vmatprep.subr.bf16.mxu0 %v1226
  %1946 = vmatpush1.bf16.msra.mxu0 %v1225
  %1947 = vmatprep.subr.bf16.mxu0 %v1242
  %1948 = vmatpush1.bf16.msra.mxu0 %v1241
  %1949 = vmatprep.subr.bf16.mxu0 %v1258
  %1950 = vmatpush1.bf16.msra.mxu0 %v1257
  %1951 = vmatprep.subr.bf16.mxu0 %v1274
  %1952 = vmatpush1.bf16.msra.mxu0 %v1273
  %1953 = vmatprep.subr.bf16.mxu0 %v1290
  %1954 = vmatpush1.bf16.msra.mxu0 %v1289
  %1955 = vmatprep.subr.bf16.mxu0 %v1306
  %1956 = vmatpush1.bf16.msra.mxu0 %v1305
  %1957 = vmatprep.subr.bf16.mxu0 %v1322
  %1958 = vmatpush1.bf16.msra.mxu0 %v1321
  %1959 = vmatprep.subr.bf16.mxu0 %v1338
  %1960 = vmatpush1.bf16.msra.mxu0 %v1337
  %1961 = vmatprep.subr.bf16.mxu0 %v1354
  %1962 = vmatpush1.bf16.msra.mxu0 %v1353
  %1963 = vmatprep.mubr.bf16.mxu0 %v74
  %1964 = vmatmul.mubr.bf16.gmra.mrb[0].mxu0 %v73
  %v1965 = vpop.f32.mrb[0].mxu0
  %v1966 = vadd.f32 0.0, %v1965
  %v1967 = vpop.f32.mrb[0].mxu0
  %v1968 = vadd.f32 0.0, %v1967
  %v1969 = vpop.f32.mrb[0].mxu0
  %v1970 = vadd.f32 0.0, %v1969
  %v1971 = vpop.f32.mrb[0].mxu0
  %v1972 = vadd.f32 0.0, %v1971
  %1973 = vmatprep.mubr.bf16.mxu0 %v76
  %1974 = vmatmul.mubr.bf16.gmra.mrb[0].mxu0 %v75
  %v1975 = vpop.f32.mrb[0].mxu0
  %v1976 = vadd.f32 0.0, %v1975
  %v1977 = vpop.f32.mrb[0].mxu0
  %v1978 = vadd.f32 0.0, %v1977
  %v1979 = vpop.f32.mrb[0].mxu0
  %v1980 = vadd.f32 0.0, %v1979
  %v1981 = vpop.f32.mrb[0].mxu0
  %v1982 = vadd.f32 0.0, %v1981
  %1983 = vdwg.mxu0
  %1984 = vmatprep.subr.bf16.mxu0 %v1116
  %1985 = vmatpush1.bf16.msra.mxu0 %v1115
  %1986 = vmatprep.subr.bf16.mxu0 %v1132
  %1987 = vmatpush1.bf16.msra.mxu0 %v1131
  %1988 = vmatprep.subr.bf16.mxu0 %v1148
  %1989 = vmatpush1.bf16.msra.mxu0 %v1147
  %1990 = vmatprep.subr.bf16.mxu0 %v1164
  %1991 = vmatpush1.bf16.msra.mxu0 %v1163
  %1992 = vmatprep.subr.bf16.mxu0 %v1180
  %1993 = vmatpush1.bf16.msra.mxu0 %v1179
  %1994 = vmatprep.subr.bf16.mxu0 %v1196
  %1995 = vmatpush1.bf16.msra.mxu0 %v1195
  %1996 = vmatprep.subr.bf16.mxu0 %v1212
  %1997 = vmatpush1.bf16.msra.mxu0 %v1211
  %1998 = vmatprep.subr.bf16.mxu0 %v1228
  %1999 = vmatpush1.bf16.msra.mxu0 %v1227
  %2000 = vmatprep.subr.bf16.mxu0 %v1244
  %2001 = vmatpush1.bf16.msra.mxu0 %v1243
  %2002 = vmatprep.subr.bf16.mxu0 %v1260
  %2003 = vmatpush1.bf16.msra.mxu0 %v1259
  %2004 = vmatprep.subr.bf16.mxu0 %v1276
  %2005 = vmatpush1.bf16.msra.mxu0 %v1275
  %2006 = vmatprep.subr.bf16.mxu0 %v1292
  %2007 = vmatpush1.bf16.msra.mxu0 %v1291
  %2008 = vmatprep.subr.bf16.mxu0 %v1308
  %2009 = vmatpush1.bf16.msra.mxu0 %v1307
  %2010 = vmatprep.subr.bf16.mxu0 %v1324
  %2011 = vmatpush1.bf16.msra.mxu0 %v1323
  %2012 = vmatprep.subr.bf16.mxu0 %v1340
  %2013 = vmatpush1.bf16.msra.mxu0 %v1339
  %2014 = vmatprep.subr.bf16.mxu0 %v1356
  %2015 = vmatpush1.bf16.msra.mxu0 %v1355
  %2016 = vmatprep.mubr.bf16.mxu0 %v74
  %2017 = vmatmul.mubr.bf16.gmra.mrb[0].mxu0 %v73
  %v2018 = vpop.f32.mrb[0].mxu0
  %v2019 = vadd.f32 0.0, %v2018
  %v2020 = vpop.f32.mrb[0].mxu0
  %v2021 = vadd.f32 0.0, %v2020
  %v2022 = vpop.f32.mrb[0].mxu0
  %v2023 = vadd.f32 0.0, %v2022
  %v2024 = vpop.f32.mrb[0].mxu0
  %v2025 = vadd.f32 0.0, %v2024
  %2026 = vmatprep.mubr.bf16.mxu0 %v76
  %2027 = vmatmul.mubr.bf16.gmra.mrb[0].mxu0 %v75
  %v2028 = vpop.f32.mrb[0].mxu0
  %v2029 = vadd.f32 0.0, %v2028
  %v2030 = vpop.f32.mrb[0].mxu0
  %v2031 = vadd.f32 0.0, %v2030
  %v2032 = vpop.f32.mrb[0].mxu0
  %v2033 = vadd.f32 0.0, %v2032
  %v2034 = vpop.f32.mrb[0].mxu0
  %v2035 = vadd.f32 0.0, %v2034
  %2036 = vdwg.mxu0
  %2037 = vst [vmem:[%s4] sm:$0xff] %v1648
  %2038 = vst [vmem:[%s4 + $0x8] sm:$0xff] %v1650
  %2039 = vst [vmem:[%s4 + $0x10] sm:$0xff] %v1701
  %2040 = vst [vmem:[%s4 + $0x18] sm:$0xff] %v1703
  %2041 = vst [vmem:[%s4 + $0x20] sm:$0xff] %v1754
  %2042 = vst [vmem:[%s4 + $0x28] sm:$0xff] %v1756
  %2043 = vst [vmem:[%s4 + $0x30] sm:$0xff] %v1807
  %2044 = vst [vmem:[%s4 + $0x38] sm:$0xff] %v1809
  %2045 = vst [vmem:[%s4 + $0x40] sm:$0xff] %v1860
  %2046 = vst [vmem:[%s4 + $0x48] sm:$0xff] %v1862
  %2047 = vst [vmem:[%s4 + $0x50] sm:$0xff] %v1913
  %2048 = vst [vmem:[%s4 + $0x58] sm:$0xff] %v1915
  %2049 = vst [vmem:[%s4 + $0x60] sm:$0xff] %v1966
  %2050 = vst [vmem:[%s4 + $0x68] sm:$0xff] %v1968
  %2051 = vst [vmem:[%s4 + $0x70] sm:$0xff] %v2019
  %2052 = vst [vmem:[%s4 + $0x78] sm:$0xff] %v2021
  %2053 = vst [vmem:[%s4 + $0x80] sm:$0xff] %v1652
  %2054 = vst [vmem:[%s4 + $0x88] sm:$0xff] %v1654
  %2055 = vst [vmem:[%s4 + $0x90] sm:$0xff] %v1705
  %2056 = vst [vmem:[%s4 + $0x98] sm:$0xff] %v1707
  %2057 = vst [vmem:[%s4 + $0xa0] sm:$0xff] %v1758
  %2058 = vst [vmem:[%s4 + $0xa8] sm:$0xff] %v1760
  %2059 = vst [vmem:[%s4 + $0xb0] sm:$0xff] %v1811
  %2060 = vst [vmem:[%s4 + $0xb8] sm:$0xff] %v1813
  %2061 = vst [vmem:[%s4 + $0xc0] sm:$0xff] %v1864
  %2062 = vst [vmem:[%s4 + $0xc8] sm:$0xff] %v1866
  %2063 = vst [vmem:[%s4 + $0xd0] sm:$0xff] %v1917
  %2064 = vst [vmem:[%s4 + $0xd8] sm:$0xff] %v1919
  %2065 = vst [vmem:[%s4 + $0xe0] sm:$0xff] %v1970
  %2066 = vst [vmem:[%s4 + $0xe8] sm:$0xff] %v1972
  %2067 = vst [vmem:[%s4 + $0xf0] sm:$0xff] %v2023
  %2068 = vst [vmem:[%s4 + $0xf8] sm:$0xff] %v2025
  %2069 = vst [vmem:[%s4 + $0x100] sm:$0xff] %v1658
  %2070 = vst [vmem:[%s4 + $0x108] sm:$0xff] %v1660
  %2071 = vst [vmem:[%s4 + $0x110] sm:$0xff] %v1711
  %2072 = vst [vmem:[%s4 + $0x118] sm:$0xff] %v1713
  %2073 = vst [vmem:[%s4 + $0x120] sm:$0xff] %v1764
  %2074 = vst [vmem:[%s4 + $0x128] sm:$0xff] %v1766
  %2075 = vst [vmem:[%s4 + $0x130] sm:$0xff] %v1817
  %2076 = vst [vmem:[%s4 + $0x138] sm:$0xff] %v1819
  %2077 = vst [vmem:[%s4 + $0x140] sm:$0xff] %v1870
  %2078 = vst [vmem:[%s4 + $0x148] sm:$0xff] %v1872
  %2079 = vst [vmem:[%s4 + $0x150] sm:$0xff] %v1923
  %2080 = vst [vmem:[%s4 + $0x158] sm:$0xff] %v1925
  %2081 = vst [vmem:[%s4 + $0x160] sm:$0xff] %v1976
  %2082 = vst [vmem:[%s4 + $0x168] sm:$0xff] %v1978
  %2083 = vst [vmem:[%s4 + $0x170] sm:$0xff] %v2029
  %2084 = vst [vmem:[%s4 + $0x178] sm:$0xff] %v2031
  %2085 = vst [vmem:[%s4 + $0x180] sm:$0xff] %v1662
  %2086 = vst [vmem:[%s4 + $0x188] sm:$0xff] %v1664
  %2087 = vst [vmem:[%s4 + $0x190] sm:$0xff] %v1715
  %2088 = vst [vmem:[%s4 + $0x198] sm:$0xff] %v1717
  %2089 = vst [vmem:[%s4 + $0x1a0] sm:$0xff] %v1768
  %2090 = vst [vmem:[%s4 + $0x1a8] sm:$0xff] %v1770
  %2091 = vst [vmem:[%s4 + $0x1b0] sm:$0xff] %v1821
  %2092 = vst [vmem:[%s4 + $0x1b8] sm:$0xff] %v1823
  %2093 = vst [vmem:[%s4 + $0x1c0] sm:$0xff] %v1874
  %2094 = vst [vmem:[%s4 + $0x1c8] sm:$0xff] %v1876
  %2095 = vst [vmem:[%s4 + $0x1d0] sm:$0xff] %v1927
  %2096 = vst [vmem:[%s4 + $0x1d8] sm:$0xff] %v1929
  %2097 = vst [vmem:[%s4 + $0x1e0] sm:$0xff] %v1980
  %2098 = vst [vmem:[%s4 + $0x1e8] sm:$0xff] %v1982
  %2099 = vst [vmem:[%s4 + $0x1f0] sm:$0xff] %v2033
  %2100 = vst [vmem:[%s4 + $0x1f8] sm:$0xff] %v2035
  // Predicated region
  $region18: #{generator_forward.10} parent=0 // pred_check
    _
  $region19: #{generator_forward.10} parent=0 // pred_check_branch
    %2102 = sbr.rel (0) target = $region21
  $region20: #{generator_forward.10} parent=0 // pred_region
    _
  $region21: #{generator_forward.10} parent=0 // pred_fallthru
    _
  // Predicated region
  $region22: #{generator_forward.10} parent=0 // pred_check
    _
  $region23: #{generator_forward.10} parent=0 // pred_check_branch
    %2104 = sbr.rel (0) target = $region25
  $region24: #{generator_forward.10} parent=0 // pred_region
    _
  $region25: #{generator_forward.10} parent=0 // pred_fallthru
    _

// kernel: generator_forward.11
$region0: #{generator_forward.11}
  #allocation0 [shape = 'u32[]', space=smem, size = 0x4, offset = 0x4, fixed_abs, tag = 'smem constant byte address 0x4 - core index']
  #allocation1 [shape = 'u32[144,128]{1,0:T(1,128)}', space=vmem, size = 0x12000, scoped, tag = 'internal scratch']
  %s0 = inlined_call_operand.vmem [shape: f32[128,128], index: 0, kind: input, shape index: {}]
  %s1 = inlined_call_operand.vmem [shape: f32[2,128], index: 1, kind: output, shape index: {}]
  %s2 = sld [smem:[#allocation0]]
  $region18: #{generator_forward.11} parent=0
    _
  %s4 = ssub.s32 1, %s2
  %s5 = scalar_select 0, %s4, %s2
  // Predicated region
  $region2: #{generator_forward.11} parent=0 // pred_check
    _
  $region3: #{generator_forward.11} parent=0 // pred_check_branch
    %7 = sbr.rel (0) target = $region5
  $region4: #{generator_forward.11} parent=0 // pred_region
    _
  $region5: #{generator_forward.11} parent=0 // pred_fallthru
    _
  %p8 = scmp.eq.s32.totalorder 0, 0
  // Predicated region
  $region6: #{generator_forward.11} parent=0 // pred_check
    %p9 = pneg %p8
  $region7: #{generator_forward.11} parent=0 // pred_check_branch
    %11 = sbr.rel (%p9) target = $region9
  $region8: #{generator_forward.11} parent=0 // pred_region
    %12 = vst [vmem:[%s1] sm:$0x3] 0.0
  $region9: #{generator_forward.11} parent=0 // pred_fallthru
    _
  %v13 = vld [vmem:[%s0] sm:$0xff]
  %v14 = vld [vmem:[%s0 + $0x8] sm:$0xff]
  %v15 = vld [vmem:[%s0 + $0x10] sm:$0xff]
  %v16 = vld [vmem:[%s0 + $0x18] sm:$0xff]
  %v17 = vld [vmem:[%s0 + $0x20] sm:$0xff]
  %v18 = vld [vmem:[%s0 + $0x28] sm:$0xff]
  %v19 = vld [vmem:[%s0 + $0x30] sm:$0xff]
  %v20 = vld [vmem:[%s0 + $0x38] sm:$0xff]
  %v21 = vld [vmem:[%s0 + $0x40] sm:$0xff]
  %v22 = vld [vmem:[%s0 + $0x48] sm:$0xff]
  %v23 = vld [vmem:[%s0 + $0x50] sm:$0xff]
  %v24 = vld [vmem:[%s0 + $0x58] sm:$0xff]
  %v25 = vld [vmem:[%s0 + $0x60] sm:$0xff]
  %v26 = vld [vmem:[%s0 + $0x68] sm:$0xff]
  %v27 = vld [vmem:[%s0 + $0x70] sm:$0xff]
  %v28 = vld [vmem:[%s0 + $0x78] sm:$0xff]
  %v29 = vadd.f32 %v13, %v14
  %v30 = vadd.f32 %v29, %v15
  %v31 = vadd.f32 %v30, %v16
  %v32 = vadd.f32 %v31, %v17
  %v33 = vadd.f32 %v32, %v18
  %v34 = vadd.f32 %v33, %v19
  %v35 = vadd.f32 %v34, %v20
  %v36 = vadd.f32 %v35, %v21
  %v37 = vadd.f32 %v36, %v22
  %v38 = vadd.f32 %v37, %v23
  %v39 = vadd.f32 %v38, %v24
  %v40 = vadd.f32 %v39, %v25
  %v41 = vadd.f32 %v40, %v26
  %v42 = vadd.f32 %v41, %v27
  %v43 = vadd.f32 %v42, %v28
  %v44 = vrot.slane %v43, 4
  %v45 = vadd.f32 %v43, %v44
  %v46 = vrot.slane %v45, 2
  %v47 = vadd.f32 %v45, %v46
  %v48 = vrot.slane %v47, 1
  %v49 = vadd.f32 %v47, %v48
  %v50 = vmul.f32 %v13, %v13
  %v51 = vmul.f32 %v14, %v14
  %v52 = vmul.f32 %v15, %v15
  %v53 = vmul.f32 %v16, %v16
  %v54 = vmul.f32 %v17, %v17
  %v55 = vmul.f32 %v18, %v18
  %v56 = vmul.f32 %v19, %v19
  %v57 = vmul.f32 %v20, %v20
  %v58 = vmul.f32 %v21, %v21
  %v59 = vmul.f32 %v22, %v22
  %v60 = vmul.f32 %v23, %v23
  %v61 = vmul.f32 %v24, %v24
  %v62 = vmul.f32 %v25, %v25
  %v63 = vmul.f32 %v26, %v26
  %v64 = vmul.f32 %v27, %v27
  %v65 = vmul.f32 %v28, %v28
  %v66 = vadd.f32 %v50, %v51
  %v67 = vadd.f32 %v66, %v52
  %v68 = vadd.f32 %v67, %v53
  %v69 = vadd.f32 %v68, %v54
  %v70 = vadd.f32 %v69, %v55
  %v71 = vadd.f32 %v70, %v56
  %v72 = vadd.f32 %v71, %v57
  %v73 = vadd.f32 %v72, %v58
  %v74 = vadd.f32 %v73, %v59
  %v75 = vadd.f32 %v74, %v60
  %v76 = vadd.f32 %v75, %v61
  %v77 = vadd.f32 %v76, %v62
  %v78 = vadd.f32 %v77, %v63
  %v79 = vadd.f32 %v78, %v64
  %v80 = vadd.f32 %v79, %v65
  %v81 = vrot.slane %v80, 4
  %v82 = vadd.f32 %v80, %v81
  %v83 = vrot.slane %v82, 2
  %v84 = vadd.f32 %v82, %v83
  %v85 = vrot.slane %v84, 1
  %v86 = vadd.f32 %v84, %v85
  %v87 = vld [vmem:[%s1] sm:$0x3]
  %vm88 = vcmask 1040384
  %v89 = vsel %vm88, %v49, %v86
  %v90 = vadd.f32 %v87, %v89
  %91 = vst [vmem:[%s1] sm:$0x3] %v90
  // Predicated region
  $region10: #{generator_forward.11} parent=0 // pred_check
    _
  $region11: #{generator_forward.11} parent=0 // pred_check_branch
    %93 = sbr.rel (0) target = $region13
  $region12: #{generator_forward.11} parent=0 // pred_region
    _
  $region13: #{generator_forward.11} parent=0 // pred_fallthru
    _
  // Predicated region
  $region14: #{generator_forward.11} parent=0 // pred_check
    _
  $region15: #{generator_forward.11} parent=0 // pred_check_branch
    %95 = sbr.rel (0) target = $region17
  $region16: #{generator_forward.11} parent=0 // pred_region
    _
  $region17: #{generator_forward.11} parent=0 // pred_fallthru
    _

// kernel: generator_forward.12
$region0: #{generator_forward.12}
  #allocation0 [shape = 'u32[]', space=smem, size = 0x4, offset = 0x4, fixed_abs, tag = 'smem constant byte address 0x4 - core index']
  #allocation1 [shape = 'u32[144,128]{1,0:T(1,128)}', space=vmem, size = 0x12000, scoped, tag = 'internal scratch']
  %s0 = inlined_call_operand.vmem [shape: f32[128,128], index: 0, kind: input, shape index: {}]
  %s1 = inlined_call_operand.vmem [shape: f32[1,128], index: 1, kind: input, shape index: {}]
  %s2 = inlined_call_operand.vmem [shape: f32[1,128], index: 2, kind: input, shape index: {}]
  %s3 = inlined_call_operand.vmem [shape: bf16[128,1024], index: 3, kind: input, shape index: {}]
  %s4 = inlined_call_operand.vmem [shape: f32[128,1024], index: 4, kind: output, shape index: {}]
  %s5 = sld [smem:[#allocation0]]
  $region26: #{generator_forward.12} parent=0
    _
  %s7 = ssub.s32 1, %s5
  %s8 = scalar_select 0, %s7, %s5
  // Predicated region
  $region2: #{generator_forward.12} parent=0 // pred_check
    _
  $region3: #{generator_forward.12} parent=0 // pred_check_branch
    %10 = sbr.rel (0) target = $region5
  $region4: #{generator_forward.12} parent=0 // pred_region
    _
  $region5: #{generator_forward.12} parent=0 // pred_fallthru
    _
  // Predicated region
  $region6: #{generator_forward.12} parent=0 // pred_check
    _
  $region7: #{generator_forward.12} parent=0 // pred_check_branch
    %12 = sbr.rel (0) target = $region9
  $region8: #{generator_forward.12} parent=0 // pred_region
    _
  $region9: #{generator_forward.12} parent=0 // pred_fallthru
    _
  // Predicated region
  $region10: #{generator_forward.12} parent=0 // pred_check
    _
  $region11: #{generator_forward.12} parent=0 // pred_check_branch
    %14 = sbr.rel (0) target = $region13
  $region12: #{generator_forward.12} parent=0 // pred_region
    _
  $region13: #{generator_forward.12} parent=0 // pred_fallthru
    _
  // Predicated region
  $region14: #{generator_forward.12} parent=0 // pred_check
    _
  $region15: #{generator_forward.12} parent=0 // pred_check_branch
    %16 = sbr.rel (0) target = $region17
  $region16: #{generator_forward.12} parent=0 // pred_region
    _
  $region17: #{generator_forward.12} parent=0 // pred_fallthru
    _
  %v18 = vld [vmem:[%s0] sm:$0xff]
  %v19 = vld [vmem:[%s0 + $0x8] sm:$0xff]
  %v20 = vld [vmem:[%s0 + $0x10] sm:$0xff]
  %v21 = vld [vmem:[%s0 + $0x18] sm:$0xff]
  %v22 = vld [vmem:[%s0 + $0x20] sm:$0xff]
  %v23 = vld [vmem:[%s0 + $0x28] sm:$0xff]
  %v24 = vld [vmem:[%s0 + $0x30] sm:$0xff]
  %v25 = vld [vmem:[%s0 + $0x38] sm:$0xff]
  %v26 = vld [vmem:[%s0 + $0x40] sm:$0xff]
  %v27 = vld [vmem:[%s0 + $0x48] sm:$0xff]
  %v28 = vld [vmem:[%s0 + $0x50] sm:$0xff]
  %v29 = vld [vmem:[%s0 + $0x58] sm:$0xff]
  %v30 = vld [vmem:[%s0 + $0x60] sm:$0xff]
  %v31 = vld [vmem:[%s0 + $0x68] sm:$0xff]
  %v32 = vld [vmem:[%s0 + $0x70] sm:$0xff]
  %v33 = vld [vmem:[%s0 + $0x78] sm:$0xff]
  %v34 = vld [vmem:[%s1] sm:$0x1]
  %v36 = vlaneseq
  %v37 = vshrl.u32 %v36, 7
  %v38 = vsub.s32 0, %v37
  %v39 = vrot.slane %v34, %v38
  %v41 = vmul.f32 %v18, %v39
  %v42 = vmul.f32 %v19, %v39
  %v43 = vmul.f32 %v20, %v39
  %v44 = vmul.f32 %v21, %v39
  %v45 = vmul.f32 %v22, %v39
  %v46 = vmul.f32 %v23, %v39
  %v47 = vmul.f32 %v24, %v39
  %v48 = vmul.f32 %v25, %v39
  %v49 = vmul.f32 %v26, %v39
  %v50 = vmul.f32 %v27, %v39
  %v51 = vmul.f32 %v28, %v39
  %v52 = vmul.f32 %v29, %v39
  %v53 = vmul.f32 %v30, %v39
  %v54 = vmul.f32 %v31, %v39
  %v55 = vmul.f32 %v32, %v39
  %v56 = vmul.f32 %v33, %v39
  %v57 = vld [vmem:[%s2] sm:$0x1]
  %v59 = vlaneseq
  %v60 = vshrl.u32 %v59, 7
  %v61 = vsub.s32 0, %v60
  %v62 = vrot.slane %v57, %v61
  %v64 = vadd.f32 %v41, %v62
  %v65 = vadd.f32 %v42, %v62
  %v66 = vadd.f32 %v43, %v62
  %v67 = vadd.f32 %v44, %v62
  %v68 = vadd.f32 %v45, %v62
  %v69 = vadd.f32 %v46, %v62
  %v70 = vadd.f32 %v47, %v62
  %v71 = vadd.f32 %v48, %v62
  %v72 = vadd.f32 %v49, %v62
  %v73 = vadd.f32 %v50, %v62
  %v74 = vadd.f32 %v51, %v62
  %v75 = vadd.f32 %v52, %v62
  %v76 = vadd.f32 %v53, %v62
  %v77 = vadd.f32 %v54, %v62
  %v78 = vadd.f32 %v55, %v62
  %v79 = vadd.f32 %v56, %v62
  %v80 = vmax.f32 %v64, 0.0
  %v81 = vmax.f32 %v65, 0.0
  %v82 = vmax.f32 %v66, 0.0
  %v83 = vmax.f32 %v67, 0.0
  %v84 = vmax.f32 %v68, 0.0
  %v85 = vmax.f32 %v69, 0.0
  %v86 = vmax.f32 %v70, 0.0
  %v87 = vmax.f32 %v71, 0.0
  %v88 = vmax.f32 %v72, 0.0
  %v89 = vmax.f32 %v73, 0.0
  %v90 = vmax.f32 %v74, 0.0
  %v91 = vmax.f32 %v75, 0.0
  %v92 = vmax.f32 %v76, 0.0
  %v93 = vmax.f32 %v77, 0.0
  %v94 = vmax.f32 %v78, 0.0
  %v95 = vmax.f32 %v79, 0.0
  %v96 = vpack.c.bf16 %v81, %v80
  %v97 = vpack.c.bf16 %v83, %v82
  %v98 = vpack.c.bf16 %v85, %v84
  %v99 = vpack.c.bf16 %v87, %v86
  %v100 = vpack.c.bf16 %v89, %v88
  %v101 = vpack.c.bf16 %v91, %v90
  %v102 = vpack.c.bf16 %v93, %v92
  %v103 = vpack.c.bf16 %v95, %v94
  %v104 = vld [vmem:[%s3] sm:$0xff]
  %v105 = vld [vmem:[%s3 + $0x8] sm:$0xff]
  %v106 = vld [vmem:[%s3 + $0x10] sm:$0xff]
  %v107 = vld [vmem:[%s3 + $0x18] sm:$0xff]
  %v108 = vld [vmem:[%s3 + $0x20] sm:$0xff]
  %v109 = vld [vmem:[%s3 + $0x28] sm:$0xff]
  %v110 = vld [vmem:[%s3 + $0x30] sm:$0xff]
  %v111 = vld [vmem:[%s3 + $0x38] sm:$0xff]
  %v112 = vld [vmem:[%s3 + $0x40] sm:$0xff]
  %v113 = vld [vmem:[%s3 + $0x48] sm:$0xff]
  %v114 = vld [vmem:[%s3 + $0x50] sm:$0xff]
  %v115 = vld [vmem:[%s3 + $0x58] sm:$0xff]
  %v116 = vld [vmem:[%s3 + $0x60] sm:$0xff]
  %v117 = vld [vmem:[%s3 + $0x68] sm:$0xff]
  %v118 = vld [vmem:[%s3 + $0x70] sm:$0xff]
  %v119 = vld [vmem:[%s3 + $0x78] sm:$0xff]
  %v120 = vld [vmem:[%s3 + $0x80] sm:$0xff]
  %v121 = vld [vmem:[%s3 + $0x88] sm:$0xff]
  %v122 = vld [vmem:[%s3 + $0x90] sm:$0xff]
  %v123 = vld [vmem:[%s3 + $0x98] sm:$0xff]
  %v124 = vld [vmem:[%s3 + $0xa0] sm:$0xff]
  %v125 = vld [vmem:[%s3 + $0xa8] sm:$0xff]
  %v126 = vld [vmem:[%s3 + $0xb0] sm:$0xff]
  %v127 = vld [vmem:[%s3 + $0xb8] sm:$0xff]
  %v128 = vld [vmem:[%s3 + $0xc0] sm:$0xff]
  %v129 = vld [vmem:[%s3 + $0xc8] sm:$0xff]
  %v130 = vld [vmem:[%s3 + $0xd0] sm:$0xff]
  %v131 = vld [vmem:[%s3 + $0xd8] sm:$0xff]
  %v132 = vld [vmem:[%s3 + $0xe0] sm:$0xff]
  %v133 = vld [vmem:[%s3 + $0xe8] sm:$0xff]
  %v134 = vld [vmem:[%s3 + $0xf0] sm:$0xff]
  %v135 = vld [vmem:[%s3 + $0xf8] sm:$0xff]
  %v136 = vld [vmem:[%s3 + $0x100] sm:$0xff]
  %v137 = vld [vmem:[%s3 + $0x108] sm:$0xff]
  %v138 = vld [vmem:[%s3 + $0x110] sm:$0xff]
  %v139 = vld [vmem:[%s3 + $0x118] sm:$0xff]
  %v140 = vld [vmem:[%s3 + $0x120] sm:$0xff]
  %v141 = vld [vmem:[%s3 + $0x128] sm:$0xff]
  %v142 = vld [vmem:[%s3 + $0x130] sm:$0xff]
  %v143 = vld [vmem:[%s3 + $0x138] sm:$0xff]
  %v144 = vld [vmem:[%s3 + $0x140] sm:$0xff]
  %v145 = vld [vmem:[%s3 + $0x148] sm:$0xff]
  %v146 = vld [vmem:[%s3 + $0x150] sm:$0xff]
  %v147 = vld [vmem:[%s3 + $0x158] sm:$0xff]
  %v148 = vld [vmem:[%s3 + $0x160] sm:$0xff]
  %v149 = vld [vmem:[%s3 + $0x168] sm:$0xff]
  %v150 = vld [vmem:[%s3 + $0x170] sm:$0xff]
  %v151 = vld [vmem:[%s3 + $0x178] sm:$0xff]
  %v152 = vld [vmem:[%s3 + $0x180] sm:$0xff]
  %v153 = vld [vmem:[%s3 + $0x188] sm:$0xff]
  %v154 = vld [vmem:[%s3 + $0x190] sm:$0xff]
  %v155 = vld [vmem:[%s3 + $0x198] sm:$0xff]
  %v156 = vld [vmem:[%s3 + $0x1a0] sm:$0xff]
  %v157 = vld [vmem:[%s3 + $0x1a8] sm:$0xff]
  %v158 = vld [vmem:[%s3 + $0x1b0] sm:$0xff]
  %v159 = vld [vmem:[%s3 + $0x1b8] sm:$0xff]
  %v160 = vld [vmem:[%s3 + $0x1c0] sm:$0xff]
  %v161 = vld [vmem:[%s3 + $0x1c8] sm:$0xff]
  %v162 = vld [vmem:[%s3 + $0x1d0] sm:$0xff]
  %v163 = vld [vmem:[%s3 + $0x1d8] sm:$0xff]
  %v164 = vld [vmem:[%s3 + $0x1e0] sm:$0xff]
  %v165 = vld [vmem:[%s3 + $0x1e8] sm:$0xff]
  %v166 = vld [vmem:[%s3 + $0x1f0] sm:$0xff]
  %v167 = vld [vmem:[%s3 + $0x1f8] sm:$0xff]
  %v232 = vunpack.c.l.b16 %v104
  %v233 = vunpack.c.h.b16 %v104
  %v234 = vunpack.c.l.b16 %v105
  %v235 = vunpack.c.h.b16 %v105
  %v236 = vunpack.c.l.b16 %v106
  %v237 = vunpack.c.h.b16 %v106
  %v238 = vunpack.c.l.b16 %v107
  %v239 = vunpack.c.h.b16 %v107
  %v240 = vunpack.c.l.b16 %v108
  %v241 = vunpack.c.h.b16 %v108
  %v242 = vunpack.c.l.b16 %v109
  %v243 = vunpack.c.h.b16 %v109
  %v244 = vunpack.c.l.b16 %v110
  %v245 = vunpack.c.h.b16 %v110
  %v246 = vunpack.c.l.b16 %v111
  %v247 = vunpack.c.h.b16 %v111
  %v248 = vunpack.c.l.b16 %v112
  %v249 = vunpack.c.h.b16 %v112
  %v250 = vunpack.c.l.b16 %v113
  %v251 = vunpack.c.h.b16 %v113
  %v252 = vunpack.c.l.b16 %v114
  %v253 = vunpack.c.h.b16 %v114
  %v254 = vunpack.c.l.b16 %v115
  %v255 = vunpack.c.h.b16 %v115
  %v256 = vunpack.c.l.b16 %v116
  %v257 = vunpack.c.h.b16 %v116
  %v258 = vunpack.c.l.b16 %v117
  %v259 = vunpack.c.h.b16 %v117
  %v260 = vunpack.c.l.b16 %v118
  %v261 = vunpack.c.h.b16 %v118
  %v262 = vunpack.c.l.b16 %v119
  %v263 = vunpack.c.h.b16 %v119
  %v264 = vunpack.c.l.b16 %v120
  %v265 = vunpack.c.h.b16 %v120
  %v266 = vunpack.c.l.b16 %v121
  %v267 = vunpack.c.h.b16 %v121
  %v268 = vunpack.c.l.b16 %v122
  %v269 = vunpack.c.h.b16 %v122
  %v270 = vunpack.c.l.b16 %v123
  %v271 = vunpack.c.h.b16 %v123
  %v272 = vunpack.c.l.b16 %v124
  %v273 = vunpack.c.h.b16 %v124
  %v274 = vunpack.c.l.b16 %v125
  %v275 = vunpack.c.h.b16 %v125
  %v276 = vunpack.c.l.b16 %v126
  %v277 = vunpack.c.h.b16 %v126
  %v278 = vunpack.c.l.b16 %v127
  %v279 = vunpack.c.h.b16 %v127
  %v280 = vunpack.c.l.b16 %v128
  %v281 = vunpack.c.h.b16 %v128
  %v282 = vunpack.c.l.b16 %v129
  %v283 = vunpack.c.h.b16 %v129
  %v284 = vunpack.c.l.b16 %v130
  %v285 = vunpack.c.h.b16 %v130
  %v286 = vunpack.c.l.b16 %v131
  %v287 = vunpack.c.h.b16 %v131
  %v288 = vunpack.c.l.b16 %v132
  %v289 = vunpack.c.h.b16 %v132
  %v290 = vunpack.c.l.b16 %v133
  %v291 = vunpack.c.h.b16 %v133
  %v292 = vunpack.c.l.b16 %v134
  %v293 = vunpack.c.h.b16 %v134
  %v294 = vunpack.c.l.b16 %v135
  %v295 = vunpack.c.h.b16 %v135
  %v296 = vunpack.c.l.b16 %v136
  %v297 = vunpack.c.h.b16 %v136
  %v298 = vunpack.c.l.b16 %v137
  %v299 = vunpack.c.h.b16 %v137
  %v300 = vunpack.c.l.b16 %v138
  %v301 = vunpack.c.h.b16 %v138
  %v302 = vunpack.c.l.b16 %v139
  %v303 = vunpack.c.h.b16 %v139
  %v304 = vunpack.c.l.b16 %v140
  %v305 = vunpack.c.h.b16 %v140
  %v306 = vunpack.c.l.b16 %v141
  %v307 = vunpack.c.h.b16 %v141
  %v308 = vunpack.c.l.b16 %v142
  %v309 = vunpack.c.h.b16 %v142
  %v310 = vunpack.c.l.b16 %v143
  %v311 = vunpack.c.h.b16 %v143
  %v312 = vunpack.c.l.b16 %v144
  %v313 = vunpack.c.h.b16 %v144
  %v314 = vunpack.c.l.b16 %v145
  %v315 = vunpack.c.h.b16 %v145
  %v316 = vunpack.c.l.b16 %v146
  %v317 = vunpack.c.h.b16 %v146
  %v318 = vunpack.c.l.b16 %v147
  %v319 = vunpack.c.h.b16 %v147
  %v320 = vunpack.c.l.b16 %v148
  %v321 = vunpack.c.h.b16 %v148
  %v322 = vunpack.c.l.b16 %v149
  %v323 = vunpack.c.h.b16 %v149
  %v324 = vunpack.c.l.b16 %v150
  %v325 = vunpack.c.h.b16 %v150
  %v326 = vunpack.c.l.b16 %v151
  %v327 = vunpack.c.h.b16 %v151
  %v328 = vunpack.c.l.b16 %v152
  %v329 = vunpack.c.h.b16 %v152
  %v330 = vunpack.c.l.b16 %v153
  %v331 = vunpack.c.h.b16 %v153
  %v332 = vunpack.c.l.b16 %v154
  %v333 = vunpack.c.h.b16 %v154
  %v334 = vunpack.c.l.b16 %v155
  %v335 = vunpack.c.h.b16 %v155
  %v336 = vunpack.c.l.b16 %v156
  %v337 = vunpack.c.h.b16 %v156
  %v338 = vunpack.c.l.b16 %v157
  %v339 = vunpack.c.h.b16 %v157
  %v340 = vunpack.c.l.b16 %v158
  %v341 = vunpack.c.h.b16 %v158
  %v342 = vunpack.c.l.b16 %v159
  %v343 = vunpack.c.h.b16 %v159
  %v344 = vunpack.c.l.b16 %v160
  %v345 = vunpack.c.h.b16 %v160
  %v346 = vunpack.c.l.b16 %v161
  %v347 = vunpack.c.h.b16 %v161
  %v348 = vunpack.c.l.b16 %v162
  %v349 = vunpack.c.h.b16 %v162
  %v350 = vunpack.c.l.b16 %v163
  %v351 = vunpack.c.h.b16 %v163
  %v352 = vunpack.c.l.b16 %v164
  %v353 = vunpack.c.h.b16 %v164
  %v354 = vunpack.c.l.b16 %v165
  %v355 = vunpack.c.h.b16 %v165
  %v356 = vunpack.c.l.b16 %v166
  %v357 = vunpack.c.h.b16 %v166
  %v358 = vunpack.c.l.b16 %v167
  %v359 = vunpack.c.h.b16 %v167
  %v360 = vpack.c.b16 %v240, %v232
  %v361 = vpack.c.b16 %v241, %v233
  %v362 = vpack.c.b16 %v242, %v234
  %v363 = vpack.c.b16 %v243, %v235
  %v364 = vpack.c.b16 %v244, %v236
  %v365 = vpack.c.b16 %v245, %v237
  %v366 = vpack.c.b16 %v246, %v238
  %v367 = vpack.c.b16 %v247, %v239
  %v368 = vpack.c.b16 %v256, %v248
  %v369 = vpack.c.b16 %v257, %v249
  %v370 = vpack.c.b16 %v258, %v250
  %v371 = vpack.c.b16 %v259, %v251
  %v372 = vpack.c.b16 %v260, %v252
  %v373 = vpack.c.b16 %v261, %v253
  %v374 = vpack.c.b16 %v262, %v254
  %v375 = vpack.c.b16 %v263, %v255
  %v376 = vpack.c.b16 %v272, %v264
  %v377 = vpack.c.b16 %v273, %v265
  %v378 = vpack.c.b16 %v274, %v266
  %v379 = vpack.c.b16 %v275, %v267
  %v380 = vpack.c.b16 %v276, %v268
  %v381 = vpack.c.b16 %v277, %v269
  %v382 = vpack.c.b16 %v278, %v270
  %v383 = vpack.c.b16 %v279, %v271
  %v384 = vpack.c.b16 %v288, %v280
  %v385 = vpack.c.b16 %v289, %v281
  %v386 = vpack.c.b16 %v290, %v282
  %v387 = vpack.c.b16 %v291, %v283
  %v388 = vpack.c.b16 %v292, %v284
  %v389 = vpack.c.b16 %v293, %v285
  %v390 = vpack.c.b16 %v294, %v286
  %v391 = vpack.c.b16 %v295, %v287
  %v392 = vpack.c.b16 %v304, %v296
  %v393 = vpack.c.b16 %v305, %v297
  %v394 = vpack.c.b16 %v306, %v298
  %v395 = vpack.c.b16 %v307, %v299
  %v396 = vpack.c.b16 %v308, %v300
  %v397 = vpack.c.b16 %v309, %v301
  %v398 = vpack.c.b16 %v310, %v302
  %v399 = vpack.c.b16 %v311, %v303
  %v400 = vpack.c.b16 %v320, %v312
  %v401 = vpack.c.b16 %v321, %v313
  %v402 = vpack.c.b16 %v322, %v314
  %v403 = vpack.c.b16 %v323, %v315
  %v404 = vpack.c.b16 %v324, %v316
  %v405 = vpack.c.b16 %v325, %v317
  %v406 = vpack.c.b16 %v326, %v318
  %v407 = vpack.c.b16 %v327, %v319
  %v408 = vpack.c.b16 %v336, %v328
  %v409 = vpack.c.b16 %v337, %v329
  %v410 = vpack.c.b16 %v338, %v330
  %v411 = vpack.c.b16 %v339, %v331
  %v412 = vpack.c.b16 %v340, %v332
  %v413 = vpack.c.b16 %v341, %v333
  %v414 = vpack.c.b16 %v342, %v334
  %v415 = vpack.c.b16 %v343, %v335
  %v416 = vpack.c.b16 %v352, %v344
  %v417 = vpack.c.b16 %v353, %v345
  %v418 = vpack.c.b16 %v354, %v346
  %v419 = vpack.c.b16 %v355, %v347
  %v420 = vpack.c.b16 %v356, %v348
  %v421 = vpack.c.b16 %v357, %v349
  %v422 = vpack.c.b16 %v358, %v350
  %v423 = vpack.c.b16 %v359, %v351
  %488 = vmatprep.subr.bf16.mxu0 %v361
  %489 = vmatpush1.bf16.msra.mxu0 %v360
  %490 = vmatprep.subr.bf16.mxu0 %v369
  %491 = vmatpush1.bf16.msra.mxu0 %v368
  %492 = vmatprep.subr.bf16.mxu0 %v377
  %493 = vmatpush1.bf16.msra.mxu0 %v376
  %494 = vmatprep.subr.bf16.mxu0 %v385
  %495 = vmatpush1.bf16.msra.mxu0 %v384
  %496 = vmatprep.subr.bf16.mxu0 %v393
  %497 = vmatpush1.bf16.msra.mxu0 %v392
  %498 = vmatprep.subr.bf16.mxu0 %v401
  %499 = vmatpush1.bf16.msra.mxu0 %v400
  %500 = vmatprep.subr.bf16.mxu0 %v409
  %501 = vmatpush1.bf16.msra.mxu0 %v408
  %502 = vmatprep.subr.bf16.mxu0 %v417
  %503 = vmatpush1.bf16.msra.mxu0 %v416
  %504 = vmatprep.subr.bf16.mxu0 0
  %505 = vmatpush1.bf16.msra.mxu0 0
  %506 = vmatprep.subr.bf16.mxu0 0
  %507 = vmatpush1.bf16.msra.mxu0 0
  %508 = vmatprep.subr.bf16.mxu0 0
  %509 = vmatpush1.bf16.msra.mxu0 0
  %510 = vmatprep.subr.bf16.mxu0 0
  %511 = vmatpush1.bf16.msra.mxu0 0
  %512 = vmatprep.subr.bf16.mxu0 0
  %513 = vmatpush1.bf16.msra.mxu0 0
  %514 = vmatprep.subr.bf16.mxu0 0
  %515 = vmatpush1.bf16.msra.mxu0 0
  %516 = vmatprep.subr.bf16.mxu0 0
  %517 = vmatpush1.bf16.msra.mxu0 0
  %518 = vmatprep.subr.bf16.mxu0 0
  %519 = vmatpush1.bf16.msra.mxu0 0
  %520 = vmatprep.mubr.bf16.mxu0 0
  %521 = vmatmul.mubr.bf16.gmra.mrb[0].mxu0 %v96
  %v522 = vpop.f32.mrb[0].mxu0
  %v523 = vadd.f32 0.0, %v522
  %v524 = vpop.f32.mrb[0].mxu0
  %v525 = vadd.f32 0.0, %v524
  %v526 = vpop.f32.mrb[0].mxu0
  %v527 = vadd.f32 0.0, %v526
  %v528 = vpop.f32.mrb[0].mxu0
  %v529 = vadd.f32 0.0, %v528
  %530 = vmatprep.mubr.bf16.mxu0 0
  %531 = vmatmul.mubr.bf16.gmra.mrb[0].mxu0 %v97
  %v532 = vpop.f32.mrb[0].mxu0
  %v533 = vadd.f32 0.0, %v532
  %v534 = vpop.f32.mrb[0].mxu0
  %v535 = vadd.f32 0.0, %v534
  %v536 = vpop.f32.mrb[0].mxu0
  %v537 = vadd.f32 0.0, %v536
  %v538 = vpop.f32.mrb[0].mxu0
  %v539 = vadd.f32 0.0, %v538
  %540 = vmatprep.mubr.bf16.mxu0 0
  %541 = vmatmul.mubr.bf16.gmra.mrb[0].mxu0 %v98
  %v542 = vpop.f32.mrb[0].mxu0
  %v543 = vadd.f32 0.0, %v542
  %v544 = vpop.f32.mrb[0].mxu0
  %v545 = vadd.f32 0.0, %v544
  %v546 = vpop.f32.mrb[0].mxu0
  %v547 = vadd.f32 0.0, %v546
  %v548 = vpop.f32.mrb[0].mxu0
  %v549 = vadd.f32 0.0, %v548
  %550 = vmatprep.mubr.bf16.mxu0 0
  %551 = vmatmul.mubr.bf16.gmra.mrb[0].mxu0 %v99
  %v552 = vpop.f32.mrb[0].mxu0
  %v553 = vadd.f32 0.0, %v552
  %v554 = vpop.f32.mrb[0].mxu0
  %v555 = vadd.f32 0.0, %v554
  %v556 = vpop.f32.mrb[0].mxu0
  %v557 = vadd.f32 0.0, %v556
  %v558 = vpop.f32.mrb[0].mxu0
  %v559 = vadd.f32 0.0, %v558
  %560 = vmatprep.mubr.bf16.mxu0 0
  %561 = vmatmul.mubr.bf16.gmra.mrb[0].mxu0 %v100
  %v562 = vpop.f32.mrb[0].mxu0
  %v563 = vadd.f32 0.0, %v562
  %v564 = vpop.f32.mrb[0].mxu0
  %v565 = vadd.f32 0.0, %v564
  %v566 = vpop.f32.mrb[0].mxu0
  %v567 = vadd.f32 0.0, %v566
  %v568 = vpop.f32.mrb[0].mxu0
  %v569 = vadd.f32 0.0, %v568
  %570 = vmatprep.mubr.bf16.mxu0 0
  %571 = vmatmul.mubr.bf16.gmra.mrb[0].mxu0 %v101
  %v572 = vpop.f32.mrb[0].mxu0
  %v573 = vadd.f32 0.0, %v572
  %v574 = vpop.f32.mrb[0].mxu0
  %v575 = vadd.f32 0.0, %v574
  %v576 = vpop.f32.mrb[0].mxu0
  %v577 = vadd.f32 0.0, %v576
  %v578 = vpop.f32.mrb[0].mxu0
  %v579 = vadd.f32 0.0, %v578
  %580 = vmatprep.mubr.bf16.mxu0 0
  %581 = vmatmul.mubr.bf16.gmra.mrb[0].mxu0 %v102
  %v582 = vpop.f32.mrb[0].mxu0
  %v583 = vadd.f32 0.0, %v582
  %v584 = vpop.f32.mrb[0].mxu0
  %v585 = vadd.f32 0.0, %v584
  %v586 = vpop.f32.mrb[0].mxu0
  %v587 = vadd.f32 0.0, %v586
  %v588 = vpop.f32.mrb[0].mxu0
  %v589 = vadd.f32 0.0, %v588
  %590 = vmatprep.mubr.bf16.mxu0 0
  %591 = vmatmul.mubr.bf16.gmra.mrb[0].mxu0 %v103
  %v592 = vpop.f32.mrb[0].mxu0
  %v593 = vadd.f32 0.0, %v592
  %v594 = vpop.f32.mrb[0].mxu0
  %v595 = vadd.f32 0.0, %v594
  %v596 = vpop.f32.mrb[0].mxu0
  %v597 = vadd.f32 0.0, %v596
  %v598 = vpop.f32.mrb[0].mxu0
  %v599 = vadd.f32 0.0, %v598
  %600 = vdwg.mxu0
  %601 = vmatprep.subr.bf16.mxu0 %v363
  %602 = vmatpush1.bf16.msra.mxu0 %v362
  %603 = vmatprep.subr.bf16.mxu0 %v371
  %604 = vmatpush1.bf16.msra.mxu0 %v370
  %605 = vmatprep.subr.bf16.mxu0 %v379
  %606 = vmatpush1.bf16.msra.mxu0 %v378
  %607 = vmatprep.subr.bf16.mxu0 %v387
  %608 = vmatpush1.bf16.msra.mxu0 %v386
  %609 = vmatprep.subr.bf16.mxu0 %v395
  %610 = vmatpush1.bf16.msra.mxu0 %v394
  %611 = vmatprep.subr.bf16.mxu0 %v403
  %612 = vmatpush1.bf16.msra.mxu0 %v402
  %613 = vmatprep.subr.bf16.mxu0 %v411
  %614 = vmatpush1.bf16.msra.mxu0 %v410
  %615 = vmatprep.subr.bf16.mxu0 %v419
  %616 = vmatpush1.bf16.msra.mxu0 %v418
  %617 = vmatprep.subr.bf16.mxu0 0
  %618 = vmatpush1.bf16.msra.mxu0 0
  %619 = vmatprep.subr.bf16.mxu0 0
  %620 = vmatpush1.bf16.msra.mxu0 0
  %621 = vmatprep.subr.bf16.mxu0 0
  %622 = vmatpush1.bf16.msra.mxu0 0
  %623 = vmatprep.subr.bf16.mxu0 0
  %624 = vmatpush1.bf16.msra.mxu0 0
  %625 = vmatprep.subr.bf16.mxu0 0
  %626 = vmatpush1.bf16.msra.mxu0 0
  %627 = vmatprep.subr.bf16.mxu0 0
  %628 = vmatpush1.bf16.msra.mxu0 0
  %629 = vmatprep.subr.bf16.mxu0 0
  %630 = vmatpush1.bf16.msra.mxu0 0
  %631 = vmatprep.subr.bf16.mxu0 0
  %632 = vmatpush1.bf16.msra.mxu0 0
  %633 = vmatprep.mubr.bf16.mxu0 0
  %634 = vmatmul.mubr.bf16.gmra.mrb[0].mxu0 %v96
  %v635 = vpop.f32.mrb[0].mxu0
  %v636 = vadd.f32 0.0, %v635
  %v637 = vpop.f32.mrb[0].mxu0
  %v638 = vadd.f32 0.0, %v637
  %v639 = vpop.f32.mrb[0].mxu0
  %v640 = vadd.f32 0.0, %v639
  %v641 = vpop.f32.mrb[0].mxu0
  %v642 = vadd.f32 0.0, %v641
  %643 = vmatprep.mubr.bf16.mxu0 0
  %644 = vmatmul.mubr.bf16.gmra.mrb[0].mxu0 %v97
  %v645 = vpop.f32.mrb[0].mxu0
  %v646 = vadd.f32 0.0, %v645
  %v647 = vpop.f32.mrb[0].mxu0
  %v648 = vadd.f32 0.0, %v647
  %v649 = vpop.f32.mrb[0].mxu0
  %v650 = vadd.f32 0.0, %v649
  %v651 = vpop.f32.mrb[0].mxu0
  %v652 = vadd.f32 0.0, %v651
  %653 = vmatprep.mubr.bf16.mxu0 0
  %654 = vmatmul.mubr.bf16.gmra.mrb[0].mxu0 %v98
  %v655 = vpop.f32.mrb[0].mxu0
  %v656 = vadd.f32 0.0, %v655
  %v657 = vpop.f32.mrb[0].mxu0
  %v658 = vadd.f32 0.0, %v657
  %v659 = vpop.f32.mrb[0].mxu0
  %v660 = vadd.f32 0.0, %v659
  %v661 = vpop.f32.mrb[0].mxu0
  %v662 = vadd.f32 0.0, %v661
  %663 = vmatprep.mubr.bf16.mxu0 0
  %664 = vmatmul.mubr.bf16.gmra.mrb[0].mxu0 %v99
  %v665 = vpop.f32.mrb[0].mxu0
  %v666 = vadd.f32 0.0, %v665
  %v667 = vpop.f32.mrb[0].mxu0
  %v668 = vadd.f32 0.0, %v667
  %v669 = vpop.f32.mrb[0].mxu0
  %v670 = vadd.f32 0.0, %v669
  %v671 = vpop.f32.mrb[0].mxu0
  %v672 = vadd.f32 0.0, %v671
  %673 = vmatprep.mubr.bf16.mxu0 0
  %674 = vmatmul.mubr.bf16.gmra.mrb[0].mxu0 %v100
  %v675 = vpop.f32.mrb[0].mxu0
  %v676 = vadd.f32 0.0, %v675
  %v677 = vpop.f32.mrb[0].mxu0
  %v678 = vadd.f32 0.0, %v677
  %v679 = vpop.f32.mrb[0].mxu0
  %v680 = vadd.f32 0.0, %v679
  %v681 = vpop.f32.mrb[0].mxu0
  %v682 = vadd.f32 0.0, %v681
  %683 = vmatprep.mubr.bf16.mxu0 0
  %684 = vmatmul.mubr.bf16.gmra.mrb[0].mxu0 %v101
  %v685 = vpop.f32.mrb[0].mxu0
  %v686 = vadd.f32 0.0, %v685
  %v687 = vpop.f32.mrb[0].mxu0
  %v688 = vadd.f32 0.0, %v687
  %v689 = vpop.f32.mrb[0].mxu0
  %v690 = vadd.f32 0.0, %v689
  %v691 = vpop.f32.mrb[0].mxu0
  %v692 = vadd.f32 0.0, %v691
  %693 = vmatprep.mubr.bf16.mxu0 0
  %694 = vmatmul.mubr.bf16.gmra.mrb[0].mxu0 %v102
  %v695 = vpop.f32.mrb[0].mxu0
  %v696 = vadd.f32 0.0, %v695
  %v697 = vpop.f32.mrb[0].mxu0
  %v698 = vadd.f32 0.0, %v697
  %v699 = vpop.f32.mrb[0].mxu0
  %v700 = vadd.f32 0.0, %v699
  %v701 = vpop.f32.mrb[0].mxu0
  %v702 = vadd.f32 0.0, %v701
  %703 = vmatprep.mubr.bf16.mxu0 0
  %704 = vmatmul.mubr.bf16.gmra.mrb[0].mxu0 %v103
  %v705 = vpop.f32.mrb[0].mxu0
  %v706 = vadd.f32 0.0, %v705
  %v707 = vpop.f32.mrb[0].mxu0
  %v708 = vadd.f32 0.0, %v707
  %v709 = vpop.f32.mrb[0].mxu0
  %v710 = vadd.f32 0.0, %v709
  %v711 = vpop.f32.mrb[0].mxu0
  %v712 = vadd.f32 0.0, %v711
  %713 = vdwg.mxu0
  %714 = vmatprep.subr.bf16.mxu0 %v365
  %715 = vmatpush1.bf16.msra.mxu0 %v364
  %716 = vmatprep.subr.bf16.mxu0 %v373
  %717 = vmatpush1.bf16.msra.mxu0 %v372
  %718 = vmatprep.subr.bf16.mxu0 %v381
  %719 = vmatpush1.bf16.msra.mxu0 %v380
  %720 = vmatprep.subr.bf16.mxu0 %v389
  %721 = vmatpush1.bf16.msra.mxu0 %v388
  %722 = vmatprep.subr.bf16.mxu0 %v397
  %723 = vmatpush1.bf16.msra.mxu0 %v396
  %724 = vmatprep.subr.bf16.mxu0 %v405
  %725 = vmatpush1.bf16.msra.mxu0 %v404
  %726 = vmatprep.subr.bf16.mxu0 %v413
  %727 = vmatpush1.bf16.msra.mxu0 %v412
  %728 = vmatprep.subr.bf16.mxu0 %v421
  %729 = vmatpush1.bf16.msra.mxu0 %v420
  %730 = vmatprep.subr.bf16.mxu0 0
  %731 = vmatpush1.bf16.msra.mxu0 0
  %732 = vmatprep.subr.bf16.mxu0 0
  %733 = vmatpush1.bf16.msra.mxu0 0
  %734 = vmatprep.subr.bf16.mxu0 0
  %735 = vmatpush1.bf16.msra.mxu0 0
  %736 = vmatprep.subr.bf16.mxu0 0
  %737 = vmatpush1.bf16.msra.mxu0 0
  %738 = vmatprep.subr.bf16.mxu0 0
  %739 = vmatpush1.bf16.msra.mxu0 0
  %740 = vmatprep.subr.bf16.mxu0 0
  %741 = vmatpush1.bf16.msra.mxu0 0
  %742 = vmatprep.subr.bf16.mxu0 0
  %743 = vmatpush1.bf16.msra.mxu0 0
  %744 = vmatprep.subr.bf16.mxu0 0
  %745 = vmatpush1.bf16.msra.mxu0 0
  %746 = vmatprep.mubr.bf16.mxu0 0
  %747 = vmatmul.mubr.bf16.gmra.mrb[0].mxu0 %v96
  %v748 = vpop.f32.mrb[0].mxu0
  %v749 = vadd.f32 0.0, %v748
  %v750 = vpop.f32.mrb[0].mxu0
  %v751 = vadd.f32 0.0, %v750
  %v752 = vpop.f32.mrb[0].mxu0
  %v753 = vadd.f32 0.0, %v752
  %v754 = vpop.f32.mrb[0].mxu0
  %v755 = vadd.f32 0.0, %v754
  %756 = vmatprep.mubr.bf16.mxu0 0
  %757 = vmatmul.mubr.bf16.gmra.mrb[0].mxu0 %v97
  %v758 = vpop.f32.mrb[0].mxu0
  %v759 = vadd.f32 0.0, %v758
  %v760 = vpop.f32.mrb[0].mxu0
  %v761 = vadd.f32 0.0, %v760
  %v762 = vpop.f32.mrb[0].mxu0
  %v763 = vadd.f32 0.0, %v762
  %v764 = vpop.f32.mrb[0].mxu0
  %v765 = vadd.f32 0.0, %v764
  %766 = vmatprep.mubr.bf16.mxu0 0
  %767 = vmatmul.mubr.bf16.gmra.mrb[0].mxu0 %v98
  %v768 = vpop.f32.mrb[0].mxu0
  %v769 = vadd.f32 0.0, %v768
  %v770 = vpop.f32.mrb[0].mxu0
  %v771 = vadd.f32 0.0, %v770
  %v772 = vpop.f32.mrb[0].mxu0
  %v773 = vadd.f32 0.0, %v772
  %v774 = vpop.f32.mrb[0].mxu0
  %v775 = vadd.f32 0.0, %v774
  %776 = vmatprep.mubr.bf16.mxu0 0
  %777 = vmatmul.mubr.bf16.gmra.mrb[0].mxu0 %v99
  %v778 = vpop.f32.mrb[0].mxu0
  %v779 = vadd.f32 0.0, %v778
  %v780 = vpop.f32.mrb[0].mxu0
  %v781 = vadd.f32 0.0, %v780
  %v782 = vpop.f32.mrb[0].mxu0
  %v783 = vadd.f32 0.0, %v782
  %v784 = vpop.f32.mrb[0].mxu0
  %v785 = vadd.f32 0.0, %v784
  %786 = vmatprep.mubr.bf16.mxu0 0
  %787 = vmatmul.mubr.bf16.gmra.mrb[0].mxu0 %v100
  %v788 = vpop.f32.mrb[0].mxu0
  %v789 = vadd.f32 0.0, %v788
  %v790 = vpop.f32.mrb[0].mxu0
  %v791 = vadd.f32 0.0, %v790
  %v792 = vpop.f32.mrb[0].mxu0
  %v793 = vadd.f32 0.0, %v792
  %v794 = vpop.f32.mrb[0].mxu0
  %v795 = vadd.f32 0.0, %v794
  %796 = vmatprep.mubr.bf16.mxu0 0
  %797 = vmatmul.mubr.bf16.gmra.mrb[0].mxu0 %v101
  %v798 = vpop.f32.mrb[0].mxu0
  %v799 = vadd.f32 0.0, %v798
  %v800 = vpop.f32.mrb[0].mxu0
  %v801 = vadd.f32 0.0, %v800
  %v802 = vpop.f32.mrb[0].mxu0
  %v803 = vadd.f32 0.0, %v802
  %v804 = vpop.f32.mrb[0].mxu0
  %v805 = vadd.f32 0.0, %v804
  %806 = vmatprep.mubr.bf16.mxu0 0
  %807 = vmatmul.mubr.bf16.gmra.mrb[0].mxu0 %v102
  %v808 = vpop.f32.mrb[0].mxu0
  %v809 = vadd.f32 0.0, %v808
  %v810 = vpop.f32.mrb[0].mxu0
  %v811 = vadd.f32 0.0, %v810
  %v812 = vpop.f32.mrb[0].mxu0
  %v813 = vadd.f32 0.0, %v812
  %v814 = vpop.f32.mrb[0].mxu0
  %v815 = vadd.f32 0.0, %v814
  %816 = vmatprep.mubr.bf16.mxu0 0
  %817 = vmatmul.mubr.bf16.gmra.mrb[0].mxu0 %v103
  %v818 = vpop.f32.mrb[0].mxu0
  %v819 = vadd.f32 0.0, %v818
  %v820 = vpop.f32.mrb[0].mxu0
  %v821 = vadd.f32 0.0, %v820
  %v822 = vpop.f32.mrb[0].mxu0
  %v823 = vadd.f32 0.0, %v822
  %v824 = vpop.f32.mrb[0].mxu0
  %v825 = vadd.f32 0.0, %v824
  %826 = vdwg.mxu0
  %827 = vmatprep.subr.bf16.mxu0 %v367
  %828 = vmatpush1.bf16.msra.mxu0 %v366
  %829 = vmatprep.subr.bf16.mxu0 %v375
  %830 = vmatpush1.bf16.msra.mxu0 %v374
  %831 = vmatprep.subr.bf16.mxu0 %v383
  %832 = vmatpush1.bf16.msra.mxu0 %v382
  %833 = vmatprep.subr.bf16.mxu0 %v391
  %834 = vmatpush1.bf16.msra.mxu0 %v390
  %835 = vmatprep.subr.bf16.mxu0 %v399
  %836 = vmatpush1.bf16.msra.mxu0 %v398
  %837 = vmatprep.subr.bf16.mxu0 %v407
  %838 = vmatpush1.bf16.msra.mxu0 %v406
  %839 = vmatprep.subr.bf16.mxu0 %v415
  %840 = vmatpush1.bf16.msra.mxu0 %v414
  %841 = vmatprep.subr.bf16.mxu0 %v423
  %842 = vmatpush1.bf16.msra.mxu0 %v422
  %843 = vmatprep.subr.bf16.mxu0 0
  %844 = vmatpush1.bf16.msra.mxu0 0
  %845 = vmatprep.subr.bf16.mxu0 0
  %846 = vmatpush1.bf16.msra.mxu0 0
  %847 = vmatprep.subr.bf16.mxu0 0
  %848 = vmatpush1.bf16.msra.mxu0 0
  %849 = vmatprep.subr.bf16.mxu0 0
  %850 = vmatpush1.bf16.msra.mxu0 0
  %851 = vmatprep.subr.bf16.mxu0 0
  %852 = vmatpush1.bf16.msra.mxu0 0
  %853 = vmatprep.subr.bf16.mxu0 0
  %854 = vmatpush1.bf16.msra.mxu0 0
  %855 = vmatprep.subr.bf16.mxu0 0
  %856 = vmatpush1.bf16.msra.mxu0 0
  %857 = vmatprep.subr.bf16.mxu0 0
  %858 = vmatpush1.bf16.msra.mxu0 0
  %859 = vmatprep.mubr.bf16.mxu0 0
  %860 = vmatmul.mubr.bf16.gmra.mrb[0].mxu0 %v96
  %v861 = vpop.f32.mrb[0].mxu0
  %v862 = vadd.f32 0.0, %v861
  %v863 = vpop.f32.mrb[0].mxu0
  %v864 = vadd.f32 0.0, %v863
  %v865 = vpop.f32.mrb[0].mxu0
  %v866 = vadd.f32 0.0, %v865
  %v867 = vpop.f32.mrb[0].mxu0
  %v868 = vadd.f32 0.0, %v867
  %869 = vmatprep.mubr.bf16.mxu0 0
  %870 = vmatmul.mubr.bf16.gmra.mrb[0].mxu0 %v97
  %v871 = vpop.f32.mrb[0].mxu0
  %v872 = vadd.f32 0.0, %v871
  %v873 = vpop.f32.mrb[0].mxu0
  %v874 = vadd.f32 0.0, %v873
  %v875 = vpop.f32.mrb[0].mxu0
  %v876 = vadd.f32 0.0, %v875
  %v877 = vpop.f32.mrb[0].mxu0
  %v878 = vadd.f32 0.0, %v877
  %879 = vmatprep.mubr.bf16.mxu0 0
  %880 = vmatmul.mubr.bf16.gmra.mrb[0].mxu0 %v98
  %v881 = vpop.f32.mrb[0].mxu0
  %v882 = vadd.f32 0.0, %v881
  %v883 = vpop.f32.mrb[0].mxu0
  %v884 = vadd.f32 0.0, %v883
  %v885 = vpop.f32.mrb[0].mxu0
  %v886 = vadd.f32 0.0, %v885
  %v887 = vpop.f32.mrb[0].mxu0
  %v888 = vadd.f32 0.0, %v887
  %889 = vmatprep.mubr.bf16.mxu0 0
  %890 = vmatmul.mubr.bf16.gmra.mrb[0].mxu0 %v99
  %v891 = vpop.f32.mrb[0].mxu0
  %v892 = vadd.f32 0.0, %v891
  %v893 = vpop.f32.mrb[0].mxu0
  %v894 = vadd.f32 0.0, %v893
  %v895 = vpop.f32.mrb[0].mxu0
  %v896 = vadd.f32 0.0, %v895
  %v897 = vpop.f32.mrb[0].mxu0
  %v898 = vadd.f32 0.0, %v897
  %899 = vmatprep.mubr.bf16.mxu0 0
  %900 = vmatmul.mubr.bf16.gmra.mrb[0].mxu0 %v100
  %v901 = vpop.f32.mrb[0].mxu0
  %v902 = vadd.f32 0.0, %v901
  %v903 = vpop.f32.mrb[0].mxu0
  %v904 = vadd.f32 0.0, %v903
  %v905 = vpop.f32.mrb[0].mxu0
  %v906 = vadd.f32 0.0, %v905
  %v907 = vpop.f32.mrb[0].mxu0
  %v908 = vadd.f32 0.0, %v907
  %909 = vmatprep.mubr.bf16.mxu0 0
  %910 = vmatmul.mubr.bf16.gmra.mrb[0].mxu0 %v101
  %v911 = vpop.f32.mrb[0].mxu0
  %v912 = vadd.f32 0.0, %v911
  %v913 = vpop.f32.mrb[0].mxu0
  %v914 = vadd.f32 0.0, %v913
  %v915 = vpop.f32.mrb[0].mxu0
  %v916 = vadd.f32 0.0, %v915
  %v917 = vpop.f32.mrb[0].mxu0
  %v918 = vadd.f32 0.0, %v917
  %919 = vmatprep.mubr.bf16.mxu0 0
  %920 = vmatmul.mubr.bf16.gmra.mrb[0].mxu0 %v102
  %v921 = vpop.f32.mrb[0].mxu0
  %v922 = vadd.f32 0.0, %v921
  %v923 = vpop.f32.mrb[0].mxu0
  %v924 = vadd.f32 0.0, %v923
  %v925 = vpop.f32.mrb[0].mxu0
  %v926 = vadd.f32 0.0, %v925
  %v927 = vpop.f32.mrb[0].mxu0
  %v928 = vadd.f32 0.0, %v927
  %929 = vmatprep.mubr.bf16.mxu0 0
  %930 = vmatmul.mubr.bf16.gmra.mrb[0].mxu0 %v103
  %v931 = vpop.f32.mrb[0].mxu0
  %v932 = vadd.f32 0.0, %v931
  %v933 = vpop.f32.mrb[0].mxu0
  %v934 = vadd.f32 0.0, %v933
  %v935 = vpop.f32.mrb[0].mxu0
  %v936 = vadd.f32 0.0, %v935
  %v937 = vpop.f32.mrb[0].mxu0
  %v938 = vadd.f32 0.0, %v937
  %939 = vdwg.mxu0
  %940 = vst [vmem:[%s4] sm:$0xff] %v523
  %941 = vst [vmem:[%s4 + $0x8] sm:$0xff] %v525
  %942 = vst [vmem:[%s4 + $0x10] sm:$0xff] %v636
  %943 = vst [vmem:[%s4 + $0x18] sm:$0xff] %v638
  %944 = vst [vmem:[%s4 + $0x20] sm:$0xff] %v749
  %945 = vst [vmem:[%s4 + $0x28] sm:$0xff] %v751
  %946 = vst [vmem:[%s4 + $0x30] sm:$0xff] %v862
  %947 = vst [vmem:[%s4 + $0x38] sm:$0xff] %v864
  %948 = vst [vmem:[%s4 + $0x40] sm:$0xff] %v527
  %949 = vst [vmem:[%s4 + $0x48] sm:$0xff] %v529
  %950 = vst [vmem:[%s4 + $0x50] sm:$0xff] %v640
  %951 = vst [vmem:[%s4 + $0x58] sm:$0xff] %v642
  %952 = vst [vmem:[%s4 + $0x60] sm:$0xff] %v753
  %953 = vst [vmem:[%s4 + $0x68] sm:$0xff] %v755
  %954 = vst [vmem:[%s4 + $0x70] sm:$0xff] %v866
  %955 = vst [vmem:[%s4 + $0x78] sm:$0xff] %v868
  %956 = vst [vmem:[%s4 + $0x80] sm:$0xff] %v533
  %957 = vst [vmem:[%s4 + $0x88] sm:$0xff] %v535
  %958 = vst [vmem:[%s4 + $0x90] sm:$0xff] %v646
  %959 = vst [vmem:[%s4 + $0x98] sm:$0xff] %v648
  %960 = vst [vmem:[%s4 + $0xa0] sm:$0xff] %v759
  %961 = vst [vmem:[%s4 + $0xa8] sm:$0xff] %v761
  %962 = vst [vmem:[%s4 + $0xb0] sm:$0xff] %v872
  %963 = vst [vmem:[%s4 + $0xb8] sm:$0xff] %v874
  %964 = vst [vmem:[%s4 + $0xc0] sm:$0xff] %v537
  %965 = vst [vmem:[%s4 + $0xc8] sm:$0xff] %v539
  %966 = vst [vmem:[%s4 + $0xd0] sm:$0xff] %v650
  %967 = vst [vmem:[%s4 + $0xd8] sm:$0xff] %v652
  %968 = vst [vmem:[%s4 + $0xe0] sm:$0xff] %v763
  %969 = vst [vmem:[%s4 + $0xe8] sm:$0xff] %v765
  %970 = vst [vmem:[%s4 + $0xf0] sm:$0xff] %v876
  %971 = vst [vmem:[%s4 + $0xf8] sm:$0xff] %v878
  %972 = vst [vmem:[%s4 + $0x100] sm:$0xff] %v543
  %973 = vst [vmem:[%s4 + $0x108] sm:$0xff] %v545
  %974 = vst [vmem:[%s4 + $0x110] sm:$0xff] %v656
  %975 = vst [vmem:[%s4 + $0x118] sm:$0xff] %v658
  %976 = vst [vmem:[%s4 + $0x120] sm:$0xff] %v769
  %977 = vst [vmem:[%s4 + $0x128] sm:$0xff] %v771
  %978 = vst [vmem:[%s4 + $0x130] sm:$0xff] %v882
  %979 = vst [vmem:[%s4 + $0x138] sm:$0xff] %v884
  %980 = vst [vmem:[%s4 + $0x140] sm:$0xff] %v547
  %981 = vst [vmem:[%s4 + $0x148] sm:$0xff] %v549
  %982 = vst [vmem:[%s4 + $0x150] sm:$0xff] %v660
  %983 = vst [vmem:[%s4 + $0x158] sm:$0xff] %v662
  %984 = vst [vmem:[%s4 + $0x160] sm:$0xff] %v773
  %985 = vst [vmem:[%s4 + $0x168] sm:$0xff] %v775
  %986 = vst [vmem:[%s4 + $0x170] sm:$0xff] %v886
  %987 = vst [vmem:[%s4 + $0x178] sm:$0xff] %v888
  %988 = vst [vmem:[%s4 + $0x180] sm:$0xff] %v553
  %989 = vst [vmem:[%s4 + $0x188] sm:$0xff] %v555
  %990 = vst [vmem:[%s4 + $0x190] sm:$0xff] %v666
  %991 = vst [vmem:[%s4 + $0x198] sm:$0xff] %v668
  %992 = vst [vmem:[%s4 + $0x1a0] sm:$0xff] %v779
  %993 = vst [vmem:[%s4 + $0x1a8] sm:$0xff] %v781
  %994 = vst [vmem:[%s4 + $0x1b0] sm:$0xff] %v892
  %995 = vst [vmem:[%s4 + $0x1b8] sm:$0xff] %v894
  %996 = vst [vmem:[%s4 + $0x1c0] sm:$0xff] %v557
  %997 = vst [vmem:[%s4 + $0x1c8] sm:$0xff] %v559
  %998 = vst [vmem:[%s4 + $0x1d0] sm:$0xff] %v670
  %999 = vst [vmem:[%s4 + $0x1d8] sm:$0xff] %v672
  %1000 = vst [vmem:[%s4 + $0x1e0] sm:$0xff] %v783
  %1001 = vst [vmem:[%s4 + $0x1e8] sm:$0xff] %v785
  %1002 = vst [vmem:[%s4 + $0x1f0] sm:$0xff] %v896
  %1003 = vst [vmem:[%s4 + $0x1f8] sm:$0xff] %v898
  %1004 = vst [vmem:[%s4 + $0x200] sm:$0xff] %v563
  %1005 = vst [vmem:[%s4 + $0x208] sm:$0xff] %v565
  %1006 = vst [vmem:[%s4 + $0x210] sm:$0xff] %v676
  %1007 = vst [vmem:[%s4 + $0x218] sm:$0xff] %v678
  %1008 = vst [vmem:[%s4 + $0x220] sm:$0xff] %v789
  %1009 = vst [vmem:[%s4 + $0x228] sm:$0xff] %v791
  %1010 = vst [vmem:[%s4 + $0x230] sm:$0xff] %v902
  %1011 = vst [vmem:[%s4 + $0x238] sm:$0xff] %v904
  %1012 = vst [vmem:[%s4 + $0x240] sm:$0xff] %v567
  %1013 = vst [vmem:[%s4 + $0x248] sm:$0xff] %v569
  %1014 = vst [vmem:[%s4 + $0x250] sm:$0xff] %v680
  %1015 = vst [vmem:[%s4 + $0x258] sm:$0xff] %v682
  %1016 = vst [vmem:[%s4 + $0x260] sm:$0xff] %v793
  %1017 = vst [vmem:[%s4 + $0x268] sm:$0xff] %v795
  %1018 = vst [vmem:[%s4 + $0x270] sm:$0xff] %v906
  %1019 = vst [vmem:[%s4 + $0x278] sm:$0xff] %v908
  %1020 = vst [vmem:[%s4 + $0x280] sm:$0xff] %v573
  %1021 = vst [vmem:[%s4 + $0x288] sm:$0xff] %v575
  %1022 = vst [vmem:[%s4 + $0x290] sm:$0xff] %v686
  %1023 = vst [vmem:[%s4 + $0x298] sm:$0xff] %v688
  %1024 = vst [vmem:[%s4 + $0x2a0] sm:$0xff] %v799
  %1025 = vst [vmem:[%s4 + $0x2a8] sm:$0xff] %v801
  %1026 = vst [vmem:[%s4 + $0x2b0] sm:$0xff] %v912
  %1027 = vst [vmem:[%s4 + $0x2b8] sm:$0xff] %v914
  %1028 = vst [vmem:[%s4 + $0x2c0] sm:$0xff] %v577
  %1029 = vst [vmem:[%s4 + $0x2c8] sm:$0xff] %v579
  %1030 = vst [vmem:[%s4 + $0x2d0] sm:$0xff] %v690
  %1031 = vst [vmem:[%s4 + $0x2d8] sm:$0xff] %v692
  %1032 = vst [vmem:[%s4 + $0x2e0] sm:$0xff] %v803
  %1033 = vst [vmem:[%s4 + $0x2e8] sm:$0xff] %v805
  %1034 = vst [vmem:[%s4 + $0x2f0] sm:$0xff] %v916
  %1035 = vst [vmem:[%s4 + $0x2f8] sm:$0xff] %v918
  %1036 = vst [vmem:[%s4 + $0x300] sm:$0xff] %v583
  %1037 = vst [vmem:[%s4 + $0x308] sm:$0xff] %v585
  %1038 = vst [vmem:[%s4 + $0x310] sm:$0xff] %v696
  %1039 = vst [vmem:[%s4 + $0x318] sm:$0xff] %v698
  %1040 = vst [vmem:[%s4 + $0x320] sm:$0xff] %v809
  %1041 = vst [vmem:[%s4 + $0x328] sm:$0xff] %v811
  %1042 = vst [vmem:[%s4 + $0x330] sm:$0xff] %v922
  %1043 = vst [vmem:[%s4 + $0x338] sm:$0xff] %v924
  %1044 = vst [vmem:[%s4 + $0x340] sm:$0xff] %v587
  %1045 = vst [vmem:[%s4 + $0x348] sm:$0xff] %v589
  %1046 = vst [vmem:[%s4 + $0x350] sm:$0xff] %v700
  %1047 = vst [vmem:[%s4 + $0x358] sm:$0xff] %v702
  %1048 = vst [vmem:[%s4 + $0x360] sm:$0xff] %v813
  %1049 = vst [vmem:[%s4 + $0x368] sm:$0xff] %v815
  %1050 = vst [vmem:[%s4 + $0x370] sm:$0xff] %v926
  %1051 = vst [vmem:[%s4 + $0x378] sm:$0xff] %v928
  %1052 = vst [vmem:[%s4 + $0x380] sm:$0xff] %v593
  %1053 = vst [vmem:[%s4 + $0x388] sm:$0xff] %v595
  %1054 = vst [vmem:[%s4 + $0x390] sm:$0xff] %v706
  %1055 = vst [vmem:[%s4 + $0x398] sm:$0xff] %v708
  %1056 = vst [vmem:[%s4 + $0x3a0] sm:$0xff] %v819
  %1057 = vst [vmem:[%s4 + $0x3a8] sm:$0xff] %v821
  %1058 = vst [vmem:[%s4 + $0x3b0] sm:$0xff] %v932
  %1059 = vst [vmem:[%s4 + $0x3b8] sm:$0xff] %v934
  %1060 = vst [vmem:[%s4 + $0x3c0] sm:$0xff] %v597
  %1061 = vst [vmem:[%s4 + $0x3c8] sm:$0xff] %v599
  %1062 = vst [vmem:[%s4 + $0x3d0] sm:$0xff] %v710
  %1063 = vst [vmem:[%s4 + $0x3d8] sm:$0xff] %v712
  %1064 = vst [vmem:[%s4 + $0x3e0] sm:$0xff] %v823
  %1065 = vst [vmem:[%s4 + $0x3e8] sm:$0xff] %v825
  %1066 = vst [vmem:[%s4 + $0x3f0] sm:$0xff] %v936
  %1067 = vst [vmem:[%s4 + $0x3f8] sm:$0xff] %v938
  // Predicated region
  $region18: #{generator_forward.12} parent=0 // pred_check
    _
  $region19: #{generator_forward.12} parent=0 // pred_check_branch
    %1069 = sbr.rel (0) target = $region21
  $region20: #{generator_forward.12} parent=0 // pred_region
    _
  $region21: #{generator_forward.12} parent=0 // pred_fallthru
    _
  // Predicated region
  $region22: #{generator_forward.12} parent=0 // pred_check
    _
  $region23: #{generator_forward.12} parent=0 // pred_check_branch
    %1071 = sbr.rel (0) target = $region25
  $region24: #{generator_forward.12} parent=0 // pred_region
    _
  $region25: #{generator_forward.12} parent=0 // pred_fallthru
    _

// kernel: generator_forward.13
$region0: #{generator_forward.13}
  #allocation0 [shape = 'u32[]', space=smem, size = 0x4, offset = 0x4, fixed_abs, tag = 'smem constant byte address 0x4 - core index']
  #allocation1 [shape = 'u32[144,128]{1,0:T(1,128)}', space=vmem, size = 0x12000, scoped, tag = 'internal scratch']
  %s0 = inlined_call_operand.vmem [shape: f32[512,64], index: 0, kind: input, shape index: {}]
  %s1 = inlined_call_operand.vmem [shape: f32[2,64], index: 1, kind: output, shape index: {}]
  %s2 = sld [smem:[#allocation0]]
  $region18: #{generator_forward.13} parent=0
    _
  %s4 = ssub.s32 1, %s2
  %s5 = scalar_select 0, %s4, %s2
  // Predicated region
  $region2: #{generator_forward.13} parent=0 // pred_check
    _
  $region3: #{generator_forward.13} parent=0 // pred_check_branch
    %7 = sbr.rel (0) target = $region5
  $region4: #{generator_forward.13} parent=0 // pred_region
    _
  $region5: #{generator_forward.13} parent=0 // pred_fallthru
    _
  %p8 = scmp.eq.s32.totalorder 0, 0
  // Predicated region
  $region6: #{generator_forward.13} parent=0 // pred_check
    %p9 = pneg %p8
  $region7: #{generator_forward.13} parent=0 // pred_check_branch
    %11 = sbr.rel (%p9) target = $region9
  $region8: #{generator_forward.13} parent=0 // pred_region
    %vm12 = vcmask 517120
    %13 = vst.msk [vmem:[%s1] sm:$0x3] %vm12, 0.0
  $region9: #{generator_forward.13} parent=0 // pred_fallthru
    _
  %v14 = vld [vmem:[%s0] sm:$0xff]
  %v15 = vld [vmem:[%s0 + $0x8] sm:$0xff]
  %v16 = vld [vmem:[%s0 + $0x10] sm:$0xff]
  %v17 = vld [vmem:[%s0 + $0x18] sm:$0xff]
  %v18 = vld [vmem:[%s0 + $0x20] sm:$0xff]
  %v19 = vld [vmem:[%s0 + $0x28] sm:$0xff]
  %v20 = vld [vmem:[%s0 + $0x30] sm:$0xff]
  %v21 = vld [vmem:[%s0 + $0x38] sm:$0xff]
  %v22 = vld [vmem:[%s0 + $0x40] sm:$0xff]
  %v23 = vld [vmem:[%s0 + $0x48] sm:$0xff]
  %v24 = vld [vmem:[%s0 + $0x50] sm:$0xff]
  %v25 = vld [vmem:[%s0 + $0x58] sm:$0xff]
  %v26 = vld [vmem:[%s0 + $0x60] sm:$0xff]
  %v27 = vld [vmem:[%s0 + $0x68] sm:$0xff]
  %v28 = vld [vmem:[%s0 + $0x70] sm:$0xff]
  %v29 = vld [vmem:[%s0 + $0x78] sm:$0xff]
  %v30 = vld [vmem:[%s0 + $0x80] sm:$0xff]
  %v31 = vld [vmem:[%s0 + $0x88] sm:$0xff]
  %v32 = vld [vmem:[%s0 + $0x90] sm:$0xff]
  %v33 = vld [vmem:[%s0 + $0x98] sm:$0xff]
  %v34 = vld [vmem:[%s0 + $0xa0] sm:$0xff]
  %v35 = vld [vmem:[%s0 + $0xa8] sm:$0xff]
  %v36 = vld [vmem:[%s0 + $0xb0] sm:$0xff]
  %v37 = vld [vmem:[%s0 + $0xb8] sm:$0xff]
  %v38 = vld [vmem:[%s0 + $0xc0] sm:$0xff]
  %v39 = vld [vmem:[%s0 + $0xc8] sm:$0xff]
  %v40 = vld [vmem:[%s0 + $0xd0] sm:$0xff]
  %v41 = vld [vmem:[%s0 + $0xd8] sm:$0xff]
  %v42 = vld [vmem:[%s0 + $0xe0] sm:$0xff]
  %v43 = vld [vmem:[%s0 + $0xe8] sm:$0xff]
  %v44 = vld [vmem:[%s0 + $0xf0] sm:$0xff]
  %v45 = vld [vmem:[%s0 + $0xf8] sm:$0xff]
  %v46 = vld [vmem:[%s0 + $0x100] sm:$0xff]
  %v47 = vld [vmem:[%s0 + $0x108] sm:$0xff]
  %v48 = vld [vmem:[%s0 + $0x110] sm:$0xff]
  %v49 = vld [vmem:[%s0 + $0x118] sm:$0xff]
  %v50 = vld [vmem:[%s0 + $0x120] sm:$0xff]
  %v51 = vld [vmem:[%s0 + $0x128] sm:$0xff]
  %v52 = vld [vmem:[%s0 + $0x130] sm:$0xff]
  %v53 = vld [vmem:[%s0 + $0x138] sm:$0xff]
  %v54 = vld [vmem:[%s0 + $0x140] sm:$0xff]
  %v55 = vld [vmem:[%s0 + $0x148] sm:$0xff]
  %v56 = vld [vmem:[%s0 + $0x150] sm:$0xff]
  %v57 = vld [vmem:[%s0 + $0x158] sm:$0xff]
  %v58 = vld [vmem:[%s0 + $0x160] sm:$0xff]
  %v59 = vld [vmem:[%s0 + $0x168] sm:$0xff]
  %v60 = vld [vmem:[%s0 + $0x170] sm:$0xff]
  %v61 = vld [vmem:[%s0 + $0x178] sm:$0xff]
  %v62 = vld [vmem:[%s0 + $0x180] sm:$0xff]
  %v63 = vld [vmem:[%s0 + $0x188] sm:$0xff]
  %v64 = vld [vmem:[%s0 + $0x190] sm:$0xff]
  %v65 = vld [vmem:[%s0 + $0x198] sm:$0xff]
  %v66 = vld [vmem:[%s0 + $0x1a0] sm:$0xff]
  %v67 = vld [vmem:[%s0 + $0x1a8] sm:$0xff]
  %v68 = vld [vmem:[%s0 + $0x1b0] sm:$0xff]
  %v69 = vld [vmem:[%s0 + $0x1b8] sm:$0xff]
  %v70 = vld [vmem:[%s0 + $0x1c0] sm:$0xff]
  %v71 = vld [vmem:[%s0 + $0x1c8] sm:$0xff]
  %v72 = vld [vmem:[%s0 + $0x1d0] sm:$0xff]
  %v73 = vld [vmem:[%s0 + $0x1d8] sm:$0xff]
  %v74 = vld [vmem:[%s0 + $0x1e0] sm:$0xff]
  %v75 = vld [vmem:[%s0 + $0x1e8] sm:$0xff]
  %v76 = vld [vmem:[%s0 + $0x1f0] sm:$0xff]
  %v77 = vld [vmem:[%s0 + $0x1f8] sm:$0xff]
  %vm78 = vcmask 523264
  %v79 = vsel %vm78, %v14, 0.0
  %v80 = vsel %vm78, %v15, 0.0
  %v81 = vadd.f32 %v79, %v80
  %v82 = vsel %vm78, %v16, 0.0
  %v83 = vadd.f32 %v81, %v82
  %v84 = vsel %vm78, %v17, 0.0
  %v85 = vadd.f32 %v83, %v84
  %v86 = vsel %vm78, %v18, 0.0
  %v87 = vadd.f32 %v85, %v86
  %v88 = vsel %vm78, %v19, 0.0
  %v89 = vadd.f32 %v87, %v88
  %v90 = vsel %vm78, %v20, 0.0
  %v91 = vadd.f32 %v89, %v90
  %v92 = vsel %vm78, %v21, 0.0
  %v93 = vadd.f32 %v91, %v92
  %v94 = vsel %vm78, %v22, 0.0
  %v95 = vadd.f32 %v93, %v94
  %v96 = vsel %vm78, %v23, 0.0
  %v97 = vadd.f32 %v95, %v96
  %v98 = vsel %vm78, %v24, 0.0
  %v99 = vadd.f32 %v97, %v98
  %v100 = vsel %vm78, %v25, 0.0
  %v101 = vadd.f32 %v99, %v100
  %v102 = vsel %vm78, %v26, 0.0
  %v103 = vadd.f32 %v101, %v102
  %v104 = vsel %vm78, %v27, 0.0
  %v105 = vadd.f32 %v103, %v104
  %v106 = vsel %vm78, %v28, 0.0
  %v107 = vadd.f32 %v105, %v106
  %v108 = vsel %vm78, %v29, 0.0
  %v109 = vadd.f32 %v107, %v108
  %v110 = vsel %vm78, %v30, 0.0
  %v111 = vadd.f32 %v109, %v110
  %v112 = vsel %vm78, %v31, 0.0
  %v113 = vadd.f32 %v111, %v112
  %v114 = vsel %vm78, %v32, 0.0
  %v115 = vadd.f32 %v113, %v114
  %v116 = vsel %vm78, %v33, 0.0
  %v117 = vadd.f32 %v115, %v116
  %v118 = vsel %vm78, %v34, 0.0
  %v119 = vadd.f32 %v117, %v118
  %v120 = vsel %vm78, %v35, 0.0
  %v121 = vadd.f32 %v119, %v120
  %v122 = vsel %vm78, %v36, 0.0
  %v123 = vadd.f32 %v121, %v122
  %v124 = vsel %vm78, %v37, 0.0
  %v125 = vadd.f32 %v123, %v124
  %v126 = vsel %vm78, %v38, 0.0
  %v127 = vadd.f32 %v125, %v126
  %v128 = vsel %vm78, %v39, 0.0
  %v129 = vadd.f32 %v127, %v128
  %v130 = vsel %vm78, %v40, 0.0
  %v131 = vadd.f32 %v129, %v130
  %v132 = vsel %vm78, %v41, 0.0
  %v133 = vadd.f32 %v131, %v132
  %v134 = vsel %vm78, %v42, 0.0
  %v135 = vadd.f32 %v133, %v134
  %v136 = vsel %vm78, %v43, 0.0
  %v137 = vadd.f32 %v135, %v136
  %v138 = vsel %vm78, %v44, 0.0
  %v139 = vadd.f32 %v137, %v138
  %v140 = vsel %vm78, %v45, 0.0
  %v141 = vadd.f32 %v139, %v140
  %v142 = vsel %vm78, %v46, 0.0
  %v143 = vadd.f32 %v141, %v142
  %v144 = vsel %vm78, %v47, 0.0
  %v145 = vadd.f32 %v143, %v144
  %v146 = vsel %vm78, %v48, 0.0
  %v147 = vadd.f32 %v145, %v146
  %v148 = vsel %vm78, %v49, 0.0
  %v149 = vadd.f32 %v147, %v148
  %v150 = vsel %vm78, %v50, 0.0
  %v151 = vadd.f32 %v149, %v150
  %v152 = vsel %vm78, %v51, 0.0
  %v153 = vadd.f32 %v151, %v152
  %v154 = vsel %vm78, %v52, 0.0
  %v155 = vadd.f32 %v153, %v154
  %v156 = vsel %vm78, %v53, 0.0
  %v157 = vadd.f32 %v155, %v156
  %v158 = vsel %vm78, %v54, 0.0
  %v159 = vadd.f32 %v157, %v158
  %v160 = vsel %vm78, %v55, 0.0
  %v161 = vadd.f32 %v159, %v160
  %v162 = vsel %vm78, %v56, 0.0
  %v163 = vadd.f32 %v161, %v162
  %v164 = vsel %vm78, %v57, 0.0
  %v165 = vadd.f32 %v163, %v164
  %v166 = vsel %vm78, %v58, 0.0
  %v167 = vadd.f32 %v165, %v166
  %v168 = vsel %vm78, %v59, 0.0
  %v169 = vadd.f32 %v167, %v168
  %v170 = vsel %vm78, %v60, 0.0
  %v171 = vadd.f32 %v169, %v170
  %v172 = vsel %vm78, %v61, 0.0
  %v173 = vadd.f32 %v171, %v172
  %v174 = vsel %vm78, %v62, 0.0
  %v175 = vadd.f32 %v173, %v174
  %v176 = vsel %vm78, %v63, 0.0
  %v177 = vadd.f32 %v175, %v176
  %v178 = vsel %vm78, %v64, 0.0
  %v179 = vadd.f32 %v177, %v178
  %v180 = vsel %vm78, %v65, 0.0
  %v181 = vadd.f32 %v179, %v180
  %v182 = vsel %vm78, %v66, 0.0
  %v183 = vadd.f32 %v181, %v182
  %v184 = vsel %vm78, %v67, 0.0
  %v185 = vadd.f32 %v183, %v184
  %v186 = vsel %vm78, %v68, 0.0
  %v187 = vadd.f32 %v185, %v186
  %v188 = vsel %vm78, %v69, 0.0
  %v189 = vadd.f32 %v187, %v188
  %v190 = vsel %vm78, %v70, 0.0
  %v191 = vadd.f32 %v189, %v190
  %v192 = vsel %vm78, %v71, 0.0
  %v193 = vadd.f32 %v191, %v192
  %v194 = vsel %vm78, %v72, 0.0
  %v195 = vadd.f32 %v193, %v194
  %v196 = vsel %vm78, %v73, 0.0
  %v197 = vadd.f32 %v195, %v196
  %v198 = vsel %vm78, %v74, 0.0
  %v199 = vadd.f32 %v197, %v198
  %v200 = vsel %vm78, %v75, 0.0
  %v201 = vadd.f32 %v199, %v200
  %v202 = vsel %vm78, %v76, 0.0
  %v203 = vadd.f32 %v201, %v202
  %v204 = vsel %vm78, %v77, 0.0
  %v205 = vadd.f32 %v203, %v204
  %v206 = vrot.slane %v205, 4
  %v207 = vadd.f32 %v205, %v206
  %v208 = vrot.slane %v207, 2
  %v209 = vadd.f32 %v207, %v208
  %v210 = vrot.slane %v209, 1
  %v211 = vadd.f32 %v209, %v210
  %v212 = vmul.f32 %v14, %v14
  %v213 = vmul.f32 %v15, %v15
  %v214 = vmul.f32 %v16, %v16
  %v215 = vmul.f32 %v17, %v17
  %v216 = vmul.f32 %v18, %v18
  %v217 = vmul.f32 %v19, %v19
  %v218 = vmul.f32 %v20, %v20
  %v219 = vmul.f32 %v21, %v21
  %v220 = vmul.f32 %v22, %v22
  %v221 = vmul.f32 %v23, %v23
  %v222 = vmul.f32 %v24, %v24
  %v223 = vmul.f32 %v25, %v25
  %v224 = vmul.f32 %v26, %v26
  %v225 = vmul.f32 %v27, %v27
  %v226 = vmul.f32 %v28, %v28
  %v227 = vmul.f32 %v29, %v29
  %v228 = vmul.f32 %v30, %v30
  %v229 = vmul.f32 %v31, %v31
  %v230 = vmul.f32 %v32, %v32
  %v231 = vmul.f32 %v33, %v33
  %v232 = vmul.f32 %v34, %v34
  %v233 = vmul.f32 %v35, %v35
  %v234 = vmul.f32 %v36, %v36
  %v235 = vmul.f32 %v37, %v37
  %v236 = vmul.f32 %v38, %v38
  %v237 = vmul.f32 %v39, %v39
  %v238 = vmul.f32 %v40, %v40
  %v239 = vmul.f32 %v41, %v41
  %v240 = vmul.f32 %v42, %v42
  %v241 = vmul.f32 %v43, %v43
  %v242 = vmul.f32 %v44, %v44
  %v243 = vmul.f32 %v45, %v45
  %v244 = vmul.f32 %v46, %v46
  %v245 = vmul.f32 %v47, %v47
  %v246 = vmul.f32 %v48, %v48
  %v247 = vmul.f32 %v49, %v49
  %v248 = vmul.f32 %v50, %v50
  %v249 = vmul.f32 %v51, %v51
  %v250 = vmul.f32 %v52, %v52
  %v251 = vmul.f32 %v53, %v53
  %v252 = vmul.f32 %v54, %v54
  %v253 = vmul.f32 %v55, %v55
  %v254 = vmul.f32 %v56, %v56
  %v255 = vmul.f32 %v57, %v57
  %v256 = vmul.f32 %v58, %v58
  %v257 = vmul.f32 %v59, %v59
  %v258 = vmul.f32 %v60, %v60
  %v259 = vmul.f32 %v61, %v61
  %v260 = vmul.f32 %v62, %v62
  %v261 = vmul.f32 %v63, %v63
  %v262 = vmul.f32 %v64, %v64
  %v263 = vmul.f32 %v65, %v65
  %v264 = vmul.f32 %v66, %v66
  %v265 = vmul.f32 %v67, %v67
  %v266 = vmul.f32 %v68, %v68
  %v267 = vmul.f32 %v69, %v69
  %v268 = vmul.f32 %v70, %v70
  %v269 = vmul.f32 %v71, %v71
  %v270 = vmul.f32 %v72, %v72
  %v271 = vmul.f32 %v73, %v73
  %v272 = vmul.f32 %v74, %v74
  %v273 = vmul.f32 %v75, %v75
  %v274 = vmul.f32 %v76, %v76
  %v275 = vmul.f32 %v77, %v77
  %v276 = vsel %vm78, %v212, 0.0
  %v277 = vsel %vm78, %v213, 0.0
  %v278 = vadd.f32 %v276, %v277
  %v279 = vsel %vm78, %v214, 0.0
  %v280 = vadd.f32 %v278, %v279
  %v281 = vsel %vm78, %v215, 0.0
  %v282 = vadd.f32 %v280, %v281
  %v283 = vsel %vm78, %v216, 0.0
  %v284 = vadd.f32 %v282, %v283
  %v285 = vsel %vm78, %v217, 0.0
  %v286 = vadd.f32 %v284, %v285
  %v287 = vsel %vm78, %v218, 0.0
  %v288 = vadd.f32 %v286, %v287
  %v289 = vsel %vm78, %v219, 0.0
  %v290 = vadd.f32 %v288, %v289
  %v291 = vsel %vm78, %v220, 0.0
  %v292 = vadd.f32 %v290, %v291
  %v293 = vsel %vm78, %v221, 0.0
  %v294 = vadd.f32 %v292, %v293
  %v295 = vsel %vm78, %v222, 0.0
  %v296 = vadd.f32 %v294, %v295
  %v297 = vsel %vm78, %v223, 0.0
  %v298 = vadd.f32 %v296, %v297
  %v299 = vsel %vm78, %v224, 0.0
  %v300 = vadd.f32 %v298, %v299
  %v301 = vsel %vm78, %v225, 0.0
  %v302 = vadd.f32 %v300, %v301
  %v303 = vsel %vm78, %v226, 0.0
  %v304 = vadd.f32 %v302, %v303
  %v305 = vsel %vm78, %v227, 0.0
  %v306 = vadd.f32 %v304, %v305
  %v307 = vsel %vm78, %v228, 0.0
  %v308 = vadd.f32 %v306, %v307
  %v309 = vsel %vm78, %v229, 0.0
  %v310 = vadd.f32 %v308, %v309
  %v311 = vsel %vm78, %v230, 0.0
  %v312 = vadd.f32 %v310, %v311
  %v313 = vsel %vm78, %v231, 0.0
  %v314 = vadd.f32 %v312, %v313
  %v315 = vsel %vm78, %v232, 0.0
  %v316 = vadd.f32 %v314, %v315
  %v317 = vsel %vm78, %v233, 0.0
  %v318 = vadd.f32 %v316, %v317
  %v319 = vsel %vm78, %v234, 0.0
  %v320 = vadd.f32 %v318, %v319
  %v321 = vsel %vm78, %v235, 0.0
  %v322 = vadd.f32 %v320, %v321
  %v323 = vsel %vm78, %v236, 0.0
  %v324 = vadd.f32 %v322, %v323
  %v325 = vsel %vm78, %v237, 0.0
  %v326 = vadd.f32 %v324, %v325
  %v327 = vsel %vm78, %v238, 0.0
  %v328 = vadd.f32 %v326, %v327
  %v329 = vsel %vm78, %v239, 0.0
  %v330 = vadd.f32 %v328, %v329
  %v331 = vsel %vm78, %v240, 0.0
  %v332 = vadd.f32 %v330, %v331
  %v333 = vsel %vm78, %v241, 0.0
  %v334 = vadd.f32 %v332, %v333
  %v335 = vsel %vm78, %v242, 0.0
  %v336 = vadd.f32 %v334, %v335
  %v337 = vsel %vm78, %v243, 0.0
  %v338 = vadd.f32 %v336, %v337
  %v339 = vsel %vm78, %v244, 0.0
  %v340 = vadd.f32 %v338, %v339
  %v341 = vsel %vm78, %v245, 0.0
  %v342 = vadd.f32 %v340, %v341
  %v343 = vsel %vm78, %v246, 0.0
  %v344 = vadd.f32 %v342, %v343
  %v345 = vsel %vm78, %v247, 0.0
  %v346 = vadd.f32 %v344, %v345
  %v347 = vsel %vm78, %v248, 0.0
  %v348 = vadd.f32 %v346, %v347
  %v349 = vsel %vm78, %v249, 0.0
  %v350 = vadd.f32 %v348, %v349
  %v351 = vsel %vm78, %v250, 0.0
  %v352 = vadd.f32 %v350, %v351
  %v353 = vsel %vm78, %v251, 0.0
  %v354 = vadd.f32 %v352, %v353
  %v355 = vsel %vm78, %v252, 0.0
  %v356 = vadd.f32 %v354, %v355
  %v357 = vsel %vm78, %v253, 0.0
  %v358 = vadd.f32 %v356, %v357
  %v359 = vsel %vm78, %v254, 0.0
  %v360 = vadd.f32 %v358, %v359
  %v361 = vsel %vm78, %v255, 0.0
  %v362 = vadd.f32 %v360, %v361
  %v363 = vsel %vm78, %v256, 0.0
  %v364 = vadd.f32 %v362, %v363
  %v365 = vsel %vm78, %v257, 0.0
  %v366 = vadd.f32 %v364, %v365
  %v367 = vsel %vm78, %v258, 0.0
  %v368 = vadd.f32 %v366, %v367
  %v369 = vsel %vm78, %v259, 0.0
  %v370 = vadd.f32 %v368, %v369
  %v371 = vsel %vm78, %v260, 0.0
  %v372 = vadd.f32 %v370, %v371
  %v373 = vsel %vm78, %v261, 0.0
  %v374 = vadd.f32 %v372, %v373
  %v375 = vsel %vm78, %v262, 0.0
  %v376 = vadd.f32 %v374, %v375
  %v377 = vsel %vm78, %v263, 0.0
  %v378 = vadd.f32 %v376, %v377
  %v379 = vsel %vm78, %v264, 0.0
  %v380 = vadd.f32 %v378, %v379
  %v381 = vsel %vm78, %v265, 0.0
  %v382 = vadd.f32 %v380, %v381
  %v383 = vsel %vm78, %v266, 0.0
  %v384 = vadd.f32 %v382, %v383
  %v385 = vsel %vm78, %v267, 0.0
  %v386 = vadd.f32 %v384, %v385
  %v387 = vsel %vm78, %v268, 0.0
  %v388 = vadd.f32 %v386, %v387
  %v389 = vsel %vm78, %v269, 0.0
  %v390 = vadd.f32 %v388, %v389
  %v391 = vsel %vm78, %v270, 0.0
  %v392 = vadd.f32 %v390, %v391
  %v393 = vsel %vm78, %v271, 0.0
  %v394 = vadd.f32 %v392, %v393
  %v395 = vsel %vm78, %v272, 0.0
  %v396 = vadd.f32 %v394, %v395
  %v397 = vsel %vm78, %v273, 0.0
  %v398 = vadd.f32 %v396, %v397
  %v399 = vsel %vm78, %v274, 0.0
  %v400 = vadd.f32 %v398, %v399
  %v401 = vsel %vm78, %v275, 0.0
  %v402 = vadd.f32 %v400, %v401
  %v403 = vrot.slane %v402, 4
  %v404 = vadd.f32 %v402, %v403
  %v405 = vrot.slane %v404, 2
  %v406 = vadd.f32 %v404, %v405
  %v407 = vrot.slane %v406, 1
  %v408 = vadd.f32 %v406, %v407
  %v409 = vld [vmem:[%s1] sm:$0x3]
  %vm410 = vcmask 1040384
  %v411 = vsel %vm410, %v211, %v408
  %v412 = vadd.f32 %v409, %v411
  %vm413 = vcmask 517120
  %414 = vst.msk [vmem:[%s1] sm:$0x3] %vm413, %v412
  // Predicated region
  $region10: #{generator_forward.13} parent=0 // pred_check
    _
  $region11: #{generator_forward.13} parent=0 // pred_check_branch
    %416 = sbr.rel (0) target = $region13
  $region12: #{generator_forward.13} parent=0 // pred_region
    _
  $region13: #{generator_forward.13} parent=0 // pred_fallthru
    _
  // Predicated region
  $region14: #{generator_forward.13} parent=0 // pred_check
    _
  $region15: #{generator_forward.13} parent=0 // pred_check_branch
    %418 = sbr.rel (0) target = $region17
  $region16: #{generator_forward.13} parent=0 // pred_region
    _
  $region17: #{generator_forward.13} parent=0 // pred_fallthru
    _

// kernel: generator_forward.14
$region0: #{generator_forward.14}
  #allocation0 [shape = 'u32[]', space=smem, size = 0x4, offset = 0x4, fixed_abs, tag = 'smem constant byte address 0x4 - core index']
  #allocation1 [shape = 'u32[144,128]{1,0:T(1,128)}', space=vmem, size = 0x12000, scoped, tag = 'internal scratch']
  %s0 = inlined_call_operand.vmem [shape: f32[512,64], index: 0, kind: input, shape index: {}]
  %s1 = inlined_call_operand.vmem [shape: f32[1,64], index: 1, kind: input, shape index: {}]
  %s2 = inlined_call_operand.vmem [shape: f32[1,64], index: 2, kind: input, shape index: {}]
  %s3 = inlined_call_operand.vmem [shape: bf16[64,128], index: 3, kind: input, shape index: {}]
  %s4 = inlined_call_operand.vmem [shape: f32[512,128], index: 4, kind: output, shape index: {}]
  %s5 = sld [smem:[#allocation0]]
  $region49: #{generator_forward.14} parent=0
    _
  %s7 = ssub.s32 1, %s5
  %s8 = scalar_select 0, %s7, %s5
  loop: start=0, step=1, limit=4
  $region2: #{generator_forward.14} parent=0 // loop_pre_header
    _
  $region3: #{generator_forward.14} parent=0 // loop_header
    %s10 = sphi 0, %s14
    %p11 = scmp.ge.s32.totalorder %s10, 4
    %s20 = sphi 0, %s22
    %s23 = sphi 0, %s20
    %s24 = sphi 0, %s23
    %s40 = sphi 0, %s24
    %s44 = sphi 0, %s44
    %s46 = sphi 0, %s44
    %s47 = sphi 0, %s46
    %s61 = sphi 0, %s47
    %s65 = sphi 0, %s65
    %s67 = sphi 0, %s65
    %s68 = sphi 0, %s67
    %s82 = sphi 0, %s68
    %s86 = sphi 0, %s86
    %s88 = sphi 0, %s86
    %s89 = sphi 0, %s88
    %s103 = sphi 0, %s89
    %s109 = sphi 0, %s111
    %s112 = sphi 0, %s109
    %s113 = sphi 0, %s112
    %s129 = sphi 0, %s113
  $region4: #{generator_forward.14} parent=0 // loop_header_branch
    %13 = sbr.rel (%p11) target = $region8
  $region5: #{generator_forward.14} parent=0 // loop_body
    %s15 = ssub.s32 %s10, 1
    %s16 = ssub.s32 %s10, 2
    %s17 = sadd.s32 %s10, 1
    %s18 = ssub.s32 %s10, %s17
    %p19 = scmp.eq.s32.totalorder %s18, 0
    %s21 = sadd.s32 %s20, 1
    %s22 = scalar_select %p19, %s20, %s21
    %p25 = pneg %p19
    %p26 = scmp.eq.s32.totalorder %s10, 1
    %p27 = por %p25, %p26
    %p28 = scmp.ne.s32.totalorder %s20, %s23
    %p29 = scmp.eq.s32.totalorder %s10, 0
    %p30 = por %p28, %p29
    %p31 = scmp.ne.s32.totalorder %s20, %s23
    %p32 = scmp.eq.s32.totalorder %s15, 1
    %p33 = por %p31, %p32
    %p34 = scmp.ne.s32.totalorder %s23, %s24
    %p35 = scmp.eq.s32.totalorder %s15, 0
    %p36 = por %p34, %p35
    %p37 = scmp.ne.s32.totalorder %s23, %s24
    %p38 = scmp.eq.s32.totalorder %s16, 1
    %p39 = por %p37, %p38
    %p41 = scmp.ne.s32.totalorder %s24, %s40
    %p42 = scmp.eq.s32.totalorder %s16, 0
    %p43 = por %p41, %p42
    %s45 = sadd.s32 %s44, 1
    %p48 = scmp.eq.s32.totalorder %s10, 1
    %p49 = scmp.ne.s32.totalorder %s44, %s46
    %p50 = scmp.eq.s32.totalorder %s10, 0
    %p51 = por %p49, %p50
    %p52 = scmp.ne.s32.totalorder %s44, %s46
    %p53 = scmp.eq.s32.totalorder %s15, 1
    %p54 = por %p52, %p53
    %p55 = scmp.ne.s32.totalorder %s46, %s47
    %p56 = scmp.eq.s32.totalorder %s15, 0
    %p57 = por %p55, %p56
    %p58 = scmp.ne.s32.totalorder %s46, %s47
    %p59 = scmp.eq.s32.totalorder %s16, 1
    %p60 = por %p58, %p59
    %p62 = scmp.ne.s32.totalorder %s47, %s61
    %p63 = scmp.eq.s32.totalorder %s16, 0
    %p64 = por %p62, %p63
    %s66 = sadd.s32 %s65, 1
    %p69 = scmp.eq.s32.totalorder %s10, 1
    %p70 = scmp.ne.s32.totalorder %s65, %s67
    %p71 = scmp.eq.s32.totalorder %s10, 0
    %p72 = por %p70, %p71
    %p73 = scmp.ne.s32.totalorder %s65, %s67
    %p74 = scmp.eq.s32.totalorder %s15, 1
    %p75 = por %p73, %p74
    %p76 = scmp.ne.s32.totalorder %s67, %s68
    %p77 = scmp.eq.s32.totalorder %s15, 0
    %p78 = por %p76, %p77
    %p79 = scmp.ne.s32.totalorder %s67, %s68
    %p80 = scmp.eq.s32.totalorder %s16, 1
    %p81 = por %p79, %p80
    %p83 = scmp.ne.s32.totalorder %s68, %s82
    %p84 = scmp.eq.s32.totalorder %s16, 0
    %p85 = por %p83, %p84
    %s87 = sadd.s32 %s86, 1
    %p90 = scmp.eq.s32.totalorder %s10, 1
    %p91 = scmp.ne.s32.totalorder %s86, %s88
    %p92 = scmp.eq.s32.totalorder %s10, 0
    %p93 = por %p91, %p92
    %p94 = scmp.ne.s32.totalorder %s86, %s88
    %p95 = scmp.eq.s32.totalorder %s15, 1
    %p96 = por %p94, %p95
    %p97 = scmp.ne.s32.totalorder %s88, %s89
    %p98 = scmp.eq.s32.totalorder %s15, 0
    %p99 = por %p97, %p98
    %p100 = scmp.ne.s32.totalorder %s88, %s89
    %p101 = scmp.eq.s32.totalorder %s16, 1
    %p102 = por %p100, %p101
    %p104 = scmp.ne.s32.totalorder %s89, %s103
    %p105 = scmp.eq.s32.totalorder %s16, 0
    %p106 = por %p104, %p105
    %s107 = ssub.s32 %s10, %s17
    %p108 = scmp.eq.s32.totalorder %s107, 0
    %s110 = sadd.s32 %s109, 1
    %s111 = scalar_select %p108, %s109, %s110
    %p114 = pneg %p108
    %p115 = scmp.eq.s32.totalorder %s10, 1
    %p116 = por %p114, %p115
    %p117 = scmp.ne.s32.totalorder %s109, %s112
    %p118 = scmp.eq.s32.totalorder %s10, 0
    %p119 = por %p117, %p118
    %p120 = scmp.ne.s32.totalorder %s109, %s112
    %p121 = scmp.eq.s32.totalorder %s15, 1
    %p122 = por %p120, %p121
    %p123 = scmp.ne.s32.totalorder %s112, %s113
    %p124 = scmp.eq.s32.totalorder %s15, 0
    %p125 = por %p123, %p124
    %p126 = scmp.ne.s32.totalorder %s112, %s113
    %p127 = scmp.eq.s32.totalorder %s16, 1
    %p128 = por %p126, %p127
    %p130 = scmp.ne.s32.totalorder %s113, %s129
    %p131 = scmp.eq.s32.totalorder %s16, 0
    %p132 = por %p130, %p131
    %p133 = scmp.le.s32.totalorder 1, %s10
    %p134 = scmp.lt.s32.totalorder %s10, 3
    %p135 = pnand %p133, %p134
    %p136 = pneg %p135
    // Predicated region
    $region9: #{generator_forward.14} parent=5 // pred_check
      _
    $region10: #{generator_forward.14} parent=5 // pred_check_branch
      %138 = sbr.rel (%p135) target = $region12
    $region11: #{generator_forward.14} parent=5 // pred_region
      %s139 = ssub.s32 %s10, 1
      // Predicated region
      $region13: #{generator_forward.14} parent=11 // pred_check
        %p140 = pneg %p57
      $region14: #{generator_forward.14} parent=11 // pred_check_branch
        %142 = sbr.rel (%p140) target = $region16
      $region15: #{generator_forward.14} parent=11 // pred_region
        _
      $region16: #{generator_forward.14} parent=11 // pred_fallthru
        _
      // Predicated region
      $region17: #{generator_forward.14} parent=11 // pred_check
        %p143 = pneg %p78
      $region18: #{generator_forward.14} parent=11 // pred_check_branch
        %145 = sbr.rel (%p143) target = $region20
      $region19: #{generator_forward.14} parent=11 // pred_region
        _
      $region20: #{generator_forward.14} parent=11 // pred_fallthru
        _
      // Predicated region
      $region21: #{generator_forward.14} parent=11 // pred_check
        %p146 = pneg %p99
      $region22: #{generator_forward.14} parent=11 // pred_check_branch
        %148 = sbr.rel (%p146) target = $region24
      $region23: #{generator_forward.14} parent=11 // pred_region
        _
      $region24: #{generator_forward.14} parent=11 // pred_fallthru
        _
    $region12: #{generator_forward.14} parent=5 // pred_fallthru
      _
    %p149 = scmp.lt.s32.totalorder %s10, 2
    // Predicated region
    $region25: #{generator_forward.14} parent=5 // pred_check
      %p150 = pneg %p149
    $region26: #{generator_forward.14} parent=5 // pred_check_branch
      %152 = sbr.rel (%p150) target = $region28
    $region27: #{generator_forward.14} parent=5 // pred_region
      // Predicated region
      $region29: #{generator_forward.14} parent=27 // pred_check
        %p153 = pneg %p30
      $region30: #{generator_forward.14} parent=27 // pred_check_branch
        %155 = sbr.rel (%p153) target = $region32
      $region31: #{generator_forward.14} parent=27 // pred_region
        %s156 = smul.u32 32, %s10
        %p157 = scmp.lt.s32.totalorder %s156, 63
        %s158 = scalar_select %p157, %s156, 63
        %s159 = smul.addr %s158, 8
        %s160 = scalar_lea.vmem %s0, %s159
        %s161 = smul.u32 32, %s10
      $region32: #{generator_forward.14} parent=27 // pred_fallthru
        _
    $region28: #{generator_forward.14} parent=5 // pred_fallthru
      _
    %p162 = scmp.le.s32.totalorder 1, %s10
    %p163 = scmp.lt.s32.totalorder %s10, 3
    %p164 = pnand %p162, %p163
    %p165 = pneg %p164
    // Predicated region
    $region33: #{generator_forward.14} parent=5 // pred_check
      _
    $region34: #{generator_forward.14} parent=5 // pred_check_branch
      %167 = sbr.rel (%p164) target = $region36
    $region35: #{generator_forward.14} parent=5 // pred_region
      %s168 = ssub.s32 %s10, 1
      %s169 = smul.u32 32, %s15
      %p170 = scmp.lt.s32.totalorder %s169, 63
      %s171 = scalar_select %p170, %s169, 63
      %s172 = smul.addr %s171, 8
      %s173 = scalar_lea.vmem %s0, %s172
      %p174 = pneg %p36
      %p175 = pneg %p33
      %p176 = pneg %p57
      %p177 = pneg %p54
      %p178 = pneg %p78
      %p179 = pneg %p75
      %p180 = pneg %p99
      %p181 = pneg %p96
      %p182 = pneg %p125
      %p183 = pneg %p122
      %s184 = smul.u32 32, %s15
      %p185 = scmp.lt.s32.totalorder %s184, 63
      %s186 = scalar_select %p185, %s184, 63
      %s187 = smul.addr %s186, 8
      %s188 = scalar_lea.vmem %s4, %s187
      %s189 = smul.u32 32, %s15
      %p190 = scmp.lt.s32.totalorder %s189, 63
      %s191 = scalar_select %p190, %s189, 63
      %s192 = smul.addr %s191, 8
      %s193 = scalar_lea.vmem %s0, %s192
      %s194 = smul.u32 32, %s15
      %s195 = smul.u32 32, %s15
      %p196 = scmp.lt.s32.totalorder %s195, 63
      %s197 = scalar_select %p196, %s195, 63
      %s198 = smul.addr %s197, 8
      %s199 = scalar_lea.vmem %s4, %s198
      %s200 = smul.u32 32, %s15
      %v202 = vld [vmem:[%s193] sm:$0xff]
      %v203 = vld [vmem:[%s193 + $0x8] sm:$0xff]
      %v204 = vld [vmem:[%s193 + $0x10] sm:$0xff]
      %v205 = vld [vmem:[%s193 + $0x18] sm:$0xff]
      %v206 = vld [vmem:[%s193 + $0x20] sm:$0xff]
      %v207 = vld [vmem:[%s193 + $0x28] sm:$0xff]
      %v208 = vld [vmem:[%s193 + $0x30] sm:$0xff]
      %v209 = vld [vmem:[%s193 + $0x38] sm:$0xff]
      %v210 = vld [vmem:[%s193 + $0x40] sm:$0xff]
      %v211 = vld [vmem:[%s193 + $0x48] sm:$0xff]
      %v212 = vld [vmem:[%s193 + $0x50] sm:$0xff]
      %v213 = vld [vmem:[%s193 + $0x58] sm:$0xff]
      %v214 = vld [vmem:[%s193 + $0x60] sm:$0xff]
      %v215 = vld [vmem:[%s193 + $0x68] sm:$0xff]
      %v216 = vld [vmem:[%s193 + $0x70] sm:$0xff]
      %v217 = vld [vmem:[%s193 + $0x78] sm:$0xff]
      %v218 = vld [vmem:[%s193 + $0x80] sm:$0xff]
      %v219 = vld [vmem:[%s193 + $0x88] sm:$0xff]
      %v220 = vld [vmem:[%s193 + $0x90] sm:$0xff]
      %v221 = vld [vmem:[%s193 + $0x98] sm:$0xff]
      %v222 = vld [vmem:[%s193 + $0xa0] sm:$0xff]
      %v223 = vld [vmem:[%s193 + $0xa8] sm:$0xff]
      %v224 = vld [vmem:[%s193 + $0xb0] sm:$0xff]
      %v225 = vld [vmem:[%s193 + $0xb8] sm:$0xff]
      %v226 = vld [vmem:[%s193 + $0xc0] sm:$0xff]
      %v227 = vld [vmem:[%s193 + $0xc8] sm:$0xff]
      %v228 = vld [vmem:[%s193 + $0xd0] sm:$0xff]
      %v229 = vld [vmem:[%s193 + $0xd8] sm:$0xff]
      %v230 = vld [vmem:[%s193 + $0xe0] sm:$0xff]
      %v231 = vld [vmem:[%s193 + $0xe8] sm:$0xff]
      %v232 = vld [vmem:[%s193 + $0xf0] sm:$0xff]
      %v233 = vld [vmem:[%s193 + $0xf8] sm:$0xff]
      %v234 = vld [vmem:[%s1] sm:$0x1]
      %v236 = vlaneseq
      %v237 = vshrl.u32 %v236, 7
      %v238 = vsub.s32 0, %v237
      %v239 = vrot.slane %v234, %v238
      %v241 = vmul.f32 %v202, %v239
      %v242 = vmul.f32 %v203, %v239
      %v243 = vmul.f32 %v204, %v239
      %v244 = vmul.f32 %v205, %v239
      %v245 = vmul.f32 %v206, %v239
      %v246 = vmul.f32 %v207, %v239
      %v247 = vmul.f32 %v208, %v239
      %v248 = vmul.f32 %v209, %v239
      %v249 = vmul.f32 %v210, %v239
      %v250 = vmul.f32 %v211, %v239
      %v251 = vmul.f32 %v212, %v239
      %v252 = vmul.f32 %v213, %v239
      %v253 = vmul.f32 %v214, %v239
      %v254 = vmul.f32 %v215, %v239
      %v255 = vmul.f32 %v216, %v239
      %v256 = vmul.f32 %v217, %v239
      %v257 = vmul.f32 %v218, %v239
      %v258 = vmul.f32 %v219, %v239
      %v259 = vmul.f32 %v220, %v239
      %v260 = vmul.f32 %v221, %v239
      %v261 = vmul.f32 %v222, %v239
      %v262 = vmul.f32 %v223, %v239
      %v263 = vmul.f32 %v224, %v239
      %v264 = vmul.f32 %v225, %v239
      %v265 = vmul.f32 %v226, %v239
      %v266 = vmul.f32 %v227, %v239
      %v267 = vmul.f32 %v228, %v239
      %v268 = vmul.f32 %v229, %v239
      %v269 = vmul.f32 %v230, %v239
      %v270 = vmul.f32 %v231, %v239
      %v271 = vmul.f32 %v232, %v239
      %v272 = vmul.f32 %v233, %v239
      %v273 = vld [vmem:[%s2] sm:$0x1]
      %v275 = vlaneseq
      %v276 = vshrl.u32 %v275, 7
      %v277 = vsub.s32 0, %v276
      %v278 = vrot.slane %v273, %v277
      %v280 = vadd.f32 %v241, %v278
      %v281 = vadd.f32 %v242, %v278
      %v282 = vadd.f32 %v243, %v278
      %v283 = vadd.f32 %v244, %v278
      %v284 = vadd.f32 %v245, %v278
      %v285 = vadd.f32 %v246, %v278
      %v286 = vadd.f32 %v247, %v278
      %v287 = vadd.f32 %v248, %v278
      %v288 = vadd.f32 %v249, %v278
      %v289 = vadd.f32 %v250, %v278
      %v290 = vadd.f32 %v251, %v278
      %v291 = vadd.f32 %v252, %v278
      %v292 = vadd.f32 %v253, %v278
      %v293 = vadd.f32 %v254, %v278
      %v294 = vadd.f32 %v255, %v278
      %v295 = vadd.f32 %v256, %v278
      %v296 = vadd.f32 %v257, %v278
      %v297 = vadd.f32 %v258, %v278
      %v298 = vadd.f32 %v259, %v278
      %v299 = vadd.f32 %v260, %v278
      %v300 = vadd.f32 %v261, %v278
      %v301 = vadd.f32 %v262, %v278
      %v302 = vadd.f32 %v263, %v278
      %v303 = vadd.f32 %v264, %v278
      %v304 = vadd.f32 %v265, %v278
      %v305 = vadd.f32 %v266, %v278
      %v306 = vadd.f32 %v267, %v278
      %v307 = vadd.f32 %v268, %v278
      %v308 = vadd.f32 %v269, %v278
      %v309 = vadd.f32 %v270, %v278
      %v310 = vadd.f32 %v271, %v278
      %v311 = vadd.f32 %v272, %v278
      %v312 = vmax.f32 %v280, 0.0
      %v313 = vmax.f32 %v281, 0.0
      %v314 = vmax.f32 %v282, 0.0
      %v315 = vmax.f32 %v283, 0.0
      %v316 = vmax.f32 %v284, 0.0
      %v317 = vmax.f32 %v285, 0.0
      %v318 = vmax.f32 %v286, 0.0
      %v319 = vmax.f32 %v287, 0.0
      %v320 = vmax.f32 %v288, 0.0
      %v321 = vmax.f32 %v289, 0.0
      %v322 = vmax.f32 %v290, 0.0
      %v323 = vmax.f32 %v291, 0.0
      %v324 = vmax.f32 %v292, 0.0
      %v325 = vmax.f32 %v293, 0.0
      %v326 = vmax.f32 %v294, 0.0
      %v327 = vmax.f32 %v295, 0.0
      %v328 = vmax.f32 %v296, 0.0
      %v329 = vmax.f32 %v297, 0.0
      %v330 = vmax.f32 %v298, 0.0
      %v331 = vmax.f32 %v299, 0.0
      %v332 = vmax.f32 %v300, 0.0
      %v333 = vmax.f32 %v301, 0.0
      %v334 = vmax.f32 %v302, 0.0
      %v335 = vmax.f32 %v303, 0.0
      %v336 = vmax.f32 %v304, 0.0
      %v337 = vmax.f32 %v305, 0.0
      %v338 = vmax.f32 %v306, 0.0
      %v339 = vmax.f32 %v307, 0.0
      %v340 = vmax.f32 %v308, 0.0
      %v341 = vmax.f32 %v309, 0.0
      %v342 = vmax.f32 %v310, 0.0
      %v343 = vmax.f32 %v311, 0.0
      %v344 = vpack.c.bf16 %v313, %v312
      %v345 = vpack.c.bf16 %v315, %v314
      %v346 = vpack.c.bf16 %v317, %v316
      %v347 = vpack.c.bf16 %v319, %v318
      %v348 = vpack.c.bf16 %v321, %v320
      %v349 = vpack.c.bf16 %v323, %v322
      %v350 = vpack.c.bf16 %v325, %v324
      %v351 = vpack.c.bf16 %v327, %v326
      %v352 = vpack.c.bf16 %v329, %v328
      %v353 = vpack.c.bf16 %v331, %v330
      %v354 = vpack.c.bf16 %v333, %v332
      %v355 = vpack.c.bf16 %v335, %v334
      %v356 = vpack.c.bf16 %v337, %v336
      %v357 = vpack.c.bf16 %v339, %v338
      %v358 = vpack.c.bf16 %v341, %v340
      %v359 = vpack.c.bf16 %v343, %v342
      %v360 = vld [vmem:[%s3] sm:$0xf]
      %v361 = vld [vmem:[%s3 + $0x4] sm:$0xf]
      %v362 = vld [vmem:[%s3 + $0x8] sm:$0xf]
      %v363 = vld [vmem:[%s3 + $0xc] sm:$0xf]
      %v364 = vld [vmem:[%s3 + $0x10] sm:$0xf]
      %v365 = vld [vmem:[%s3 + $0x14] sm:$0xf]
      %v366 = vld [vmem:[%s3 + $0x18] sm:$0xf]
      %v367 = vld [vmem:[%s3 + $0x1c] sm:$0xf]
      %v376 = vunpack.c.l.b16 %v360
      %v377 = vunpack.c.l.b16 %v361
      %v378 = vunpack.c.l.b16 %v362
      %v379 = vunpack.c.l.b16 %v363
      %v380 = vunpack.c.l.b16 %v364
      %v381 = vunpack.c.l.b16 %v365
      %v382 = vunpack.c.l.b16 %v366
      %v383 = vunpack.c.l.b16 %v367
      %v384 = vpack.c.b16 %v377, %v376
      %v385 = vpack.c.b16 %v379, %v378
      %v386 = vpack.c.b16 %v381, %v380
      %v387 = vpack.c.b16 %v383, %v382
      %vm392 = vcmask 523264
      %v394 = vsel %vm392, %v344, 0
      %v397 = vsel %vm392, %v345, 0
      %v400 = vsel %vm392, %v346, 0
      %v403 = vsel %vm392, %v347, 0
      %v406 = vsel %vm392, %v348, 0
      %v409 = vsel %vm392, %v349, 0
      %v412 = vsel %vm392, %v350, 0
      %v415 = vsel %vm392, %v351, 0
      %v418 = vsel %vm392, %v352, 0
      %v421 = vsel %vm392, %v353, 0
      %v424 = vsel %vm392, %v354, 0
      %v427 = vsel %vm392, %v355, 0
      %v430 = vsel %vm392, %v356, 0
      %v433 = vsel %vm392, %v357, 0
      %v436 = vsel %vm392, %v358, 0
      %v439 = vsel %vm392, %v359, 0
      %441 = vmatprep.subr.bf16.mxu0 0
      %442 = vmatpush1.bf16.msra.mxu0 %v384
      %443 = vmatprep.subr.bf16.mxu0 0
      %444 = vmatpush1.bf16.msra.mxu0 %v385
      %445 = vmatprep.subr.bf16.mxu0 0
      %446 = vmatpush1.bf16.msra.mxu0 %v386
      %447 = vmatprep.subr.bf16.mxu0 0
      %448 = vmatpush1.bf16.msra.mxu0 %v387
      %449 = vmatprep.subr.bf16.mxu0 0
      %450 = vmatpush1.bf16.msra.mxu0 0
      %451 = vmatprep.subr.bf16.mxu0 0
      %452 = vmatpush1.bf16.msra.mxu0 0
      %453 = vmatprep.subr.bf16.mxu0 0
      %454 = vmatpush1.bf16.msra.mxu0 0
      %455 = vmatprep.subr.bf16.mxu0 0
      %456 = vmatpush1.bf16.msra.mxu0 0
      %457 = vmatprep.subr.bf16.mxu0 0
      %458 = vmatpush1.bf16.msra.mxu0 0
      %459 = vmatprep.subr.bf16.mxu0 0
      %460 = vmatpush1.bf16.msra.mxu0 0
      %461 = vmatprep.subr.bf16.mxu0 0
      %462 = vmatpush1.bf16.msra.mxu0 0
      %463 = vmatprep.subr.bf16.mxu0 0
      %464 = vmatpush1.bf16.msra.mxu0 0
      %465 = vmatprep.subr.bf16.mxu0 0
      %466 = vmatpush1.bf16.msra.mxu0 0
      %467 = vmatprep.subr.bf16.mxu0 0
      %468 = vmatpush1.bf16.msra.mxu0 0
      %469 = vmatprep.subr.bf16.mxu0 0
      %470 = vmatpush1.bf16.msra.mxu0 0
      %471 = vmatprep.subr.bf16.mxu0 0
      %472 = vmatpush1.bf16.msra.mxu0 0
      %473 = vmatprep.mubr.bf16.mxu0 0
      %474 = vmatmul.mubr.bf16.gmra.mrb[0].mxu0 %v394
      %v475 = vpop.f32.mrb[0].mxu0
      %v476 = vadd.f32 0.0, %v475
      %v477 = vpop.f32.mrb[0].mxu0
      %v478 = vpop.f32.mrb[0].mxu0
      %v479 = vadd.f32 0.0, %v478
      %v480 = vpop.f32.mrb[0].mxu0
      %481 = vmatprep.mubr.bf16.mxu0 0
      %482 = vmatmul.mubr.bf16.gmra.mrb[0].mxu0 %v397
      %v483 = vpop.f32.mrb[0].mxu0
      %v484 = vadd.f32 0.0, %v483
      %v485 = vpop.f32.mrb[0].mxu0
      %v486 = vpop.f32.mrb[0].mxu0
      %v487 = vadd.f32 0.0, %v486
      %v488 = vpop.f32.mrb[0].mxu0
      %489 = vmatprep.mubr.bf16.mxu0 0
      %490 = vmatmul.mubr.bf16.gmra.mrb[0].mxu0 %v400
      %v491 = vpop.f32.mrb[0].mxu0
      %v492 = vadd.f32 0.0, %v491
      %v493 = vpop.f32.mrb[0].mxu0
      %v494 = vpop.f32.mrb[0].mxu0
      %v495 = vadd.f32 0.0, %v494
      %v496 = vpop.f32.mrb[0].mxu0
      %497 = vmatprep.mubr.bf16.mxu0 0
      %498 = vmatmul.mubr.bf16.gmra.mrb[0].mxu0 %v403
      %v499 = vpop.f32.mrb[0].mxu0
      %v500 = vadd.f32 0.0, %v499
      %v501 = vpop.f32.mrb[0].mxu0
      %v502 = vpop.f32.mrb[0].mxu0
      %v503 = vadd.f32 0.0, %v502
      %v504 = vpop.f32.mrb[0].mxu0
      %505 = vmatprep.mubr.bf16.mxu0 0
      %506 = vmatmul.mubr.bf16.gmra.mrb[0].mxu0 %v406
      %v507 = vpop.f32.mrb[0].mxu0
      %v508 = vadd.f32 0.0, %v507
      %v509 = vpop.f32.mrb[0].mxu0
      %v510 = vpop.f32.mrb[0].mxu0
      %v511 = vadd.f32 0.0, %v510
      %v512 = vpop.f32.mrb[0].mxu0
      %513 = vmatprep.mubr.bf16.mxu0 0
      %514 = vmatmul.mubr.bf16.gmra.mrb[0].mxu0 %v409
      %v515 = vpop.f32.mrb[0].mxu0
      %v516 = vadd.f32 0.0, %v515
      %v517 = vpop.f32.mrb[0].mxu0
      %v518 = vpop.f32.mrb[0].mxu0
      %v519 = vadd.f32 0.0, %v518
      %v520 = vpop.f32.mrb[0].mxu0
      %521 = vmatprep.mubr.bf16.mxu0 0
      %522 = vmatmul.mubr.bf16.gmra.mrb[0].mxu0 %v412
      %v523 = vpop.f32.mrb[0].mxu0
      %v524 = vadd.f32 0.0, %v523
      %v525 = vpop.f32.mrb[0].mxu0
      %v526 = vpop.f32.mrb[0].mxu0
      %v527 = vadd.f32 0.0, %v526
      %v528 = vpop.f32.mrb[0].mxu0
      %529 = vmatprep.mubr.bf16.mxu0 0
      %530 = vmatmul.mubr.bf16.gmra.mrb[0].mxu0 %v415
      %v531 = vpop.f32.mrb[0].mxu0
      %v532 = vadd.f32 0.0, %v531
      %v533 = vpop.f32.mrb[0].mxu0
      %v534 = vpop.f32.mrb[0].mxu0
      %v535 = vadd.f32 0.0, %v534
      %v536 = vpop.f32.mrb[0].mxu0
      %537 = vmatprep.mubr.bf16.mxu0 0
      %538 = vmatmul.mubr.bf16.gmra.mrb[0].mxu0 %v418
      %v539 = vpop.f32.mrb[0].mxu0
      %v540 = vadd.f32 0.0, %v539
      %v541 = vpop.f32.mrb[0].mxu0
      %v542 = vpop.f32.mrb[0].mxu0
      %v543 = vadd.f32 0.0, %v542
      %v544 = vpop.f32.mrb[0].mxu0
      %545 = vmatprep.mubr.bf16.mxu0 0
      %546 = vmatmul.mubr.bf16.gmra.mrb[0].mxu0 %v421
      %v547 = vpop.f32.mrb[0].mxu0
      %v548 = vadd.f32 0.0, %v547
      %v549 = vpop.f32.mrb[0].mxu0
      %v550 = vpop.f32.mrb[0].mxu0
      %v551 = vadd.f32 0.0, %v550
      %v552 = vpop.f32.mrb[0].mxu0
      %553 = vmatprep.mubr.bf16.mxu0 0
      %554 = vmatmul.mubr.bf16.gmra.mrb[0].mxu0 %v424
      %v555 = vpop.f32.mrb[0].mxu0
      %v556 = vadd.f32 0.0, %v555
      %v557 = vpop.f32.mrb[0].mxu0
      %v558 = vpop.f32.mrb[0].mxu0
      %v559 = vadd.f32 0.0, %v558
      %v560 = vpop.f32.mrb[0].mxu0
      %561 = vmatprep.mubr.bf16.mxu0 0
      %562 = vmatmul.mubr.bf16.gmra.mrb[0].mxu0 %v427
      %v563 = vpop.f32.mrb[0].mxu0
      %v564 = vadd.f32 0.0, %v563
      %v565 = vpop.f32.mrb[0].mxu0
      %v566 = vpop.f32.mrb[0].mxu0
      %v567 = vadd.f32 0.0, %v566
      %v568 = vpop.f32.mrb[0].mxu0
      %569 = vmatprep.mubr.bf16.mxu0 0
      %570 = vmatmul.mubr.bf16.gmra.mrb[0].mxu0 %v430
      %v571 = vpop.f32.mrb[0].mxu0
      %v572 = vadd.f32 0.0, %v571
      %v573 = vpop.f32.mrb[0].mxu0
      %v574 = vpop.f32.mrb[0].mxu0
      %v575 = vadd.f32 0.0, %v574
      %v576 = vpop.f32.mrb[0].mxu0
      %577 = vmatprep.mubr.bf16.mxu0 0
      %578 = vmatmul.mubr.bf16.gmra.mrb[0].mxu0 %v433
      %v579 = vpop.f32.mrb[0].mxu0
      %v580 = vadd.f32 0.0, %v579
      %v581 = vpop.f32.mrb[0].mxu0
      %v582 = vpop.f32.mrb[0].mxu0
      %v583 = vadd.f32 0.0, %v582
      %v584 = vpop.f32.mrb[0].mxu0
      %585 = vmatprep.mubr.bf16.mxu0 0
      %586 = vmatmul.mubr.bf16.gmra.mrb[0].mxu0 %v436
      %v587 = vpop.f32.mrb[0].mxu0
      %v588 = vadd.f32 0.0, %v587
      %v589 = vpop.f32.mrb[0].mxu0
      %v590 = vpop.f32.mrb[0].mxu0
      %v591 = vadd.f32 0.0, %v590
      %v592 = vpop.f32.mrb[0].mxu0
      %593 = vmatprep.mubr.bf16.mxu0 0
      %594 = vmatmul.mubr.bf16.gmra.mrb[0].mxu0 %v439
      %v595 = vpop.f32.mrb[0].mxu0
      %v596 = vadd.f32 0.0, %v595
      %v597 = vpop.f32.mrb[0].mxu0
      %v598 = vpop.f32.mrb[0].mxu0
      %v599 = vadd.f32 0.0, %v598
      %v600 = vpop.f32.mrb[0].mxu0
      %601 = vdwg.mxu0
      %602 = vst [vmem:[%s199] sm:$0xff] %v476
      %603 = vst [vmem:[%s199 + $0x8] sm:$0xff] %v479
      %604 = vst [vmem:[%s199 + $0x10] sm:$0xff] %v484
      %605 = vst [vmem:[%s199 + $0x18] sm:$0xff] %v487
      %606 = vst [vmem:[%s199 + $0x20] sm:$0xff] %v492
      %607 = vst [vmem:[%s199 + $0x28] sm:$0xff] %v495
      %608 = vst [vmem:[%s199 + $0x30] sm:$0xff] %v500
      %609 = vst [vmem:[%s199 + $0x38] sm:$0xff] %v503
      %610 = vst [vmem:[%s199 + $0x40] sm:$0xff] %v508
      %611 = vst [vmem:[%s199 + $0x48] sm:$0xff] %v511
      %612 = vst [vmem:[%s199 + $0x50] sm:$0xff] %v516
      %613 = vst [vmem:[%s199 + $0x58] sm:$0xff] %v519
      %614 = vst [vmem:[%s199 + $0x60] sm:$0xff] %v524
      %615 = vst [vmem:[%s199 + $0x68] sm:$0xff] %v527
      %616 = vst [vmem:[%s199 + $0x70] sm:$0xff] %v532
      %617 = vst [vmem:[%s199 + $0x78] sm:$0xff] %v535
      %618 = vst [vmem:[%s199 + $0x80] sm:$0xff] %v540
      %619 = vst [vmem:[%s199 + $0x88] sm:$0xff] %v543
      %620 = vst [vmem:[%s199 + $0x90] sm:$0xff] %v548
      %621 = vst [vmem:[%s199 + $0x98] sm:$0xff] %v551
      %622 = vst [vmem:[%s199 + $0xa0] sm:$0xff] %v556
      %623 = vst [vmem:[%s199 + $0xa8] sm:$0xff] %v559
      %624 = vst [vmem:[%s199 + $0xb0] sm:$0xff] %v564
      %625 = vst [vmem:[%s199 + $0xb8] sm:$0xff] %v567
      %626 = vst [vmem:[%s199 + $0xc0] sm:$0xff] %v572
      %627 = vst [vmem:[%s199 + $0xc8] sm:$0xff] %v575
      %628 = vst [vmem:[%s199 + $0xd0] sm:$0xff] %v580
      %629 = vst [vmem:[%s199 + $0xd8] sm:$0xff] %v583
      %630 = vst [vmem:[%s199 + $0xe0] sm:$0xff] %v588
      %631 = vst [vmem:[%s199 + $0xe8] sm:$0xff] %v591
      %632 = vst [vmem:[%s199 + $0xf0] sm:$0xff] %v596
      %633 = vst [vmem:[%s199 + $0xf8] sm:$0xff] %v599
      %s634 = smul.u32 32, %s15
      %p635 = scmp.lt.s32.totalorder %s634, 63
      %s636 = scalar_select %p635, %s634, 63
      %s637 = smul.addr %s636, 8
      %s638 = scalar_lea.vmem %s4, %s637
      // Predicated region
      $region37: #{generator_forward.14} parent=35 // pred_check
        %p639 = pneg %p122
      $region38: #{generator_forward.14} parent=35 // pred_check_branch
        %641 = sbr.rel (%p639) target = $region40
      $region39: #{generator_forward.14} parent=35 // pred_region
        %s642 = smul.u32 32, %s15
      $region40: #{generator_forward.14} parent=35 // pred_fallthru
        _
    $region36: #{generator_forward.14} parent=5 // pred_fallthru
      _
    %p643 = scmp.le.s32.totalorder 2, %s10
    // Predicated region
    $region41: #{generator_forward.14} parent=5 // pred_check
      %p644 = pneg %p643
    $region42: #{generator_forward.14} parent=5 // pred_check_branch
      %646 = sbr.rel (%p644) target = $region44
    $region43: #{generator_forward.14} parent=5 // pred_region
      %s647 = ssub.s32 %s10, 2
      // Predicated region
      $region45: #{generator_forward.14} parent=43 // pred_check
        %p648 = pneg %p128
      $region46: #{generator_forward.14} parent=43 // pred_check_branch
        %650 = sbr.rel (%p648) target = $region48
      $region47: #{generator_forward.14} parent=43 // pred_region
        %s651 = smul.u32 32, %s16
        %p652 = scmp.lt.s32.totalorder %s651, 63
        %s653 = scalar_select %p652, %s651, 63
        %s654 = smul.addr %s653, 8
        %s655 = scalar_lea.vmem %s4, %s654
      $region48: #{generator_forward.14} parent=43 // pred_fallthru
        _
    $region44: #{generator_forward.14} parent=5 // pred_fallthru
      _
  $region6: #{generator_forward.14} parent=0 // loop_footer
    %s14 = sadd.s32 1, %s10
  $region7: #{generator_forward.14} parent=0 // loop_footer_branch
    %9 = sbr.rel target = $region3
  $region8: #{generator_forward.14} parent=0 // loop_exit
    _

// kernel: tile.8
$region0: #{tile.8}
  #allocation0 [shape = 's32[1]{0}', space=sflag, size = 0x4, scoped, tag = 'scoped memory for tile.8']
  %s0 = inlined_call_operand.vmem [shape: f32[8], index: 0, kind: input, shape index: {}]
  %s1 = inlined_call_operand.vmem [shape: f32[32,8], index: 1, kind: output, shape index: {}]
  // Predicated region
  $region2: #{tile.8} parent=0 // pred_check
    _
  $region3: #{tile.8} parent=0 // pred_check_branch
    %3 = sbr.rel (0) target = $region5
  $region4: #{tile.8} parent=0 // pred_region
    _
  $region5: #{tile.8} parent=0 // pred_fallthru
    _
  %v4 = vld [vmem:[%s0] ss:$0 sm:$0xff]
  %5 = vst [vmem:[%s1] sm:$0xff] %v4
  %s6 = scalar_lea.vmem %s1, 8
  %7 = vst [vmem:[%s6] sm:$0xff] %v4
  %s8 = scalar_lea.vmem %s1, 16
  %9 = vst [vmem:[%s8] sm:$0xff] %v4
  %s10 = scalar_lea.vmem %s1, 24
  %11 = vst [vmem:[%s10] sm:$0xff] %v4

// kernel: tile.9
$region0: #{tile.9}
  %s0 = inlined_call_operand.vmem [shape: f32[32,8], index: 0, kind: input, shape index: {}]
  %s1 = inlined_call_operand.vmem [shape: f32[1,256], index: 1, kind: output, shape index: {}]
  $region1: #{tile.9} parent=0
    #allocation0 [shape = 'u8[8192]{0}', space=vmem, size = 0x2000, scoped, tag = 'scoped mem for output reshape']
    %s2 = smov 3
    %v3 = vld [vmem:[%s0] ss:$16 sm:%s2]
    %vm4 = vcmask 64512
    %5 = vst.msk [vmem:[#allocation0] ss:$8 sm:$0x3] %vm4, %v3
    %s6 = scalar_lea.vmem %s0, 15
    %s7 = smov 3
    %v8 = vld [vmem:[%s6] ss:$16 sm:%s7]
    %9 = vrot.lane.b32.xlu0 %v8, 120
    %v10 = vpop.permute.xlu0 %9
    %vm11 = vcmask 1048512
    %12 = vst.msk [vmem:[#allocation0] ss:$8 sm:$0x3] %vm11, %v10
    %s13 = scalar_lea.vmem %s0, 14
    %s14 = smov 3
    %v15 = vld [vmem:[%s13] ss:$16 sm:%s14]
    %16 = vrot.lane.b32.xlu0 %v15, 112
    %v17 = vpop.permute.xlu0 %16
    %vm18 = vcmask 982912
    %19 = vst.msk [vmem:[#allocation0] ss:$8 sm:$0x3] %vm18, %v17
    %s20 = scalar_lea.vmem %s0, 13
    %s21 = smov 3
    %v22 = vld [vmem:[%s20] ss:$16 sm:%s21]
    %23 = vrot.lane.b32.xlu0 %v22, 104
    %v24 = vpop.permute.xlu0 %23
    %vm25 = vcmask 917312
    %26 = vst.msk [vmem:[#allocation0] ss:$8 sm:$0x3] %vm25, %v24
    %s27 = scalar_lea.vmem %s0, 12
    %s28 = smov 3
    %v29 = vld [vmem:[%s27] ss:$16 sm:%s28]
    %30 = vrot.lane.b32.xlu0 %v29, 96
    %v31 = vpop.permute.xlu0 %30
    %vm32 = vcmask 851712
    %33 = vst.msk [vmem:[#allocation0] ss:$8 sm:$0x3] %vm32, %v31
    %s34 = scalar_lea.vmem %s0, 11
    %s35 = smov 3
    %v36 = vld [vmem:[%s34] ss:$16 sm:%s35]
    %37 = vrot.lane.b32.xlu0 %v36, 88
    %v38 = vpop.permute.xlu0 %37
    %vm39 = vcmask 786112
    %40 = vst.msk [vmem:[#allocation0] ss:$8 sm:$0x3] %vm39, %v38
    %s41 = scalar_lea.vmem %s0, 10
    %s42 = smov 3
    %v43 = vld [vmem:[%s41] ss:$16 sm:%s42]
    %44 = vrot.lane.b32.xlu0 %v43, 80
    %v45 = vpop.permute.xlu0 %44
    %vm46 = vcmask 720512
    %47 = vst.msk [vmem:[#allocation0] ss:$8 sm:$0x3] %vm46, %v45
    %s48 = scalar_lea.vmem %s0, 9
    %s49 = smov 3
    %v50 = vld [vmem:[%s48] ss:$16 sm:%s49]
    %51 = vrot.lane.b32.xlu0 %v50, 72
    %v52 = vpop.permute.xlu0 %51
    %vm53 = vcmask 654912
    %54 = vst.msk [vmem:[#allocation0] ss:$8 sm:$0x3] %vm53, %v52
    %s55 = scalar_lea.vmem %s0, 8
    %s56 = smov 3
    %v57 = vld [vmem:[%s55] ss:$16 sm:%s56]
    %58 = vrot.lane.b32.xlu0 %v57, 64
    %v59 = vpop.permute.xlu0 %58
    %vm60 = vcmask 589312
    %61 = vst.msk [vmem:[#allocation0] ss:$8 sm:$0x3] %vm60, %v59
    %s62 = scalar_lea.vmem %s0, 7
    %s63 = smov 3
    %v64 = vld [vmem:[%s62] ss:$16 sm:%s63]
    %65 = vrot.lane.b32.xlu0 %v64, 56
    %v66 = vpop.permute.xlu0 %65
    %vm67 = vcmask 523712
    %68 = vst.msk [vmem:[#allocation0] ss:$8 sm:$0x3] %vm67, %v66
    %s69 = scalar_lea.vmem %s0, 6
    %s70 = smov 3
    %v71 = vld [vmem:[%s69] ss:$16 sm:%s70]
    %72 = vrot.lane.b32.xlu0 %v71, 48
    %v73 = vpop.permute.xlu0 %72
    %vm74 = vcmask 458112
    %75 = vst.msk [vmem:[#allocation0] ss:$8 sm:$0x3] %vm74, %v73
    %s76 = scalar_lea.vmem %s0, 5
    %s77 = smov 3
    %v78 = vld [vmem:[%s76] ss:$16 sm:%s77]
    %79 = vrot.lane.b32.xlu0 %v78, 40
    %v80 = vpop.permute.xlu0 %79
    %vm81 = vcmask 392512
    %82 = vst.msk [vmem:[#allocation0] ss:$8 sm:$0x3] %vm81, %v80
    %s83 = scalar_lea.vmem %s0, 4
    %s84 = smov 3
    %v85 = vld [vmem:[%s83] ss:$16 sm:%s84]
    %86 = vrot.lane.b32.xlu0 %v85, 32
    %v87 = vpop.permute.xlu0 %86
    %vm88 = vcmask 326912
    %89 = vst.msk [vmem:[#allocation0] ss:$8 sm:$0x3] %vm88, %v87
    %s90 = scalar_lea.vmem %s0, 3
    %s91 = smov 3
    %v92 = vld [vmem:[%s90] ss:$16 sm:%s91]
    %93 = vrot.lane.b32.xlu0 %v92, 24
    %v94 = vpop.permute.xlu0 %93
    %vm95 = vcmask 261312
    %96 = vst.msk [vmem:[#allocation0] ss:$8 sm:$0x3] %vm95, %v94
    %s97 = scalar_lea.vmem %s0, 2
    %s98 = smov 3
    %v99 = vld [vmem:[%s97] ss:$16 sm:%s98]
    %100 = vrot.lane.b32.xlu0 %v99, 16
    %v101 = vpop.permute.xlu0 %100
    %vm102 = vcmask 195712
    %103 = vst.msk [vmem:[#allocation0] ss:$8 sm:$0x3] %vm102, %v101
    %s104 = scalar_lea.vmem %s0, 1
    %s105 = smov 3
    %v106 = vld [vmem:[%s104] ss:$16 sm:%s105]
    %107 = vrot.lane.b32.xlu0 %v106, 8
    %v108 = vpop.permute.xlu0 %107
    %vm109 = vcmask 130112
    %110 = vst.msk [vmem:[#allocation0] ss:$8 sm:$0x3] %vm109, %v108
    %s112 = sshllo.u32 0, 1
    %v114 = vld [vmem:[#allocation0] sm:%s112]
    %s115 = sshllo.u32 0, 1
    %116 = vst [vmem:[%s1] sm:%s115] %v114
    %s117 = scalar_lea.vmem [#allocation0], 8
    %v118 = vld [vmem:[%s117] sm:%s112]
    %s119 = sshllo.u32 0, 1
    %s120 = scalar_lea.vmem %s1, 1
    %121 = vst [vmem:[%s120] sm:%s119] %v118

// kernel: generator_forward.15
$region0: #{generator_forward.15}
  #allocation0 [shape = 'u32[]', space=smem, size = 0x4, offset = 0x4, fixed_abs, tag = 'smem constant byte address 0x4 - core index']
  #allocation1 [shape = 'u32[144,128]{1,0:T(1,128)}', space=vmem, size = 0x12000, scoped, tag = 'internal scratch']
  %s0 = inlined_call_operand.vmem [shape: f32[64,256], index: 0, kind: input, shape index: {}]
  %s1 = inlined_call_operand.vmem [shape: f32[1,256], index: 1, kind: input, shape index: {}]
  %s2 = inlined_call_operand.vmem [shape: f32[64,256], index: 2, kind: output, shape index: {}]
  %s3 = sld [smem:[#allocation0]]
  $region18: #{generator_forward.15} parent=0
    _
  %s5 = ssub.s32 1, %s3
  %s6 = scalar_select 0, %s5, %s3
  // Predicated region
  $region2: #{generator_forward.15} parent=0 // pred_check
    _
  $region3: #{generator_forward.15} parent=0 // pred_check_branch
    %8 = sbr.rel (0) target = $region5
  $region4: #{generator_forward.15} parent=0 // pred_region
    _
  $region5: #{generator_forward.15} parent=0 // pred_fallthru
    _
  // Predicated region
  $region6: #{generator_forward.15} parent=0 // pred_check
    _
  $region7: #{generator_forward.15} parent=0 // pred_check_branch
    %10 = sbr.rel (0) target = $region9
  $region8: #{generator_forward.15} parent=0 // pred_region
    _
  $region9: #{generator_forward.15} parent=0 // pred_fallthru
    _
  %v11 = vld [vmem:[%s0] sm:$0xff]
  %v12 = vld [vmem:[%s0 + $0x8] sm:$0xff]
  %v13 = vld [vmem:[%s0 + $0x10] sm:$0xff]
  %v14 = vld [vmem:[%s0 + $0x18] sm:$0xff]
  %v15 = vld [vmem:[%s0 + $0x20] sm:$0xff]
  %v16 = vld [vmem:[%s0 + $0x28] sm:$0xff]
  %v17 = vld [vmem:[%s0 + $0x30] sm:$0xff]
  %v18 = vld [vmem:[%s0 + $0x38] sm:$0xff]
  %v19 = vld [vmem:[%s0 + $0x40] sm:$0xff]
  %v20 = vld [vmem:[%s0 + $0x48] sm:$0xff]
  %v21 = vld [vmem:[%s0 + $0x50] sm:$0xff]
  %v22 = vld [vmem:[%s0 + $0x58] sm:$0xff]
  %v23 = vld [vmem:[%s0 + $0x60] sm:$0xff]
  %v24 = vld [vmem:[%s0 + $0x68] sm:$0xff]
  %v25 = vld [vmem:[%s0 + $0x70] sm:$0xff]
  %v26 = vld [vmem:[%s0 + $0x78] sm:$0xff]
  %v27 = vld [vmem:[%s1] sm:$0x3]
  %v29 = vlaneseq
  %v30 = vshrl.u32 %v29, 7
  %v31 = vsub.s32 0, %v30
  %v32 = vrot.slane %v27, %v31
  %v33 = vlaneseq
  %v34 = vshrl.u32 %v33, 7
  %v35 = vsub.s32 1, %v34
  %v36 = vrot.slane %v27, %v35
  %v39 = vadd.f32 %v11, %v32
  %v40 = vadd.f32 %v12, %v36
  %v41 = vadd.f32 %v13, %v32
  %v42 = vadd.f32 %v14, %v36
  %v43 = vadd.f32 %v15, %v32
  %v44 = vadd.f32 %v16, %v36
  %v45 = vadd.f32 %v17, %v32
  %v46 = vadd.f32 %v18, %v36
  %v47 = vadd.f32 %v19, %v32
  %v48 = vadd.f32 %v20, %v36
  %v49 = vadd.f32 %v21, %v32
  %v50 = vadd.f32 %v22, %v36
  %v51 = vadd.f32 %v23, %v32
  %v52 = vadd.f32 %v24, %v36
  %v53 = vadd.f32 %v25, %v32
  %v54 = vadd.f32 %v26, %v36
  %v55 = vtanh.pop %v39
  %v56 = vtanh.pop %v40
  %v57 = vtanh.pop %v41
  %v58 = vtanh.pop %v42
  %v59 = vtanh.pop %v43
  %v60 = vtanh.pop %v44
  %v61 = vtanh.pop %v45
  %v62 = vtanh.pop %v46
  %v63 = vtanh.pop %v47
  %v64 = vtanh.pop %v48
  %v65 = vtanh.pop %v49
  %v66 = vtanh.pop %v50
  %v67 = vtanh.pop %v51
  %v68 = vtanh.pop %v52
  %v69 = vtanh.pop %v53
  %v70 = vtanh.pop %v54
  %71 = vst [vmem:[%s2] sm:$0xff] %v55
  %72 = vst [vmem:[%s2 + $0x8] sm:$0xff] %v56
  %73 = vst [vmem:[%s2 + $0x10] sm:$0xff] %v57
  %74 = vst [vmem:[%s2 + $0x18] sm:$0xff] %v58
  %75 = vst [vmem:[%s2 + $0x20] sm:$0xff] %v59
  %76 = vst [vmem:[%s2 + $0x28] sm:$0xff] %v60
  %77 = vst [vmem:[%s2 + $0x30] sm:$0xff] %v61
  %78 = vst [vmem:[%s2 + $0x38] sm:$0xff] %v62
  %79 = vst [vmem:[%s2 + $0x40] sm:$0xff] %v63
  %80 = vst [vmem:[%s2 + $0x48] sm:$0xff] %v64
  %81 = vst [vmem:[%s2 + $0x50] sm:$0xff] %v65
  %82 = vst [vmem:[%s2 + $0x58] sm:$0xff] %v66
  %83 = vst [vmem:[%s2 + $0x60] sm:$0xff] %v67
  %84 = vst [vmem:[%s2 + $0x68] sm:$0xff] %v68
  %85 = vst [vmem:[%s2 + $0x70] sm:$0xff] %v69
  %86 = vst [vmem:[%s2 + $0x78] sm:$0xff] %v70
  // Predicated region
  $region10: #{generator_forward.15} parent=0 // pred_check
    _
  $region11: #{generator_forward.15} parent=0 // pred_check_branch
    %88 = sbr.rel (0) target = $region13
  $region12: #{generator_forward.15} parent=0 // pred_region
    _
  $region13: #{generator_forward.15} parent=0 // pred_fallthru
    _
  // Predicated region
  $region14: #{generator_forward.15} parent=0 // pred_check
    _
  $region15: #{generator_forward.15} parent=0 // pred_check_branch
    %90 = sbr.rel (0) target = $region17
  $region16: #{generator_forward.15} parent=0 // pred_region
    _
  $region17: #{generator_forward.15} parent=0 // pred_fallthru
    _

</llo_original>
